<compile_context>
chip_gen: v5e
topology: v5e:2x2
jax: 0.10.0
libtpu: 0.0.40
codegen_flags: <defaults>
</compile_context>

<pallas_src>
import jax
import jax.numpy as jnp
import numpy as np
from jax import lax
from jax.experimental import pallas as pl
from jax.experimental.pallas import tpu as pltpu

# Small, TPU-tile-friendly shapes consistent with the module's forward pass.
SEQUENCE_LENGTH = 8      # module uses 30; kept small for the example run
BATCH_SIZE = 32          # matches module
EMBEDDING_DIM = 128      # matches module
HIDDEN_DIM = 256         # matches module
VOCAB_SIZE = 256


def _lstm_lm_kernel(ids_ref, emb_ref, wih_ref, b_ref, bout_ref,
                    whh_hbm, wout_hbm,
                    out_ref,
                    gates_ref, whh_vmem, wout_vmem, dma_sem):
    """Whole forward pass in one invocation: embed -> LSTM over T -> Linear."""
    TB = ids_ref.shape[0]
    V, E = emb_ref.shape
    H = wih_ref.shape[1] // 4
    B = out_ref.shape[0]
    T = TB // B  # static Python int

    # --- Kick off recurrent / output weight DMAs; hide them behind the ------
    # --- hoisted matmuls below. ----------------------------------------------
    whh_cp = pltpu.make_async_copy(whh_hbm, whh_vmem, dma_sem.at[0])
    wout_cp = pltpu.make_async_copy(wout_hbm, wout_vmem, dma_sem.at[1])
    whh_cp.start()
    wout_cp.start()

    # --- Fused embedding lookup as a one-hot matmul (exact row select). ------
    ids = ids_ref[...]                                               # (T*B, 1) i32
    onehot = (ids == lax.broadcasted_iota(jnp.int32, (TB, V), 1)
              ).astype(jnp.bfloat16)                                 # (T*B, V)
    x_all = jnp.dot(onehot, emb_ref[...],
                    preferred_element_type=jnp.float32
                    ).astype(jnp.bfloat16)                           # (T*B, E) exact

    # --- Hoisted input projection + bias for ALL timesteps -> VMEM scratch. --
    gates_ref[...] = (jnp.dot(x_all, wih_ref[...],
                              preferred_element_type=jnp.float32)
                      + b_ref[...])                                  # (T*B, 4H) f32

    # --- Sequential LSTM recurrence (only h @ W_hh per step). ----------------
    whh_cp.wait()
    w_hh = whh_vmem[...]                                             # (H, 4H) bf16

    def step(t, carry):
        h, c = carry
        start = pl.multiple_of(t * B, B)
        gates = gates_ref[pl.ds(start, B), :] + jnp.dot(
            h.astype(jnp.bfloat16), w_hh,
            preferred_element_type=jnp.float32)                      # (B, 4H)
        # Gate columns pre-permuted to [i, f, o, g]: one contiguous sigmoid
        # slice and one tanh slice on the serial critical chain.
        sig = jax.nn.sigmoid(gates[:, :3 * H])
        g_g = jnp.tanh(gates[:, 3 * H:])
        i_g = sig[:, 0 * H:1 * H]
        f_g = sig[:, 1 * H:2 * H]
        o_g = sig[:, 2 * H:3 * H]
        c_new = f_g * c + i_g * g_g
        h_new = o_g * jnp.tanh(c_new)
        return h_new, c_new

    h0 = jnp.zeros((B, H), jnp.float32)
    c0 = jnp.zeros((B, H), jnp.float32)
    h, _ = lax.fori_loop(0, T, step, (h0, c0), unroll=T <= 8)

    # --- Output Linear on the last timestep's hidden state. ------------------
    wout_cp.wait()
    out_ref[...] = (jnp.dot(h.astype(jnp.bfloat16), wout_vmem[...],
                            preferred_element_type=jnp.float32)
                    + bout_ref[...]).astype(out_ref.dtype)


def _permute_ifgo_to_ifog(w, axis):
    """PyTorch fused-gate order [i, f, g, o] -> [i, f, o, g]."""
    i, f, g, o = jnp.split(w, 4, axis=axis)
    return jnp.concatenate([i, f, o, g], axis=axis)


@jax.jit
def lstm_language_model(input_seq, emb_table, w_ih_t, w_hh_t, bias,
                        w_out_t, b_out):
    """input_seq: (T, B) int32 token ids. Returns logits (B, V) f32."""
    T, B = input_seq.shape
    V, E = emb_table.shape
    H = w_hh_t.shape[0]
    assert w_ih_t.shape == (E, 4 * H)
    assert w_hh_t.shape == (H, 4 * H)
    assert bias.shape == (1, 4 * H)
    assert w_out_t.shape == (H, V)
    assert b_out.shape == (1, V)

    # bf16 weight casts (native MXU rate, half the weight DMA) + gate permute.
    emb_bf = emb_table.astype(jnp.bfloat16)
    w_ih_bf = _permute_ifgo_to_ifog(w_ih_t.astype(jnp.bfloat16), axis=1)
    w_hh_bf = _permute_ifgo_to_ifog(w_hh_t.astype(jnp.bfloat16), axis=1)
    bias_p = _permute_ifgo_to_ifog(bias, axis=1)      # bias stays f32
    w_out_bf = w_out_t.astype(jnp.bfloat16)

    ids_flat = input_seq.reshape(T * B, 1)            # time-major flatten
    assert ids_flat.shape[0] == T * B

    return pl.pallas_call(
        _lstm_lm_kernel,
        out_shape=jax.ShapeDtypeStruct((B, V), jnp.float32),
        grid_spec=pltpu.PrefetchScalarGridSpec(
            num_scalar_prefetch=0,
            grid=(1,),  # single invocation: recurrence lives inside the kernel
            in_specs=[
                pl.BlockSpec((T * B, 1), lambda i: (0, 0)),      # token ids
                pl.BlockSpec((V, E), lambda i: (0, 0)),          # embedding table
                pl.BlockSpec((E, 4 * H), lambda i: (0, 0)),      # W_ih^T (perm)
                pl.BlockSpec((1, 4 * H), lambda i: (0, 0)),      # b_ih + b_hh (perm)
                pl.BlockSpec((1, V), lambda i: (0, 0)),          # b_out
                pl.BlockSpec(memory_space=pl.ANY),               # W_hh^T (HBM)
                pl.BlockSpec(memory_space=pl.ANY),               # W_out^T (HBM)
            ],
            out_specs=pl.BlockSpec((B, V), lambda i: (0, 0)),    # logits
            scratch_shapes=[
                pltpu.VMEM((T * B, 4 * H), jnp.float32),         # gates_x
                pltpu.VMEM((H, 4 * H), jnp.bfloat16),            # W_hh buffer
                pltpu.VMEM((H, V), jnp.bfloat16),                # W_out buffer
                pltpu.SemaphoreType.DMA((2,)),
            ],
        ),
        compiler_params=pltpu.CompilerParams(
            dimension_semantics=("arbitrary",),
        ),
    )(ids_flat, emb_bf, w_ih_bf, bias_p, b_out, w_hh_bf, w_out_bf)


def _reference_forward(input_seq, emb_table, w_ih_t, w_hh_t, bias,
                       w_out_t, b_out):
    """Pure-JAX reference with PyTorch nn.LSTM semantics and gate order,
    precision-matched to the kernel (bf16 weights / bf16 h, f32 accumulation).
    """
    T, B = input_seq.shape
    H = w_hh_t.shape[0]
    emb_bf = emb_table.astype(jnp.bfloat16)
    w_ih_bf = w_ih_t.astype(jnp.bfloat16)
    w_hh_bf = w_hh_t.astype(jnp.bfloat16)
    w_out_bf = w_out_t.astype(jnp.bfloat16)
    embeds = jnp.take(emb_bf, input_seq, axis=0)                 # (T, B, E) bf16
    h = jnp.zeros((B, H), jnp.float32)
    c = jnp.zeros((B, H), jnp.float32)
    for t in range(T):
        gates = (jnp.dot(embeds[t], w_ih_bf,
                         preferred_element_type=jnp.float32)
                 + jnp.dot(h.astype(jnp.bfloat16), w_hh_bf,
                           preferred_element_type=jnp.float32)
                 + bias)
        i = jax.nn.sigmoid(gates[:, 0 * H:1 * H])
        f = jax.nn.sigmoid(gates[:, 1 * H:2 * H])
        g = jnp.tanh(gates[:, 2 * H:3 * H])
        o = jax.nn.sigmoid(gates[:, 3 * H:4 * H])
        c = f * c + i * g
        h = o * jnp.tanh(c)
    return (jnp.dot(h.astype(jnp.bfloat16), w_out_bf,
                    preferred_element_type=jnp.float32) + b_out)


if __name__ == "__main__":
    key = jax.random.PRNGKey(0)
    k_emb, k_ih, k_hh, k_bih, k_bhh, k_wo, k_bo, k_tok = jax.random.split(key, 8)

    # Deterministic parameter init (PyTorch-style ranges, synthetic values).
    emb_table = jax.random.normal(k_emb, (VOCAB_SIZE, EMBEDDING_DIM), jnp.float32)
    bound = 1.0 / np.sqrt(HIDDEN_DIM)
    # PyTorch stores weight_ih as (4H, E); we keep the transposed (E, 4H) layout,
    # gate order [i, f, g, o] (permuted to [i, f, o, g] inside the wrapper).
    w_ih_t = jax.random.uniform(k_ih, (EMBEDDING_DIM, 4 * HIDDEN_DIM),
                                jnp.float32, -bound, bound)
    w_hh_t = jax.random.uniform(k_hh, (HIDDEN_DIM, 4 * HIDDEN_DIM),
                                jnp.float32, -bound, bound)
    b_ih = jax.random.uniform(k_bih, (4 * HIDDEN_DIM,), jnp.float32, -bound, bound)
    b_hh = jax.random.uniform(k_bhh, (4 * HIDDEN_DIM,), jnp.float32, -bound, bound)
    bias = (b_ih + b_hh).reshape(1, 4 * HIDDEN_DIM)
    w_out_t = jax.random.uniform(k_wo, (HIDDEN_DIM, VOCAB_SIZE),
                                 jnp.float32, -bound, bound)
    b_out = jax.random.uniform(k_bo, (VOCAB_SIZE,), jnp.float32,
                               -bound, bound).reshape(1, VOCAB_SIZE)

    # Token ids: (T, B), matching the module's time-major view.
    input_seq = jax.random.randint(k_tok, (SEQUENCE_LENGTH, BATCH_SIZE),
                                   0, VOCAB_SIZE, jnp.int32)

    logits = lstm_language_model(input_seq, emb_table, w_ih_t, w_hh_t, bias,
                                 w_out_t, b_out)
    logits = jax.block_until_ready(logits)

    ref = _reference_forward(input_seq, emb_table, w_ih_t, w_hh_t, bias,
                             w_out_t, b_out)
    np.testing.assert_allclose(np.asarray(logits), np.asarray(ref),
                               rtol=1e-3, atol=1e-3)

    assert logits.shape == (BATCH_SIZE, VOCAB_SIZE)
    print("KERNEL_OK")
</pallas_src>

<mosaic_0001>
module attributes {stable_mosaic.version = 11 : i64} {
  func.func @_lstm_lm_kernel(%arg0: i32, %arg1: memref<256x1xi32, #tpu.memory_space<vmem>>, %arg2: memref<256x128xbf16, #tpu.memory_space<vmem>>, %arg3: memref<128x1024xbf16, #tpu.memory_space<vmem>>, %arg4: memref<1x1024xf32, #tpu.memory_space<vmem>>, %arg5: memref<1x256xf32, #tpu.memory_space<vmem>>, %arg6: memref<256x1024xbf16, #tpu.memory_space<any>>, %arg7: memref<256x256xbf16, #tpu.memory_space<any>>, %arg8: memref<32x256xf32, #tpu.memory_space<vmem>>, %arg9: memref<256x1024xf32, #tpu.memory_space<vmem>>, %arg10: memref<256x1024xbf16, #tpu.memory_space<vmem>>, %arg11: memref<256x256xbf16, #tpu.memory_space<vmem>>, %arg12: memref<2x!tpu.dma_semaphore, #tpu.memory_space<semaphore_mem>>) attributes {dimension_semantics = [#tpu.dimension_semantics<arbitrary>], iteration_bounds = array<i64: 1>, scalar_prefetch = 0 : i64, scratch_operands = 4 : i64, tpu.core_type = #tpu.core_type<tc>, window_params = [{pipeline_mode = #tpu.pipeline_mode<synchronous>, transform_indices = @transform_0, window_bounds = array<i64: 256, 1>}, {pipeline_mode = #tpu.pipeline_mode<synchronous>, transform_indices = @transform_1, window_bounds = array<i64: 256, 128>}, {pipeline_mode = #tpu.pipeline_mode<synchronous>, transform_indices = @transform_2, window_bounds = array<i64: 128, 1024>}, {pipeline_mode = #tpu.pipeline_mode<synchronous>, transform_indices = @transform_3, window_bounds = array<i64: 1, 1024>}, {pipeline_mode = #tpu.pipeline_mode<synchronous>, transform_indices = @transform_4, window_bounds = array<i64: 1, 256>}, {}, {}, {pipeline_mode = #tpu.pipeline_mode<synchronous>, transform_indices = @transform_7, window_bounds = array<i64: 32, 256>}]} {
    %c0_i32 = arith.constant 0 : i32
    %0 = tpu.memref_slice %arg12[%c0_i32] : memref<2x!tpu.dma_semaphore, #tpu.memory_space<semaphore_mem>> -> memref<1x!tpu.dma_semaphore, #tpu.memory_space<semaphore_mem>>
    %1 = tpu.memref_squeeze %0 : memref<1x!tpu.dma_semaphore, #tpu.memory_space<semaphore_mem>> -> memref<!tpu.dma_semaphore, #tpu.memory_space<semaphore_mem>>
    tpu.enqueue_dma source(%arg6 : memref<256x1024xbf16, #tpu.memory_space<any>>) target(%arg10 : memref<256x1024xbf16, #tpu.memory_space<vmem>>) target_semaphore(%1 : memref<!tpu.dma_semaphore, #tpu.memory_space<semaphore_mem>>)
    %c1_i32 = arith.constant 1 : i32
    %2 = tpu.memref_slice %arg12[%c1_i32] : memref<2x!tpu.dma_semaphore, #tpu.memory_space<semaphore_mem>> -> memref<1x!tpu.dma_semaphore, #tpu.memory_space<semaphore_mem>>
    %3 = tpu.memref_squeeze %2 : memref<1x!tpu.dma_semaphore, #tpu.memory_space<semaphore_mem>> -> memref<!tpu.dma_semaphore, #tpu.memory_space<semaphore_mem>>
    tpu.enqueue_dma source(%arg7 : memref<256x256xbf16, #tpu.memory_space<any>>) target(%arg11 : memref<256x256xbf16, #tpu.memory_space<vmem>>) target_semaphore(%3 : memref<!tpu.dma_semaphore, #tpu.memory_space<semaphore_mem>>)
    %c0 = arith.constant 0 : index
    %c0_0 = arith.constant 0 : index
    %4 = vector.load %arg1[%c0, %c0_0] : memref<256x1xi32, #tpu.memory_space<vmem>>, vector<256x1xi32>
    %5 = tpu.iota {dimensions = array<i32: 1>} : vector<256x256xi32>
    %6 = vector.broadcast %4 : vector<256x1xi32> to vector<256x256xi32>
    %7 = arith.cmpi eq, %6, %5 : vector<256x256xi32>
    %8 = arith.extui %7 : vector<256x256xi1> to vector<256x256xi32>
    %9 = arith.sitofp %8 : vector<256x256xi32> to vector<256x256xf32>
    %10 = arith.truncf %9 : vector<256x256xf32> to vector<256x256xbf16>
    %c0_1 = arith.constant 0 : index
    %c0_2 = arith.constant 0 : index
    %11 = vector.load %arg2[%c0_1, %c0_2] : memref<256x128xbf16, #tpu.memory_space<vmem>>, vector<256x128xbf16>
    %cst = arith.constant dense<0.000000e+00> : vector<256x128xf32>
    %12 = tpu.matmul %10, %11, %cst {dimension_numbers = #tpu.dot_dimension_numbers<[1], [0], [0], [1], [0, 0, 1, 1], [], []>} : vector<256x256xbf16>, vector<256x128xbf16>, vector<256x128xf32> -> vector<256x128xf32>
    %13 = arith.truncf %12 : vector<256x128xf32> to vector<256x128xbf16>
    %c0_3 = arith.constant 0 : index
    %c0_4 = arith.constant 0 : index
    %14 = vector.load %arg3[%c0_3, %c0_4] : memref<128x1024xbf16, #tpu.memory_space<vmem>>, vector<128x1024xbf16>
    %cst_5 = arith.constant dense<0.000000e+00> : vector<256x1024xf32>
    %15 = tpu.matmul %13, %14, %cst_5 {dimension_numbers = #tpu.dot_dimension_numbers<[1], [0], [0], [1], [0, 0, 1, 1], [], []>} : vector<256x128xbf16>, vector<128x1024xbf16>, vector<256x1024xf32> -> vector<256x1024xf32>
    %c0_6 = arith.constant 0 : index
    %c0_7 = arith.constant 0 : index
    %16 = vector.load %arg4[%c0_6, %c0_7] : memref<1x1024xf32, #tpu.memory_space<vmem>>, vector<1x1024xf32>
    %17 = vector.broadcast %16 : vector<1x1024xf32> to vector<256x1024xf32>
    %18 = arith.addf %15, %17 : vector<256x1024xf32>
    %c0_8 = arith.constant 0 : index
    %c0_9 = arith.constant 0 : index
    %19 = vector.load %arg9[%c0_8, %c0_9] : memref<256x1024xf32, #tpu.memory_space<vmem>>, vector<256x1024xf32>
    tpu.vector_store %arg9[%c0_8, %c0_9], %18 {strides = array<i32>} : memref<256x1024xf32, #tpu.memory_space<vmem>>, vector<256x1024xf32>,
    %c0_i32_10 = arith.constant 0 : i32
    %20 = tpu.memref_slice %arg12[%c0_i32_10] : memref<2x!tpu.dma_semaphore, #tpu.memory_space<semaphore_mem>> -> memref<1x!tpu.dma_semaphore, #tpu.memory_space<semaphore_mem>>
    %21 = tpu.memref_squeeze %20 : memref<1x!tpu.dma_semaphore, #tpu.memory_space<semaphore_mem>> -> memref<!tpu.dma_semaphore, #tpu.memory_space<semaphore_mem>>
    tpu.wait_dma2 semaphore(%21 : memref<!tpu.dma_semaphore, #tpu.memory_space<semaphore_mem>>) src(%arg6 : memref<256x1024xbf16, #tpu.memory_space<any>>) dst(%arg10 : memref<256x1024xbf16, #tpu.memory_space<vmem>>)
    %c0_11 = arith.constant 0 : index
    %c0_12 = arith.constant 0 : index
    %22 = vector.load %arg10[%c0_11, %c0_12] : memref<256x1024xbf16, #tpu.memory_space<vmem>>, vector<256x1024xbf16>
    %cst_13 = arith.constant 0.000000e+00 : f32
    %23 = vector.broadcast %cst_13 : f32 to vector<32x256xf32>
    %cst_14 = arith.constant 0.000000e+00 : f32
    %24 = vector.broadcast %cst_14 : f32 to vector<32x256xf32>
    %c0_i32_15 = arith.constant 0 : i32
    %c32_i32 = arith.constant 32 : i32
    %25 = arith.muli %c0_i32_15, %c32_i32 : i32
    %26 = tpu.assume_multiple %25, 32 : i32
    %27 = arith.index_cast %26 : i32 to index
    %c0_16 = arith.constant 0 : index
    %28 = vector.load %arg9[%27, %c0_16] : memref<256x1024xf32, #tpu.memory_space<vmem>>, vector<32x1024xf32>
    %29 = arith.truncf %23 : vector<32x256xf32> to vector<32x256xbf16>
    %cst_17 = arith.constant dense<0.000000e+00> : vector<32x1024xf32>
    %30 = tpu.matmul %29, %22, %cst_17 {dimension_numbers = #tpu.dot_dimension_numbers<[1], [0], [0], [1], [0, 0, 1, 1], [], []>} : vector<32x256xbf16>, vector<256x1024xbf16>, vector<32x1024xf32> -> vector<32x1024xf32>
    %31 = arith.addf %28, %30 : vector<32x1024xf32>
    %32 = vector.extract_strided_slice %31 {offsets = [0, 0], sizes = [32, 768], strides = [1, 1]} : vector<32x1024xf32> to vector<32x768xf32>
    %33 = arith.negf %32 : vector<32x768xf32>
    %34 = math.exp %33 : vector<32x768xf32>
    %cst_18 = arith.constant 1.000000e+00 : f32
    %35 = vector.broadcast %cst_18 : f32 to vector<32x768xf32>
    %36 = arith.addf %35, %34 : vector<32x768xf32>
    %37 = arith.divf %35, %36 : vector<32x768xf32>
    %38 = vector.extract_strided_slice %31 {offsets = [0, 768], sizes = [32, 256], strides = [1, 1]} : vector<32x1024xf32> to vector<32x256xf32>
    %39 = math.tanh %38 : vector<32x256xf32>
    %40 = vector.extract_strided_slice %37 {offsets = [0, 0], sizes = [32, 256], strides = [1, 1]} : vector<32x768xf32> to vector<32x256xf32>
    %41 = vector.extract_strided_slice %37 {offsets = [0, 256], sizes = [32, 256], strides = [1, 1]} : vector<32x768xf32> to vector<32x256xf32>
    %42 = vector.extract_strided_slice %37 {offsets = [0, 512], sizes = [32, 256], strides = [1, 1]} : vector<32x768xf32> to vector<32x256xf32>
    %43 = arith.mulf %41, %24 : vector<32x256xf32>
    %44 = arith.mulf %40, %39 : vector<32x256xf32>
    %45 = arith.addf %43, %44 : vector<32x256xf32>
    %46 = math.tanh %45 : vector<32x256xf32>
    %47 = arith.mulf %42, %46 : vector<32x256xf32>
    %c1_i32_19 = arith.constant 1 : i32
    %c32_i32_20 = arith.constant 32 : i32
    %48 = arith.muli %c1_i32_19, %c32_i32_20 : i32
    %49 = tpu.assume_multiple %48, 32 : i32
    %50 = arith.index_cast %49 : i32 to index
    %c0_21 = arith.constant 0 : index
    %51 = vector.load %arg9[%50, %c0_21] : memref<256x1024xf32, #tpu.memory_space<vmem>>, vector<32x1024xf32>
    %52 = arith.truncf %47 : vector<32x256xf32> to vector<32x256xbf16>
    %cst_22 = arith.constant dense<0.000000e+00> : vector<32x1024xf32>
    %53 = tpu.matmul %52, %22, %cst_22 {dimension_numbers = #tpu.dot_dimension_numbers<[1], [0], [0], [1], [0, 0, 1, 1], [], []>} : vector<32x256xbf16>, vector<256x1024xbf16>, vector<32x1024xf32> -> vector<32x1024xf32>
    %54 = arith.addf %51, %53 : vector<32x1024xf32>
    %55 = vector.extract_strided_slice %54 {offsets = [0, 0], sizes = [32, 768], strides = [1, 1]} : vector<32x1024xf32> to vector<32x768xf32>
    %56 = arith.negf %55 : vector<32x768xf32>
    %57 = math.exp %56 : vector<32x768xf32>
    %cst_23 = arith.constant 1.000000e+00 : f32
    %58 = vector.broadcast %cst_23 : f32 to vector<32x768xf32>
    %59 = arith.addf %58, %57 : vector<32x768xf32>
    %60 = arith.divf %58, %59 : vector<32x768xf32>
    %61 = vector.extract_strided_slice %54 {offsets = [0, 768], sizes = [32, 256], strides = [1, 1]} : vector<32x1024xf32> to vector<32x256xf32>
    %62 = math.tanh %61 : vector<32x256xf32>
    %63 = vector.extract_strided_slice %60 {offsets = [0, 0], sizes = [32, 256], strides = [1, 1]} : vector<32x768xf32> to vector<32x256xf32>
    %64 = vector.extract_strided_slice %60 {offsets = [0, 256], sizes = [32, 256], strides = [1, 1]} : vector<32x768xf32> to vector<32x256xf32>
    %65 = vector.extract_strided_slice %60 {offsets = [0, 512], sizes = [32, 256], strides = [1, 1]} : vector<32x768xf32> to vector<32x256xf32>
    %66 = arith.mulf %64, %45 : vector<32x256xf32>
    %67 = arith.mulf %63, %62 : vector<32x256xf32>
    %68 = arith.addf %66, %67 : vector<32x256xf32>
    %69 = math.tanh %68 : vector<32x256xf32>
    %70 = arith.mulf %65, %69 : vector<32x256xf32>
    %c2_i32 = arith.constant 2 : i32
    %c32_i32_24 = arith.constant 32 : i32
    %71 = arith.muli %c2_i32, %c32_i32_24 : i32
    %72 = tpu.assume_multiple %71, 32 : i32
    %73 = arith.index_cast %72 : i32 to index
    %c0_25 = arith.constant 0 : index
    %74 = vector.load %arg9[%73, %c0_25] : memref<256x1024xf32, #tpu.memory_space<vmem>>, vector<32x1024xf32>
    %75 = arith.truncf %70 : vector<32x256xf32> to vector<32x256xbf16>
    %cst_26 = arith.constant dense<0.000000e+00> : vector<32x1024xf32>
    %76 = tpu.matmul %75, %22, %cst_26 {dimension_numbers = #tpu.dot_dimension_numbers<[1], [0], [0], [1], [0, 0, 1, 1], [], []>} : vector<32x256xbf16>, vector<256x1024xbf16>, vector<32x1024xf32> -> vector<32x1024xf32>
    %77 = arith.addf %74, %76 : vector<32x1024xf32>
    %78 = vector.extract_strided_slice %77 {offsets = [0, 0], sizes = [32, 768], strides = [1, 1]} : vector<32x1024xf32> to vector<32x768xf32>
    %79 = arith.negf %78 : vector<32x768xf32>
    %80 = math.exp %79 : vector<32x768xf32>
    %cst_27 = arith.constant 1.000000e+00 : f32
    %81 = vector.broadcast %cst_27 : f32 to vector<32x768xf32>
    %82 = arith.addf %81, %80 : vector<32x768xf32>
    %83 = arith.divf %81, %82 : vector<32x768xf32>
    %84 = vector.extract_strided_slice %77 {offsets = [0, 768], sizes = [32, 256], strides = [1, 1]} : vector<32x1024xf32> to vector<32x256xf32>
    %85 = math.tanh %84 : vector<32x256xf32>
    %86 = vector.extract_strided_slice %83 {offsets = [0, 0], sizes = [32, 256], strides = [1, 1]} : vector<32x768xf32> to vector<32x256xf32>
    %87 = vector.extract_strided_slice %83 {offsets = [0, 256], sizes = [32, 256], strides = [1, 1]} : vector<32x768xf32> to vector<32x256xf32>
    %88 = vector.extract_strided_slice %83 {offsets = [0, 512], sizes = [32, 256], strides = [1, 1]} : vector<32x768xf32> to vector<32x256xf32>
    %89 = arith.mulf %87, %68 : vector<32x256xf32>
    %90 = arith.mulf %86, %85 : vector<32x256xf32>
    %91 = arith.addf %89, %90 : vector<32x256xf32>
    %92 = math.tanh %91 : vector<32x256xf32>
    %93 = arith.mulf %88, %92 : vector<32x256xf32>
    %c3_i32 = arith.constant 3 : i32
    %c32_i32_28 = arith.constant 32 : i32
    %94 = arith.muli %c3_i32, %c32_i32_28 : i32
    %95 = tpu.assume_multiple %94, 32 : i32
    %96 = arith.index_cast %95 : i32 to index
    %c0_29 = arith.constant 0 : index
    %97 = vector.load %arg9[%96, %c0_29] : memref<256x1024xf32, #tpu.memory_space<vmem>>, vector<32x1024xf32>
    %98 = arith.truncf %93 : vector<32x256xf32> to vector<32x256xbf16>
    %cst_30 = arith.constant dense<0.000000e+00> : vector<32x1024xf32>
    %99 = tpu.matmul %98, %22, %cst_30 {dimension_numbers = #tpu.dot_dimension_numbers<[1], [0], [0], [1], [0, 0, 1, 1], [], []>} : vector<32x256xbf16>, vector<256x1024xbf16>, vector<32x1024xf32> -> vector<32x1024xf32>
    %100 = arith.addf %97, %99 : vector<32x1024xf32>
    %101 = vector.extract_strided_slice %100 {offsets = [0, 0], sizes = [32, 768], strides = [1, 1]} : vector<32x1024xf32> to vector<32x768xf32>
    %102 = arith.negf %101 : vector<32x768xf32>
    %103 = math.exp %102 : vector<32x768xf32>
    %cst_31 = arith.constant 1.000000e+00 : f32
    %104 = vector.broadcast %cst_31 : f32 to vector<32x768xf32>
    %105 = arith.addf %104, %103 : vector<32x768xf32>
    %106 = arith.divf %104, %105 : vector<32x768xf32>
    %107 = vector.extract_strided_slice %100 {offsets = [0, 768], sizes = [32, 256], strides = [1, 1]} : vector<32x1024xf32> to vector<32x256xf32>
    %108 = math.tanh %107 : vector<32x256xf32>
    %109 = vector.extract_strided_slice %106 {offsets = [0, 0], sizes = [32, 256], strides = [1, 1]} : vector<32x768xf32> to vector<32x256xf32>
    %110 = vector.extract_strided_slice %106 {offsets = [0, 256], sizes = [32, 256], strides = [1, 1]} : vector<32x768xf32> to vector<32x256xf32>
    %111 = vector.extract_strided_slice %106 {offsets = [0, 512], sizes = [32, 256], strides = [1, 1]} : vector<32x768xf32> to vector<32x256xf32>
    %112 = arith.mulf %110, %91 : vector<32x256xf32>
    %113 = arith.mulf %109, %108 : vector<32x256xf32>
    %114 = arith.addf %112, %113 : vector<32x256xf32>
    %115 = math.tanh %114 : vector<32x256xf32>
    %116 = arith.mulf %111, %115 : vector<32x256xf32>
    %c4_i32 = arith.constant 4 : i32
    %c32_i32_32 = arith.constant 32 : i32
    %117 = arith.muli %c4_i32, %c32_i32_32 : i32
    %118 = tpu.assume_multiple %117, 32 : i32
    %119 = arith.index_cast %118 : i32 to index
    %c0_33 = arith.constant 0 : index
    %120 = vector.load %arg9[%119, %c0_33] : memref<256x1024xf32, #tpu.memory_space<vmem>>, vector<32x1024xf32>
    %121 = arith.truncf %116 : vector<32x256xf32> to vector<32x256xbf16>
    %cst_34 = arith.constant dense<0.000000e+00> : vector<32x1024xf32>
    %122 = tpu.matmul %121, %22, %cst_34 {dimension_numbers = #tpu.dot_dimension_numbers<[1], [0], [0], [1], [0, 0, 1, 1], [], []>} : vector<32x256xbf16>, vector<256x1024xbf16>, vector<32x1024xf32> -> vector<32x1024xf32>
    %123 = arith.addf %120, %122 : vector<32x1024xf32>
    %124 = vector.extract_strided_slice %123 {offsets = [0, 0], sizes = [32, 768], strides = [1, 1]} : vector<32x1024xf32> to vector<32x768xf32>
    %125 = arith.negf %124 : vector<32x768xf32>
    %126 = math.exp %125 : vector<32x768xf32>
    %cst_35 = arith.constant 1.000000e+00 : f32
    %127 = vector.broadcast %cst_35 : f32 to vector<32x768xf32>
    %128 = arith.addf %127, %126 : vector<32x768xf32>
    %129 = arith.divf %127, %128 : vector<32x768xf32>
    %130 = vector.extract_strided_slice %123 {offsets = [0, 768], sizes = [32, 256], strides = [1, 1]} : vector<32x1024xf32> to vector<32x256xf32>
    %131 = math.tanh %130 : vector<32x256xf32>
    %132 = vector.extract_strided_slice %129 {offsets = [0, 0], sizes = [32, 256], strides = [1, 1]} : vector<32x768xf32> to vector<32x256xf32>
    %133 = vector.extract_strided_slice %129 {offsets = [0, 256], sizes = [32, 256], strides = [1, 1]} : vector<32x768xf32> to vector<32x256xf32>
    %134 = vector.extract_strided_slice %129 {offsets = [0, 512], sizes = [32, 256], strides = [1, 1]} : vector<32x768xf32> to vector<32x256xf32>
    %135 = arith.mulf %133, %114 : vector<32x256xf32>
    %136 = arith.mulf %132, %131 : vector<32x256xf32>
    %137 = arith.addf %135, %136 : vector<32x256xf32>
    %138 = math.tanh %137 : vector<32x256xf32>
    %139 = arith.mulf %134, %138 : vector<32x256xf32>
    %c5_i32 = arith.constant 5 : i32
    %c32_i32_36 = arith.constant 32 : i32
    %140 = arith.muli %c5_i32, %c32_i32_36 : i32
    %141 = tpu.assume_multiple %140, 32 : i32
    %142 = arith.index_cast %141 : i32 to index
    %c0_37 = arith.constant 0 : index
    %143 = vector.load %arg9[%142, %c0_37] : memref<256x1024xf32, #tpu.memory_space<vmem>>, vector<32x1024xf32>
    %144 = arith.truncf %139 : vector<32x256xf32> to vector<32x256xbf16>
    %cst_38 = arith.constant dense<0.000000e+00> : vector<32x1024xf32>
    %145 = tpu.matmul %144, %22, %cst_38 {dimension_numbers = #tpu.dot_dimension_numbers<[1], [0], [0], [1], [0, 0, 1, 1], [], []>} : vector<32x256xbf16>, vector<256x1024xbf16>, vector<32x1024xf32> -> vector<32x1024xf32>
    %146 = arith.addf %143, %145 : vector<32x1024xf32>
    %147 = vector.extract_strided_slice %146 {offsets = [0, 0], sizes = [32, 768], strides = [1, 1]} : vector<32x1024xf32> to vector<32x768xf32>
    %148 = arith.negf %147 : vector<32x768xf32>
    %149 = math.exp %148 : vector<32x768xf32>
    %cst_39 = arith.constant 1.000000e+00 : f32
    %150 = vector.broadcast %cst_39 : f32 to vector<32x768xf32>
    %151 = arith.addf %150, %149 : vector<32x768xf32>
    %152 = arith.divf %150, %151 : vector<32x768xf32>
    %153 = vector.extract_strided_slice %146 {offsets = [0, 768], sizes = [32, 256], strides = [1, 1]} : vector<32x1024xf32> to vector<32x256xf32>
    %154 = math.tanh %153 : vector<32x256xf32>
    %155 = vector.extract_strided_slice %152 {offsets = [0, 0], sizes = [32, 256], strides = [1, 1]} : vector<32x768xf32> to vector<32x256xf32>
    %156 = vector.extract_strided_slice %152 {offsets = [0, 256], sizes = [32, 256], strides = [1, 1]} : vector<32x768xf32> to vector<32x256xf32>
    %157 = vector.extract_strided_slice %152 {offsets = [0, 512], sizes = [32, 256], strides = [1, 1]} : vector<32x768xf32> to vector<32x256xf32>
    %158 = arith.mulf %156, %137 : vector<32x256xf32>
    %159 = arith.mulf %155, %154 : vector<32x256xf32>
    %160 = arith.addf %158, %159 : vector<32x256xf32>
    %161 = math.tanh %160 : vector<32x256xf32>
    %162 = arith.mulf %157, %161 : vector<32x256xf32>
    %c6_i32 = arith.constant 6 : i32
    %c32_i32_40 = arith.constant 32 : i32
    %163 = arith.muli %c6_i32, %c32_i32_40 : i32
    %164 = tpu.assume_multiple %163, 32 : i32
    %165 = arith.index_cast %164 : i32 to index
    %c0_41 = arith.constant 0 : index
    %166 = vector.load %arg9[%165, %c0_41] : memref<256x1024xf32, #tpu.memory_space<vmem>>, vector<32x1024xf32>
    %167 = arith.truncf %162 : vector<32x256xf32> to vector<32x256xbf16>
    %cst_42 = arith.constant dense<0.000000e+00> : vector<32x1024xf32>
    %168 = tpu.matmul %167, %22, %cst_42 {dimension_numbers = #tpu.dot_dimension_numbers<[1], [0], [0], [1], [0, 0, 1, 1], [], []>} : vector<32x256xbf16>, vector<256x1024xbf16>, vector<32x1024xf32> -> vector<32x1024xf32>
    %169 = arith.addf %166, %168 : vector<32x1024xf32>
    %170 = vector.extract_strided_slice %169 {offsets = [0, 0], sizes = [32, 768], strides = [1, 1]} : vector<32x1024xf32> to vector<32x768xf32>
    %171 = arith.negf %170 : vector<32x768xf32>
    %172 = math.exp %171 : vector<32x768xf32>
    %cst_43 = arith.constant 1.000000e+00 : f32
    %173 = vector.broadcast %cst_43 : f32 to vector<32x768xf32>
    %174 = arith.addf %173, %172 : vector<32x768xf32>
    %175 = arith.divf %173, %174 : vector<32x768xf32>
    %176 = vector.extract_strided_slice %169 {offsets = [0, 768], sizes = [32, 256], strides = [1, 1]} : vector<32x1024xf32> to vector<32x256xf32>
    %177 = math.tanh %176 : vector<32x256xf32>
    %178 = vector.extract_strided_slice %175 {offsets = [0, 0], sizes = [32, 256], strides = [1, 1]} : vector<32x768xf32> to vector<32x256xf32>
    %179 = vector.extract_strided_slice %175 {offsets = [0, 256], sizes = [32, 256], strides = [1, 1]} : vector<32x768xf32> to vector<32x256xf32>
    %180 = vector.extract_strided_slice %175 {offsets = [0, 512], sizes = [32, 256], strides = [1, 1]} : vector<32x768xf32> to vector<32x256xf32>
    %181 = arith.mulf %179, %160 : vector<32x256xf32>
    %182 = arith.mulf %178, %177 : vector<32x256xf32>
    %183 = arith.addf %181, %182 : vector<32x256xf32>
    %184 = math.tanh %183 : vector<32x256xf32>
    %185 = arith.mulf %180, %184 : vector<32x256xf32>
    %c7_i32 = arith.constant 7 : i32
    %c32_i32_44 = arith.constant 32 : i32
    %186 = arith.muli %c7_i32, %c32_i32_44 : i32
    %187 = tpu.assume_multiple %186, 32 : i32
    %188 = arith.index_cast %187 : i32 to index
    %c0_45 = arith.constant 0 : index
    %189 = vector.load %arg9[%188, %c0_45] : memref<256x1024xf32, #tpu.memory_space<vmem>>, vector<32x1024xf32>
    %190 = arith.truncf %185 : vector<32x256xf32> to vector<32x256xbf16>
    %cst_46 = arith.constant dense<0.000000e+00> : vector<32x1024xf32>
    %191 = tpu.matmul %190, %22, %cst_46 {dimension_numbers = #tpu.dot_dimension_numbers<[1], [0], [0], [1], [0, 0, 1, 1], [], []>} : vector<32x256xbf16>, vector<256x1024xbf16>, vector<32x1024xf32> -> vector<32x1024xf32>
    %192 = arith.addf %189, %191 : vector<32x1024xf32>
    %193 = vector.extract_strided_slice %192 {offsets = [0, 0], sizes = [32, 768], strides = [1, 1]} : vector<32x1024xf32> to vector<32x768xf32>
    %194 = arith.negf %193 : vector<32x768xf32>
    %195 = math.exp %194 : vector<32x768xf32>
    %cst_47 = arith.constant 1.000000e+00 : f32
    %196 = vector.broadcast %cst_47 : f32 to vector<32x768xf32>
    %197 = arith.addf %196, %195 : vector<32x768xf32>
    %198 = arith.divf %196, %197 : vector<32x768xf32>
    %199 = vector.extract_strided_slice %192 {offsets = [0, 768], sizes = [32, 256], strides = [1, 1]} : vector<32x1024xf32> to vector<32x256xf32>
    %200 = math.tanh %199 : vector<32x256xf32>
    %201 = vector.extract_strided_slice %198 {offsets = [0, 0], sizes = [32, 256], strides = [1, 1]} : vector<32x768xf32> to vector<32x256xf32>
    %202 = vector.extract_strided_slice %198 {offsets = [0, 256], sizes = [32, 256], strides = [1, 1]} : vector<32x768xf32> to vector<32x256xf32>
    %203 = vector.extract_strided_slice %198 {offsets = [0, 512], sizes = [32, 256], strides = [1, 1]} : vector<32x768xf32> to vector<32x256xf32>
    %204 = arith.mulf %202, %183 : vector<32x256xf32>
    %205 = arith.mulf %201, %200 : vector<32x256xf32>
    %206 = arith.addf %204, %205 : vector<32x256xf32>
    %207 = math.tanh %206 : vector<32x256xf32>
    %208 = arith.mulf %203, %207 : vector<32x256xf32>
    %c8_i32 = arith.constant 8 : i32
    %c1_i32_48 = arith.constant 1 : i32
    %209 = tpu.memref_slice %arg12[%c1_i32_48] : memref<2x!tpu.dma_semaphore, #tpu.memory_space<semaphore_mem>> -> memref<1x!tpu.dma_semaphore, #tpu.memory_space<semaphore_mem>>
    %210 = tpu.memref_squeeze %209 : memref<1x!tpu.dma_semaphore, #tpu.memory_space<semaphore_mem>> -> memref<!tpu.dma_semaphore, #tpu.memory_space<semaphore_mem>>
    tpu.wait_dma2 semaphore(%210 : memref<!tpu.dma_semaphore, #tpu.memory_space<semaphore_mem>>) src(%arg7 : memref<256x256xbf16, #tpu.memory_space<any>>) dst(%arg11 : memref<256x256xbf16, #tpu.memory_space<vmem>>)
    %211 = arith.truncf %208 : vector<32x256xf32> to vector<32x256xbf16>
    %c0_49 = arith.constant 0 : index
    %c0_50 = arith.constant 0 : index
    %212 = vector.load %arg11[%c0_49, %c0_50] : memref<256x256xbf16, #tpu.memory_space<vmem>>, vector<256x256xbf16>
    %cst_51 = arith.constant dense<0.000000e+00> : vector<32x256xf32>
    %213 = tpu.matmul %211, %212, %cst_51 {dimension_numbers = #tpu.dot_dimension_numbers<[1], [0], [0], [1], [0, 0, 1, 1], [], []>} : vector<32x256xbf16>, vector<256x256xbf16>, vector<32x256xf32> -> vector<32x256xf32>
    %c0_52 = arith.constant 0 : index
    %c0_53 = arith.constant 0 : index
    %214 = vector.load %arg5[%c0_52, %c0_53] : memref<1x256xf32, #tpu.memory_space<vmem>>, vector<1x256xf32>
    %215 = vector.broadcast %214 : vector<1x256xf32> to vector<32x256xf32>
    %216 = arith.addf %213, %215 : vector<32x256xf32>
    %c0_54 = arith.constant 0 : index
    %c0_55 = arith.constant 0 : index
    %217 = vector.load %arg8[%c0_54, %c0_55] : memref<32x256xf32, #tpu.memory_space<vmem>>, vector<32x256xf32>
    tpu.vector_store %arg8[%c0_54, %c0_55], %216 {strides = array<i32>} : memref<32x256xf32, #tpu.memory_space<vmem>>, vector<32x256xf32>,
    return
  }
  func.func @transform_0(%arg0: i32) -> (i32, i32) {
    %c0_i32 = arith.constant 0 : i32
    %c0_i32_0 = arith.constant 0 : i32
    %c0_i32_1 = arith.constant 0 : i32
    return %c0_i32, %c0_i32_0 : i32, i32
  }
  func.func @transform_1(%arg0: i32) -> (i32, i32) {
    %c0_i32 = arith.constant 0 : i32
    %c0_i32_0 = arith.constant 0 : i32
    %c0_i32_1 = arith.constant 0 : i32
    return %c0_i32, %c0_i32_0 : i32, i32
  }
  func.func @transform_2(%arg0: i32) -> (i32, i32) {
    %c0_i32 = arith.constant 0 : i32
    %c0_i32_0 = arith.constant 0 : i32
    %c0_i32_1 = arith.constant 0 : i32
    return %c0_i32, %c0_i32_0 : i32, i32
  }
  func.func @transform_3(%arg0: i32) -> (i32, i32) {
    %c0_i32 = arith.constant 0 : i32
    %c0_i32_0 = arith.constant 0 : i32
    %c0_i32_1 = arith.constant 0 : i32
    return %c0_i32, %c0_i32_0 : i32, i32
  }
  func.func @transform_4(%arg0: i32) -> (i32, i32) {
    %c0_i32 = arith.constant 0 : i32
    %c0_i32_0 = arith.constant 0 : i32
    %c0_i32_1 = arith.constant 0 : i32
    return %c0_i32, %c0_i32_0 : i32, i32
  }
  func.func @transform_7(%arg0: i32) -> (i32, i32) {
    %c0_i32 = arith.constant 0 : i32
    %c0_i32_0 = arith.constant 0 : i32
    %c0_i32_1 = arith.constant 0 : i32
    return %c0_i32, %c0_i32_0 : i32, i32
  }
}

</mosaic_0001>

<llo_original>
// kernel: lstm_language_model.1
$region0: #{lstm_language_model.1}
  #allocation0 [shape = 'u32[]', space=smem, size = 0x4, offset = 0x4, fixed_abs, tag = 'smem constant byte address 0x4 - core index']
  #allocation1 [shape = 'u32[72,128]{1,0:T(1,128)}', space=vmem, size = 0x9000, scoped, tag = 'internal scratch']
  #allocation2 [shape = 'f32[256,1024]{1,0:T(8,128)}', space=vmem, size = 0x100000, scoped, tag = 'scratch operand']
  #allocation3 [shape = 'bf16[256,1024]{1,0:T(8,128)(2,1)}', space=vmem, size = 0x80000, scoped, tag = 'scratch operand']
  #allocation4 [shape = 'bf16[256,256]{1,0:T(8,128)(2,1)}', space=vmem, size = 0x20000, scoped, tag = 'scratch operand']
  #allocation5 [shape = 's32[2]{0}', space=sflag, size = 0x8, scoped, tag = 'scratch operand']
  #allocation8 [shape = 's32[]', space=sflag, size = 0x4, offset = 0, fixed_abs, tag = 'sflag constant byte address 0x0 - dummy sync flag']
  #allocation9 [shape = 's32[]', space=sflag, size = 0x4, offset = 0, fixed_abs, tag = 'sflag constant byte address 0x0 - dummy sync flag']
  %s0 = inlined_call_operand.vmem [shape: s32[256,1], index: 0, kind: input, shape index: {}]
  %s1 = inlined_call_operand.vmem [shape: bf16[256,128], index: 1, kind: input, shape index: {}]
  %s2 = inlined_call_operand.vmem [shape: bf16[128,1024], index: 2, kind: input, shape index: {}]
  %s3 = inlined_call_operand.vmem [shape: f32[1,1024], index: 3, kind: input, shape index: {}]
  %s4 = inlined_call_operand.vmem [shape: f32[1,256], index: 4, kind: input, shape index: {}]
  %s5 = inlined_call_operand.vmem [shape: bf16[256,1024], index: 5, kind: input, shape index: {}]
  %s6 = inlined_call_operand.vmem [shape: bf16[256,256], index: 6, kind: input, shape index: {}]
  %s7 = inlined_call_operand.hbm [shape: f32[32,256], index: 7, kind: output, shape index: {}]
  %s8 = sld [smem:[#allocation0]]
  $region68: #{lstm_language_model.1} parent=0
    _
  %s10 = ssub.s32 1, %s8
  %s11 = scalar_select 0, %s10, %s8
  $region1: #{lstm_language_model.1} parent=0
    #allocation6 [shape = 'u8[32768]{0}', space=vmem, size = 0x8000, scoped, tag = 'output window, operand 0, single buffered']
    #allocation7 [shape = 's32[1]{0}', space=sflag, size = 0x4, scoped, tag = 'scoped memory for lstm_language_model.1']
    %12 = vsyncpa [#allocation7], 0
    // Predicated region
    $region2: #{lstm_language_model.1} parent=1 // pred_check
      _
    $region3: #{lstm_language_model.1} parent=1 // pred_check_branch
      %14 = sbr.rel (0) target = $region5
    $region4: #{lstm_language_model.1} parent=1 // pred_region
      _
    $region5: #{lstm_language_model.1} parent=1 // pred_fallthru
      _
    // Predicated region
    $region6: #{lstm_language_model.1} parent=1 // pred_check
      _
    $region7: #{lstm_language_model.1} parent=1 // pred_check_branch
      %16 = sbr.rel (0) target = $region9
    $region8: #{lstm_language_model.1} parent=1 // pred_region
      _
    $region9: #{lstm_language_model.1} parent=1 // pred_fallthru
      _
    // Predicated region
    $region10: #{lstm_language_model.1} parent=1 // pred_check
      _
    $region11: #{lstm_language_model.1} parent=1 // pred_check_branch
      %18 = sbr.rel (0) target = $region13
    $region12: #{lstm_language_model.1} parent=1 // pred_region
      _
    $region13: #{lstm_language_model.1} parent=1 // pred_fallthru
      _
    // Predicated region
    $region14: #{lstm_language_model.1} parent=1 // pred_check
      _
    $region15: #{lstm_language_model.1} parent=1 // pred_check_branch
      %20 = sbr.rel (0) target = $region17
    $region16: #{lstm_language_model.1} parent=1 // pred_region
      _
    $region17: #{lstm_language_model.1} parent=1 // pred_fallthru
      _
    // Predicated region
    $region18: #{lstm_language_model.1} parent=1 // pred_check
      _
    $region19: #{lstm_language_model.1} parent=1 // pred_check_branch
      %22 = sbr.rel (0) target = $region21
    $region20: #{lstm_language_model.1} parent=1 // pred_region
      _
    $region21: #{lstm_language_model.1} parent=1 // pred_fallthru
      _
    // Predicated region
    $region22: #{lstm_language_model.1} parent=1 // pred_check
      _
    $region23: #{lstm_language_model.1} parent=1 // pred_check_branch
      %25 = sbr.rel (0) target = $region25
    $region24: #{lstm_language_model.1} parent=1 // pred_region
      loop: start=0, step=1, limit=1
      $region26: #{lstm_language_model.1} parent=24 // loop_pre_header
        _
      $region27: #{lstm_language_model.1} parent=24 // loop_header
        %s27 = sphi 0, %s31
        %p28 = scmp.ge.s32.totalorder %s27, 1
        %s32 = sphi %s5, %s5
        %s33 = sphi [#allocation3], [#allocation3]
      $region28: #{lstm_language_model.1} parent=24 // loop_header_branch
        %30 = sbr.rel (%p28) target = $region32
      $region29: #{lstm_language_model.1} parent=24 // loop_body
        %v34 = vld [vmem:[%s32] sm:$0xff]
        %35 = vst [vmem:[%s33] sm:$0xff] %v34
        %v36 = vld [vmem:[%s32 + $0x8] sm:$0xff]
        %37 = vst [vmem:[%s33 + $0x8] sm:$0xff] %v36
        %v38 = vld [vmem:[%s32 + $0x10] sm:$0xff]
        %39 = vst [vmem:[%s33 + $0x10] sm:$0xff] %v38
        %v40 = vld [vmem:[%s32 + $0x18] sm:$0xff]
        %41 = vst [vmem:[%s33 + $0x18] sm:$0xff] %v40
        %v42 = vld [vmem:[%s32 + $0x20] sm:$0xff]
        %43 = vst [vmem:[%s33 + $0x20] sm:$0xff] %v42
        %v44 = vld [vmem:[%s32 + $0x28] sm:$0xff]
        %45 = vst [vmem:[%s33 + $0x28] sm:$0xff] %v44
        %v46 = vld [vmem:[%s32 + $0x30] sm:$0xff]
        %47 = vst [vmem:[%s33 + $0x30] sm:$0xff] %v46
        %v48 = vld [vmem:[%s32 + $0x38] sm:$0xff]
        %49 = vst [vmem:[%s33 + $0x38] sm:$0xff] %v48
        %v50 = vld [vmem:[%s32 + $0x40] sm:$0xff]
        %51 = vst [vmem:[%s33 + $0x40] sm:$0xff] %v50
        %v52 = vld [vmem:[%s32 + $0x48] sm:$0xff]
        %53 = vst [vmem:[%s33 + $0x48] sm:$0xff] %v52
        %v54 = vld [vmem:[%s32 + $0x50] sm:$0xff]
        %55 = vst [vmem:[%s33 + $0x50] sm:$0xff] %v54
        %v56 = vld [vmem:[%s32 + $0x58] sm:$0xff]
        %57 = vst [vmem:[%s33 + $0x58] sm:$0xff] %v56
        %v58 = vld [vmem:[%s32 + $0x60] sm:$0xff]
        %59 = vst [vmem:[%s33 + $0x60] sm:$0xff] %v58
        %v60 = vld [vmem:[%s32 + $0x68] sm:$0xff]
        %61 = vst [vmem:[%s33 + $0x68] sm:$0xff] %v60
        %v62 = vld [vmem:[%s32 + $0x70] sm:$0xff]
        %63 = vst [vmem:[%s33 + $0x70] sm:$0xff] %v62
        %v64 = vld [vmem:[%s32 + $0x78] sm:$0xff]
        %65 = vst [vmem:[%s33 + $0x78] sm:$0xff] %v64
        %v66 = vld [vmem:[%s32 + $0x80] sm:$0xff]
        %67 = vst [vmem:[%s33 + $0x80] sm:$0xff] %v66
        %v68 = vld [vmem:[%s32 + $0x88] sm:$0xff]
        %69 = vst [vmem:[%s33 + $0x88] sm:$0xff] %v68
        %v70 = vld [vmem:[%s32 + $0x90] sm:$0xff]
        %71 = vst [vmem:[%s33 + $0x90] sm:$0xff] %v70
        %v72 = vld [vmem:[%s32 + $0x98] sm:$0xff]
        %73 = vst [vmem:[%s33 + $0x98] sm:$0xff] %v72
        %v74 = vld [vmem:[%s32 + $0xa0] sm:$0xff]
        %75 = vst [vmem:[%s33 + $0xa0] sm:$0xff] %v74
        %v76 = vld [vmem:[%s32 + $0xa8] sm:$0xff]
        %77 = vst [vmem:[%s33 + $0xa8] sm:$0xff] %v76
        %v78 = vld [vmem:[%s32 + $0xb0] sm:$0xff]
        %79 = vst [vmem:[%s33 + $0xb0] sm:$0xff] %v78
        %v80 = vld [vmem:[%s32 + $0xb8] sm:$0xff]
        %81 = vst [vmem:[%s33 + $0xb8] sm:$0xff] %v80
        %v82 = vld [vmem:[%s32 + $0xc0] sm:$0xff]
        %83 = vst [vmem:[%s33 + $0xc0] sm:$0xff] %v82
        %v84 = vld [vmem:[%s32 + $0xc8] sm:$0xff]
        %85 = vst [vmem:[%s33 + $0xc8] sm:$0xff] %v84
        %v86 = vld [vmem:[%s32 + $0xd0] sm:$0xff]
        %87 = vst [vmem:[%s33 + $0xd0] sm:$0xff] %v86
        %v88 = vld [vmem:[%s32 + $0xd8] sm:$0xff]
        %89 = vst [vmem:[%s33 + $0xd8] sm:$0xff] %v88
        %v90 = vld [vmem:[%s32 + $0xe0] sm:$0xff]
        %91 = vst [vmem:[%s33 + $0xe0] sm:$0xff] %v90
        %v92 = vld [vmem:[%s32 + $0xe8] sm:$0xff]
        %93 = vst [vmem:[%s33 + $0xe8] sm:$0xff] %v92
        %v94 = vld [vmem:[%s32 + $0xf0] sm:$0xff]
        %95 = vst [vmem:[%s33 + $0xf0] sm:$0xff] %v94
        %v96 = vld [vmem:[%s32 + $0xf8] sm:$0xff]
        %97 = vst [vmem:[%s33 + $0xf8] sm:$0xff] %v96
        %v98 = vld [vmem:[%s32 + $0x100] sm:$0xff]
        %99 = vst [vmem:[%s33 + $0x100] sm:$0xff] %v98
        %v100 = vld [vmem:[%s32 + $0x108] sm:$0xff]
        %101 = vst [vmem:[%s33 + $0x108] sm:$0xff] %v100
        %v102 = vld [vmem:[%s32 + $0x110] sm:$0xff]
        %103 = vst [vmem:[%s33 + $0x110] sm:$0xff] %v102
        %v104 = vld [vmem:[%s32 + $0x118] sm:$0xff]
        %105 = vst [vmem:[%s33 + $0x118] sm:$0xff] %v104
        %v106 = vld [vmem:[%s32 + $0x120] sm:$0xff]
        %107 = vst [vmem:[%s33 + $0x120] sm:$0xff] %v106
        %v108 = vld [vmem:[%s32 + $0x128] sm:$0xff]
        %109 = vst [vmem:[%s33 + $0x128] sm:$0xff] %v108
        %v110 = vld [vmem:[%s32 + $0x130] sm:$0xff]
        %111 = vst [vmem:[%s33 + $0x130] sm:$0xff] %v110
        %v112 = vld [vmem:[%s32 + $0x138] sm:$0xff]
        %113 = vst [vmem:[%s33 + $0x138] sm:$0xff] %v112
        %v114 = vld [vmem:[%s32 + $0x140] sm:$0xff]
        %115 = vst [vmem:[%s33 + $0x140] sm:$0xff] %v114
        %v116 = vld [vmem:[%s32 + $0x148] sm:$0xff]
        %117 = vst [vmem:[%s33 + $0x148] sm:$0xff] %v116
        %v118 = vld [vmem:[%s32 + $0x150] sm:$0xff]
        %119 = vst [vmem:[%s33 + $0x150] sm:$0xff] %v118
        %v120 = vld [vmem:[%s32 + $0x158] sm:$0xff]
        %121 = vst [vmem:[%s33 + $0x158] sm:$0xff] %v120
        %v122 = vld [vmem:[%s32 + $0x160] sm:$0xff]
        %123 = vst [vmem:[%s33 + $0x160] sm:$0xff] %v122
        %v124 = vld [vmem:[%s32 + $0x168] sm:$0xff]
        %125 = vst [vmem:[%s33 + $0x168] sm:$0xff] %v124
        %v126 = vld [vmem:[%s32 + $0x170] sm:$0xff]
        %127 = vst [vmem:[%s33 + $0x170] sm:$0xff] %v126
        %v128 = vld [vmem:[%s32 + $0x178] sm:$0xff]
        %129 = vst [vmem:[%s33 + $0x178] sm:$0xff] %v128
        %v130 = vld [vmem:[%s32 + $0x180] sm:$0xff]
        %131 = vst [vmem:[%s33 + $0x180] sm:$0xff] %v130
        %v132 = vld [vmem:[%s32 + $0x188] sm:$0xff]
        %133 = vst [vmem:[%s33 + $0x188] sm:$0xff] %v132
        %v134 = vld [vmem:[%s32 + $0x190] sm:$0xff]
        %135 = vst [vmem:[%s33 + $0x190] sm:$0xff] %v134
        %v136 = vld [vmem:[%s32 + $0x198] sm:$0xff]
        %137 = vst [vmem:[%s33 + $0x198] sm:$0xff] %v136
        %v138 = vld [vmem:[%s32 + $0x1a0] sm:$0xff]
        %139 = vst [vmem:[%s33 + $0x1a0] sm:$0xff] %v138
        %v140 = vld [vmem:[%s32 + $0x1a8] sm:$0xff]
        %141 = vst [vmem:[%s33 + $0x1a8] sm:$0xff] %v140
        %v142 = vld [vmem:[%s32 + $0x1b0] sm:$0xff]
        %143 = vst [vmem:[%s33 + $0x1b0] sm:$0xff] %v142
        %v144 = vld [vmem:[%s32 + $0x1b8] sm:$0xff]
        %145 = vst [vmem:[%s33 + $0x1b8] sm:$0xff] %v144
        %v146 = vld [vmem:[%s32 + $0x1c0] sm:$0xff]
        %147 = vst [vmem:[%s33 + $0x1c0] sm:$0xff] %v146
        %v148 = vld [vmem:[%s32 + $0x1c8] sm:$0xff]
        %149 = vst [vmem:[%s33 + $0x1c8] sm:$0xff] %v148
        %v150 = vld [vmem:[%s32 + $0x1d0] sm:$0xff]
        %151 = vst [vmem:[%s33 + $0x1d0] sm:$0xff] %v150
        %v152 = vld [vmem:[%s32 + $0x1d8] sm:$0xff]
        %153 = vst [vmem:[%s33 + $0x1d8] sm:$0xff] %v152
        %v154 = vld [vmem:[%s32 + $0x1e0] sm:$0xff]
        %155 = vst [vmem:[%s33 + $0x1e0] sm:$0xff] %v154
        %v156 = vld [vmem:[%s32 + $0x1e8] sm:$0xff]
        %157 = vst [vmem:[%s33 + $0x1e8] sm:$0xff] %v156
        %v158 = vld [vmem:[%s32 + $0x1f0] sm:$0xff]
        %159 = vst [vmem:[%s33 + $0x1f0] sm:$0xff] %v158
        %v160 = vld [vmem:[%s32 + $0x1f8] sm:$0xff]
        %161 = vst [vmem:[%s33 + $0x1f8] sm:$0xff] %v160
        %v162 = vld [vmem:[%s32 + $0x200] sm:$0xff]
        %163 = vst [vmem:[%s33 + $0x200] sm:$0xff] %v162
        %v164 = vld [vmem:[%s32 + $0x208] sm:$0xff]
        %165 = vst [vmem:[%s33 + $0x208] sm:$0xff] %v164
        %v166 = vld [vmem:[%s32 + $0x210] sm:$0xff]
        %167 = vst [vmem:[%s33 + $0x210] sm:$0xff] %v166
        %v168 = vld [vmem:[%s32 + $0x218] sm:$0xff]
        %169 = vst [vmem:[%s33 + $0x218] sm:$0xff] %v168
        %v170 = vld [vmem:[%s32 + $0x220] sm:$0xff]
        %171 = vst [vmem:[%s33 + $0x220] sm:$0xff] %v170
        %v172 = vld [vmem:[%s32 + $0x228] sm:$0xff]
        %173 = vst [vmem:[%s33 + $0x228] sm:$0xff] %v172
        %v174 = vld [vmem:[%s32 + $0x230] sm:$0xff]
        %175 = vst [vmem:[%s33 + $0x230] sm:$0xff] %v174
        %v176 = vld [vmem:[%s32 + $0x238] sm:$0xff]
        %177 = vst [vmem:[%s33 + $0x238] sm:$0xff] %v176
        %v178 = vld [vmem:[%s32 + $0x240] sm:$0xff]
        %179 = vst [vmem:[%s33 + $0x240] sm:$0xff] %v178
        %v180 = vld [vmem:[%s32 + $0x248] sm:$0xff]
        %181 = vst [vmem:[%s33 + $0x248] sm:$0xff] %v180
        %v182 = vld [vmem:[%s32 + $0x250] sm:$0xff]
        %183 = vst [vmem:[%s33 + $0x250] sm:$0xff] %v182
        %v184 = vld [vmem:[%s32 + $0x258] sm:$0xff]
        %185 = vst [vmem:[%s33 + $0x258] sm:$0xff] %v184
        %v186 = vld [vmem:[%s32 + $0x260] sm:$0xff]
        %187 = vst [vmem:[%s33 + $0x260] sm:$0xff] %v186
        %v188 = vld [vmem:[%s32 + $0x268] sm:$0xff]
        %189 = vst [vmem:[%s33 + $0x268] sm:$0xff] %v188
        %v190 = vld [vmem:[%s32 + $0x270] sm:$0xff]
        %191 = vst [vmem:[%s33 + $0x270] sm:$0xff] %v190
        %v192 = vld [vmem:[%s32 + $0x278] sm:$0xff]
        %193 = vst [vmem:[%s33 + $0x278] sm:$0xff] %v192
        %v194 = vld [vmem:[%s32 + $0x280] sm:$0xff]
        %195 = vst [vmem:[%s33 + $0x280] sm:$0xff] %v194
        %v196 = vld [vmem:[%s32 + $0x288] sm:$0xff]
        %197 = vst [vmem:[%s33 + $0x288] sm:$0xff] %v196
        %v198 = vld [vmem:[%s32 + $0x290] sm:$0xff]
        %199 = vst [vmem:[%s33 + $0x290] sm:$0xff] %v198
        %v200 = vld [vmem:[%s32 + $0x298] sm:$0xff]
        %201 = vst [vmem:[%s33 + $0x298] sm:$0xff] %v200
        %v202 = vld [vmem:[%s32 + $0x2a0] sm:$0xff]
        %203 = vst [vmem:[%s33 + $0x2a0] sm:$0xff] %v202
        %v204 = vld [vmem:[%s32 + $0x2a8] sm:$0xff]
        %205 = vst [vmem:[%s33 + $0x2a8] sm:$0xff] %v204
        %v206 = vld [vmem:[%s32 + $0x2b0] sm:$0xff]
        %207 = vst [vmem:[%s33 + $0x2b0] sm:$0xff] %v206
        %v208 = vld [vmem:[%s32 + $0x2b8] sm:$0xff]
        %209 = vst [vmem:[%s33 + $0x2b8] sm:$0xff] %v208
        %v210 = vld [vmem:[%s32 + $0x2c0] sm:$0xff]
        %211 = vst [vmem:[%s33 + $0x2c0] sm:$0xff] %v210
        %v212 = vld [vmem:[%s32 + $0x2c8] sm:$0xff]
        %213 = vst [vmem:[%s33 + $0x2c8] sm:$0xff] %v212
        %v214 = vld [vmem:[%s32 + $0x2d0] sm:$0xff]
        %215 = vst [vmem:[%s33 + $0x2d0] sm:$0xff] %v214
        %v216 = vld [vmem:[%s32 + $0x2d8] sm:$0xff]
        %217 = vst [vmem:[%s33 + $0x2d8] sm:$0xff] %v216
        %v218 = vld [vmem:[%s32 + $0x2e0] sm:$0xff]
        %219 = vst [vmem:[%s33 + $0x2e0] sm:$0xff] %v218
        %v220 = vld [vmem:[%s32 + $0x2e8] sm:$0xff]
        %221 = vst [vmem:[%s33 + $0x2e8] sm:$0xff] %v220
        %v222 = vld [vmem:[%s32 + $0x2f0] sm:$0xff]
        %223 = vst [vmem:[%s33 + $0x2f0] sm:$0xff] %v222
        %v224 = vld [vmem:[%s32 + $0x2f8] sm:$0xff]
        %225 = vst [vmem:[%s33 + $0x2f8] sm:$0xff] %v224
        %v226 = vld [vmem:[%s32 + $0x300] sm:$0xff]
        %227 = vst [vmem:[%s33 + $0x300] sm:$0xff] %v226
        %v228 = vld [vmem:[%s32 + $0x308] sm:$0xff]
        %229 = vst [vmem:[%s33 + $0x308] sm:$0xff] %v228
        %v230 = vld [vmem:[%s32 + $0x310] sm:$0xff]
        %231 = vst [vmem:[%s33 + $0x310] sm:$0xff] %v230
        %v232 = vld [vmem:[%s32 + $0x318] sm:$0xff]
        %233 = vst [vmem:[%s33 + $0x318] sm:$0xff] %v232
        %v234 = vld [vmem:[%s32 + $0x320] sm:$0xff]
        %235 = vst [vmem:[%s33 + $0x320] sm:$0xff] %v234
        %v236 = vld [vmem:[%s32 + $0x328] sm:$0xff]
        %237 = vst [vmem:[%s33 + $0x328] sm:$0xff] %v236
        %v238 = vld [vmem:[%s32 + $0x330] sm:$0xff]
        %239 = vst [vmem:[%s33 + $0x330] sm:$0xff] %v238
        %v240 = vld [vmem:[%s32 + $0x338] sm:$0xff]
        %241 = vst [vmem:[%s33 + $0x338] sm:$0xff] %v240
        %v242 = vld [vmem:[%s32 + $0x340] sm:$0xff]
        %243 = vst [vmem:[%s33 + $0x340] sm:$0xff] %v242
        %v244 = vld [vmem:[%s32 + $0x348] sm:$0xff]
        %245 = vst [vmem:[%s33 + $0x348] sm:$0xff] %v244
        %v246 = vld [vmem:[%s32 + $0x350] sm:$0xff]
        %247 = vst [vmem:[%s33 + $0x350] sm:$0xff] %v246
        %v248 = vld [vmem:[%s32 + $0x358] sm:$0xff]
        %249 = vst [vmem:[%s33 + $0x358] sm:$0xff] %v248
        %v250 = vld [vmem:[%s32 + $0x360] sm:$0xff]
        %251 = vst [vmem:[%s33 + $0x360] sm:$0xff] %v250
        %v252 = vld [vmem:[%s32 + $0x368] sm:$0xff]
        %253 = vst [vmem:[%s33 + $0x368] sm:$0xff] %v252
        %v254 = vld [vmem:[%s32 + $0x370] sm:$0xff]
        %255 = vst [vmem:[%s33 + $0x370] sm:$0xff] %v254
        %v256 = vld [vmem:[%s32 + $0x378] sm:$0xff]
        %257 = vst [vmem:[%s33 + $0x378] sm:$0xff] %v256
        %v258 = vld [vmem:[%s32 + $0x380] sm:$0xff]
        %259 = vst [vmem:[%s33 + $0x380] sm:$0xff] %v258
        %v260 = vld [vmem:[%s32 + $0x388] sm:$0xff]
        %261 = vst [vmem:[%s33 + $0x388] sm:$0xff] %v260
        %v262 = vld [vmem:[%s32 + $0x390] sm:$0xff]
        %263 = vst [vmem:[%s33 + $0x390] sm:$0xff] %v262
        %v264 = vld [vmem:[%s32 + $0x398] sm:$0xff]
        %265 = vst [vmem:[%s33 + $0x398] sm:$0xff] %v264
        %v266 = vld [vmem:[%s32 + $0x3a0] sm:$0xff]
        %267 = vst [vmem:[%s33 + $0x3a0] sm:$0xff] %v266
        %v268 = vld [vmem:[%s32 + $0x3a8] sm:$0xff]
        %269 = vst [vmem:[%s33 + $0x3a8] sm:$0xff] %v268
        %v270 = vld [vmem:[%s32 + $0x3b0] sm:$0xff]
        %271 = vst [vmem:[%s33 + $0x3b0] sm:$0xff] %v270
        %v272 = vld [vmem:[%s32 + $0x3b8] sm:$0xff]
        %273 = vst [vmem:[%s33 + $0x3b8] sm:$0xff] %v272
        %v274 = vld [vmem:[%s32 + $0x3c0] sm:$0xff]
        %275 = vst [vmem:[%s33 + $0x3c0] sm:$0xff] %v274
        %v276 = vld [vmem:[%s32 + $0x3c8] sm:$0xff]
        %277 = vst [vmem:[%s33 + $0x3c8] sm:$0xff] %v276
        %v278 = vld [vmem:[%s32 + $0x3d0] sm:$0xff]
        %279 = vst [vmem:[%s33 + $0x3d0] sm:$0xff] %v278
        %v280 = vld [vmem:[%s32 + $0x3d8] sm:$0xff]
        %281 = vst [vmem:[%s33 + $0x3d8] sm:$0xff] %v280
        %v282 = vld [vmem:[%s32 + $0x3e0] sm:$0xff]
        %283 = vst [vmem:[%s33 + $0x3e0] sm:$0xff] %v282
        %v284 = vld [vmem:[%s32 + $0x3e8] sm:$0xff]
        %285 = vst [vmem:[%s33 + $0x3e8] sm:$0xff] %v284
        %v286 = vld [vmem:[%s32 + $0x3f0] sm:$0xff]
        %287 = vst [vmem:[%s33 + $0x3f0] sm:$0xff] %v286
        %v288 = vld [vmem:[%s32 + $0x3f8] sm:$0xff]
        %289 = vst [vmem:[%s33 + $0x3f8] sm:$0xff] %v288
      $region30: #{lstm_language_model.1} parent=24 // loop_footer
        %s31 = sadd.s32 1, %s27
      $region31: #{lstm_language_model.1} parent=24 // loop_footer_branch
        %26 = sbr.rel target = $region27
      $region32: #{lstm_language_model.1} parent=24 // loop_exit
        _
    $region25: #{lstm_language_model.1} parent=1 // pred_fallthru
      _
    // Predicated region
    $region33: #{lstm_language_model.1} parent=1 // pred_check
      _
    $region34: #{lstm_language_model.1} parent=1 // pred_check_branch
      %291 = sbr.rel target = $region36
    $region35: #{lstm_language_model.1} parent=1 // pred_region
      _
    $region36: #{lstm_language_model.1} parent=1 // pred_fallthru
      _
    // Predicated region
    $region37: #{lstm_language_model.1} parent=1 // pred_check
      _
    $region38: #{lstm_language_model.1} parent=1 // pred_check_branch
      %294 = sbr.rel (0) target = $region40
    $region39: #{lstm_language_model.1} parent=1 // pred_region
      %295 = vsyncadd [#allocation5], 16384
    $region40: #{lstm_language_model.1} parent=1 // pred_fallthru
      _
    %s296 = scalar_lea.sflag [#allocation5], 1
    // Predicated region
    $region41: #{lstm_language_model.1} parent=1 // pred_check
      _
    $region42: #{lstm_language_model.1} parent=1 // pred_check_branch
      %298 = sbr.rel (0) target = $region44
    $region43: #{lstm_language_model.1} parent=1 // pred_region
      loop: start=0, step=1, limit=1
      $region45: #{lstm_language_model.1} parent=43 // loop_pre_header
        _
      $region46: #{lstm_language_model.1} parent=43 // loop_header
        %s300 = sphi 0, %s304
        %p301 = scmp.ge.s32.totalorder %s300, 1
        %s305 = sphi %s6, %s6
        %s306 = sphi [#allocation4], [#allocation4]
      $region47: #{lstm_language_model.1} parent=43 // loop_header_branch
        %303 = sbr.rel (%p301) target = $region51
      $region48: #{lstm_language_model.1} parent=43 // loop_body
        %v307 = vld [vmem:[%s305] sm:$0xff]
        %308 = vst [vmem:[%s306] sm:$0xff] %v307
        %v309 = vld [vmem:[%s305 + $0x8] sm:$0xff]
        %310 = vst [vmem:[%s306 + $0x8] sm:$0xff] %v309
        %v311 = vld [vmem:[%s305 + $0x10] sm:$0xff]
        %312 = vst [vmem:[%s306 + $0x10] sm:$0xff] %v311
        %v313 = vld [vmem:[%s305 + $0x18] sm:$0xff]
        %314 = vst [vmem:[%s306 + $0x18] sm:$0xff] %v313
        %v315 = vld [vmem:[%s305 + $0x20] sm:$0xff]
        %316 = vst [vmem:[%s306 + $0x20] sm:$0xff] %v315
        %v317 = vld [vmem:[%s305 + $0x28] sm:$0xff]
        %318 = vst [vmem:[%s306 + $0x28] sm:$0xff] %v317
        %v319 = vld [vmem:[%s305 + $0x30] sm:$0xff]
        %320 = vst [vmem:[%s306 + $0x30] sm:$0xff] %v319
        %v321 = vld [vmem:[%s305 + $0x38] sm:$0xff]
        %322 = vst [vmem:[%s306 + $0x38] sm:$0xff] %v321
        %v323 = vld [vmem:[%s305 + $0x40] sm:$0xff]
        %324 = vst [vmem:[%s306 + $0x40] sm:$0xff] %v323
        %v325 = vld [vmem:[%s305 + $0x48] sm:$0xff]
        %326 = vst [vmem:[%s306 + $0x48] sm:$0xff] %v325
        %v327 = vld [vmem:[%s305 + $0x50] sm:$0xff]
        %328 = vst [vmem:[%s306 + $0x50] sm:$0xff] %v327
        %v329 = vld [vmem:[%s305 + $0x58] sm:$0xff]
        %330 = vst [vmem:[%s306 + $0x58] sm:$0xff] %v329
        %v331 = vld [vmem:[%s305 + $0x60] sm:$0xff]
        %332 = vst [vmem:[%s306 + $0x60] sm:$0xff] %v331
        %v333 = vld [vmem:[%s305 + $0x68] sm:$0xff]
        %334 = vst [vmem:[%s306 + $0x68] sm:$0xff] %v333
        %v335 = vld [vmem:[%s305 + $0x70] sm:$0xff]
        %336 = vst [vmem:[%s306 + $0x70] sm:$0xff] %v335
        %v337 = vld [vmem:[%s305 + $0x78] sm:$0xff]
        %338 = vst [vmem:[%s306 + $0x78] sm:$0xff] %v337
        %v339 = vld [vmem:[%s305 + $0x80] sm:$0xff]
        %340 = vst [vmem:[%s306 + $0x80] sm:$0xff] %v339
        %v341 = vld [vmem:[%s305 + $0x88] sm:$0xff]
        %342 = vst [vmem:[%s306 + $0x88] sm:$0xff] %v341
        %v343 = vld [vmem:[%s305 + $0x90] sm:$0xff]
        %344 = vst [vmem:[%s306 + $0x90] sm:$0xff] %v343
        %v345 = vld [vmem:[%s305 + $0x98] sm:$0xff]
        %346 = vst [vmem:[%s306 + $0x98] sm:$0xff] %v345
        %v347 = vld [vmem:[%s305 + $0xa0] sm:$0xff]
        %348 = vst [vmem:[%s306 + $0xa0] sm:$0xff] %v347
        %v349 = vld [vmem:[%s305 + $0xa8] sm:$0xff]
        %350 = vst [vmem:[%s306 + $0xa8] sm:$0xff] %v349
        %v351 = vld [vmem:[%s305 + $0xb0] sm:$0xff]
        %352 = vst [vmem:[%s306 + $0xb0] sm:$0xff] %v351
        %v353 = vld [vmem:[%s305 + $0xb8] sm:$0xff]
        %354 = vst [vmem:[%s306 + $0xb8] sm:$0xff] %v353
        %v355 = vld [vmem:[%s305 + $0xc0] sm:$0xff]
        %356 = vst [vmem:[%s306 + $0xc0] sm:$0xff] %v355
        %v357 = vld [vmem:[%s305 + $0xc8] sm:$0xff]
        %358 = vst [vmem:[%s306 + $0xc8] sm:$0xff] %v357
        %v359 = vld [vmem:[%s305 + $0xd0] sm:$0xff]
        %360 = vst [vmem:[%s306 + $0xd0] sm:$0xff] %v359
        %v361 = vld [vmem:[%s305 + $0xd8] sm:$0xff]
        %362 = vst [vmem:[%s306 + $0xd8] sm:$0xff] %v361
        %v363 = vld [vmem:[%s305 + $0xe0] sm:$0xff]
        %364 = vst [vmem:[%s306 + $0xe0] sm:$0xff] %v363
        %v365 = vld [vmem:[%s305 + $0xe8] sm:$0xff]
        %366 = vst [vmem:[%s306 + $0xe8] sm:$0xff] %v365
        %v367 = vld [vmem:[%s305 + $0xf0] sm:$0xff]
        %368 = vst [vmem:[%s306 + $0xf0] sm:$0xff] %v367
        %v369 = vld [vmem:[%s305 + $0xf8] sm:$0xff]
        %370 = vst [vmem:[%s306 + $0xf8] sm:$0xff] %v369
      $region49: #{lstm_language_model.1} parent=43 // loop_footer
        %s304 = sadd.s32 1, %s300
      $region50: #{lstm_language_model.1} parent=43 // loop_footer_branch
        %299 = sbr.rel target = $region46
      $region51: #{lstm_language_model.1} parent=43 // loop_exit
        _
    $region44: #{lstm_language_model.1} parent=1 // pred_fallthru
      _
    // Predicated region
    $region52: #{lstm_language_model.1} parent=1 // pred_check
      _
    $region53: #{lstm_language_model.1} parent=1 // pred_check_branch
      %372 = sbr.rel target = $region55
    $region54: #{lstm_language_model.1} parent=1 // pred_region
      _
    $region55: #{lstm_language_model.1} parent=1 // pred_fallthru
      _
    // Predicated region
    $region56: #{lstm_language_model.1} parent=1 // pred_check
      _
    $region57: #{lstm_language_model.1} parent=1 // pred_check_branch
      %375 = sbr.rel (0) target = $region59
    $region58: #{lstm_language_model.1} parent=1 // pred_region
      %376 = vsyncadd %s296, 4096
    $region59: #{lstm_language_model.1} parent=1 // pred_fallthru
      _
    %v377 = vld [vmem:[%s0] sm:$0xff]
    %v378 = vld [vmem:[%s0 + $0x8] sm:$0xff]
    %v379 = vld [vmem:[%s0 + $0x10] sm:$0xff]
    %v380 = vld [vmem:[%s0 + $0x18] sm:$0xff]
    %v381 = vld [vmem:[%s0 + $0x20] sm:$0xff]
    %v382 = vld [vmem:[%s0 + $0x28] sm:$0xff]
    %v383 = vld [vmem:[%s0 + $0x30] sm:$0xff]
    %v384 = vld [vmem:[%s0 + $0x38] sm:$0xff]
    %v385 = vld [vmem:[%s0 + $0x40] sm:$0xff]
    %v386 = vld [vmem:[%s0 + $0x48] sm:$0xff]
    %v387 = vld [vmem:[%s0 + $0x50] sm:$0xff]
    %v388 = vld [vmem:[%s0 + $0x58] sm:$0xff]
    %v389 = vld [vmem:[%s0 + $0x60] sm:$0xff]
    %v390 = vld [vmem:[%s0 + $0x68] sm:$0xff]
    %v391 = vld [vmem:[%s0 + $0x70] sm:$0xff]
    %v392 = vld [vmem:[%s0 + $0x78] sm:$0xff]
    %v393 = vld [vmem:[%s0 + $0x80] sm:$0xff]
    %v394 = vld [vmem:[%s0 + $0x88] sm:$0xff]
    %v395 = vld [vmem:[%s0 + $0x90] sm:$0xff]
    %v396 = vld [vmem:[%s0 + $0x98] sm:$0xff]
    %v397 = vld [vmem:[%s0 + $0xa0] sm:$0xff]
    %v398 = vld [vmem:[%s0 + $0xa8] sm:$0xff]
    %v399 = vld [vmem:[%s0 + $0xb0] sm:$0xff]
    %v400 = vld [vmem:[%s0 + $0xb8] sm:$0xff]
    %v401 = vld [vmem:[%s0 + $0xc0] sm:$0xff]
    %v402 = vld [vmem:[%s0 + $0xc8] sm:$0xff]
    %v403 = vld [vmem:[%s0 + $0xd0] sm:$0xff]
    %v404 = vld [vmem:[%s0 + $0xd8] sm:$0xff]
    %v405 = vld [vmem:[%s0 + $0xe0] sm:$0xff]
    %v406 = vld [vmem:[%s0 + $0xe8] sm:$0xff]
    %v407 = vld [vmem:[%s0 + $0xf0] sm:$0xff]
    %v408 = vld [vmem:[%s0 + $0xf8] sm:$0xff]
    %v409 = vlaneseq
    %v410 = vand.u32 %v409, 127
    %v411 = vadd.s32 %v410, 128
    %412 = vset.pattern.permute.xlu0 0
    %413 = vperm.xlu0 %412, %v377
    %v414 = vpop.permute.xlu0 %413
    %415 = vset.pattern.permute.xlu0 0
    %416 = vperm.xlu0 %415, %v378
    %v417 = vpop.permute.xlu0 %416
    %418 = vset.pattern.permute.xlu0 0
    %419 = vperm.xlu0 %418, %v379
    %v420 = vpop.permute.xlu0 %419
    %421 = vset.pattern.permute.xlu0 0
    %422 = vperm.xlu0 %421, %v380
    %v423 = vpop.permute.xlu0 %422
    %424 = vset.pattern.permute.xlu0 0
    %425 = vperm.xlu0 %424, %v381
    %v426 = vpop.permute.xlu0 %425
    %427 = vset.pattern.permute.xlu0 0
    %428 = vperm.xlu0 %427, %v382
    %v429 = vpop.permute.xlu0 %428
    %430 = vset.pattern.permute.xlu0 0
    %431 = vperm.xlu0 %430, %v383
    %v432 = vpop.permute.xlu0 %431
    %433 = vset.pattern.permute.xlu0 0
    %434 = vperm.xlu0 %433, %v384
    %v435 = vpop.permute.xlu0 %434
    %436 = vset.pattern.permute.xlu0 0
    %437 = vperm.xlu0 %436, %v385
    %v438 = vpop.permute.xlu0 %437
    %439 = vset.pattern.permute.xlu0 0
    %440 = vperm.xlu0 %439, %v386
    %v441 = vpop.permute.xlu0 %440
    %442 = vset.pattern.permute.xlu0 0
    %443 = vperm.xlu0 %442, %v387
    %v444 = vpop.permute.xlu0 %443
    %445 = vset.pattern.permute.xlu0 0
    %446 = vperm.xlu0 %445, %v388
    %v447 = vpop.permute.xlu0 %446
    %448 = vset.pattern.permute.xlu0 0
    %449 = vperm.xlu0 %448, %v389
    %v450 = vpop.permute.xlu0 %449
    %451 = vset.pattern.permute.xlu0 0
    %452 = vperm.xlu0 %451, %v390
    %v453 = vpop.permute.xlu0 %452
    %454 = vset.pattern.permute.xlu0 0
    %455 = vperm.xlu0 %454, %v391
    %v456 = vpop.permute.xlu0 %455
    %457 = vset.pattern.permute.xlu0 0
    %458 = vperm.xlu0 %457, %v392
    %v459 = vpop.permute.xlu0 %458
    %460 = vset.pattern.permute.xlu0 0
    %461 = vperm.xlu0 %460, %v393
    %v462 = vpop.permute.xlu0 %461
    %463 = vset.pattern.permute.xlu0 0
    %464 = vperm.xlu0 %463, %v394
    %v465 = vpop.permute.xlu0 %464
    %466 = vset.pattern.permute.xlu0 0
    %467 = vperm.xlu0 %466, %v395
    %v468 = vpop.permute.xlu0 %467
    %469 = vset.pattern.permute.xlu0 0
    %470 = vperm.xlu0 %469, %v396
    %v471 = vpop.permute.xlu0 %470
    %472 = vset.pattern.permute.xlu0 0
    %473 = vperm.xlu0 %472, %v397
    %v474 = vpop.permute.xlu0 %473
    %475 = vset.pattern.permute.xlu0 0
    %476 = vperm.xlu0 %475, %v398
    %v477 = vpop.permute.xlu0 %476
    %478 = vset.pattern.permute.xlu0 0
    %479 = vperm.xlu0 %478, %v399
    %v480 = vpop.permute.xlu0 %479
    %481 = vset.pattern.permute.xlu0 0
    %482 = vperm.xlu0 %481, %v400
    %v483 = vpop.permute.xlu0 %482
    %484 = vset.pattern.permute.xlu0 0
    %485 = vperm.xlu0 %484, %v401
    %v486 = vpop.permute.xlu0 %485
    %487 = vset.pattern.permute.xlu0 0
    %488 = vperm.xlu0 %487, %v402
    %v489 = vpop.permute.xlu0 %488
    %490 = vset.pattern.permute.xlu0 0
    %491 = vperm.xlu0 %490, %v403
    %v492 = vpop.permute.xlu0 %491
    %493 = vset.pattern.permute.xlu0 0
    %494 = vperm.xlu0 %493, %v404
    %v495 = vpop.permute.xlu0 %494
    %496 = vset.pattern.permute.xlu0 0
    %497 = vperm.xlu0 %496, %v405
    %v498 = vpop.permute.xlu0 %497
    %499 = vset.pattern.permute.xlu0 0
    %500 = vperm.xlu0 %499, %v406
    %v501 = vpop.permute.xlu0 %500
    %502 = vset.pattern.permute.xlu0 0
    %503 = vperm.xlu0 %502, %v407
    %v504 = vpop.permute.xlu0 %503
    %505 = vset.pattern.permute.xlu0 0
    %506 = vperm.xlu0 %505, %v408
    %v507 = vpop.permute.xlu0 %506
    %vm508 = vcmp.eq.s32.totalorder %v414, %v410
    %vm509 = vcmp.eq.s32.totalorder %v414, %v411
    %vm510 = vcmp.eq.s32.totalorder %v417, %v410
    %vm511 = vcmp.eq.s32.totalorder %v417, %v411
    %vm512 = vcmp.eq.s32.totalorder %v420, %v410
    %vm513 = vcmp.eq.s32.totalorder %v420, %v411
    %vm514 = vcmp.eq.s32.totalorder %v423, %v410
    %vm515 = vcmp.eq.s32.totalorder %v423, %v411
    %vm516 = vcmp.eq.s32.totalorder %v426, %v410
    %vm517 = vcmp.eq.s32.totalorder %v426, %v411
    %vm518 = vcmp.eq.s32.totalorder %v429, %v410
    %vm519 = vcmp.eq.s32.totalorder %v429, %v411
    %vm520 = vcmp.eq.s32.totalorder %v432, %v410
    %vm521 = vcmp.eq.s32.totalorder %v432, %v411
    %vm522 = vcmp.eq.s32.totalorder %v435, %v410
    %vm523 = vcmp.eq.s32.totalorder %v435, %v411
    %vm524 = vcmp.eq.s32.totalorder %v438, %v410
    %vm525 = vcmp.eq.s32.totalorder %v438, %v411
    %vm526 = vcmp.eq.s32.totalorder %v441, %v410
    %vm527 = vcmp.eq.s32.totalorder %v441, %v411
    %vm528 = vcmp.eq.s32.totalorder %v444, %v410
    %vm529 = vcmp.eq.s32.totalorder %v444, %v411
    %vm530 = vcmp.eq.s32.totalorder %v447, %v410
    %vm531 = vcmp.eq.s32.totalorder %v447, %v411
    %vm532 = vcmp.eq.s32.totalorder %v450, %v410
    %vm533 = vcmp.eq.s32.totalorder %v450, %v411
    %vm534 = vcmp.eq.s32.totalorder %v453, %v410
    %vm535 = vcmp.eq.s32.totalorder %v453, %v411
    %vm536 = vcmp.eq.s32.totalorder %v456, %v410
    %vm537 = vcmp.eq.s32.totalorder %v456, %v411
    %vm538 = vcmp.eq.s32.totalorder %v459, %v410
    %vm539 = vcmp.eq.s32.totalorder %v459, %v411
    %vm540 = vcmp.eq.s32.totalorder %v462, %v410
    %vm541 = vcmp.eq.s32.totalorder %v462, %v411
    %vm542 = vcmp.eq.s32.totalorder %v465, %v410
    %vm543 = vcmp.eq.s32.totalorder %v465, %v411
    %vm544 = vcmp.eq.s32.totalorder %v468, %v410
    %vm545 = vcmp.eq.s32.totalorder %v468, %v411
    %vm546 = vcmp.eq.s32.totalorder %v471, %v410
    %vm547 = vcmp.eq.s32.totalorder %v471, %v411
    %vm548 = vcmp.eq.s32.totalorder %v474, %v410
    %vm549 = vcmp.eq.s32.totalorder %v474, %v411
    %vm550 = vcmp.eq.s32.totalorder %v477, %v410
    %vm551 = vcmp.eq.s32.totalorder %v477, %v411
    %vm552 = vcmp.eq.s32.totalorder %v480, %v410
    %vm553 = vcmp.eq.s32.totalorder %v480, %v411
    %vm554 = vcmp.eq.s32.totalorder %v483, %v410
    %vm555 = vcmp.eq.s32.totalorder %v483, %v411
    %vm556 = vcmp.eq.s32.totalorder %v486, %v410
    %vm557 = vcmp.eq.s32.totalorder %v486, %v411
    %vm558 = vcmp.eq.s32.totalorder %v489, %v410
    %vm559 = vcmp.eq.s32.totalorder %v489, %v411
    %vm560 = vcmp.eq.s32.totalorder %v492, %v410
    %vm561 = vcmp.eq.s32.totalorder %v492, %v411
    %vm562 = vcmp.eq.s32.totalorder %v495, %v410
    %vm563 = vcmp.eq.s32.totalorder %v495, %v411
    %vm564 = vcmp.eq.s32.totalorder %v498, %v410
    %vm565 = vcmp.eq.s32.totalorder %v498, %v411
    %vm566 = vcmp.eq.s32.totalorder %v501, %v410
    %vm567 = vcmp.eq.s32.totalorder %v501, %v411
    %vm568 = vcmp.eq.s32.totalorder %v504, %v410
    %vm569 = vcmp.eq.s32.totalorder %v504, %v411
    %vm570 = vcmp.eq.s32.totalorder %v507, %v410
    %vm571 = vcmp.eq.s32.totalorder %v507, %v411
    %v572 = vsel %vm508, 1, 0
    %v573 = vsel %vm509, 1, 0
    %v574 = vsel %vm510, 1, 0
    %v575 = vsel %vm511, 1, 0
    %v576 = vsel %vm512, 1, 0
    %v577 = vsel %vm513, 1, 0
    %v578 = vsel %vm514, 1, 0
    %v579 = vsel %vm515, 1, 0
    %v580 = vsel %vm516, 1, 0
    %v581 = vsel %vm517, 1, 0
    %v582 = vsel %vm518, 1, 0
    %v583 = vsel %vm519, 1, 0
    %v584 = vsel %vm520, 1, 0
    %v585 = vsel %vm521, 1, 0
    %v586 = vsel %vm522, 1, 0
    %v587 = vsel %vm523, 1, 0
    %v588 = vsel %vm524, 1, 0
    %v589 = vsel %vm525, 1, 0
    %v590 = vsel %vm526, 1, 0
    %v591 = vsel %vm527, 1, 0
    %v592 = vsel %vm528, 1, 0
    %v593 = vsel %vm529, 1, 0
    %v594 = vsel %vm530, 1, 0
    %v595 = vsel %vm531, 1, 0
    %v596 = vsel %vm532, 1, 0
    %v597 = vsel %vm533, 1, 0
    %v598 = vsel %vm534, 1, 0
    %v599 = vsel %vm535, 1, 0
    %v600 = vsel %vm536, 1, 0
    %v601 = vsel %vm537, 1, 0
    %v602 = vsel %vm538, 1, 0
    %v603 = vsel %vm539, 1, 0
    %v604 = vsel %vm540, 1, 0
    %v605 = vsel %vm541, 1, 0
    %v606 = vsel %vm542, 1, 0
    %v607 = vsel %vm543, 1, 0
    %v608 = vsel %vm544, 1, 0
    %v609 = vsel %vm545, 1, 0
    %v610 = vsel %vm546, 1, 0
    %v611 = vsel %vm547, 1, 0
    %v612 = vsel %vm548, 1, 0
    %v613 = vsel %vm549, 1, 0
    %v614 = vsel %vm550, 1, 0
    %v615 = vsel %vm551, 1, 0
    %v616 = vsel %vm552, 1, 0
    %v617 = vsel %vm553, 1, 0
    %v618 = vsel %vm554, 1, 0
    %v619 = vsel %vm555, 1, 0
    %v620 = vsel %vm556, 1, 0
    %v621 = vsel %vm557, 1, 0
    %v622 = vsel %vm558, 1, 0
    %v623 = vsel %vm559, 1, 0
    %v624 = vsel %vm560, 1, 0
    %v625 = vsel %vm561, 1, 0
    %v626 = vsel %vm562, 1, 0
    %v627 = vsel %vm563, 1, 0
    %v628 = vsel %vm564, 1, 0
    %v629 = vsel %vm565, 1, 0
    %v630 = vsel %vm566, 1, 0
    %v631 = vsel %vm567, 1, 0
    %v632 = vsel %vm568, 1, 0
    %v633 = vsel %vm569, 1, 0
    %v634 = vsel %vm570, 1, 0
    %v635 = vsel %vm571, 1, 0
    %v636 = vcvt.s32.f32 %v572
    %v637 = vcvt.s32.f32 %v573
    %v638 = vcvt.s32.f32 %v574
    %v639 = vcvt.s32.f32 %v575
    %v640 = vcvt.s32.f32 %v576
    %v641 = vcvt.s32.f32 %v577
    %v642 = vcvt.s32.f32 %v578
    %v643 = vcvt.s32.f32 %v579
    %v644 = vcvt.s32.f32 %v580
    %v645 = vcvt.s32.f32 %v581
    %v646 = vcvt.s32.f32 %v582
    %v647 = vcvt.s32.f32 %v583
    %v648 = vcvt.s32.f32 %v584
    %v649 = vcvt.s32.f32 %v585
    %v650 = vcvt.s32.f32 %v586
    %v651 = vcvt.s32.f32 %v587
    %v652 = vcvt.s32.f32 %v588
    %v653 = vcvt.s32.f32 %v589
    %v654 = vcvt.s32.f32 %v590
    %v655 = vcvt.s32.f32 %v591
    %v656 = vcvt.s32.f32 %v592
    %v657 = vcvt.s32.f32 %v593
    %v658 = vcvt.s32.f32 %v594
    %v659 = vcvt.s32.f32 %v595
    %v660 = vcvt.s32.f32 %v596
    %v661 = vcvt.s32.f32 %v597
    %v662 = vcvt.s32.f32 %v598
    %v663 = vcvt.s32.f32 %v599
    %v664 = vcvt.s32.f32 %v600
    %v665 = vcvt.s32.f32 %v601
    %v666 = vcvt.s32.f32 %v602
    %v667 = vcvt.s32.f32 %v603
    %v668 = vcvt.s32.f32 %v604
    %v669 = vcvt.s32.f32 %v605
    %v670 = vcvt.s32.f32 %v606
    %v671 = vcvt.s32.f32 %v607
    %v672 = vcvt.s32.f32 %v608
    %v673 = vcvt.s32.f32 %v609
    %v674 = vcvt.s32.f32 %v610
    %v675 = vcvt.s32.f32 %v611
    %v676 = vcvt.s32.f32 %v612
    %v677 = vcvt.s32.f32 %v613
    %v678 = vcvt.s32.f32 %v614
    %v679 = vcvt.s32.f32 %v615
    %v680 = vcvt.s32.f32 %v616
    %v681 = vcvt.s32.f32 %v617
    %v682 = vcvt.s32.f32 %v618
    %v683 = vcvt.s32.f32 %v619
    %v684 = vcvt.s32.f32 %v620
    %v685 = vcvt.s32.f32 %v621
    %v686 = vcvt.s32.f32 %v622
    %v687 = vcvt.s32.f32 %v623
    %v688 = vcvt.s32.f32 %v624
    %v689 = vcvt.s32.f32 %v625
    %v690 = vcvt.s32.f32 %v626
    %v691 = vcvt.s32.f32 %v627
    %v692 = vcvt.s32.f32 %v628
    %v693 = vcvt.s32.f32 %v629
    %v694 = vcvt.s32.f32 %v630
    %v695 = vcvt.s32.f32 %v631
    %v696 = vcvt.s32.f32 %v632
    %v697 = vcvt.s32.f32 %v633
    %v698 = vcvt.s32.f32 %v634
    %v699 = vcvt.s32.f32 %v635
    %v700 = vpack.c.bf16 %v638, %v636
    %v701 = vpack.c.bf16 %v639, %v637
    %v702 = vpack.c.bf16 %v642, %v640
    %v703 = vpack.c.bf16 %v643, %v641
    %v704 = vpack.c.bf16 %v646, %v644
    %v705 = vpack.c.bf16 %v647, %v645
    %v706 = vpack.c.bf16 %v650, %v648
    %v707 = vpack.c.bf16 %v651, %v649
    %v708 = vpack.c.bf16 %v654, %v652
    %v709 = vpack.c.bf16 %v655, %v653
    %v710 = vpack.c.bf16 %v658, %v656
    %v711 = vpack.c.bf16 %v659, %v657
    %v712 = vpack.c.bf16 %v662, %v660
    %v713 = vpack.c.bf16 %v663, %v661
    %v714 = vpack.c.bf16 %v666, %v664
    %v715 = vpack.c.bf16 %v667, %v665
    %v716 = vpack.c.bf16 %v670, %v668
    %v717 = vpack.c.bf16 %v671, %v669
    %v718 = vpack.c.bf16 %v674, %v672
    %v719 = vpack.c.bf16 %v675, %v673
    %v720 = vpack.c.bf16 %v678, %v676
    %v721 = vpack.c.bf16 %v679, %v677
    %v722 = vpack.c.bf16 %v682, %v680
    %v723 = vpack.c.bf16 %v683, %v681
    %v724 = vpack.c.bf16 %v686, %v684
    %v725 = vpack.c.bf16 %v687, %v685
    %v726 = vpack.c.bf16 %v690, %v688
    %v727 = vpack.c.bf16 %v691, %v689
    %v728 = vpack.c.bf16 %v694, %v692
    %v729 = vpack.c.bf16 %v695, %v693
    %v730 = vpack.c.bf16 %v698, %v696
    %v731 = vpack.c.bf16 %v699, %v697
    %v732 = vld [vmem:[%s1] sm:$0xf]
    %v733 = vld [vmem:[%s1 + $0x4] sm:$0xf]
    %v734 = vld [vmem:[%s1 + $0x8] sm:$0xf]
    %v735 = vld [vmem:[%s1 + $0xc] sm:$0xf]
    %v736 = vld [vmem:[%s1 + $0x10] sm:$0xf]
    %v737 = vld [vmem:[%s1 + $0x14] sm:$0xf]
    %v738 = vld [vmem:[%s1 + $0x18] sm:$0xf]
    %v739 = vld [vmem:[%s1 + $0x1c] sm:$0xf]
    %v740 = vld [vmem:[%s1 + $0x20] sm:$0xf]
    %v741 = vld [vmem:[%s1 + $0x24] sm:$0xf]
    %v742 = vld [vmem:[%s1 + $0x28] sm:$0xf]
    %v743 = vld [vmem:[%s1 + $0x2c] sm:$0xf]
    %v744 = vld [vmem:[%s1 + $0x30] sm:$0xf]
    %v745 = vld [vmem:[%s1 + $0x34] sm:$0xf]
    %v746 = vld [vmem:[%s1 + $0x38] sm:$0xf]
    %v747 = vld [vmem:[%s1 + $0x3c] sm:$0xf]
    %v748 = vld [vmem:[%s1 + $0x40] sm:$0xf]
    %v749 = vld [vmem:[%s1 + $0x44] sm:$0xf]
    %v750 = vld [vmem:[%s1 + $0x48] sm:$0xf]
    %v751 = vld [vmem:[%s1 + $0x4c] sm:$0xf]
    %v752 = vld [vmem:[%s1 + $0x50] sm:$0xf]
    %v753 = vld [vmem:[%s1 + $0x54] sm:$0xf]
    %v754 = vld [vmem:[%s1 + $0x58] sm:$0xf]
    %v755 = vld [vmem:[%s1 + $0x5c] sm:$0xf]
    %v756 = vld [vmem:[%s1 + $0x60] sm:$0xf]
    %v757 = vld [vmem:[%s1 + $0x64] sm:$0xf]
    %v758 = vld [vmem:[%s1 + $0x68] sm:$0xf]
    %v759 = vld [vmem:[%s1 + $0x6c] sm:$0xf]
    %v760 = vld [vmem:[%s1 + $0x70] sm:$0xf]
    %v761 = vld [vmem:[%s1 + $0x74] sm:$0xf]
    %v762 = vld [vmem:[%s1 + $0x78] sm:$0xf]
    %v763 = vld [vmem:[%s1 + $0x7c] sm:$0xf]
    %v796 = vunpack.c.l.b16 %v732
    %v797 = vunpack.c.l.b16 %v733
    %v798 = vunpack.c.l.b16 %v734
    %v799 = vunpack.c.l.b16 %v735
    %v800 = vunpack.c.l.b16 %v736
    %v801 = vunpack.c.l.b16 %v737
    %v802 = vunpack.c.l.b16 %v738
    %v803 = vunpack.c.l.b16 %v739
    %v804 = vunpack.c.l.b16 %v740
    %v805 = vunpack.c.l.b16 %v741
    %v806 = vunpack.c.l.b16 %v742
    %v807 = vunpack.c.l.b16 %v743
    %v808 = vunpack.c.l.b16 %v744
    %v809 = vunpack.c.l.b16 %v745
    %v810 = vunpack.c.l.b16 %v746
    %v811 = vunpack.c.l.b16 %v747
    %v812 = vunpack.c.l.b16 %v748
    %v813 = vunpack.c.l.b16 %v749
    %v814 = vunpack.c.l.b16 %v750
    %v815 = vunpack.c.l.b16 %v751
    %v816 = vunpack.c.l.b16 %v752
    %v817 = vunpack.c.l.b16 %v753
    %v818 = vunpack.c.l.b16 %v754
    %v819 = vunpack.c.l.b16 %v755
    %v820 = vunpack.c.l.b16 %v756
    %v821 = vunpack.c.l.b16 %v757
    %v822 = vunpack.c.l.b16 %v758
    %v823 = vunpack.c.l.b16 %v759
    %v824 = vunpack.c.l.b16 %v760
    %v825 = vunpack.c.l.b16 %v761
    %v826 = vunpack.c.l.b16 %v762
    %v827 = vunpack.c.l.b16 %v763
    %v828 = vpack.c.b16 %v797, %v796
    %v829 = vpack.c.b16 %v799, %v798
    %v830 = vpack.c.b16 %v801, %v800
    %v831 = vpack.c.b16 %v803, %v802
    %v832 = vpack.c.b16 %v805, %v804
    %v833 = vpack.c.b16 %v807, %v806
    %v834 = vpack.c.b16 %v809, %v808
    %v835 = vpack.c.b16 %v811, %v810
    %v836 = vpack.c.b16 %v813, %v812
    %v837 = vpack.c.b16 %v815, %v814
    %v838 = vpack.c.b16 %v817, %v816
    %v839 = vpack.c.b16 %v819, %v818
    %v840 = vpack.c.b16 %v821, %v820
    %v841 = vpack.c.b16 %v823, %v822
    %v842 = vpack.c.b16 %v825, %v824
    %v843 = vpack.c.b16 %v827, %v826
    %860 = vmatpush.bf16.msra.mxu0 %v835
    %861 = vmatpush.bf16.msra.mxu0 %v834
    %862 = vmatpush.bf16.msra.mxu0 %v833
    %863 = vmatpush.bf16.msra.mxu0 %v832
    %864 = vmatpush.bf16.msra.mxu0 %v831
    %865 = vmatpush.bf16.msra.mxu0 %v830
    %866 = vmatpush.bf16.msra.mxu0 %v829
    %867 = vmatpush.bf16.msra.mxu0 %v828
    %868 = vmatmul.bf16.gmra.mxu0 %v700
    %v869 = vpop.f32.mrf.mxu0
    %v870 = vadd.f32 0.0, %v869
    %v871 = vpop.f32.mrf.mxu0
    %v872 = vadd.f32 0.0, %v871
    %873 = vmatmul.bf16.gmra.mxu0 %v702
    %v874 = vpop.f32.mrf.mxu0
    %v875 = vadd.f32 0.0, %v874
    %v876 = vpop.f32.mrf.mxu0
    %v877 = vadd.f32 0.0, %v876
    %878 = vmatmul.bf16.gmra.mxu0 %v704
    %v879 = vpop.f32.mrf.mxu0
    %v880 = vadd.f32 0.0, %v879
    %v881 = vpop.f32.mrf.mxu0
    %v882 = vadd.f32 0.0, %v881
    %883 = vmatmul.bf16.gmra.mxu0 %v706
    %v884 = vpop.f32.mrf.mxu0
    %v885 = vadd.f32 0.0, %v884
    %v886 = vpop.f32.mrf.mxu0
    %v887 = vadd.f32 0.0, %v886
    %888 = vmatmul.bf16.gmra.mxu0 %v708
    %v889 = vpop.f32.mrf.mxu0
    %v890 = vadd.f32 0.0, %v889
    %v891 = vpop.f32.mrf.mxu0
    %v892 = vadd.f32 0.0, %v891
    %893 = vmatmul.bf16.gmra.mxu0 %v710
    %v894 = vpop.f32.mrf.mxu0
    %v895 = vadd.f32 0.0, %v894
    %v896 = vpop.f32.mrf.mxu0
    %v897 = vadd.f32 0.0, %v896
    %898 = vmatmul.bf16.gmra.mxu0 %v712
    %v899 = vpop.f32.mrf.mxu0
    %v900 = vadd.f32 0.0, %v899
    %v901 = vpop.f32.mrf.mxu0
    %v902 = vadd.f32 0.0, %v901
    %903 = vmatmul.bf16.gmra.mxu0 %v714
    %v904 = vpop.f32.mrf.mxu0
    %v905 = vadd.f32 0.0, %v904
    %v906 = vpop.f32.mrf.mxu0
    %v907 = vadd.f32 0.0, %v906
    %908 = vmatmul.bf16.gmra.mxu0 %v716
    %v909 = vpop.f32.mrf.mxu0
    %v910 = vadd.f32 0.0, %v909
    %v911 = vpop.f32.mrf.mxu0
    %v912 = vadd.f32 0.0, %v911
    %913 = vmatmul.bf16.gmra.mxu0 %v718
    %v914 = vpop.f32.mrf.mxu0
    %v915 = vadd.f32 0.0, %v914
    %v916 = vpop.f32.mrf.mxu0
    %v917 = vadd.f32 0.0, %v916
    %918 = vmatmul.bf16.gmra.mxu0 %v720
    %v919 = vpop.f32.mrf.mxu0
    %v920 = vadd.f32 0.0, %v919
    %v921 = vpop.f32.mrf.mxu0
    %v922 = vadd.f32 0.0, %v921
    %923 = vmatmul.bf16.gmra.mxu0 %v722
    %v924 = vpop.f32.mrf.mxu0
    %v925 = vadd.f32 0.0, %v924
    %v926 = vpop.f32.mrf.mxu0
    %v927 = vadd.f32 0.0, %v926
    %928 = vmatmul.bf16.gmra.mxu0 %v724
    %v929 = vpop.f32.mrf.mxu0
    %v930 = vadd.f32 0.0, %v929
    %v931 = vpop.f32.mrf.mxu0
    %v932 = vadd.f32 0.0, %v931
    %933 = vmatmul.bf16.gmra.mxu0 %v726
    %v934 = vpop.f32.mrf.mxu0
    %v935 = vadd.f32 0.0, %v934
    %v936 = vpop.f32.mrf.mxu0
    %v937 = vadd.f32 0.0, %v936
    %938 = vmatmul.bf16.gmra.mxu0 %v728
    %v939 = vpop.f32.mrf.mxu0
    %v940 = vadd.f32 0.0, %v939
    %v941 = vpop.f32.mrf.mxu0
    %v942 = vadd.f32 0.0, %v941
    %943 = vmatmul.bf16.gmra.mxu0 %v730
    %v944 = vpop.f32.mrf.mxu0
    %v945 = vadd.f32 0.0, %v944
    %v946 = vpop.f32.mrf.mxu0
    %v947 = vadd.f32 0.0, %v946
    %948 = vdwg.mxu0
    %949 = vmatpush.bf16.msra.mxu0 %v843
    %950 = vmatpush.bf16.msra.mxu0 %v842
    %951 = vmatpush.bf16.msra.mxu0 %v841
    %952 = vmatpush.bf16.msra.mxu0 %v840
    %953 = vmatpush.bf16.msra.mxu0 %v839
    %954 = vmatpush.bf16.msra.mxu0 %v838
    %955 = vmatpush.bf16.msra.mxu0 %v837
    %956 = vmatpush.bf16.msra.mxu0 %v836
    %957 = vmatmul.bf16.gmra.mxu0 %v701
    %v958 = vpop.f32.mrf.mxu0
    %v959 = vadd.f32 %v870, %v958
    %v960 = vpop.f32.mrf.mxu0
    %v961 = vadd.f32 %v872, %v960
    %962 = vmatmul.bf16.gmra.mxu0 %v703
    %v963 = vpop.f32.mrf.mxu0
    %v964 = vadd.f32 %v875, %v963
    %v965 = vpop.f32.mrf.mxu0
    %v966 = vadd.f32 %v877, %v965
    %967 = vmatmul.bf16.gmra.mxu0 %v705
    %v968 = vpop.f32.mrf.mxu0
    %v969 = vadd.f32 %v880, %v968
    %v970 = vpop.f32.mrf.mxu0
    %v971 = vadd.f32 %v882, %v970
    %972 = vmatmul.bf16.gmra.mxu0 %v707
    %v973 = vpop.f32.mrf.mxu0
    %v974 = vadd.f32 %v885, %v973
    %v975 = vpop.f32.mrf.mxu0
    %v976 = vadd.f32 %v887, %v975
    %977 = vmatmul.bf16.gmra.mxu0 %v709
    %v978 = vpop.f32.mrf.mxu0
    %v979 = vadd.f32 %v890, %v978
    %v980 = vpop.f32.mrf.mxu0
    %v981 = vadd.f32 %v892, %v980
    %982 = vmatmul.bf16.gmra.mxu0 %v711
    %v983 = vpop.f32.mrf.mxu0
    %v984 = vadd.f32 %v895, %v983
    %v985 = vpop.f32.mrf.mxu0
    %v986 = vadd.f32 %v897, %v985
    %987 = vmatmul.bf16.gmra.mxu0 %v713
    %v988 = vpop.f32.mrf.mxu0
    %v989 = vadd.f32 %v900, %v988
    %v990 = vpop.f32.mrf.mxu0
    %v991 = vadd.f32 %v902, %v990
    %992 = vmatmul.bf16.gmra.mxu0 %v715
    %v993 = vpop.f32.mrf.mxu0
    %v994 = vadd.f32 %v905, %v993
    %v995 = vpop.f32.mrf.mxu0
    %v996 = vadd.f32 %v907, %v995
    %997 = vmatmul.bf16.gmra.mxu0 %v717
    %v998 = vpop.f32.mrf.mxu0
    %v999 = vadd.f32 %v910, %v998
    %v1000 = vpop.f32.mrf.mxu0
    %v1001 = vadd.f32 %v912, %v1000
    %1002 = vmatmul.bf16.gmra.mxu0 %v719
    %v1003 = vpop.f32.mrf.mxu0
    %v1004 = vadd.f32 %v915, %v1003
    %v1005 = vpop.f32.mrf.mxu0
    %v1006 = vadd.f32 %v917, %v1005
    %1007 = vmatmul.bf16.gmra.mxu0 %v721
    %v1008 = vpop.f32.mrf.mxu0
    %v1009 = vadd.f32 %v920, %v1008
    %v1010 = vpop.f32.mrf.mxu0
    %v1011 = vadd.f32 %v922, %v1010
    %1012 = vmatmul.bf16.gmra.mxu0 %v723
    %v1013 = vpop.f32.mrf.mxu0
    %v1014 = vadd.f32 %v925, %v1013
    %v1015 = vpop.f32.mrf.mxu0
    %v1016 = vadd.f32 %v927, %v1015
    %1017 = vmatmul.bf16.gmra.mxu0 %v725
    %v1018 = vpop.f32.mrf.mxu0
    %v1019 = vadd.f32 %v930, %v1018
    %v1020 = vpop.f32.mrf.mxu0
    %v1021 = vadd.f32 %v932, %v1020
    %1022 = vmatmul.bf16.gmra.mxu0 %v727
    %v1023 = vpop.f32.mrf.mxu0
    %v1024 = vadd.f32 %v935, %v1023
    %v1025 = vpop.f32.mrf.mxu0
    %v1026 = vadd.f32 %v937, %v1025
    %1027 = vmatmul.bf16.gmra.mxu0 %v729
    %v1028 = vpop.f32.mrf.mxu0
    %v1029 = vadd.f32 %v940, %v1028
    %v1030 = vpop.f32.mrf.mxu0
    %v1031 = vadd.f32 %v942, %v1030
    %1032 = vmatmul.bf16.gmra.mxu0 %v731
    %v1033 = vpop.f32.mrf.mxu0
    %v1034 = vadd.f32 %v945, %v1033
    %v1035 = vpop.f32.mrf.mxu0
    %v1036 = vadd.f32 %v947, %v1035
    %1037 = vdwg.mxu0
    %v1038 = vpack.c.bf16 %v961, %v959
    %v1039 = vpack.c.bf16 %v966, %v964
    %v1040 = vpack.c.bf16 %v971, %v969
    %v1041 = vpack.c.bf16 %v976, %v974
    %v1042 = vpack.c.bf16 %v981, %v979
    %v1043 = vpack.c.bf16 %v986, %v984
    %v1044 = vpack.c.bf16 %v991, %v989
    %v1045 = vpack.c.bf16 %v996, %v994
    %v1046 = vpack.c.bf16 %v1001, %v999
    %v1047 = vpack.c.bf16 %v1006, %v1004
    %v1048 = vpack.c.bf16 %v1011, %v1009
    %v1049 = vpack.c.bf16 %v1016, %v1014
    %v1050 = vpack.c.bf16 %v1021, %v1019
    %v1051 = vpack.c.bf16 %v1026, %v1024
    %v1052 = vpack.c.bf16 %v1031, %v1029
    %v1053 = vpack.c.bf16 %v1036, %v1034
    %v1054 = vld [vmem:[%s2] sm:$0xff]
    %v1055 = vld [vmem:[%s2 + $0x8] sm:$0xff]
    %v1056 = vld [vmem:[%s2 + $0x10] sm:$0xff]
    %v1057 = vld [vmem:[%s2 + $0x18] sm:$0xff]
    %v1058 = vld [vmem:[%s2 + $0x20] sm:$0xff]
    %v1059 = vld [vmem:[%s2 + $0x28] sm:$0xff]
    %v1060 = vld [vmem:[%s2 + $0x30] sm:$0xff]
    %v1061 = vld [vmem:[%s2 + $0x38] sm:$0xff]
    %v1062 = vld [vmem:[%s2 + $0x40] sm:$0xff]
    %v1063 = vld [vmem:[%s2 + $0x48] sm:$0xff]
    %v1064 = vld [vmem:[%s2 + $0x50] sm:$0xff]
    %v1065 = vld [vmem:[%s2 + $0x58] sm:$0xff]
    %v1066 = vld [vmem:[%s2 + $0x60] sm:$0xff]
    %v1067 = vld [vmem:[%s2 + $0x68] sm:$0xff]
    %v1068 = vld [vmem:[%s2 + $0x70] sm:$0xff]
    %v1069 = vld [vmem:[%s2 + $0x78] sm:$0xff]
    %v1070 = vld [vmem:[%s2 + $0x80] sm:$0xff]
    %v1071 = vld [vmem:[%s2 + $0x88] sm:$0xff]
    %v1072 = vld [vmem:[%s2 + $0x90] sm:$0xff]
    %v1073 = vld [vmem:[%s2 + $0x98] sm:$0xff]
    %v1074 = vld [vmem:[%s2 + $0xa0] sm:$0xff]
    %v1075 = vld [vmem:[%s2 + $0xa8] sm:$0xff]
    %v1076 = vld [vmem:[%s2 + $0xb0] sm:$0xff]
    %v1077 = vld [vmem:[%s2 + $0xb8] sm:$0xff]
    %v1078 = vld [vmem:[%s2 + $0xc0] sm:$0xff]
    %v1079 = vld [vmem:[%s2 + $0xc8] sm:$0xff]
    %v1080 = vld [vmem:[%s2 + $0xd0] sm:$0xff]
    %v1081 = vld [vmem:[%s2 + $0xd8] sm:$0xff]
    %v1082 = vld [vmem:[%s2 + $0xe0] sm:$0xff]
    %v1083 = vld [vmem:[%s2 + $0xe8] sm:$0xff]
    %v1084 = vld [vmem:[%s2 + $0xf0] sm:$0xff]
    %v1085 = vld [vmem:[%s2 + $0xf8] sm:$0xff]
    %v1086 = vld [vmem:[%s2 + $0x100] sm:$0xff]
    %v1087 = vld [vmem:[%s2 + $0x108] sm:$0xff]
    %v1088 = vld [vmem:[%s2 + $0x110] sm:$0xff]
    %v1089 = vld [vmem:[%s2 + $0x118] sm:$0xff]
    %v1090 = vld [vmem:[%s2 + $0x120] sm:$0xff]
    %v1091 = vld [vmem:[%s2 + $0x128] sm:$0xff]
    %v1092 = vld [vmem:[%s2 + $0x130] sm:$0xff]
    %v1093 = vld [vmem:[%s2 + $0x138] sm:$0xff]
    %v1094 = vld [vmem:[%s2 + $0x140] sm:$0xff]
    %v1095 = vld [vmem:[%s2 + $0x148] sm:$0xff]
    %v1096 = vld [vmem:[%s2 + $0x150] sm:$0xff]
    %v1097 = vld [vmem:[%s2 + $0x158] sm:$0xff]
    %v1098 = vld [vmem:[%s2 + $0x160] sm:$0xff]
    %v1099 = vld [vmem:[%s2 + $0x168] sm:$0xff]
    %v1100 = vld [vmem:[%s2 + $0x170] sm:$0xff]
    %v1101 = vld [vmem:[%s2 + $0x178] sm:$0xff]
    %v1102 = vld [vmem:[%s2 + $0x180] sm:$0xff]
    %v1103 = vld [vmem:[%s2 + $0x188] sm:$0xff]
    %v1104 = vld [vmem:[%s2 + $0x190] sm:$0xff]
    %v1105 = vld [vmem:[%s2 + $0x198] sm:$0xff]
    %v1106 = vld [vmem:[%s2 + $0x1a0] sm:$0xff]
    %v1107 = vld [vmem:[%s2 + $0x1a8] sm:$0xff]
    %v1108 = vld [vmem:[%s2 + $0x1b0] sm:$0xff]
    %v1109 = vld [vmem:[%s2 + $0x1b8] sm:$0xff]
    %v1110 = vld [vmem:[%s2 + $0x1c0] sm:$0xff]
    %v1111 = vld [vmem:[%s2 + $0x1c8] sm:$0xff]
    %v1112 = vld [vmem:[%s2 + $0x1d0] sm:$0xff]
    %v1113 = vld [vmem:[%s2 + $0x1d8] sm:$0xff]
    %v1114 = vld [vmem:[%s2 + $0x1e0] sm:$0xff]
    %v1115 = vld [vmem:[%s2 + $0x1e8] sm:$0xff]
    %v1116 = vld [vmem:[%s2 + $0x1f0] sm:$0xff]
    %v1117 = vld [vmem:[%s2 + $0x1f8] sm:$0xff]
    %v1118 = vld [vmem:[%s3] sm:$0xff]
    %v1120 = vperm.slane %v1118, 0
    %v1121 = vperm.slane %v1118, 1
    %v1122 = vperm.slane %v1118, 2
    %v1123 = vperm.slane %v1118, 3
    %v1124 = vperm.slane %v1118, 4
    %v1125 = vperm.slane %v1118, 5
    %v1126 = vperm.slane %v1118, 6
    %v1127 = vperm.slane %v1118, 7
    %v1200 = vunpack.c.l.b16 %v1054
    %v1201 = vunpack.c.h.b16 %v1054
    %v1202 = vunpack.c.l.b16 %v1055
    %v1203 = vunpack.c.h.b16 %v1055
    %v1204 = vunpack.c.l.b16 %v1056
    %v1205 = vunpack.c.h.b16 %v1056
    %v1206 = vunpack.c.l.b16 %v1057
    %v1207 = vunpack.c.h.b16 %v1057
    %v1208 = vunpack.c.l.b16 %v1058
    %v1209 = vunpack.c.h.b16 %v1058
    %v1210 = vunpack.c.l.b16 %v1059
    %v1211 = vunpack.c.h.b16 %v1059
    %v1212 = vunpack.c.l.b16 %v1060
    %v1213 = vunpack.c.h.b16 %v1060
    %v1214 = vunpack.c.l.b16 %v1061
    %v1215 = vunpack.c.h.b16 %v1061
    %v1216 = vunpack.c.l.b16 %v1062
    %v1217 = vunpack.c.h.b16 %v1062
    %v1218 = vunpack.c.l.b16 %v1063
    %v1219 = vunpack.c.h.b16 %v1063
    %v1220 = vunpack.c.l.b16 %v1064
    %v1221 = vunpack.c.h.b16 %v1064
    %v1222 = vunpack.c.l.b16 %v1065
    %v1223 = vunpack.c.h.b16 %v1065
    %v1224 = vunpack.c.l.b16 %v1066
    %v1225 = vunpack.c.h.b16 %v1066
    %v1226 = vunpack.c.l.b16 %v1067
    %v1227 = vunpack.c.h.b16 %v1067
    %v1228 = vunpack.c.l.b16 %v1068
    %v1229 = vunpack.c.h.b16 %v1068
    %v1230 = vunpack.c.l.b16 %v1069
    %v1231 = vunpack.c.h.b16 %v1069
    %v1232 = vunpack.c.l.b16 %v1070
    %v1233 = vunpack.c.h.b16 %v1070
    %v1234 = vunpack.c.l.b16 %v1071
    %v1235 = vunpack.c.h.b16 %v1071
    %v1236 = vunpack.c.l.b16 %v1072
    %v1237 = vunpack.c.h.b16 %v1072
    %v1238 = vunpack.c.l.b16 %v1073
    %v1239 = vunpack.c.h.b16 %v1073
    %v1240 = vunpack.c.l.b16 %v1074
    %v1241 = vunpack.c.h.b16 %v1074
    %v1242 = vunpack.c.l.b16 %v1075
    %v1243 = vunpack.c.h.b16 %v1075
    %v1244 = vunpack.c.l.b16 %v1076
    %v1245 = vunpack.c.h.b16 %v1076
    %v1246 = vunpack.c.l.b16 %v1077
    %v1247 = vunpack.c.h.b16 %v1077
    %v1248 = vunpack.c.l.b16 %v1078
    %v1249 = vunpack.c.h.b16 %v1078
    %v1250 = vunpack.c.l.b16 %v1079
    %v1251 = vunpack.c.h.b16 %v1079
    %v1252 = vunpack.c.l.b16 %v1080
    %v1253 = vunpack.c.h.b16 %v1080
    %v1254 = vunpack.c.l.b16 %v1081
    %v1255 = vunpack.c.h.b16 %v1081
    %v1256 = vunpack.c.l.b16 %v1082
    %v1257 = vunpack.c.h.b16 %v1082
    %v1258 = vunpack.c.l.b16 %v1083
    %v1259 = vunpack.c.h.b16 %v1083
    %v1260 = vunpack.c.l.b16 %v1084
    %v1261 = vunpack.c.h.b16 %v1084
    %v1262 = vunpack.c.l.b16 %v1085
    %v1263 = vunpack.c.h.b16 %v1085
    %v1264 = vunpack.c.l.b16 %v1086
    %v1265 = vunpack.c.h.b16 %v1086
    %v1266 = vunpack.c.l.b16 %v1087
    %v1267 = vunpack.c.h.b16 %v1087
    %v1268 = vunpack.c.l.b16 %v1088
    %v1269 = vunpack.c.h.b16 %v1088
    %v1270 = vunpack.c.l.b16 %v1089
    %v1271 = vunpack.c.h.b16 %v1089
    %v1272 = vunpack.c.l.b16 %v1090
    %v1273 = vunpack.c.h.b16 %v1090
    %v1274 = vunpack.c.l.b16 %v1091
    %v1275 = vunpack.c.h.b16 %v1091
    %v1276 = vunpack.c.l.b16 %v1092
    %v1277 = vunpack.c.h.b16 %v1092
    %v1278 = vunpack.c.l.b16 %v1093
    %v1279 = vunpack.c.h.b16 %v1093
    %v1280 = vunpack.c.l.b16 %v1094
    %v1281 = vunpack.c.h.b16 %v1094
    %v1282 = vunpack.c.l.b16 %v1095
    %v1283 = vunpack.c.h.b16 %v1095
    %v1284 = vunpack.c.l.b16 %v1096
    %v1285 = vunpack.c.h.b16 %v1096
    %v1286 = vunpack.c.l.b16 %v1097
    %v1287 = vunpack.c.h.b16 %v1097
    %v1288 = vunpack.c.l.b16 %v1098
    %v1289 = vunpack.c.h.b16 %v1098
    %v1290 = vunpack.c.l.b16 %v1099
    %v1291 = vunpack.c.h.b16 %v1099
    %v1292 = vunpack.c.l.b16 %v1100
    %v1293 = vunpack.c.h.b16 %v1100
    %v1294 = vunpack.c.l.b16 %v1101
    %v1295 = vunpack.c.h.b16 %v1101
    %v1296 = vunpack.c.l.b16 %v1102
    %v1297 = vunpack.c.h.b16 %v1102
    %v1298 = vunpack.c.l.b16 %v1103
    %v1299 = vunpack.c.h.b16 %v1103
    %v1300 = vunpack.c.l.b16 %v1104
    %v1301 = vunpack.c.h.b16 %v1104
    %v1302 = vunpack.c.l.b16 %v1105
    %v1303 = vunpack.c.h.b16 %v1105
    %v1304 = vunpack.c.l.b16 %v1106
    %v1305 = vunpack.c.h.b16 %v1106
    %v1306 = vunpack.c.l.b16 %v1107
    %v1307 = vunpack.c.h.b16 %v1107
    %v1308 = vunpack.c.l.b16 %v1108
    %v1309 = vunpack.c.h.b16 %v1108
    %v1310 = vunpack.c.l.b16 %v1109
    %v1311 = vunpack.c.h.b16 %v1109
    %v1312 = vunpack.c.l.b16 %v1110
    %v1313 = vunpack.c.h.b16 %v1110
    %v1314 = vunpack.c.l.b16 %v1111
    %v1315 = vunpack.c.h.b16 %v1111
    %v1316 = vunpack.c.l.b16 %v1112
    %v1317 = vunpack.c.h.b16 %v1112
    %v1318 = vunpack.c.l.b16 %v1113
    %v1319 = vunpack.c.h.b16 %v1113
    %v1320 = vunpack.c.l.b16 %v1114
    %v1321 = vunpack.c.h.b16 %v1114
    %v1322 = vunpack.c.l.b16 %v1115
    %v1323 = vunpack.c.h.b16 %v1115
    %v1324 = vunpack.c.l.b16 %v1116
    %v1325 = vunpack.c.h.b16 %v1116
    %v1326 = vunpack.c.l.b16 %v1117
    %v1327 = vunpack.c.h.b16 %v1117
    %v1328 = vpack.c.b16 %v1208, %v1200
    %v1329 = vpack.c.b16 %v1209, %v1201
    %v1330 = vpack.c.b16 %v1210, %v1202
    %v1331 = vpack.c.b16 %v1211, %v1203
    %v1332 = vpack.c.b16 %v1212, %v1204
    %v1333 = vpack.c.b16 %v1213, %v1205
    %v1334 = vpack.c.b16 %v1214, %v1206
    %v1335 = vpack.c.b16 %v1215, %v1207
    %v1336 = vpack.c.b16 %v1224, %v1216
    %v1337 = vpack.c.b16 %v1225, %v1217
    %v1338 = vpack.c.b16 %v1226, %v1218
    %v1339 = vpack.c.b16 %v1227, %v1219
    %v1340 = vpack.c.b16 %v1228, %v1220
    %v1341 = vpack.c.b16 %v1229, %v1221
    %v1342 = vpack.c.b16 %v1230, %v1222
    %v1343 = vpack.c.b16 %v1231, %v1223
    %v1344 = vpack.c.b16 %v1240, %v1232
    %v1345 = vpack.c.b16 %v1241, %v1233
    %v1346 = vpack.c.b16 %v1242, %v1234
    %v1347 = vpack.c.b16 %v1243, %v1235
    %v1348 = vpack.c.b16 %v1244, %v1236
    %v1349 = vpack.c.b16 %v1245, %v1237
    %v1350 = vpack.c.b16 %v1246, %v1238
    %v1351 = vpack.c.b16 %v1247, %v1239
    %v1352 = vpack.c.b16 %v1256, %v1248
    %v1353 = vpack.c.b16 %v1257, %v1249
    %v1354 = vpack.c.b16 %v1258, %v1250
    %v1355 = vpack.c.b16 %v1259, %v1251
    %v1356 = vpack.c.b16 %v1260, %v1252
    %v1357 = vpack.c.b16 %v1261, %v1253
    %v1358 = vpack.c.b16 %v1262, %v1254
    %v1359 = vpack.c.b16 %v1263, %v1255
    %v1360 = vpack.c.b16 %v1272, %v1264
    %v1361 = vpack.c.b16 %v1273, %v1265
    %v1362 = vpack.c.b16 %v1274, %v1266
    %v1363 = vpack.c.b16 %v1275, %v1267
    %v1364 = vpack.c.b16 %v1276, %v1268
    %v1365 = vpack.c.b16 %v1277, %v1269
    %v1366 = vpack.c.b16 %v1278, %v1270
    %v1367 = vpack.c.b16 %v1279, %v1271
    %v1368 = vpack.c.b16 %v1288, %v1280
    %v1369 = vpack.c.b16 %v1289, %v1281
    %v1370 = vpack.c.b16 %v1290, %v1282
    %v1371 = vpack.c.b16 %v1291, %v1283
    %v1372 = vpack.c.b16 %v1292, %v1284
    %v1373 = vpack.c.b16 %v1293, %v1285
    %v1374 = vpack.c.b16 %v1294, %v1286
    %v1375 = vpack.c.b16 %v1295, %v1287
    %v1376 = vpack.c.b16 %v1304, %v1296
    %v1377 = vpack.c.b16 %v1305, %v1297
    %v1378 = vpack.c.b16 %v1306, %v1298
    %v1379 = vpack.c.b16 %v1307, %v1299
    %v1380 = vpack.c.b16 %v1308, %v1300
    %v1381 = vpack.c.b16 %v1309, %v1301
    %v1382 = vpack.c.b16 %v1310, %v1302
    %v1383 = vpack.c.b16 %v1311, %v1303
    %v1384 = vpack.c.b16 %v1320, %v1312
    %v1385 = vpack.c.b16 %v1321, %v1313
    %v1386 = vpack.c.b16 %v1322, %v1314
    %v1387 = vpack.c.b16 %v1323, %v1315
    %v1388 = vpack.c.b16 %v1324, %v1316
    %v1389 = vpack.c.b16 %v1325, %v1317
    %v1390 = vpack.c.b16 %v1326, %v1318
    %v1391 = vpack.c.b16 %v1327, %v1319
    %1456 = vmatpush.bf16.msra.mxu0 %v1384
    %1457 = vmatpush.bf16.msra.mxu0 %v1376
    %1458 = vmatpush.bf16.msra.mxu0 %v1368
    %1459 = vmatpush.bf16.msra.mxu0 %v1360
    %1460 = vmatpush.bf16.msra.mxu0 %v1352
    %1461 = vmatpush.bf16.msra.mxu0 %v1344
    %1462 = vmatpush.bf16.msra.mxu0 %v1336
    %1463 = vmatpush.bf16.msra.mxu0 %v1328
    %1464 = vmatmul.bf16.gmra.mxu0 %v1038
    %v1465 = vpop.f32.mrf.mxu0
    %v1466 = vadd.f32 %v1120, %v1465
    %v1467 = vpop.f32.mrf.mxu0
    %v1468 = vadd.f32 %v1120, %v1467
    %1469 = vmatmul.bf16.gmra.mxu0 %v1039
    %v1470 = vpop.f32.mrf.mxu0
    %v1471 = vadd.f32 %v1120, %v1470
    %v1472 = vpop.f32.mrf.mxu0
    %v1473 = vadd.f32 %v1120, %v1472
    %1474 = vmatmul.bf16.gmra.mxu0 %v1040
    %v1475 = vpop.f32.mrf.mxu0
    %v1476 = vadd.f32 %v1120, %v1475
    %v1477 = vpop.f32.mrf.mxu0
    %v1478 = vadd.f32 %v1120, %v1477
    %1479 = vmatmul.bf16.gmra.mxu0 %v1041
    %v1480 = vpop.f32.mrf.mxu0
    %v1481 = vadd.f32 %v1120, %v1480
    %v1482 = vpop.f32.mrf.mxu0
    %v1483 = vadd.f32 %v1120, %v1482
    %1484 = vmatmul.bf16.gmra.mxu0 %v1042
    %v1485 = vpop.f32.mrf.mxu0
    %v1486 = vadd.f32 %v1120, %v1485
    %v1487 = vpop.f32.mrf.mxu0
    %v1488 = vadd.f32 %v1120, %v1487
    %1489 = vmatmul.bf16.gmra.mxu0 %v1043
    %v1490 = vpop.f32.mrf.mxu0
    %v1491 = vadd.f32 %v1120, %v1490
    %v1492 = vpop.f32.mrf.mxu0
    %v1493 = vadd.f32 %v1120, %v1492
    %1494 = vmatmul.bf16.gmra.mxu0 %v1044
    %v1495 = vpop.f32.mrf.mxu0
    %v1496 = vadd.f32 %v1120, %v1495
    %v1497 = vpop.f32.mrf.mxu0
    %v1498 = vadd.f32 %v1120, %v1497
    %1499 = vmatmul.bf16.gmra.mxu0 %v1045
    %v1500 = vpop.f32.mrf.mxu0
    %v1501 = vadd.f32 %v1120, %v1500
    %v1502 = vpop.f32.mrf.mxu0
    %v1503 = vadd.f32 %v1120, %v1502
    %1504 = vmatmul.bf16.gmra.mxu0 %v1046
    %v1505 = vpop.f32.mrf.mxu0
    %v1506 = vadd.f32 %v1120, %v1505
    %v1507 = vpop.f32.mrf.mxu0
    %v1508 = vadd.f32 %v1120, %v1507
    %1509 = vmatmul.bf16.gmra.mxu0 %v1047
    %v1510 = vpop.f32.mrf.mxu0
    %v1511 = vadd.f32 %v1120, %v1510
    %v1512 = vpop.f32.mrf.mxu0
    %v1513 = vadd.f32 %v1120, %v1512
    %1514 = vmatmul.bf16.gmra.mxu0 %v1048
    %v1515 = vpop.f32.mrf.mxu0
    %v1516 = vadd.f32 %v1120, %v1515
    %v1517 = vpop.f32.mrf.mxu0
    %v1518 = vadd.f32 %v1120, %v1517
    %1519 = vmatmul.bf16.gmra.mxu0 %v1049
    %v1520 = vpop.f32.mrf.mxu0
    %v1521 = vadd.f32 %v1120, %v1520
    %v1522 = vpop.f32.mrf.mxu0
    %v1523 = vadd.f32 %v1120, %v1522
    %1524 = vmatmul.bf16.gmra.mxu0 %v1050
    %v1525 = vpop.f32.mrf.mxu0
    %v1526 = vadd.f32 %v1120, %v1525
    %v1527 = vpop.f32.mrf.mxu0
    %v1528 = vadd.f32 %v1120, %v1527
    %1529 = vmatmul.bf16.gmra.mxu0 %v1051
    %v1530 = vpop.f32.mrf.mxu0
    %v1531 = vadd.f32 %v1120, %v1530
    %v1532 = vpop.f32.mrf.mxu0
    %v1533 = vadd.f32 %v1120, %v1532
    %1534 = vmatmul.bf16.gmra.mxu0 %v1052
    %v1535 = vpop.f32.mrf.mxu0
    %v1536 = vadd.f32 %v1120, %v1535
    %v1537 = vpop.f32.mrf.mxu0
    %v1538 = vadd.f32 %v1120, %v1537
    %1539 = vmatmul.bf16.gmra.mxu0 %v1053
    %v1540 = vpop.f32.mrf.mxu0
    %v1541 = vadd.f32 %v1120, %v1540
    %v1542 = vpop.f32.mrf.mxu0
    %v1543 = vadd.f32 %v1120, %v1542
    %1544 = vdwg.mxu0
    %1545 = vmatpush.bf16.msra.mxu0 %v1385
    %1546 = vmatpush.bf16.msra.mxu0 %v1377
    %1547 = vmatpush.bf16.msra.mxu0 %v1369
    %1548 = vmatpush.bf16.msra.mxu0 %v1361
    %1549 = vmatpush.bf16.msra.mxu0 %v1353
    %1550 = vmatpush.bf16.msra.mxu0 %v1345
    %1551 = vmatpush.bf16.msra.mxu0 %v1337
    %1552 = vmatpush.bf16.msra.mxu0 %v1329
    %1553 = vmatmul.bf16.gmra.mxu0 %v1038
    %v1554 = vpop.f32.mrf.mxu0
    %v1555 = vadd.f32 %v1121, %v1554
    %v1556 = vpop.f32.mrf.mxu0
    %v1557 = vadd.f32 %v1121, %v1556
    %1558 = vmatmul.bf16.gmra.mxu0 %v1039
    %v1559 = vpop.f32.mrf.mxu0
    %v1560 = vadd.f32 %v1121, %v1559
    %v1561 = vpop.f32.mrf.mxu0
    %v1562 = vadd.f32 %v1121, %v1561
    %1563 = vmatmul.bf16.gmra.mxu0 %v1040
    %v1564 = vpop.f32.mrf.mxu0
    %v1565 = vadd.f32 %v1121, %v1564
    %v1566 = vpop.f32.mrf.mxu0
    %v1567 = vadd.f32 %v1121, %v1566
    %1568 = vmatmul.bf16.gmra.mxu0 %v1041
    %v1569 = vpop.f32.mrf.mxu0
    %v1570 = vadd.f32 %v1121, %v1569
    %v1571 = vpop.f32.mrf.mxu0
    %v1572 = vadd.f32 %v1121, %v1571
    %1573 = vmatmul.bf16.gmra.mxu0 %v1042
    %v1574 = vpop.f32.mrf.mxu0
    %v1575 = vadd.f32 %v1121, %v1574
    %v1576 = vpop.f32.mrf.mxu0
    %v1577 = vadd.f32 %v1121, %v1576
    %1578 = vmatmul.bf16.gmra.mxu0 %v1043
    %v1579 = vpop.f32.mrf.mxu0
    %v1580 = vadd.f32 %v1121, %v1579
    %v1581 = vpop.f32.mrf.mxu0
    %v1582 = vadd.f32 %v1121, %v1581
    %1583 = vmatmul.bf16.gmra.mxu0 %v1044
    %v1584 = vpop.f32.mrf.mxu0
    %v1585 = vadd.f32 %v1121, %v1584
    %v1586 = vpop.f32.mrf.mxu0
    %v1587 = vadd.f32 %v1121, %v1586
    %1588 = vmatmul.bf16.gmra.mxu0 %v1045
    %v1589 = vpop.f32.mrf.mxu0
    %v1590 = vadd.f32 %v1121, %v1589
    %v1591 = vpop.f32.mrf.mxu0
    %v1592 = vadd.f32 %v1121, %v1591
    %1593 = vmatmul.bf16.gmra.mxu0 %v1046
    %v1594 = vpop.f32.mrf.mxu0
    %v1595 = vadd.f32 %v1121, %v1594
    %v1596 = vpop.f32.mrf.mxu0
    %v1597 = vadd.f32 %v1121, %v1596
    %1598 = vmatmul.bf16.gmra.mxu0 %v1047
    %v1599 = vpop.f32.mrf.mxu0
    %v1600 = vadd.f32 %v1121, %v1599
    %v1601 = vpop.f32.mrf.mxu0
    %v1602 = vadd.f32 %v1121, %v1601
    %1603 = vmatmul.bf16.gmra.mxu0 %v1048
    %v1604 = vpop.f32.mrf.mxu0
    %v1605 = vadd.f32 %v1121, %v1604
    %v1606 = vpop.f32.mrf.mxu0
    %v1607 = vadd.f32 %v1121, %v1606
    %1608 = vmatmul.bf16.gmra.mxu0 %v1049
    %v1609 = vpop.f32.mrf.mxu0
    %v1610 = vadd.f32 %v1121, %v1609
    %v1611 = vpop.f32.mrf.mxu0
    %v1612 = vadd.f32 %v1121, %v1611
    %1613 = vmatmul.bf16.gmra.mxu0 %v1050
    %v1614 = vpop.f32.mrf.mxu0
    %v1615 = vadd.f32 %v1121, %v1614
    %v1616 = vpop.f32.mrf.mxu0
    %v1617 = vadd.f32 %v1121, %v1616
    %1618 = vmatmul.bf16.gmra.mxu0 %v1051
    %v1619 = vpop.f32.mrf.mxu0
    %v1620 = vadd.f32 %v1121, %v1619
    %v1621 = vpop.f32.mrf.mxu0
    %v1622 = vadd.f32 %v1121, %v1621
    %1623 = vmatmul.bf16.gmra.mxu0 %v1052
    %v1624 = vpop.f32.mrf.mxu0
    %v1625 = vadd.f32 %v1121, %v1624
    %v1626 = vpop.f32.mrf.mxu0
    %v1627 = vadd.f32 %v1121, %v1626
    %1628 = vmatmul.bf16.gmra.mxu0 %v1053
    %v1629 = vpop.f32.mrf.mxu0
    %v1630 = vadd.f32 %v1121, %v1629
    %v1631 = vpop.f32.mrf.mxu0
    %v1632 = vadd.f32 %v1121, %v1631
    %1633 = vdwg.mxu0
    %1634 = vmatpush.bf16.msra.mxu0 %v1386
    %1635 = vmatpush.bf16.msra.mxu0 %v1378
    %1636 = vmatpush.bf16.msra.mxu0 %v1370
    %1637 = vmatpush.bf16.msra.mxu0 %v1362
    %1638 = vmatpush.bf16.msra.mxu0 %v1354
    %1639 = vmatpush.bf16.msra.mxu0 %v1346
    %1640 = vmatpush.bf16.msra.mxu0 %v1338
    %1641 = vmatpush.bf16.msra.mxu0 %v1330
    %1642 = vmatmul.bf16.gmra.mxu0 %v1038
    %v1643 = vpop.f32.mrf.mxu0
    %v1644 = vadd.f32 %v1122, %v1643
    %v1645 = vpop.f32.mrf.mxu0
    %v1646 = vadd.f32 %v1122, %v1645
    %1647 = vmatmul.bf16.gmra.mxu0 %v1039
    %v1648 = vpop.f32.mrf.mxu0
    %v1649 = vadd.f32 %v1122, %v1648
    %v1650 = vpop.f32.mrf.mxu0
    %v1651 = vadd.f32 %v1122, %v1650
    %1652 = vmatmul.bf16.gmra.mxu0 %v1040
    %v1653 = vpop.f32.mrf.mxu0
    %v1654 = vadd.f32 %v1122, %v1653
    %v1655 = vpop.f32.mrf.mxu0
    %v1656 = vadd.f32 %v1122, %v1655
    %1657 = vmatmul.bf16.gmra.mxu0 %v1041
    %v1658 = vpop.f32.mrf.mxu0
    %v1659 = vadd.f32 %v1122, %v1658
    %v1660 = vpop.f32.mrf.mxu0
    %v1661 = vadd.f32 %v1122, %v1660
    %1662 = vmatmul.bf16.gmra.mxu0 %v1042
    %v1663 = vpop.f32.mrf.mxu0
    %v1664 = vadd.f32 %v1122, %v1663
    %v1665 = vpop.f32.mrf.mxu0
    %v1666 = vadd.f32 %v1122, %v1665
    %1667 = vmatmul.bf16.gmra.mxu0 %v1043
    %v1668 = vpop.f32.mrf.mxu0
    %v1669 = vadd.f32 %v1122, %v1668
    %v1670 = vpop.f32.mrf.mxu0
    %v1671 = vadd.f32 %v1122, %v1670
    %1672 = vmatmul.bf16.gmra.mxu0 %v1044
    %v1673 = vpop.f32.mrf.mxu0
    %v1674 = vadd.f32 %v1122, %v1673
    %v1675 = vpop.f32.mrf.mxu0
    %v1676 = vadd.f32 %v1122, %v1675
    %1677 = vmatmul.bf16.gmra.mxu0 %v1045
    %v1678 = vpop.f32.mrf.mxu0
    %v1679 = vadd.f32 %v1122, %v1678
    %v1680 = vpop.f32.mrf.mxu0
    %v1681 = vadd.f32 %v1122, %v1680
    %1682 = vmatmul.bf16.gmra.mxu0 %v1046
    %v1683 = vpop.f32.mrf.mxu0
    %v1684 = vadd.f32 %v1122, %v1683
    %v1685 = vpop.f32.mrf.mxu0
    %v1686 = vadd.f32 %v1122, %v1685
    %1687 = vmatmul.bf16.gmra.mxu0 %v1047
    %v1688 = vpop.f32.mrf.mxu0
    %v1689 = vadd.f32 %v1122, %v1688
    %v1690 = vpop.f32.mrf.mxu0
    %v1691 = vadd.f32 %v1122, %v1690
    %1692 = vmatmul.bf16.gmra.mxu0 %v1048
    %v1693 = vpop.f32.mrf.mxu0
    %v1694 = vadd.f32 %v1122, %v1693
    %v1695 = vpop.f32.mrf.mxu0
    %v1696 = vadd.f32 %v1122, %v1695
    %1697 = vmatmul.bf16.gmra.mxu0 %v1049
    %v1698 = vpop.f32.mrf.mxu0
    %v1699 = vadd.f32 %v1122, %v1698
    %v1700 = vpop.f32.mrf.mxu0
    %v1701 = vadd.f32 %v1122, %v1700
    %1702 = vmatmul.bf16.gmra.mxu0 %v1050
    %v1703 = vpop.f32.mrf.mxu0
    %v1704 = vadd.f32 %v1122, %v1703
    %v1705 = vpop.f32.mrf.mxu0
    %v1706 = vadd.f32 %v1122, %v1705
    %1707 = vmatmul.bf16.gmra.mxu0 %v1051
    %v1708 = vpop.f32.mrf.mxu0
    %v1709 = vadd.f32 %v1122, %v1708
    %v1710 = vpop.f32.mrf.mxu0
    %v1711 = vadd.f32 %v1122, %v1710
    %1712 = vmatmul.bf16.gmra.mxu0 %v1052
    %v1713 = vpop.f32.mrf.mxu0
    %v1714 = vadd.f32 %v1122, %v1713
    %v1715 = vpop.f32.mrf.mxu0
    %v1716 = vadd.f32 %v1122, %v1715
    %1717 = vmatmul.bf16.gmra.mxu0 %v1053
    %v1718 = vpop.f32.mrf.mxu0
    %v1719 = vadd.f32 %v1122, %v1718
    %v1720 = vpop.f32.mrf.mxu0
    %v1721 = vadd.f32 %v1122, %v1720
    %1722 = vdwg.mxu0
    %1723 = vmatpush.bf16.msra.mxu0 %v1387
    %1724 = vmatpush.bf16.msra.mxu0 %v1379
    %1725 = vmatpush.bf16.msra.mxu0 %v1371
    %1726 = vmatpush.bf16.msra.mxu0 %v1363
    %1727 = vmatpush.bf16.msra.mxu0 %v1355
    %1728 = vmatpush.bf16.msra.mxu0 %v1347
    %1729 = vmatpush.bf16.msra.mxu0 %v1339
    %1730 = vmatpush.bf16.msra.mxu0 %v1331
    %1731 = vmatmul.bf16.gmra.mxu0 %v1038
    %v1732 = vpop.f32.mrf.mxu0
    %v1733 = vadd.f32 %v1123, %v1732
    %v1734 = vpop.f32.mrf.mxu0
    %v1735 = vadd.f32 %v1123, %v1734
    %1736 = vmatmul.bf16.gmra.mxu0 %v1039
    %v1737 = vpop.f32.mrf.mxu0
    %v1738 = vadd.f32 %v1123, %v1737
    %v1739 = vpop.f32.mrf.mxu0
    %v1740 = vadd.f32 %v1123, %v1739
    %1741 = vmatmul.bf16.gmra.mxu0 %v1040
    %v1742 = vpop.f32.mrf.mxu0
    %v1743 = vadd.f32 %v1123, %v1742
    %v1744 = vpop.f32.mrf.mxu0
    %v1745 = vadd.f32 %v1123, %v1744
    %1746 = vmatmul.bf16.gmra.mxu0 %v1041
    %v1747 = vpop.f32.mrf.mxu0
    %v1748 = vadd.f32 %v1123, %v1747
    %v1749 = vpop.f32.mrf.mxu0
    %v1750 = vadd.f32 %v1123, %v1749
    %1751 = vmatmul.bf16.gmra.mxu0 %v1042
    %v1752 = vpop.f32.mrf.mxu0
    %v1753 = vadd.f32 %v1123, %v1752
    %v1754 = vpop.f32.mrf.mxu0
    %v1755 = vadd.f32 %v1123, %v1754
    %1756 = vmatmul.bf16.gmra.mxu0 %v1043
    %v1757 = vpop.f32.mrf.mxu0
    %v1758 = vadd.f32 %v1123, %v1757
    %v1759 = vpop.f32.mrf.mxu0
    %v1760 = vadd.f32 %v1123, %v1759
    %1761 = vmatmul.bf16.gmra.mxu0 %v1044
    %v1762 = vpop.f32.mrf.mxu0
    %v1763 = vadd.f32 %v1123, %v1762
    %v1764 = vpop.f32.mrf.mxu0
    %v1765 = vadd.f32 %v1123, %v1764
    %1766 = vmatmul.bf16.gmra.mxu0 %v1045
    %v1767 = vpop.f32.mrf.mxu0
    %v1768 = vadd.f32 %v1123, %v1767
    %v1769 = vpop.f32.mrf.mxu0
    %v1770 = vadd.f32 %v1123, %v1769
    %1771 = vmatmul.bf16.gmra.mxu0 %v1046
    %v1772 = vpop.f32.mrf.mxu0
    %v1773 = vadd.f32 %v1123, %v1772
    %v1774 = vpop.f32.mrf.mxu0
    %v1775 = vadd.f32 %v1123, %v1774
    %1776 = vmatmul.bf16.gmra.mxu0 %v1047
    %v1777 = vpop.f32.mrf.mxu0
    %v1778 = vadd.f32 %v1123, %v1777
    %v1779 = vpop.f32.mrf.mxu0
    %v1780 = vadd.f32 %v1123, %v1779
    %1781 = vmatmul.bf16.gmra.mxu0 %v1048
    %v1782 = vpop.f32.mrf.mxu0
    %v1783 = vadd.f32 %v1123, %v1782
    %v1784 = vpop.f32.mrf.mxu0
    %v1785 = vadd.f32 %v1123, %v1784
    %1786 = vmatmul.bf16.gmra.mxu0 %v1049
    %v1787 = vpop.f32.mrf.mxu0
    %v1788 = vadd.f32 %v1123, %v1787
    %v1789 = vpop.f32.mrf.mxu0
    %v1790 = vadd.f32 %v1123, %v1789
    %1791 = vmatmul.bf16.gmra.mxu0 %v1050
    %v1792 = vpop.f32.mrf.mxu0
    %v1793 = vadd.f32 %v1123, %v1792
    %v1794 = vpop.f32.mrf.mxu0
    %v1795 = vadd.f32 %v1123, %v1794
    %1796 = vmatmul.bf16.gmra.mxu0 %v1051
    %v1797 = vpop.f32.mrf.mxu0
    %v1798 = vadd.f32 %v1123, %v1797
    %v1799 = vpop.f32.mrf.mxu0
    %v1800 = vadd.f32 %v1123, %v1799
    %1801 = vmatmul.bf16.gmra.mxu0 %v1052
    %v1802 = vpop.f32.mrf.mxu0
    %v1803 = vadd.f32 %v1123, %v1802
    %v1804 = vpop.f32.mrf.mxu0
    %v1805 = vadd.f32 %v1123, %v1804
    %1806 = vmatmul.bf16.gmra.mxu0 %v1053
    %v1807 = vpop.f32.mrf.mxu0
    %v1808 = vadd.f32 %v1123, %v1807
    %v1809 = vpop.f32.mrf.mxu0
    %v1810 = vadd.f32 %v1123, %v1809
    %1811 = vdwg.mxu0
    %1812 = vmatpush.bf16.msra.mxu0 %v1388
    %1813 = vmatpush.bf16.msra.mxu0 %v1380
    %1814 = vmatpush.bf16.msra.mxu0 %v1372
    %1815 = vmatpush.bf16.msra.mxu0 %v1364
    %1816 = vmatpush.bf16.msra.mxu0 %v1356
    %1817 = vmatpush.bf16.msra.mxu0 %v1348
    %1818 = vmatpush.bf16.msra.mxu0 %v1340
    %1819 = vmatpush.bf16.msra.mxu0 %v1332
    %1820 = vmatmul.bf16.gmra.mxu0 %v1038
    %v1821 = vpop.f32.mrf.mxu0
    %v1822 = vadd.f32 %v1124, %v1821
    %v1823 = vpop.f32.mrf.mxu0
    %v1824 = vadd.f32 %v1124, %v1823
    %1825 = vmatmul.bf16.gmra.mxu0 %v1039
    %v1826 = vpop.f32.mrf.mxu0
    %v1827 = vadd.f32 %v1124, %v1826
    %v1828 = vpop.f32.mrf.mxu0
    %v1829 = vadd.f32 %v1124, %v1828
    %1830 = vmatmul.bf16.gmra.mxu0 %v1040
    %v1831 = vpop.f32.mrf.mxu0
    %v1832 = vadd.f32 %v1124, %v1831
    %v1833 = vpop.f32.mrf.mxu0
    %v1834 = vadd.f32 %v1124, %v1833
    %1835 = vmatmul.bf16.gmra.mxu0 %v1041
    %v1836 = vpop.f32.mrf.mxu0
    %v1837 = vadd.f32 %v1124, %v1836
    %v1838 = vpop.f32.mrf.mxu0
    %v1839 = vadd.f32 %v1124, %v1838
    %1840 = vmatmul.bf16.gmra.mxu0 %v1042
    %v1841 = vpop.f32.mrf.mxu0
    %v1842 = vadd.f32 %v1124, %v1841
    %v1843 = vpop.f32.mrf.mxu0
    %v1844 = vadd.f32 %v1124, %v1843
    %1845 = vmatmul.bf16.gmra.mxu0 %v1043
    %v1846 = vpop.f32.mrf.mxu0
    %v1847 = vadd.f32 %v1124, %v1846
    %v1848 = vpop.f32.mrf.mxu0
    %v1849 = vadd.f32 %v1124, %v1848
    %1850 = vmatmul.bf16.gmra.mxu0 %v1044
    %v1851 = vpop.f32.mrf.mxu0
    %v1852 = vadd.f32 %v1124, %v1851
    %v1853 = vpop.f32.mrf.mxu0
    %v1854 = vadd.f32 %v1124, %v1853
    %1855 = vmatmul.bf16.gmra.mxu0 %v1045
    %v1856 = vpop.f32.mrf.mxu0
    %v1857 = vadd.f32 %v1124, %v1856
    %v1858 = vpop.f32.mrf.mxu0
    %v1859 = vadd.f32 %v1124, %v1858
    %1860 = vmatmul.bf16.gmra.mxu0 %v1046
    %v1861 = vpop.f32.mrf.mxu0
    %v1862 = vadd.f32 %v1124, %v1861
    %v1863 = vpop.f32.mrf.mxu0
    %v1864 = vadd.f32 %v1124, %v1863
    %1865 = vmatmul.bf16.gmra.mxu0 %v1047
    %v1866 = vpop.f32.mrf.mxu0
    %v1867 = vadd.f32 %v1124, %v1866
    %v1868 = vpop.f32.mrf.mxu0
    %v1869 = vadd.f32 %v1124, %v1868
    %1870 = vmatmul.bf16.gmra.mxu0 %v1048
    %v1871 = vpop.f32.mrf.mxu0
    %v1872 = vadd.f32 %v1124, %v1871
    %v1873 = vpop.f32.mrf.mxu0
    %v1874 = vadd.f32 %v1124, %v1873
    %1875 = vmatmul.bf16.gmra.mxu0 %v1049
    %v1876 = vpop.f32.mrf.mxu0
    %v1877 = vadd.f32 %v1124, %v1876
    %v1878 = vpop.f32.mrf.mxu0
    %v1879 = vadd.f32 %v1124, %v1878
    %1880 = vmatmul.bf16.gmra.mxu0 %v1050
    %v1881 = vpop.f32.mrf.mxu0
    %v1882 = vadd.f32 %v1124, %v1881
    %v1883 = vpop.f32.mrf.mxu0
    %v1884 = vadd.f32 %v1124, %v1883
    %1885 = vmatmul.bf16.gmra.mxu0 %v1051
    %v1886 = vpop.f32.mrf.mxu0
    %v1887 = vadd.f32 %v1124, %v1886
    %v1888 = vpop.f32.mrf.mxu0
    %v1889 = vadd.f32 %v1124, %v1888
    %1890 = vmatmul.bf16.gmra.mxu0 %v1052
    %v1891 = vpop.f32.mrf.mxu0
    %v1892 = vadd.f32 %v1124, %v1891
    %v1893 = vpop.f32.mrf.mxu0
    %v1894 = vadd.f32 %v1124, %v1893
    %1895 = vmatmul.bf16.gmra.mxu0 %v1053
    %v1896 = vpop.f32.mrf.mxu0
    %v1897 = vadd.f32 %v1124, %v1896
    %v1898 = vpop.f32.mrf.mxu0
    %v1899 = vadd.f32 %v1124, %v1898
    %1900 = vdwg.mxu0
    %1901 = vmatpush.bf16.msra.mxu0 %v1389
    %1902 = vmatpush.bf16.msra.mxu0 %v1381
    %1903 = vmatpush.bf16.msra.mxu0 %v1373
    %1904 = vmatpush.bf16.msra.mxu0 %v1365
    %1905 = vmatpush.bf16.msra.mxu0 %v1357
    %1906 = vmatpush.bf16.msra.mxu0 %v1349
    %1907 = vmatpush.bf16.msra.mxu0 %v1341
    %1908 = vmatpush.bf16.msra.mxu0 %v1333
    %1909 = vmatmul.bf16.gmra.mxu0 %v1038
    %v1910 = vpop.f32.mrf.mxu0
    %v1911 = vadd.f32 %v1125, %v1910
    %v1912 = vpop.f32.mrf.mxu0
    %v1913 = vadd.f32 %v1125, %v1912
    %1914 = vmatmul.bf16.gmra.mxu0 %v1039
    %v1915 = vpop.f32.mrf.mxu0
    %v1916 = vadd.f32 %v1125, %v1915
    %v1917 = vpop.f32.mrf.mxu0
    %v1918 = vadd.f32 %v1125, %v1917
    %1919 = vmatmul.bf16.gmra.mxu0 %v1040
    %v1920 = vpop.f32.mrf.mxu0
    %v1921 = vadd.f32 %v1125, %v1920
    %v1922 = vpop.f32.mrf.mxu0
    %v1923 = vadd.f32 %v1125, %v1922
    %1924 = vmatmul.bf16.gmra.mxu0 %v1041
    %v1925 = vpop.f32.mrf.mxu0
    %v1926 = vadd.f32 %v1125, %v1925
    %v1927 = vpop.f32.mrf.mxu0
    %v1928 = vadd.f32 %v1125, %v1927
    %1929 = vmatmul.bf16.gmra.mxu0 %v1042
    %v1930 = vpop.f32.mrf.mxu0
    %v1931 = vadd.f32 %v1125, %v1930
    %v1932 = vpop.f32.mrf.mxu0
    %v1933 = vadd.f32 %v1125, %v1932
    %1934 = vmatmul.bf16.gmra.mxu0 %v1043
    %v1935 = vpop.f32.mrf.mxu0
    %v1936 = vadd.f32 %v1125, %v1935
    %v1937 = vpop.f32.mrf.mxu0
    %v1938 = vadd.f32 %v1125, %v1937
    %1939 = vmatmul.bf16.gmra.mxu0 %v1044
    %v1940 = vpop.f32.mrf.mxu0
    %v1941 = vadd.f32 %v1125, %v1940
    %v1942 = vpop.f32.mrf.mxu0
    %v1943 = vadd.f32 %v1125, %v1942
    %1944 = vmatmul.bf16.gmra.mxu0 %v1045
    %v1945 = vpop.f32.mrf.mxu0
    %v1946 = vadd.f32 %v1125, %v1945
    %v1947 = vpop.f32.mrf.mxu0
    %v1948 = vadd.f32 %v1125, %v1947
    %1949 = vmatmul.bf16.gmra.mxu0 %v1046
    %v1950 = vpop.f32.mrf.mxu0
    %v1951 = vadd.f32 %v1125, %v1950
    %v1952 = vpop.f32.mrf.mxu0
    %v1953 = vadd.f32 %v1125, %v1952
    %1954 = vmatmul.bf16.gmra.mxu0 %v1047
    %v1955 = vpop.f32.mrf.mxu0
    %v1956 = vadd.f32 %v1125, %v1955
    %v1957 = vpop.f32.mrf.mxu0
    %v1958 = vadd.f32 %v1125, %v1957
    %1959 = vmatmul.bf16.gmra.mxu0 %v1048
    %v1960 = vpop.f32.mrf.mxu0
    %v1961 = vadd.f32 %v1125, %v1960
    %v1962 = vpop.f32.mrf.mxu0
    %v1963 = vadd.f32 %v1125, %v1962
    %1964 = vmatmul.bf16.gmra.mxu0 %v1049
    %v1965 = vpop.f32.mrf.mxu0
    %v1966 = vadd.f32 %v1125, %v1965
    %v1967 = vpop.f32.mrf.mxu0
    %v1968 = vadd.f32 %v1125, %v1967
    %1969 = vmatmul.bf16.gmra.mxu0 %v1050
    %v1970 = vpop.f32.mrf.mxu0
    %v1971 = vadd.f32 %v1125, %v1970
    %v1972 = vpop.f32.mrf.mxu0
    %v1973 = vadd.f32 %v1125, %v1972
    %1974 = vmatmul.bf16.gmra.mxu0 %v1051
    %v1975 = vpop.f32.mrf.mxu0
    %v1976 = vadd.f32 %v1125, %v1975
    %v1977 = vpop.f32.mrf.mxu0
    %v1978 = vadd.f32 %v1125, %v1977
    %1979 = vmatmul.bf16.gmra.mxu0 %v1052
    %v1980 = vpop.f32.mrf.mxu0
    %v1981 = vadd.f32 %v1125, %v1980
    %v1982 = vpop.f32.mrf.mxu0
    %v1983 = vadd.f32 %v1125, %v1982
    %1984 = vmatmul.bf16.gmra.mxu0 %v1053
    %v1985 = vpop.f32.mrf.mxu0
    %v1986 = vadd.f32 %v1125, %v1985
    %v1987 = vpop.f32.mrf.mxu0
    %v1988 = vadd.f32 %v1125, %v1987
    %1989 = vdwg.mxu0
    %1990 = vmatpush.bf16.msra.mxu0 %v1390
    %1991 = vmatpush.bf16.msra.mxu0 %v1382
    %1992 = vmatpush.bf16.msra.mxu0 %v1374
    %1993 = vmatpush.bf16.msra.mxu0 %v1366
    %1994 = vmatpush.bf16.msra.mxu0 %v1358
    %1995 = vmatpush.bf16.msra.mxu0 %v1350
    %1996 = vmatpush.bf16.msra.mxu0 %v1342
    %1997 = vmatpush.bf16.msra.mxu0 %v1334
    %1998 = vmatmul.bf16.gmra.mxu0 %v1038
    %v1999 = vpop.f32.mrf.mxu0
    %v2000 = vadd.f32 %v1126, %v1999
    %v2001 = vpop.f32.mrf.mxu0
    %v2002 = vadd.f32 %v1126, %v2001
    %2003 = vmatmul.bf16.gmra.mxu0 %v1039
    %v2004 = vpop.f32.mrf.mxu0
    %v2005 = vadd.f32 %v1126, %v2004
    %v2006 = vpop.f32.mrf.mxu0
    %v2007 = vadd.f32 %v1126, %v2006
    %2008 = vmatmul.bf16.gmra.mxu0 %v1040
    %v2009 = vpop.f32.mrf.mxu0
    %v2010 = vadd.f32 %v1126, %v2009
    %v2011 = vpop.f32.mrf.mxu0
    %v2012 = vadd.f32 %v1126, %v2011
    %2013 = vmatmul.bf16.gmra.mxu0 %v1041
    %v2014 = vpop.f32.mrf.mxu0
    %v2015 = vadd.f32 %v1126, %v2014
    %v2016 = vpop.f32.mrf.mxu0
    %v2017 = vadd.f32 %v1126, %v2016
    %2018 = vmatmul.bf16.gmra.mxu0 %v1042
    %v2019 = vpop.f32.mrf.mxu0
    %v2020 = vadd.f32 %v1126, %v2019
    %v2021 = vpop.f32.mrf.mxu0
    %v2022 = vadd.f32 %v1126, %v2021
    %2023 = vmatmul.bf16.gmra.mxu0 %v1043
    %v2024 = vpop.f32.mrf.mxu0
    %v2025 = vadd.f32 %v1126, %v2024
    %v2026 = vpop.f32.mrf.mxu0
    %v2027 = vadd.f32 %v1126, %v2026
    %2028 = vmatmul.bf16.gmra.mxu0 %v1044
    %v2029 = vpop.f32.mrf.mxu0
    %v2030 = vadd.f32 %v1126, %v2029
    %v2031 = vpop.f32.mrf.mxu0
    %v2032 = vadd.f32 %v1126, %v2031
    %2033 = vmatmul.bf16.gmra.mxu0 %v1045
    %v2034 = vpop.f32.mrf.mxu0
    %v2035 = vadd.f32 %v1126, %v2034
    %v2036 = vpop.f32.mrf.mxu0
    %v2037 = vadd.f32 %v1126, %v2036
    %2038 = vmatmul.bf16.gmra.mxu0 %v1046
    %v2039 = vpop.f32.mrf.mxu0
    %v2040 = vadd.f32 %v1126, %v2039
    %v2041 = vpop.f32.mrf.mxu0
    %v2042 = vadd.f32 %v1126, %v2041
    %2043 = vmatmul.bf16.gmra.mxu0 %v1047
    %v2044 = vpop.f32.mrf.mxu0
    %v2045 = vadd.f32 %v1126, %v2044
    %v2046 = vpop.f32.mrf.mxu0
    %v2047 = vadd.f32 %v1126, %v2046
    %2048 = vmatmul.bf16.gmra.mxu0 %v1048
    %v2049 = vpop.f32.mrf.mxu0
    %v2050 = vadd.f32 %v1126, %v2049
    %v2051 = vpop.f32.mrf.mxu0
    %v2052 = vadd.f32 %v1126, %v2051
    %2053 = vmatmul.bf16.gmra.mxu0 %v1049
    %v2054 = vpop.f32.mrf.mxu0
    %v2055 = vadd.f32 %v1126, %v2054
    %v2056 = vpop.f32.mrf.mxu0
    %v2057 = vadd.f32 %v1126, %v2056
    %2058 = vmatmul.bf16.gmra.mxu0 %v1050
    %v2059 = vpop.f32.mrf.mxu0
    %v2060 = vadd.f32 %v1126, %v2059
    %v2061 = vpop.f32.mrf.mxu0
    %v2062 = vadd.f32 %v1126, %v2061
    %2063 = vmatmul.bf16.gmra.mxu0 %v1051
    %v2064 = vpop.f32.mrf.mxu0
    %v2065 = vadd.f32 %v1126, %v2064
    %v2066 = vpop.f32.mrf.mxu0
    %v2067 = vadd.f32 %v1126, %v2066
    %2068 = vmatmul.bf16.gmra.mxu0 %v1052
    %v2069 = vpop.f32.mrf.mxu0
    %v2070 = vadd.f32 %v1126, %v2069
    %v2071 = vpop.f32.mrf.mxu0
    %v2072 = vadd.f32 %v1126, %v2071
    %2073 = vmatmul.bf16.gmra.mxu0 %v1053
    %v2074 = vpop.f32.mrf.mxu0
    %v2075 = vadd.f32 %v1126, %v2074
    %v2076 = vpop.f32.mrf.mxu0
    %v2077 = vadd.f32 %v1126, %v2076
    %2078 = vdwg.mxu0
    %2079 = vmatpush.bf16.msra.mxu0 %v1391
    %2080 = vmatpush.bf16.msra.mxu0 %v1383
    %2081 = vmatpush.bf16.msra.mxu0 %v1375
    %2082 = vmatpush.bf16.msra.mxu0 %v1367
    %2083 = vmatpush.bf16.msra.mxu0 %v1359
    %2084 = vmatpush.bf16.msra.mxu0 %v1351
    %2085 = vmatpush.bf16.msra.mxu0 %v1343
    %2086 = vmatpush.bf16.msra.mxu0 %v1335
    %2087 = vmatmul.bf16.gmra.mxu0 %v1038
    %v2088 = vpop.f32.mrf.mxu0
    %v2089 = vadd.f32 %v1127, %v2088
    %v2090 = vpop.f32.mrf.mxu0
    %v2091 = vadd.f32 %v1127, %v2090
    %2092 = vmatmul.bf16.gmra.mxu0 %v1039
    %v2093 = vpop.f32.mrf.mxu0
    %v2094 = vadd.f32 %v1127, %v2093
    %v2095 = vpop.f32.mrf.mxu0
    %v2096 = vadd.f32 %v1127, %v2095
    %2097 = vmatmul.bf16.gmra.mxu0 %v1040
    %v2098 = vpop.f32.mrf.mxu0
    %v2099 = vadd.f32 %v1127, %v2098
    %v2100 = vpop.f32.mrf.mxu0
    %v2101 = vadd.f32 %v1127, %v2100
    %2102 = vmatmul.bf16.gmra.mxu0 %v1041
    %v2103 = vpop.f32.mrf.mxu0
    %v2104 = vadd.f32 %v1127, %v2103
    %v2105 = vpop.f32.mrf.mxu0
    %v2106 = vadd.f32 %v1127, %v2105
    %2107 = vmatmul.bf16.gmra.mxu0 %v1042
    %v2108 = vpop.f32.mrf.mxu0
    %v2109 = vadd.f32 %v1127, %v2108
    %v2110 = vpop.f32.mrf.mxu0
    %v2111 = vadd.f32 %v1127, %v2110
    %2112 = vmatmul.bf16.gmra.mxu0 %v1043
    %v2113 = vpop.f32.mrf.mxu0
    %v2114 = vadd.f32 %v1127, %v2113
    %v2115 = vpop.f32.mrf.mxu0
    %v2116 = vadd.f32 %v1127, %v2115
    %2117 = vmatmul.bf16.gmra.mxu0 %v1044
    %v2118 = vpop.f32.mrf.mxu0
    %v2119 = vadd.f32 %v1127, %v2118
    %v2120 = vpop.f32.mrf.mxu0
    %v2121 = vadd.f32 %v1127, %v2120
    %2122 = vmatmul.bf16.gmra.mxu0 %v1045
    %v2123 = vpop.f32.mrf.mxu0
    %v2124 = vadd.f32 %v1127, %v2123
    %v2125 = vpop.f32.mrf.mxu0
    %v2126 = vadd.f32 %v1127, %v2125
    %2127 = vmatmul.bf16.gmra.mxu0 %v1046
    %v2128 = vpop.f32.mrf.mxu0
    %v2129 = vadd.f32 %v1127, %v2128
    %v2130 = vpop.f32.mrf.mxu0
    %v2131 = vadd.f32 %v1127, %v2130
    %2132 = vmatmul.bf16.gmra.mxu0 %v1047
    %v2133 = vpop.f32.mrf.mxu0
    %v2134 = vadd.f32 %v1127, %v2133
    %v2135 = vpop.f32.mrf.mxu0
    %v2136 = vadd.f32 %v1127, %v2135
    %2137 = vmatmul.bf16.gmra.mxu0 %v1048
    %v2138 = vpop.f32.mrf.mxu0
    %v2139 = vadd.f32 %v1127, %v2138
    %v2140 = vpop.f32.mrf.mxu0
    %v2141 = vadd.f32 %v1127, %v2140
    %2142 = vmatmul.bf16.gmra.mxu0 %v1049
    %v2143 = vpop.f32.mrf.mxu0
    %v2144 = vadd.f32 %v1127, %v2143
    %v2145 = vpop.f32.mrf.mxu0
    %v2146 = vadd.f32 %v1127, %v2145
    %2147 = vmatmul.bf16.gmra.mxu0 %v1050
    %v2148 = vpop.f32.mrf.mxu0
    %v2149 = vadd.f32 %v1127, %v2148
    %v2150 = vpop.f32.mrf.mxu0
    %v2151 = vadd.f32 %v1127, %v2150
    %2152 = vmatmul.bf16.gmra.mxu0 %v1051
    %v2153 = vpop.f32.mrf.mxu0
    %v2154 = vadd.f32 %v1127, %v2153
    %v2155 = vpop.f32.mrf.mxu0
    %v2156 = vadd.f32 %v1127, %v2155
    %2157 = vmatmul.bf16.gmra.mxu0 %v1052
    %v2158 = vpop.f32.mrf.mxu0
    %v2159 = vadd.f32 %v1127, %v2158
    %v2160 = vpop.f32.mrf.mxu0
    %v2161 = vadd.f32 %v1127, %v2160
    %2162 = vmatmul.bf16.gmra.mxu0 %v1053
    %v2163 = vpop.f32.mrf.mxu0
    %v2164 = vadd.f32 %v1127, %v2163
    %v2165 = vpop.f32.mrf.mxu0
    %v2166 = vadd.f32 %v1127, %v2165
    %2167 = vdwg.mxu0
    %2168 = vst [vmem:[#allocation2] sm:$0xff] %v1466
    %2169 = vst [vmem:[#allocation2 + $0x8] sm:$0xff] %v1555
    %2170 = vst [vmem:[#allocation2 + $0x10] sm:$0xff] %v1644
    %2171 = vst [vmem:[#allocation2 + $0x18] sm:$0xff] %v1733
    %2172 = vst [vmem:[#allocation2 + $0x20] sm:$0xff] %v1822
    %2173 = vst [vmem:[#allocation2 + $0x28] sm:$0xff] %v1911
    %2174 = vst [vmem:[#allocation2 + $0x30] sm:$0xff] %v2000
    %2175 = vst [vmem:[#allocation2 + $0x38] sm:$0xff] %v2089
    %2176 = vst [vmem:[#allocation2 + $0x40] sm:$0xff] %v1468
    %2177 = vst [vmem:[#allocation2 + $0x48] sm:$0xff] %v1557
    %2178 = vst [vmem:[#allocation2 + $0x50] sm:$0xff] %v1646
    %2179 = vst [vmem:[#allocation2 + $0x58] sm:$0xff] %v1735
    %2180 = vst [vmem:[#allocation2 + $0x60] sm:$0xff] %v1824
    %2181 = vst [vmem:[#allocation2 + $0x68] sm:$0xff] %v1913
    %2182 = vst [vmem:[#allocation2 + $0x70] sm:$0xff] %v2002
    %2183 = vst [vmem:[#allocation2 + $0x78] sm:$0xff] %v2091
    %2184 = vst [vmem:[#allocation2 + $0x80] sm:$0xff] %v1471
    %2185 = vst [vmem:[#allocation2 + $0x88] sm:$0xff] %v1560
    %2186 = vst [vmem:[#allocation2 + $0x90] sm:$0xff] %v1649
    %2187 = vst [vmem:[#allocation2 + $0x98] sm:$0xff] %v1738
    %2188 = vst [vmem:[#allocation2 + $0xa0] sm:$0xff] %v1827
    %2189 = vst [vmem:[#allocation2 + $0xa8] sm:$0xff] %v1916
    %2190 = vst [vmem:[#allocation2 + $0xb0] sm:$0xff] %v2005
    %2191 = vst [vmem:[#allocation2 + $0xb8] sm:$0xff] %v2094
    %2192 = vst [vmem:[#allocation2 + $0xc0] sm:$0xff] %v1473
    %2193 = vst [vmem:[#allocation2 + $0xc8] sm:$0xff] %v1562
    %2194 = vst [vmem:[#allocation2 + $0xd0] sm:$0xff] %v1651
    %2195 = vst [vmem:[#allocation2 + $0xd8] sm:$0xff] %v1740
    %2196 = vst [vmem:[#allocation2 + $0xe0] sm:$0xff] %v1829
    %2197 = vst [vmem:[#allocation2 + $0xe8] sm:$0xff] %v1918
    %2198 = vst [vmem:[#allocation2 + $0xf0] sm:$0xff] %v2007
    %2199 = vst [vmem:[#allocation2 + $0xf8] sm:$0xff] %v2096
    %2200 = vst [vmem:[#allocation2 + $0x100] sm:$0xff] %v1476
    %2201 = vst [vmem:[#allocation2 + $0x108] sm:$0xff] %v1565
    %2202 = vst [vmem:[#allocation2 + $0x110] sm:$0xff] %v1654
    %2203 = vst [vmem:[#allocation2 + $0x118] sm:$0xff] %v1743
    %2204 = vst [vmem:[#allocation2 + $0x120] sm:$0xff] %v1832
    %2205 = vst [vmem:[#allocation2 + $0x128] sm:$0xff] %v1921
    %2206 = vst [vmem:[#allocation2 + $0x130] sm:$0xff] %v2010
    %2207 = vst [vmem:[#allocation2 + $0x138] sm:$0xff] %v2099
    %2208 = vst [vmem:[#allocation2 + $0x140] sm:$0xff] %v1478
    %2209 = vst [vmem:[#allocation2 + $0x148] sm:$0xff] %v1567
    %2210 = vst [vmem:[#allocation2 + $0x150] sm:$0xff] %v1656
    %2211 = vst [vmem:[#allocation2 + $0x158] sm:$0xff] %v1745
    %2212 = vst [vmem:[#allocation2 + $0x160] sm:$0xff] %v1834
    %2213 = vst [vmem:[#allocation2 + $0x168] sm:$0xff] %v1923
    %2214 = vst [vmem:[#allocation2 + $0x170] sm:$0xff] %v2012
    %2215 = vst [vmem:[#allocation2 + $0x178] sm:$0xff] %v2101
    %2216 = vst [vmem:[#allocation2 + $0x180] sm:$0xff] %v1481
    %2217 = vst [vmem:[#allocation2 + $0x188] sm:$0xff] %v1570
    %2218 = vst [vmem:[#allocation2 + $0x190] sm:$0xff] %v1659
    %2219 = vst [vmem:[#allocation2 + $0x198] sm:$0xff] %v1748
    %2220 = vst [vmem:[#allocation2 + $0x1a0] sm:$0xff] %v1837
    %2221 = vst [vmem:[#allocation2 + $0x1a8] sm:$0xff] %v1926
    %2222 = vst [vmem:[#allocation2 + $0x1b0] sm:$0xff] %v2015
    %2223 = vst [vmem:[#allocation2 + $0x1b8] sm:$0xff] %v2104
    %2224 = vst [vmem:[#allocation2 + $0x1c0] sm:$0xff] %v1483
    %2225 = vst [vmem:[#allocation2 + $0x1c8] sm:$0xff] %v1572
    %2226 = vst [vmem:[#allocation2 + $0x1d0] sm:$0xff] %v1661
    %2227 = vst [vmem:[#allocation2 + $0x1d8] sm:$0xff] %v1750
    %2228 = vst [vmem:[#allocation2 + $0x1e0] sm:$0xff] %v1839
    %2229 = vst [vmem:[#allocation2 + $0x1e8] sm:$0xff] %v1928
    %2230 = vst [vmem:[#allocation2 + $0x1f0] sm:$0xff] %v2017
    %2231 = vst [vmem:[#allocation2 + $0x1f8] sm:$0xff] %v2106
    %2232 = vst [vmem:[#allocation2 + $0x200] sm:$0xff] %v1486
    %2233 = vst [vmem:[#allocation2 + $0x208] sm:$0xff] %v1575
    %2234 = vst [vmem:[#allocation2 + $0x210] sm:$0xff] %v1664
    %2235 = vst [vmem:[#allocation2 + $0x218] sm:$0xff] %v1753
    %2236 = vst [vmem:[#allocation2 + $0x220] sm:$0xff] %v1842
    %2237 = vst [vmem:[#allocation2 + $0x228] sm:$0xff] %v1931
    %2238 = vst [vmem:[#allocation2 + $0x230] sm:$0xff] %v2020
    %2239 = vst [vmem:[#allocation2 + $0x238] sm:$0xff] %v2109
    %2240 = vst [vmem:[#allocation2 + $0x240] sm:$0xff] %v1488
    %2241 = vst [vmem:[#allocation2 + $0x248] sm:$0xff] %v1577
    %2242 = vst [vmem:[#allocation2 + $0x250] sm:$0xff] %v1666
    %2243 = vst [vmem:[#allocation2 + $0x258] sm:$0xff] %v1755
    %2244 = vst [vmem:[#allocation2 + $0x260] sm:$0xff] %v1844
    %2245 = vst [vmem:[#allocation2 + $0x268] sm:$0xff] %v1933
    %2246 = vst [vmem:[#allocation2 + $0x270] sm:$0xff] %v2022
    %2247 = vst [vmem:[#allocation2 + $0x278] sm:$0xff] %v2111
    %2248 = vst [vmem:[#allocation2 + $0x280] sm:$0xff] %v1491
    %2249 = vst [vmem:[#allocation2 + $0x288] sm:$0xff] %v1580
    %2250 = vst [vmem:[#allocation2 + $0x290] sm:$0xff] %v1669
    %2251 = vst [vmem:[#allocation2 + $0x298] sm:$0xff] %v1758
    %2252 = vst [vmem:[#allocation2 + $0x2a0] sm:$0xff] %v1847
    %2253 = vst [vmem:[#allocation2 + $0x2a8] sm:$0xff] %v1936
    %2254 = vst [vmem:[#allocation2 + $0x2b0] sm:$0xff] %v2025
    %2255 = vst [vmem:[#allocation2 + $0x2b8] sm:$0xff] %v2114
    %2256 = vst [vmem:[#allocation2 + $0x2c0] sm:$0xff] %v1493
    %2257 = vst [vmem:[#allocation2 + $0x2c8] sm:$0xff] %v1582
    %2258 = vst [vmem:[#allocation2 + $0x2d0] sm:$0xff] %v1671
    %2259 = vst [vmem:[#allocation2 + $0x2d8] sm:$0xff] %v1760
    %2260 = vst [vmem:[#allocation2 + $0x2e0] sm:$0xff] %v1849
    %2261 = vst [vmem:[#allocation2 + $0x2e8] sm:$0xff] %v1938
    %2262 = vst [vmem:[#allocation2 + $0x2f0] sm:$0xff] %v2027
    %2263 = vst [vmem:[#allocation2 + $0x2f8] sm:$0xff] %v2116
    %2264 = vst [vmem:[#allocation2 + $0x300] sm:$0xff] %v1496
    %2265 = vst [vmem:[#allocation2 + $0x308] sm:$0xff] %v1585
    %2266 = vst [vmem:[#allocation2 + $0x310] sm:$0xff] %v1674
    %2267 = vst [vmem:[#allocation2 + $0x318] sm:$0xff] %v1763
    %2268 = vst [vmem:[#allocation2 + $0x320] sm:$0xff] %v1852
    %2269 = vst [vmem:[#allocation2 + $0x328] sm:$0xff] %v1941
    %2270 = vst [vmem:[#allocation2 + $0x330] sm:$0xff] %v2030
    %2271 = vst [vmem:[#allocation2 + $0x338] sm:$0xff] %v2119
    %2272 = vst [vmem:[#allocation2 + $0x340] sm:$0xff] %v1498
    %2273 = vst [vmem:[#allocation2 + $0x348] sm:$0xff] %v1587
    %2274 = vst [vmem:[#allocation2 + $0x350] sm:$0xff] %v1676
    %2275 = vst [vmem:[#allocation2 + $0x358] sm:$0xff] %v1765
    %2276 = vst [vmem:[#allocation2 + $0x360] sm:$0xff] %v1854
    %2277 = vst [vmem:[#allocation2 + $0x368] sm:$0xff] %v1943
    %2278 = vst [vmem:[#allocation2 + $0x370] sm:$0xff] %v2032
    %2279 = vst [vmem:[#allocation2 + $0x378] sm:$0xff] %v2121
    %2280 = vst [vmem:[#allocation2 + $0x380] sm:$0xff] %v1501
    %2281 = vst [vmem:[#allocation2 + $0x388] sm:$0xff] %v1590
    %2282 = vst [vmem:[#allocation2 + $0x390] sm:$0xff] %v1679
    %2283 = vst [vmem:[#allocation2 + $0x398] sm:$0xff] %v1768
    %2284 = vst [vmem:[#allocation2 + $0x3a0] sm:$0xff] %v1857
    %2285 = vst [vmem:[#allocation2 + $0x3a8] sm:$0xff] %v1946
    %2286 = vst [vmem:[#allocation2 + $0x3b0] sm:$0xff] %v2035
    %2287 = vst [vmem:[#allocation2 + $0x3b8] sm:$0xff] %v2124
    %2288 = vst [vmem:[#allocation2 + $0x3c0] sm:$0xff] %v1503
    %2289 = vst [vmem:[#allocation2 + $0x3c8] sm:$0xff] %v1592
    %2290 = vst [vmem:[#allocation2 + $0x3d0] sm:$0xff] %v1681
    %2291 = vst [vmem:[#allocation2 + $0x3d8] sm:$0xff] %v1770
    %2292 = vst [vmem:[#allocation2 + $0x3e0] sm:$0xff] %v1859
    %2293 = vst [vmem:[#allocation2 + $0x3e8] sm:$0xff] %v1948
    %2294 = vst [vmem:[#allocation2 + $0x3f0] sm:$0xff] %v2037
    %2295 = vst [vmem:[#allocation2 + $0x3f8] sm:$0xff] %v2126
    %2296 = vst [vmem:[#allocation2 + $0x400] sm:$0xff] %v1506
    %2297 = vst [vmem:[#allocation2 + $0x408] sm:$0xff] %v1595
    %2298 = vst [vmem:[#allocation2 + $0x410] sm:$0xff] %v1684
    %2299 = vst [vmem:[#allocation2 + $0x418] sm:$0xff] %v1773
    %2300 = vst [vmem:[#allocation2 + $0x420] sm:$0xff] %v1862
    %2301 = vst [vmem:[#allocation2 + $0x428] sm:$0xff] %v1951
    %2302 = vst [vmem:[#allocation2 + $0x430] sm:$0xff] %v2040
    %2303 = vst [vmem:[#allocation2 + $0x438] sm:$0xff] %v2129
    %2304 = vst [vmem:[#allocation2 + $0x440] sm:$0xff] %v1508
    %2305 = vst [vmem:[#allocation2 + $0x448] sm:$0xff] %v1597
    %2306 = vst [vmem:[#allocation2 + $0x450] sm:$0xff] %v1686
    %2307 = vst [vmem:[#allocation2 + $0x458] sm:$0xff] %v1775
    %2308 = vst [vmem:[#allocation2 + $0x460] sm:$0xff] %v1864
    %2309 = vst [vmem:[#allocation2 + $0x468] sm:$0xff] %v1953
    %2310 = vst [vmem:[#allocation2 + $0x470] sm:$0xff] %v2042
    %2311 = vst [vmem:[#allocation2 + $0x478] sm:$0xff] %v2131
    %2312 = vst [vmem:[#allocation2 + $0x480] sm:$0xff] %v1511
    %2313 = vst [vmem:[#allocation2 + $0x488] sm:$0xff] %v1600
    %2314 = vst [vmem:[#allocation2 + $0x490] sm:$0xff] %v1689
    %2315 = vst [vmem:[#allocation2 + $0x498] sm:$0xff] %v1778
    %2316 = vst [vmem:[#allocation2 + $0x4a0] sm:$0xff] %v1867
    %2317 = vst [vmem:[#allocation2 + $0x4a8] sm:$0xff] %v1956
    %2318 = vst [vmem:[#allocation2 + $0x4b0] sm:$0xff] %v2045
    %2319 = vst [vmem:[#allocation2 + $0x4b8] sm:$0xff] %v2134
    %2320 = vst [vmem:[#allocation2 + $0x4c0] sm:$0xff] %v1513
    %2321 = vst [vmem:[#allocation2 + $0x4c8] sm:$0xff] %v1602
    %2322 = vst [vmem:[#allocation2 + $0x4d0] sm:$0xff] %v1691
    %2323 = vst [vmem:[#allocation2 + $0x4d8] sm:$0xff] %v1780
    %2324 = vst [vmem:[#allocation2 + $0x4e0] sm:$0xff] %v1869
    %2325 = vst [vmem:[#allocation2 + $0x4e8] sm:$0xff] %v1958
    %2326 = vst [vmem:[#allocation2 + $0x4f0] sm:$0xff] %v2047
    %2327 = vst [vmem:[#allocation2 + $0x4f8] sm:$0xff] %v2136
    %2328 = vst [vmem:[#allocation2 + $0x500] sm:$0xff] %v1516
    %2329 = vst [vmem:[#allocation2 + $0x508] sm:$0xff] %v1605
    %2330 = vst [vmem:[#allocation2 + $0x510] sm:$0xff] %v1694
    %2331 = vst [vmem:[#allocation2 + $0x518] sm:$0xff] %v1783
    %2332 = vst [vmem:[#allocation2 + $0x520] sm:$0xff] %v1872
    %2333 = vst [vmem:[#allocation2 + $0x528] sm:$0xff] %v1961
    %2334 = vst [vmem:[#allocation2 + $0x530] sm:$0xff] %v2050
    %2335 = vst [vmem:[#allocation2 + $0x538] sm:$0xff] %v2139
    %2336 = vst [vmem:[#allocation2 + $0x540] sm:$0xff] %v1518
    %2337 = vst [vmem:[#allocation2 + $0x548] sm:$0xff] %v1607
    %2338 = vst [vmem:[#allocation2 + $0x550] sm:$0xff] %v1696
    %2339 = vst [vmem:[#allocation2 + $0x558] sm:$0xff] %v1785
    %2340 = vst [vmem:[#allocation2 + $0x560] sm:$0xff] %v1874
    %2341 = vst [vmem:[#allocation2 + $0x568] sm:$0xff] %v1963
    %2342 = vst [vmem:[#allocation2 + $0x570] sm:$0xff] %v2052
    %2343 = vst [vmem:[#allocation2 + $0x578] sm:$0xff] %v2141
    %2344 = vst [vmem:[#allocation2 + $0x580] sm:$0xff] %v1521
    %2345 = vst [vmem:[#allocation2 + $0x588] sm:$0xff] %v1610
    %2346 = vst [vmem:[#allocation2 + $0x590] sm:$0xff] %v1699
    %2347 = vst [vmem:[#allocation2 + $0x598] sm:$0xff] %v1788
    %2348 = vst [vmem:[#allocation2 + $0x5a0] sm:$0xff] %v1877
    %2349 = vst [vmem:[#allocation2 + $0x5a8] sm:$0xff] %v1966
    %2350 = vst [vmem:[#allocation2 + $0x5b0] sm:$0xff] %v2055
    %2351 = vst [vmem:[#allocation2 + $0x5b8] sm:$0xff] %v2144
    %2352 = vst [vmem:[#allocation2 + $0x5c0] sm:$0xff] %v1523
    %2353 = vst [vmem:[#allocation2 + $0x5c8] sm:$0xff] %v1612
    %2354 = vst [vmem:[#allocation2 + $0x5d0] sm:$0xff] %v1701
    %2355 = vst [vmem:[#allocation2 + $0x5d8] sm:$0xff] %v1790
    %2356 = vst [vmem:[#allocation2 + $0x5e0] sm:$0xff] %v1879
    %2357 = vst [vmem:[#allocation2 + $0x5e8] sm:$0xff] %v1968
    %2358 = vst [vmem:[#allocation2 + $0x5f0] sm:$0xff] %v2057
    %2359 = vst [vmem:[#allocation2 + $0x5f8] sm:$0xff] %v2146
    %2360 = vst [vmem:[#allocation2 + $0x600] sm:$0xff] %v1526
    %2361 = vst [vmem:[#allocation2 + $0x608] sm:$0xff] %v1615
    %2362 = vst [vmem:[#allocation2 + $0x610] sm:$0xff] %v1704
    %2363 = vst [vmem:[#allocation2 + $0x618] sm:$0xff] %v1793
    %2364 = vst [vmem:[#allocation2 + $0x620] sm:$0xff] %v1882
    %2365 = vst [vmem:[#allocation2 + $0x628] sm:$0xff] %v1971
    %2366 = vst [vmem:[#allocation2 + $0x630] sm:$0xff] %v2060
    %2367 = vst [vmem:[#allocation2 + $0x638] sm:$0xff] %v2149
    %2368 = vst [vmem:[#allocation2 + $0x640] sm:$0xff] %v1528
    %2369 = vst [vmem:[#allocation2 + $0x648] sm:$0xff] %v1617
    %2370 = vst [vmem:[#allocation2 + $0x650] sm:$0xff] %v1706
    %2371 = vst [vmem:[#allocation2 + $0x658] sm:$0xff] %v1795
    %2372 = vst [vmem:[#allocation2 + $0x660] sm:$0xff] %v1884
    %2373 = vst [vmem:[#allocation2 + $0x668] sm:$0xff] %v1973
    %2374 = vst [vmem:[#allocation2 + $0x670] sm:$0xff] %v2062
    %2375 = vst [vmem:[#allocation2 + $0x678] sm:$0xff] %v2151
    %2376 = vst [vmem:[#allocation2 + $0x680] sm:$0xff] %v1531
    %2377 = vst [vmem:[#allocation2 + $0x688] sm:$0xff] %v1620
    %2378 = vst [vmem:[#allocation2 + $0x690] sm:$0xff] %v1709
    %2379 = vst [vmem:[#allocation2 + $0x698] sm:$0xff] %v1798
    %2380 = vst [vmem:[#allocation2 + $0x6a0] sm:$0xff] %v1887
    %2381 = vst [vmem:[#allocation2 + $0x6a8] sm:$0xff] %v1976
    %2382 = vst [vmem:[#allocation2 + $0x6b0] sm:$0xff] %v2065
    %2383 = vst [vmem:[#allocation2 + $0x6b8] sm:$0xff] %v2154
    %2384 = vst [vmem:[#allocation2 + $0x6c0] sm:$0xff] %v1533
    %2385 = vst [vmem:[#allocation2 + $0x6c8] sm:$0xff] %v1622
    %2386 = vst [vmem:[#allocation2 + $0x6d0] sm:$0xff] %v1711
    %2387 = vst [vmem:[#allocation2 + $0x6d8] sm:$0xff] %v1800
    %2388 = vst [vmem:[#allocation2 + $0x6e0] sm:$0xff] %v1889
    %2389 = vst [vmem:[#allocation2 + $0x6e8] sm:$0xff] %v1978
    %2390 = vst [vmem:[#allocation2 + $0x6f0] sm:$0xff] %v2067
    %2391 = vst [vmem:[#allocation2 + $0x6f8] sm:$0xff] %v2156
    %2392 = vst [vmem:[#allocation2 + $0x700] sm:$0xff] %v1536
    %2393 = vst [vmem:[#allocation2 + $0x708] sm:$0xff] %v1625
    %2394 = vst [vmem:[#allocation2 + $0x710] sm:$0xff] %v1714
    %2395 = vst [vmem:[#allocation2 + $0x718] sm:$0xff] %v1803
    %2396 = vst [vmem:[#allocation2 + $0x720] sm:$0xff] %v1892
    %2397 = vst [vmem:[#allocation2 + $0x728] sm:$0xff] %v1981
    %2398 = vst [vmem:[#allocation2 + $0x730] sm:$0xff] %v2070
    %2399 = vst [vmem:[#allocation2 + $0x738] sm:$0xff] %v2159
    %2400 = vst [vmem:[#allocation2 + $0x740] sm:$0xff] %v1538
    %2401 = vst [vmem:[#allocation2 + $0x748] sm:$0xff] %v1627
    %2402 = vst [vmem:[#allocation2 + $0x750] sm:$0xff] %v1716
    %2403 = vst [vmem:[#allocation2 + $0x758] sm:$0xff] %v1805
    %2404 = vst [vmem:[#allocation2 + $0x760] sm:$0xff] %v1894
    %2405 = vst [vmem:[#allocation2 + $0x768] sm:$0xff] %v1983
    %2406 = vst [vmem:[#allocation2 + $0x770] sm:$0xff] %v2072
    %2407 = vst [vmem:[#allocation2 + $0x778] sm:$0xff] %v2161
    %2408 = vst [vmem:[#allocation2 + $0x780] sm:$0xff] %v1541
    %2409 = vst [vmem:[#allocation2 + $0x788] sm:$0xff] %v1630
    %2410 = vst [vmem:[#allocation2 + $0x790] sm:$0xff] %v1719
    %2411 = vst [vmem:[#allocation2 + $0x798] sm:$0xff] %v1808
    %2412 = vst [vmem:[#allocation2 + $0x7a0] sm:$0xff] %v1897
    %2413 = vst [vmem:[#allocation2 + $0x7a8] sm:$0xff] %v1986
    %2414 = vst [vmem:[#allocation2 + $0x7b0] sm:$0xff] %v2075
    %2415 = vst [vmem:[#allocation2 + $0x7b8] sm:$0xff] %v2164
    %2416 = vst [vmem:[#allocation2 + $0x7c0] sm:$0xff] %v1543
    %2417 = vst [vmem:[#allocation2 + $0x7c8] sm:$0xff] %v1632
    %2418 = vst [vmem:[#allocation2 + $0x7d0] sm:$0xff] %v1721
    %2419 = vst [vmem:[#allocation2 + $0x7d8] sm:$0xff] %v1810
    %2420 = vst [vmem:[#allocation2 + $0x7e0] sm:$0xff] %v1899
    %2421 = vst [vmem:[#allocation2 + $0x7e8] sm:$0xff] %v1988
    %2422 = vst [vmem:[#allocation2 + $0x7f0] sm:$0xff] %v2077
    %2423 = vst [vmem:[#allocation2 + $0x7f8] sm:$0xff] %v2166
    %s2424 = smul.u32 4, 32
    %s2425 = smul.u32 %s2424, 8
    %s2426 = sshll.u32 %s2425, 4
    %2427 = dma.done [#allocation5], %s2426
    %v2428 = vld [vmem:[#allocation3] sm:$0xff]
    %v2429 = vld [vmem:[#allocation3 + $0x8] sm:$0xff]
    %v2430 = vld [vmem:[#allocation3 + $0x10] sm:$0xff]
    %v2431 = vld [vmem:[#allocation3 + $0x18] sm:$0xff]
    %v2432 = vld [vmem:[#allocation3 + $0x20] sm:$0xff]
    %v2433 = vld [vmem:[#allocation3 + $0x28] sm:$0xff]
    %v2434 = vld [vmem:[#allocation3 + $0x30] sm:$0xff]
    %v2435 = vld [vmem:[#allocation3 + $0x38] sm:$0xff]
    %v2436 = vld [vmem:[#allocation3 + $0x40] sm:$0xff]
    %v2437 = vld [vmem:[#allocation3 + $0x48] sm:$0xff]
    %v2438 = vld [vmem:[#allocation3 + $0x50] sm:$0xff]
    %v2439 = vld [vmem:[#allocation3 + $0x58] sm:$0xff]
    %v2440 = vld [vmem:[#allocation3 + $0x60] sm:$0xff]
    %v2441 = vld [vmem:[#allocation3 + $0x68] sm:$0xff]
    %v2442 = vld [vmem:[#allocation3 + $0x70] sm:$0xff]
    %v2443 = vld [vmem:[#allocation3 + $0x78] sm:$0xff]
    %v2444 = vld [vmem:[#allocation3 + $0x80] sm:$0xff]
    %v2445 = vld [vmem:[#allocation3 + $0x88] sm:$0xff]
    %v2446 = vld [vmem:[#allocation3 + $0x90] sm:$0xff]
    %v2447 = vld [vmem:[#allocation3 + $0x98] sm:$0xff]
    %v2448 = vld [vmem:[#allocation3 + $0xa0] sm:$0xff]
    %v2449 = vld [vmem:[#allocation3 + $0xa8] sm:$0xff]
    %v2450 = vld [vmem:[#allocation3 + $0xb0] sm:$0xff]
    %v2451 = vld [vmem:[#allocation3 + $0xb8] sm:$0xff]
    %v2452 = vld [vmem:[#allocation3 + $0xc0] sm:$0xff]
    %v2453 = vld [vmem:[#allocation3 + $0xc8] sm:$0xff]
    %v2454 = vld [vmem:[#allocation3 + $0xd0] sm:$0xff]
    %v2455 = vld [vmem:[#allocation3 + $0xd8] sm:$0xff]
    %v2456 = vld [vmem:[#allocation3 + $0xe0] sm:$0xff]
    %v2457 = vld [vmem:[#allocation3 + $0xe8] sm:$0xff]
    %v2458 = vld [vmem:[#allocation3 + $0xf0] sm:$0xff]
    %v2459 = vld [vmem:[#allocation3 + $0xf8] sm:$0xff]
    %v2460 = vld [vmem:[#allocation3 + $0x100] sm:$0xff]
    %v2461 = vld [vmem:[#allocation3 + $0x108] sm:$0xff]
    %v2462 = vld [vmem:[#allocation3 + $0x110] sm:$0xff]
    %v2463 = vld [vmem:[#allocation3 + $0x118] sm:$0xff]
    %v2464 = vld [vmem:[#allocation3 + $0x120] sm:$0xff]
    %v2465 = vld [vmem:[#allocation3 + $0x128] sm:$0xff]
    %v2466 = vld [vmem:[#allocation3 + $0x130] sm:$0xff]
    %v2467 = vld [vmem:[#allocation3 + $0x138] sm:$0xff]
    %v2468 = vld [vmem:[#allocation3 + $0x140] sm:$0xff]
    %v2469 = vld [vmem:[#allocation3 + $0x148] sm:$0xff]
    %v2470 = vld [vmem:[#allocation3 + $0x150] sm:$0xff]
    %v2471 = vld [vmem:[#allocation3 + $0x158] sm:$0xff]
    %v2472 = vld [vmem:[#allocation3 + $0x160] sm:$0xff]
    %v2473 = vld [vmem:[#allocation3 + $0x168] sm:$0xff]
    %v2474 = vld [vmem:[#allocation3 + $0x170] sm:$0xff]
    %v2475 = vld [vmem:[#allocation3 + $0x178] sm:$0xff]
    %v2476 = vld [vmem:[#allocation3 + $0x180] sm:$0xff]
    %v2477 = vld [vmem:[#allocation3 + $0x188] sm:$0xff]
    %v2478 = vld [vmem:[#allocation3 + $0x190] sm:$0xff]
    %v2479 = vld [vmem:[#allocation3 + $0x198] sm:$0xff]
    %v2480 = vld [vmem:[#allocation3 + $0x1a0] sm:$0xff]
    %v2481 = vld [vmem:[#allocation3 + $0x1a8] sm:$0xff]
    %v2482 = vld [vmem:[#allocation3 + $0x1b0] sm:$0xff]
    %v2483 = vld [vmem:[#allocation3 + $0x1b8] sm:$0xff]
    %v2484 = vld [vmem:[#allocation3 + $0x1c0] sm:$0xff]
    %v2485 = vld [vmem:[#allocation3 + $0x1c8] sm:$0xff]
    %v2486 = vld [vmem:[#allocation3 + $0x1d0] sm:$0xff]
    %v2487 = vld [vmem:[#allocation3 + $0x1d8] sm:$0xff]
    %v2488 = vld [vmem:[#allocation3 + $0x1e0] sm:$0xff]
    %v2489 = vld [vmem:[#allocation3 + $0x1e8] sm:$0xff]
    %v2490 = vld [vmem:[#allocation3 + $0x1f0] sm:$0xff]
    %v2491 = vld [vmem:[#allocation3 + $0x1f8] sm:$0xff]
    %v2492 = vld [vmem:[#allocation3 + $0x200] sm:$0xff]
    %v2493 = vld [vmem:[#allocation3 + $0x208] sm:$0xff]
    %v2494 = vld [vmem:[#allocation3 + $0x210] sm:$0xff]
    %v2495 = vld [vmem:[#allocation3 + $0x218] sm:$0xff]
    %v2496 = vld [vmem:[#allocation3 + $0x220] sm:$0xff]
    %v2497 = vld [vmem:[#allocation3 + $0x228] sm:$0xff]
    %v2498 = vld [vmem:[#allocation3 + $0x230] sm:$0xff]
    %v2499 = vld [vmem:[#allocation3 + $0x238] sm:$0xff]
    %v2500 = vld [vmem:[#allocation3 + $0x240] sm:$0xff]
    %v2501 = vld [vmem:[#allocation3 + $0x248] sm:$0xff]
    %v2502 = vld [vmem:[#allocation3 + $0x250] sm:$0xff]
    %v2503 = vld [vmem:[#allocation3 + $0x258] sm:$0xff]
    %v2504 = vld [vmem:[#allocation3 + $0x260] sm:$0xff]
    %v2505 = vld [vmem:[#allocation3 + $0x268] sm:$0xff]
    %v2506 = vld [vmem:[#allocation3 + $0x270] sm:$0xff]
    %v2507 = vld [vmem:[#allocation3 + $0x278] sm:$0xff]
    %v2508 = vld [vmem:[#allocation3 + $0x280] sm:$0xff]
    %v2509 = vld [vmem:[#allocation3 + $0x288] sm:$0xff]
    %v2510 = vld [vmem:[#allocation3 + $0x290] sm:$0xff]
    %v2511 = vld [vmem:[#allocation3 + $0x298] sm:$0xff]
    %v2512 = vld [vmem:[#allocation3 + $0x2a0] sm:$0xff]
    %v2513 = vld [vmem:[#allocation3 + $0x2a8] sm:$0xff]
    %v2514 = vld [vmem:[#allocation3 + $0x2b0] sm:$0xff]
    %v2515 = vld [vmem:[#allocation3 + $0x2b8] sm:$0xff]
    %v2516 = vld [vmem:[#allocation3 + $0x2c0] sm:$0xff]
    %v2517 = vld [vmem:[#allocation3 + $0x2c8] sm:$0xff]
    %v2518 = vld [vmem:[#allocation3 + $0x2d0] sm:$0xff]
    %v2519 = vld [vmem:[#allocation3 + $0x2d8] sm:$0xff]
    %v2520 = vld [vmem:[#allocation3 + $0x2e0] sm:$0xff]
    %v2521 = vld [vmem:[#allocation3 + $0x2e8] sm:$0xff]
    %v2522 = vld [vmem:[#allocation3 + $0x2f0] sm:$0xff]
    %v2523 = vld [vmem:[#allocation3 + $0x2f8] sm:$0xff]
    %v2524 = vld [vmem:[#allocation3 + $0x300] sm:$0xff]
    %v2525 = vld [vmem:[#allocation3 + $0x308] sm:$0xff]
    %v2526 = vld [vmem:[#allocation3 + $0x310] sm:$0xff]
    %v2527 = vld [vmem:[#allocation3 + $0x318] sm:$0xff]
    %v2528 = vld [vmem:[#allocation3 + $0x320] sm:$0xff]
    %v2529 = vld [vmem:[#allocation3 + $0x328] sm:$0xff]
    %v2530 = vld [vmem:[#allocation3 + $0x330] sm:$0xff]
    %v2531 = vld [vmem:[#allocation3 + $0x338] sm:$0xff]
    %v2532 = vld [vmem:[#allocation3 + $0x340] sm:$0xff]
    %v2533 = vld [vmem:[#allocation3 + $0x348] sm:$0xff]
    %v2534 = vld [vmem:[#allocation3 + $0x350] sm:$0xff]
    %v2535 = vld [vmem:[#allocation3 + $0x358] sm:$0xff]
    %v2536 = vld [vmem:[#allocation3 + $0x360] sm:$0xff]
    %v2537 = vld [vmem:[#allocation3 + $0x368] sm:$0xff]
    %v2538 = vld [vmem:[#allocation3 + $0x370] sm:$0xff]
    %v2539 = vld [vmem:[#allocation3 + $0x378] sm:$0xff]
    %v2540 = vld [vmem:[#allocation3 + $0x380] sm:$0xff]
    %v2541 = vld [vmem:[#allocation3 + $0x388] sm:$0xff]
    %v2542 = vld [vmem:[#allocation3 + $0x390] sm:$0xff]
    %v2543 = vld [vmem:[#allocation3 + $0x398] sm:$0xff]
    %v2544 = vld [vmem:[#allocation3 + $0x3a0] sm:$0xff]
    %v2545 = vld [vmem:[#allocation3 + $0x3a8] sm:$0xff]
    %v2546 = vld [vmem:[#allocation3 + $0x3b0] sm:$0xff]
    %v2547 = vld [vmem:[#allocation3 + $0x3b8] sm:$0xff]
    %v2548 = vld [vmem:[#allocation3 + $0x3c0] sm:$0xff]
    %v2549 = vld [vmem:[#allocation3 + $0x3c8] sm:$0xff]
    %v2550 = vld [vmem:[#allocation3 + $0x3d0] sm:$0xff]
    %v2551 = vld [vmem:[#allocation3 + $0x3d8] sm:$0xff]
    %v2552 = vld [vmem:[#allocation3 + $0x3e0] sm:$0xff]
    %v2553 = vld [vmem:[#allocation3 + $0x3e8] sm:$0xff]
    %v2554 = vld [vmem:[#allocation3 + $0x3f0] sm:$0xff]
    %v2555 = vld [vmem:[#allocation3 + $0x3f8] sm:$0xff]
    %s2556 = smul.u32 0, 8
    %s2557 = smul.addr %s2556, 8
    %s2558 = scalar_lea.vmem [#allocation2], %s2557
    %v2559 = vld [vmem:[%s2558] sm:$0xff]
    %v2560 = vld [vmem:[%s2558 + $0x8] sm:$0xff]
    %v2561 = vld [vmem:[%s2558 + $0x10] sm:$0xff]
    %v2562 = vld [vmem:[%s2558 + $0x18] sm:$0xff]
    %v2563 = vld [vmem:[%s2558 + $0x20] sm:$0xff]
    %v2564 = vld [vmem:[%s2558 + $0x28] sm:$0xff]
    %v2565 = vld [vmem:[%s2558 + $0x30] sm:$0xff]
    %v2566 = vld [vmem:[%s2558 + $0x38] sm:$0xff]
    %v2567 = vld [vmem:[%s2558 + $0x40] sm:$0xff]
    %v2568 = vld [vmem:[%s2558 + $0x48] sm:$0xff]
    %v2569 = vld [vmem:[%s2558 + $0x50] sm:$0xff]
    %v2570 = vld [vmem:[%s2558 + $0x58] sm:$0xff]
    %v2571 = vld [vmem:[%s2558 + $0x60] sm:$0xff]
    %v2572 = vld [vmem:[%s2558 + $0x68] sm:$0xff]
    %v2573 = vld [vmem:[%s2558 + $0x70] sm:$0xff]
    %v2574 = vld [vmem:[%s2558 + $0x78] sm:$0xff]
    %v2575 = vld [vmem:[%s2558 + $0x80] sm:$0xff]
    %v2576 = vld [vmem:[%s2558 + $0x88] sm:$0xff]
    %v2577 = vld [vmem:[%s2558 + $0x90] sm:$0xff]
    %v2578 = vld [vmem:[%s2558 + $0x98] sm:$0xff]
    %v2579 = vld [vmem:[%s2558 + $0xa0] sm:$0xff]
    %v2580 = vld [vmem:[%s2558 + $0xa8] sm:$0xff]
    %v2581 = vld [vmem:[%s2558 + $0xb0] sm:$0xff]
    %v2582 = vld [vmem:[%s2558 + $0xb8] sm:$0xff]
    %v2583 = vld [vmem:[%s2558 + $0xc0] sm:$0xff]
    %v2584 = vld [vmem:[%s2558 + $0xc8] sm:$0xff]
    %v2585 = vld [vmem:[%s2558 + $0xd0] sm:$0xff]
    %v2586 = vld [vmem:[%s2558 + $0xd8] sm:$0xff]
    %v2587 = vld [vmem:[%s2558 + $0xe0] sm:$0xff]
    %v2588 = vld [vmem:[%s2558 + $0xe8] sm:$0xff]
    %v2589 = vld [vmem:[%s2558 + $0xf0] sm:$0xff]
    %v2590 = vld [vmem:[%s2558 + $0xf8] sm:$0xff]
    %v2719 = vunpack.c.l.b16 %v2428
    %v2720 = vunpack.c.h.b16 %v2428
    %v2721 = vunpack.c.l.b16 %v2429
    %v2722 = vunpack.c.h.b16 %v2429
    %v2723 = vunpack.c.l.b16 %v2430
    %v2724 = vunpack.c.h.b16 %v2430
    %v2725 = vunpack.c.l.b16 %v2431
    %v2726 = vunpack.c.h.b16 %v2431
    %v2727 = vunpack.c.l.b16 %v2432
    %v2728 = vunpack.c.h.b16 %v2432
    %v2729 = vunpack.c.l.b16 %v2433
    %v2730 = vunpack.c.h.b16 %v2433
    %v2731 = vunpack.c.l.b16 %v2434
    %v2732 = vunpack.c.h.b16 %v2434
    %v2733 = vunpack.c.l.b16 %v2435
    %v2734 = vunpack.c.h.b16 %v2435
    %v2735 = vunpack.c.l.b16 %v2436
    %v2736 = vunpack.c.h.b16 %v2436
    %v2737 = vunpack.c.l.b16 %v2437
    %v2738 = vunpack.c.h.b16 %v2437
    %v2739 = vunpack.c.l.b16 %v2438
    %v2740 = vunpack.c.h.b16 %v2438
    %v2741 = vunpack.c.l.b16 %v2439
    %v2742 = vunpack.c.h.b16 %v2439
    %v2743 = vunpack.c.l.b16 %v2440
    %v2744 = vunpack.c.h.b16 %v2440
    %v2745 = vunpack.c.l.b16 %v2441
    %v2746 = vunpack.c.h.b16 %v2441
    %v2747 = vunpack.c.l.b16 %v2442
    %v2748 = vunpack.c.h.b16 %v2442
    %v2749 = vunpack.c.l.b16 %v2443
    %v2750 = vunpack.c.h.b16 %v2443
    %v2751 = vunpack.c.l.b16 %v2444
    %v2752 = vunpack.c.h.b16 %v2444
    %v2753 = vunpack.c.l.b16 %v2445
    %v2754 = vunpack.c.h.b16 %v2445
    %v2755 = vunpack.c.l.b16 %v2446
    %v2756 = vunpack.c.h.b16 %v2446
    %v2757 = vunpack.c.l.b16 %v2447
    %v2758 = vunpack.c.h.b16 %v2447
    %v2759 = vunpack.c.l.b16 %v2448
    %v2760 = vunpack.c.h.b16 %v2448
    %v2761 = vunpack.c.l.b16 %v2449
    %v2762 = vunpack.c.h.b16 %v2449
    %v2763 = vunpack.c.l.b16 %v2450
    %v2764 = vunpack.c.h.b16 %v2450
    %v2765 = vunpack.c.l.b16 %v2451
    %v2766 = vunpack.c.h.b16 %v2451
    %v2767 = vunpack.c.l.b16 %v2452
    %v2768 = vunpack.c.h.b16 %v2452
    %v2769 = vunpack.c.l.b16 %v2453
    %v2770 = vunpack.c.h.b16 %v2453
    %v2771 = vunpack.c.l.b16 %v2454
    %v2772 = vunpack.c.h.b16 %v2454
    %v2773 = vunpack.c.l.b16 %v2455
    %v2774 = vunpack.c.h.b16 %v2455
    %v2775 = vunpack.c.l.b16 %v2456
    %v2776 = vunpack.c.h.b16 %v2456
    %v2777 = vunpack.c.l.b16 %v2457
    %v2778 = vunpack.c.h.b16 %v2457
    %v2779 = vunpack.c.l.b16 %v2458
    %v2780 = vunpack.c.h.b16 %v2458
    %v2781 = vunpack.c.l.b16 %v2459
    %v2782 = vunpack.c.h.b16 %v2459
    %v2783 = vunpack.c.l.b16 %v2460
    %v2784 = vunpack.c.h.b16 %v2460
    %v2785 = vunpack.c.l.b16 %v2461
    %v2786 = vunpack.c.h.b16 %v2461
    %v2787 = vunpack.c.l.b16 %v2462
    %v2788 = vunpack.c.h.b16 %v2462
    %v2789 = vunpack.c.l.b16 %v2463
    %v2790 = vunpack.c.h.b16 %v2463
    %v2791 = vunpack.c.l.b16 %v2464
    %v2792 = vunpack.c.h.b16 %v2464
    %v2793 = vunpack.c.l.b16 %v2465
    %v2794 = vunpack.c.h.b16 %v2465
    %v2795 = vunpack.c.l.b16 %v2466
    %v2796 = vunpack.c.h.b16 %v2466
    %v2797 = vunpack.c.l.b16 %v2467
    %v2798 = vunpack.c.h.b16 %v2467
    %v2799 = vunpack.c.l.b16 %v2468
    %v2800 = vunpack.c.h.b16 %v2468
    %v2801 = vunpack.c.l.b16 %v2469
    %v2802 = vunpack.c.h.b16 %v2469
    %v2803 = vunpack.c.l.b16 %v2470
    %v2804 = vunpack.c.h.b16 %v2470
    %v2805 = vunpack.c.l.b16 %v2471
    %v2806 = vunpack.c.h.b16 %v2471
    %v2807 = vunpack.c.l.b16 %v2472
    %v2808 = vunpack.c.h.b16 %v2472
    %v2809 = vunpack.c.l.b16 %v2473
    %v2810 = vunpack.c.h.b16 %v2473
    %v2811 = vunpack.c.l.b16 %v2474
    %v2812 = vunpack.c.h.b16 %v2474
    %v2813 = vunpack.c.l.b16 %v2475
    %v2814 = vunpack.c.h.b16 %v2475
    %v2815 = vunpack.c.l.b16 %v2476
    %v2816 = vunpack.c.h.b16 %v2476
    %v2817 = vunpack.c.l.b16 %v2477
    %v2818 = vunpack.c.h.b16 %v2477
    %v2819 = vunpack.c.l.b16 %v2478
    %v2820 = vunpack.c.h.b16 %v2478
    %v2821 = vunpack.c.l.b16 %v2479
    %v2822 = vunpack.c.h.b16 %v2479
    %v2823 = vunpack.c.l.b16 %v2480
    %v2824 = vunpack.c.h.b16 %v2480
    %v2825 = vunpack.c.l.b16 %v2481
    %v2826 = vunpack.c.h.b16 %v2481
    %v2827 = vunpack.c.l.b16 %v2482
    %v2828 = vunpack.c.h.b16 %v2482
    %v2829 = vunpack.c.l.b16 %v2483
    %v2830 = vunpack.c.h.b16 %v2483
    %v2831 = vunpack.c.l.b16 %v2484
    %v2832 = vunpack.c.h.b16 %v2484
    %v2833 = vunpack.c.l.b16 %v2485
    %v2834 = vunpack.c.h.b16 %v2485
    %v2835 = vunpack.c.l.b16 %v2486
    %v2836 = vunpack.c.h.b16 %v2486
    %v2837 = vunpack.c.l.b16 %v2487
    %v2838 = vunpack.c.h.b16 %v2487
    %v2839 = vunpack.c.l.b16 %v2488
    %v2840 = vunpack.c.h.b16 %v2488
    %v2841 = vunpack.c.l.b16 %v2489
    %v2842 = vunpack.c.h.b16 %v2489
    %v2843 = vunpack.c.l.b16 %v2490
    %v2844 = vunpack.c.h.b16 %v2490
    %v2845 = vunpack.c.l.b16 %v2491
    %v2846 = vunpack.c.h.b16 %v2491
    %v2847 = vunpack.c.l.b16 %v2492
    %v2848 = vunpack.c.h.b16 %v2492
    %v2849 = vunpack.c.l.b16 %v2493
    %v2850 = vunpack.c.h.b16 %v2493
    %v2851 = vunpack.c.l.b16 %v2494
    %v2852 = vunpack.c.h.b16 %v2494
    %v2853 = vunpack.c.l.b16 %v2495
    %v2854 = vunpack.c.h.b16 %v2495
    %v2855 = vunpack.c.l.b16 %v2496
    %v2856 = vunpack.c.h.b16 %v2496
    %v2857 = vunpack.c.l.b16 %v2497
    %v2858 = vunpack.c.h.b16 %v2497
    %v2859 = vunpack.c.l.b16 %v2498
    %v2860 = vunpack.c.h.b16 %v2498
    %v2861 = vunpack.c.l.b16 %v2499
    %v2862 = vunpack.c.h.b16 %v2499
    %v2863 = vunpack.c.l.b16 %v2500
    %v2864 = vunpack.c.h.b16 %v2500
    %v2865 = vunpack.c.l.b16 %v2501
    %v2866 = vunpack.c.h.b16 %v2501
    %v2867 = vunpack.c.l.b16 %v2502
    %v2868 = vunpack.c.h.b16 %v2502
    %v2869 = vunpack.c.l.b16 %v2503
    %v2870 = vunpack.c.h.b16 %v2503
    %v2871 = vunpack.c.l.b16 %v2504
    %v2872 = vunpack.c.h.b16 %v2504
    %v2873 = vunpack.c.l.b16 %v2505
    %v2874 = vunpack.c.h.b16 %v2505
    %v2875 = vunpack.c.l.b16 %v2506
    %v2876 = vunpack.c.h.b16 %v2506
    %v2877 = vunpack.c.l.b16 %v2507
    %v2878 = vunpack.c.h.b16 %v2507
    %v2879 = vunpack.c.l.b16 %v2508
    %v2880 = vunpack.c.h.b16 %v2508
    %v2881 = vunpack.c.l.b16 %v2509
    %v2882 = vunpack.c.h.b16 %v2509
    %v2883 = vunpack.c.l.b16 %v2510
    %v2884 = vunpack.c.h.b16 %v2510
    %v2885 = vunpack.c.l.b16 %v2511
    %v2886 = vunpack.c.h.b16 %v2511
    %v2887 = vunpack.c.l.b16 %v2512
    %v2888 = vunpack.c.h.b16 %v2512
    %v2889 = vunpack.c.l.b16 %v2513
    %v2890 = vunpack.c.h.b16 %v2513
    %v2891 = vunpack.c.l.b16 %v2514
    %v2892 = vunpack.c.h.b16 %v2514
    %v2893 = vunpack.c.l.b16 %v2515
    %v2894 = vunpack.c.h.b16 %v2515
    %v2895 = vunpack.c.l.b16 %v2516
    %v2896 = vunpack.c.h.b16 %v2516
    %v2897 = vunpack.c.l.b16 %v2517
    %v2898 = vunpack.c.h.b16 %v2517
    %v2899 = vunpack.c.l.b16 %v2518
    %v2900 = vunpack.c.h.b16 %v2518
    %v2901 = vunpack.c.l.b16 %v2519
    %v2902 = vunpack.c.h.b16 %v2519
    %v2903 = vunpack.c.l.b16 %v2520
    %v2904 = vunpack.c.h.b16 %v2520
    %v2905 = vunpack.c.l.b16 %v2521
    %v2906 = vunpack.c.h.b16 %v2521
    %v2907 = vunpack.c.l.b16 %v2522
    %v2908 = vunpack.c.h.b16 %v2522
    %v2909 = vunpack.c.l.b16 %v2523
    %v2910 = vunpack.c.h.b16 %v2523
    %v2911 = vunpack.c.l.b16 %v2524
    %v2912 = vunpack.c.h.b16 %v2524
    %v2913 = vunpack.c.l.b16 %v2525
    %v2914 = vunpack.c.h.b16 %v2525
    %v2915 = vunpack.c.l.b16 %v2526
    %v2916 = vunpack.c.h.b16 %v2526
    %v2917 = vunpack.c.l.b16 %v2527
    %v2918 = vunpack.c.h.b16 %v2527
    %v2919 = vunpack.c.l.b16 %v2528
    %v2920 = vunpack.c.h.b16 %v2528
    %v2921 = vunpack.c.l.b16 %v2529
    %v2922 = vunpack.c.h.b16 %v2529
    %v2923 = vunpack.c.l.b16 %v2530
    %v2924 = vunpack.c.h.b16 %v2530
    %v2925 = vunpack.c.l.b16 %v2531
    %v2926 = vunpack.c.h.b16 %v2531
    %v2927 = vunpack.c.l.b16 %v2532
    %v2928 = vunpack.c.h.b16 %v2532
    %v2929 = vunpack.c.l.b16 %v2533
    %v2930 = vunpack.c.h.b16 %v2533
    %v2931 = vunpack.c.l.b16 %v2534
    %v2932 = vunpack.c.h.b16 %v2534
    %v2933 = vunpack.c.l.b16 %v2535
    %v2934 = vunpack.c.h.b16 %v2535
    %v2935 = vunpack.c.l.b16 %v2536
    %v2936 = vunpack.c.h.b16 %v2536
    %v2937 = vunpack.c.l.b16 %v2537
    %v2938 = vunpack.c.h.b16 %v2537
    %v2939 = vunpack.c.l.b16 %v2538
    %v2940 = vunpack.c.h.b16 %v2538
    %v2941 = vunpack.c.l.b16 %v2539
    %v2942 = vunpack.c.h.b16 %v2539
    %v2943 = vunpack.c.l.b16 %v2540
    %v2944 = vunpack.c.h.b16 %v2540
    %v2945 = vunpack.c.l.b16 %v2541
    %v2946 = vunpack.c.h.b16 %v2541
    %v2947 = vunpack.c.l.b16 %v2542
    %v2948 = vunpack.c.h.b16 %v2542
    %v2949 = vunpack.c.l.b16 %v2543
    %v2950 = vunpack.c.h.b16 %v2543
    %v2951 = vunpack.c.l.b16 %v2544
    %v2952 = vunpack.c.h.b16 %v2544
    %v2953 = vunpack.c.l.b16 %v2545
    %v2954 = vunpack.c.h.b16 %v2545
    %v2955 = vunpack.c.l.b16 %v2546
    %v2956 = vunpack.c.h.b16 %v2546
    %v2957 = vunpack.c.l.b16 %v2547
    %v2958 = vunpack.c.h.b16 %v2547
    %v2959 = vunpack.c.l.b16 %v2548
    %v2960 = vunpack.c.h.b16 %v2548
    %v2961 = vunpack.c.l.b16 %v2549
    %v2962 = vunpack.c.h.b16 %v2549
    %v2963 = vunpack.c.l.b16 %v2550
    %v2964 = vunpack.c.h.b16 %v2550
    %v2965 = vunpack.c.l.b16 %v2551
    %v2966 = vunpack.c.h.b16 %v2551
    %v2967 = vunpack.c.l.b16 %v2552
    %v2968 = vunpack.c.h.b16 %v2552
    %v2969 = vunpack.c.l.b16 %v2553
    %v2970 = vunpack.c.h.b16 %v2553
    %v2971 = vunpack.c.l.b16 %v2554
    %v2972 = vunpack.c.h.b16 %v2554
    %v2973 = vunpack.c.l.b16 %v2555
    %v2974 = vunpack.c.h.b16 %v2555
    %v2975 = vpack.c.b16 %v2727, %v2719
    %v2976 = vpack.c.b16 %v2728, %v2720
    %v2977 = vpack.c.b16 %v2729, %v2721
    %v2978 = vpack.c.b16 %v2730, %v2722
    %v2979 = vpack.c.b16 %v2731, %v2723
    %v2980 = vpack.c.b16 %v2732, %v2724
    %v2981 = vpack.c.b16 %v2733, %v2725
    %v2982 = vpack.c.b16 %v2734, %v2726
    %v2983 = vpack.c.b16 %v2743, %v2735
    %v2984 = vpack.c.b16 %v2744, %v2736
    %v2985 = vpack.c.b16 %v2745, %v2737
    %v2986 = vpack.c.b16 %v2746, %v2738
    %v2987 = vpack.c.b16 %v2747, %v2739
    %v2988 = vpack.c.b16 %v2748, %v2740
    %v2989 = vpack.c.b16 %v2749, %v2741
    %v2990 = vpack.c.b16 %v2750, %v2742
    %v2991 = vpack.c.b16 %v2759, %v2751
    %v2992 = vpack.c.b16 %v2760, %v2752
    %v2993 = vpack.c.b16 %v2761, %v2753
    %v2994 = vpack.c.b16 %v2762, %v2754
    %v2995 = vpack.c.b16 %v2763, %v2755
    %v2996 = vpack.c.b16 %v2764, %v2756
    %v2997 = vpack.c.b16 %v2765, %v2757
    %v2998 = vpack.c.b16 %v2766, %v2758
    %v2999 = vpack.c.b16 %v2775, %v2767
    %v3000 = vpack.c.b16 %v2776, %v2768
    %v3001 = vpack.c.b16 %v2777, %v2769
    %v3002 = vpack.c.b16 %v2778, %v2770
    %v3003 = vpack.c.b16 %v2779, %v2771
    %v3004 = vpack.c.b16 %v2780, %v2772
    %v3005 = vpack.c.b16 %v2781, %v2773
    %v3006 = vpack.c.b16 %v2782, %v2774
    %v3007 = vpack.c.b16 %v2791, %v2783
    %v3008 = vpack.c.b16 %v2792, %v2784
    %v3009 = vpack.c.b16 %v2793, %v2785
    %v3010 = vpack.c.b16 %v2794, %v2786
    %v3011 = vpack.c.b16 %v2795, %v2787
    %v3012 = vpack.c.b16 %v2796, %v2788
    %v3013 = vpack.c.b16 %v2797, %v2789
    %v3014 = vpack.c.b16 %v2798, %v2790
    %v3015 = vpack.c.b16 %v2807, %v2799
    %v3016 = vpack.c.b16 %v2808, %v2800
    %v3017 = vpack.c.b16 %v2809, %v2801
    %v3018 = vpack.c.b16 %v2810, %v2802
    %v3019 = vpack.c.b16 %v2811, %v2803
    %v3020 = vpack.c.b16 %v2812, %v2804
    %v3021 = vpack.c.b16 %v2813, %v2805
    %v3022 = vpack.c.b16 %v2814, %v2806
    %v3023 = vpack.c.b16 %v2823, %v2815
    %v3024 = vpack.c.b16 %v2824, %v2816
    %v3025 = vpack.c.b16 %v2825, %v2817
    %v3026 = vpack.c.b16 %v2826, %v2818
    %v3027 = vpack.c.b16 %v2827, %v2819
    %v3028 = vpack.c.b16 %v2828, %v2820
    %v3029 = vpack.c.b16 %v2829, %v2821
    %v3030 = vpack.c.b16 %v2830, %v2822
    %v3031 = vpack.c.b16 %v2839, %v2831
    %v3032 = vpack.c.b16 %v2840, %v2832
    %v3033 = vpack.c.b16 %v2841, %v2833
    %v3034 = vpack.c.b16 %v2842, %v2834
    %v3035 = vpack.c.b16 %v2843, %v2835
    %v3036 = vpack.c.b16 %v2844, %v2836
    %v3037 = vpack.c.b16 %v2845, %v2837
    %v3038 = vpack.c.b16 %v2846, %v2838
    %v3039 = vpack.c.b16 %v2855, %v2847
    %v3040 = vpack.c.b16 %v2856, %v2848
    %v3041 = vpack.c.b16 %v2857, %v2849
    %v3042 = vpack.c.b16 %v2858, %v2850
    %v3043 = vpack.c.b16 %v2859, %v2851
    %v3044 = vpack.c.b16 %v2860, %v2852
    %v3045 = vpack.c.b16 %v2861, %v2853
    %v3046 = vpack.c.b16 %v2862, %v2854
    %v3047 = vpack.c.b16 %v2871, %v2863
    %v3048 = vpack.c.b16 %v2872, %v2864
    %v3049 = vpack.c.b16 %v2873, %v2865
    %v3050 = vpack.c.b16 %v2874, %v2866
    %v3051 = vpack.c.b16 %v2875, %v2867
    %v3052 = vpack.c.b16 %v2876, %v2868
    %v3053 = vpack.c.b16 %v2877, %v2869
    %v3054 = vpack.c.b16 %v2878, %v2870
    %v3055 = vpack.c.b16 %v2887, %v2879
    %v3056 = vpack.c.b16 %v2888, %v2880
    %v3057 = vpack.c.b16 %v2889, %v2881
    %v3058 = vpack.c.b16 %v2890, %v2882
    %v3059 = vpack.c.b16 %v2891, %v2883
    %v3060 = vpack.c.b16 %v2892, %v2884
    %v3061 = vpack.c.b16 %v2893, %v2885
    %v3062 = vpack.c.b16 %v2894, %v2886
    %v3063 = vpack.c.b16 %v2903, %v2895
    %v3064 = vpack.c.b16 %v2904, %v2896
    %v3065 = vpack.c.b16 %v2905, %v2897
    %v3066 = vpack.c.b16 %v2906, %v2898
    %v3067 = vpack.c.b16 %v2907, %v2899
    %v3068 = vpack.c.b16 %v2908, %v2900
    %v3069 = vpack.c.b16 %v2909, %v2901
    %v3070 = vpack.c.b16 %v2910, %v2902
    %v3071 = vpack.c.b16 %v2919, %v2911
    %v3072 = vpack.c.b16 %v2920, %v2912
    %v3073 = vpack.c.b16 %v2921, %v2913
    %v3074 = vpack.c.b16 %v2922, %v2914
    %v3075 = vpack.c.b16 %v2923, %v2915
    %v3076 = vpack.c.b16 %v2924, %v2916
    %v3077 = vpack.c.b16 %v2925, %v2917
    %v3078 = vpack.c.b16 %v2926, %v2918
    %v3079 = vpack.c.b16 %v2935, %v2927
    %v3080 = vpack.c.b16 %v2936, %v2928
    %v3081 = vpack.c.b16 %v2937, %v2929
    %v3082 = vpack.c.b16 %v2938, %v2930
    %v3083 = vpack.c.b16 %v2939, %v2931
    %v3084 = vpack.c.b16 %v2940, %v2932
    %v3085 = vpack.c.b16 %v2941, %v2933
    %v3086 = vpack.c.b16 %v2942, %v2934
    %v3087 = vpack.c.b16 %v2951, %v2943
    %v3088 = vpack.c.b16 %v2952, %v2944
    %v3089 = vpack.c.b16 %v2953, %v2945
    %v3090 = vpack.c.b16 %v2954, %v2946
    %v3091 = vpack.c.b16 %v2955, %v2947
    %v3092 = vpack.c.b16 %v2956, %v2948
    %v3093 = vpack.c.b16 %v2957, %v2949
    %v3094 = vpack.c.b16 %v2958, %v2950
    %v3095 = vpack.c.b16 %v2967, %v2959
    %v3096 = vpack.c.b16 %v2968, %v2960
    %v3097 = vpack.c.b16 %v2969, %v2961
    %v3098 = vpack.c.b16 %v2970, %v2962
    %v3099 = vpack.c.b16 %v2971, %v2963
    %v3100 = vpack.c.b16 %v2972, %v2964
    %v3101 = vpack.c.b16 %v2973, %v2965
    %v3102 = vpack.c.b16 %v2974, %v2966
    %3231 = vmatpush.bf16.msra.mxu0 %v3031
    %3232 = vmatpush.bf16.msra.mxu0 %v3023
    %3233 = vmatpush.bf16.msra.mxu0 %v3015
    %3234 = vmatpush.bf16.msra.mxu0 %v3007
    %3235 = vmatpush.bf16.msra.mxu0 %v2999
    %3236 = vmatpush.bf16.msra.mxu0 %v2991
    %3237 = vmatpush.bf16.msra.mxu0 %v2983
    %3238 = vmatpush.bf16.msra.mxu0 %v2975
    %3239 = vmatmul.bf16.gmra.mxu0 0
    %v3240 = vpop.f32.mrf.mxu0
    %v3241 = vadd.f32 0.0, %v3240
    %v3242 = vpop.f32.mrf.mxu0
    %v3243 = vadd.f32 0.0, %v3242
    %3244 = vmatmul.bf16.gmra.mxu0 0
    %v3245 = vpop.f32.mrf.mxu0
    %v3246 = vadd.f32 0.0, %v3245
    %v3247 = vpop.f32.mrf.mxu0
    %v3248 = vadd.f32 0.0, %v3247
    %3249 = vdwg.mxu0
    %3250 = vmatpush.bf16.msra.mxu0 %v3095
    %3251 = vmatpush.bf16.msra.mxu0 %v3087
    %3252 = vmatpush.bf16.msra.mxu0 %v3079
    %3253 = vmatpush.bf16.msra.mxu0 %v3071
    %3254 = vmatpush.bf16.msra.mxu0 %v3063
    %3255 = vmatpush.bf16.msra.mxu0 %v3055
    %3256 = vmatpush.bf16.msra.mxu0 %v3047
    %3257 = vmatpush.bf16.msra.mxu0 %v3039
    %3258 = vmatmul.bf16.gmra.mxu0 0
    %v3259 = vpop.f32.mrf.mxu0
    %v3260 = vadd.f32 %v3241, %v3259
    %v3261 = vpop.f32.mrf.mxu0
    %v3262 = vadd.f32 %v3243, %v3261
    %3263 = vmatmul.bf16.gmra.mxu0 0
    %v3264 = vpop.f32.mrf.mxu0
    %v3265 = vadd.f32 %v3246, %v3264
    %v3266 = vpop.f32.mrf.mxu0
    %v3267 = vadd.f32 %v3248, %v3266
    %3268 = vdwg.mxu0
    %3269 = vmatpush.bf16.msra.mxu0 %v3032
    %3270 = vmatpush.bf16.msra.mxu0 %v3024
    %3271 = vmatpush.bf16.msra.mxu0 %v3016
    %3272 = vmatpush.bf16.msra.mxu0 %v3008
    %3273 = vmatpush.bf16.msra.mxu0 %v3000
    %3274 = vmatpush.bf16.msra.mxu0 %v2992
    %3275 = vmatpush.bf16.msra.mxu0 %v2984
    %3276 = vmatpush.bf16.msra.mxu0 %v2976
    %3277 = vmatmul.bf16.gmra.mxu0 0
    %v3278 = vpop.f32.mrf.mxu0
    %v3279 = vadd.f32 0.0, %v3278
    %v3280 = vpop.f32.mrf.mxu0
    %v3281 = vadd.f32 0.0, %v3280
    %3282 = vmatmul.bf16.gmra.mxu0 0
    %v3283 = vpop.f32.mrf.mxu0
    %v3284 = vadd.f32 0.0, %v3283
    %v3285 = vpop.f32.mrf.mxu0
    %v3286 = vadd.f32 0.0, %v3285
    %3287 = vdwg.mxu0
    %3288 = vmatpush.bf16.msra.mxu0 %v3096
    %3289 = vmatpush.bf16.msra.mxu0 %v3088
    %3290 = vmatpush.bf16.msra.mxu0 %v3080
    %3291 = vmatpush.bf16.msra.mxu0 %v3072
    %3292 = vmatpush.bf16.msra.mxu0 %v3064
    %3293 = vmatpush.bf16.msra.mxu0 %v3056
    %3294 = vmatpush.bf16.msra.mxu0 %v3048
    %3295 = vmatpush.bf16.msra.mxu0 %v3040
    %3296 = vmatmul.bf16.gmra.mxu0 0
    %v3297 = vpop.f32.mrf.mxu0
    %v3298 = vadd.f32 %v3279, %v3297
    %v3299 = vpop.f32.mrf.mxu0
    %v3300 = vadd.f32 %v3281, %v3299
    %3301 = vmatmul.bf16.gmra.mxu0 0
    %v3302 = vpop.f32.mrf.mxu0
    %v3303 = vadd.f32 %v3284, %v3302
    %v3304 = vpop.f32.mrf.mxu0
    %v3305 = vadd.f32 %v3286, %v3304
    %3306 = vdwg.mxu0
    %3307 = vmatpush.bf16.msra.mxu0 %v3033
    %3308 = vmatpush.bf16.msra.mxu0 %v3025
    %3309 = vmatpush.bf16.msra.mxu0 %v3017
    %3310 = vmatpush.bf16.msra.mxu0 %v3009
    %3311 = vmatpush.bf16.msra.mxu0 %v3001
    %3312 = vmatpush.bf16.msra.mxu0 %v2993
    %3313 = vmatpush.bf16.msra.mxu0 %v2985
    %3314 = vmatpush.bf16.msra.mxu0 %v2977
    %3315 = vmatmul.bf16.gmra.mxu0 0
    %v3316 = vpop.f32.mrf.mxu0
    %v3317 = vadd.f32 0.0, %v3316
    %v3318 = vpop.f32.mrf.mxu0
    %v3319 = vadd.f32 0.0, %v3318
    %3320 = vmatmul.bf16.gmra.mxu0 0
    %v3321 = vpop.f32.mrf.mxu0
    %v3322 = vadd.f32 0.0, %v3321
    %v3323 = vpop.f32.mrf.mxu0
    %v3324 = vadd.f32 0.0, %v3323
    %3325 = vdwg.mxu0
    %3326 = vmatpush.bf16.msra.mxu0 %v3097
    %3327 = vmatpush.bf16.msra.mxu0 %v3089
    %3328 = vmatpush.bf16.msra.mxu0 %v3081
    %3329 = vmatpush.bf16.msra.mxu0 %v3073
    %3330 = vmatpush.bf16.msra.mxu0 %v3065
    %3331 = vmatpush.bf16.msra.mxu0 %v3057
    %3332 = vmatpush.bf16.msra.mxu0 %v3049
    %3333 = vmatpush.bf16.msra.mxu0 %v3041
    %3334 = vmatmul.bf16.gmra.mxu0 0
    %v3335 = vpop.f32.mrf.mxu0
    %v3336 = vadd.f32 %v3317, %v3335
    %v3337 = vpop.f32.mrf.mxu0
    %v3338 = vadd.f32 %v3319, %v3337
    %3339 = vmatmul.bf16.gmra.mxu0 0
    %v3340 = vpop.f32.mrf.mxu0
    %v3341 = vadd.f32 %v3322, %v3340
    %v3342 = vpop.f32.mrf.mxu0
    %v3343 = vadd.f32 %v3324, %v3342
    %3344 = vdwg.mxu0
    %3345 = vmatpush.bf16.msra.mxu0 %v3034
    %3346 = vmatpush.bf16.msra.mxu0 %v3026
    %3347 = vmatpush.bf16.msra.mxu0 %v3018
    %3348 = vmatpush.bf16.msra.mxu0 %v3010
    %3349 = vmatpush.bf16.msra.mxu0 %v3002
    %3350 = vmatpush.bf16.msra.mxu0 %v2994
    %3351 = vmatpush.bf16.msra.mxu0 %v2986
    %3352 = vmatpush.bf16.msra.mxu0 %v2978
    %3353 = vmatmul.bf16.gmra.mxu0 0
    %v3354 = vpop.f32.mrf.mxu0
    %v3355 = vadd.f32 0.0, %v3354
    %v3356 = vpop.f32.mrf.mxu0
    %v3357 = vadd.f32 0.0, %v3356
    %3358 = vmatmul.bf16.gmra.mxu0 0
    %v3359 = vpop.f32.mrf.mxu0
    %v3360 = vadd.f32 0.0, %v3359
    %v3361 = vpop.f32.mrf.mxu0
    %v3362 = vadd.f32 0.0, %v3361
    %3363 = vdwg.mxu0
    %3364 = vmatpush.bf16.msra.mxu0 %v3098
    %3365 = vmatpush.bf16.msra.mxu0 %v3090
    %3366 = vmatpush.bf16.msra.mxu0 %v3082
    %3367 = vmatpush.bf16.msra.mxu0 %v3074
    %3368 = vmatpush.bf16.msra.mxu0 %v3066
    %3369 = vmatpush.bf16.msra.mxu0 %v3058
    %3370 = vmatpush.bf16.msra.mxu0 %v3050
    %3371 = vmatpush.bf16.msra.mxu0 %v3042
    %3372 = vmatmul.bf16.gmra.mxu0 0
    %v3373 = vpop.f32.mrf.mxu0
    %v3374 = vadd.f32 %v3355, %v3373
    %v3375 = vpop.f32.mrf.mxu0
    %v3376 = vadd.f32 %v3357, %v3375
    %3377 = vmatmul.bf16.gmra.mxu0 0
    %v3378 = vpop.f32.mrf.mxu0
    %v3379 = vadd.f32 %v3360, %v3378
    %v3380 = vpop.f32.mrf.mxu0
    %v3381 = vadd.f32 %v3362, %v3380
    %3382 = vdwg.mxu0
    %3383 = vmatpush.bf16.msra.mxu0 %v3035
    %3384 = vmatpush.bf16.msra.mxu0 %v3027
    %3385 = vmatpush.bf16.msra.mxu0 %v3019
    %3386 = vmatpush.bf16.msra.mxu0 %v3011
    %3387 = vmatpush.bf16.msra.mxu0 %v3003
    %3388 = vmatpush.bf16.msra.mxu0 %v2995
    %3389 = vmatpush.bf16.msra.mxu0 %v2987
    %3390 = vmatpush.bf16.msra.mxu0 %v2979
    %3391 = vmatmul.bf16.gmra.mxu0 0
    %v3392 = vpop.f32.mrf.mxu0
    %v3393 = vadd.f32 0.0, %v3392
    %v3394 = vpop.f32.mrf.mxu0
    %v3395 = vadd.f32 0.0, %v3394
    %3396 = vmatmul.bf16.gmra.mxu0 0
    %v3397 = vpop.f32.mrf.mxu0
    %v3398 = vadd.f32 0.0, %v3397
    %v3399 = vpop.f32.mrf.mxu0
    %v3400 = vadd.f32 0.0, %v3399
    %3401 = vdwg.mxu0
    %3402 = vmatpush.bf16.msra.mxu0 %v3099
    %3403 = vmatpush.bf16.msra.mxu0 %v3091
    %3404 = vmatpush.bf16.msra.mxu0 %v3083
    %3405 = vmatpush.bf16.msra.mxu0 %v3075
    %3406 = vmatpush.bf16.msra.mxu0 %v3067
    %3407 = vmatpush.bf16.msra.mxu0 %v3059
    %3408 = vmatpush.bf16.msra.mxu0 %v3051
    %3409 = vmatpush.bf16.msra.mxu0 %v3043
    %3410 = vmatmul.bf16.gmra.mxu0 0
    %v3411 = vpop.f32.mrf.mxu0
    %v3412 = vadd.f32 %v3393, %v3411
    %v3413 = vpop.f32.mrf.mxu0
    %v3414 = vadd.f32 %v3395, %v3413
    %3415 = vmatmul.bf16.gmra.mxu0 0
    %v3416 = vpop.f32.mrf.mxu0
    %v3417 = vadd.f32 %v3398, %v3416
    %v3418 = vpop.f32.mrf.mxu0
    %v3419 = vadd.f32 %v3400, %v3418
    %3420 = vdwg.mxu0
    %3421 = vmatpush.bf16.msra.mxu0 %v3036
    %3422 = vmatpush.bf16.msra.mxu0 %v3028
    %3423 = vmatpush.bf16.msra.mxu0 %v3020
    %3424 = vmatpush.bf16.msra.mxu0 %v3012
    %3425 = vmatpush.bf16.msra.mxu0 %v3004
    %3426 = vmatpush.bf16.msra.mxu0 %v2996
    %3427 = vmatpush.bf16.msra.mxu0 %v2988
    %3428 = vmatpush.bf16.msra.mxu0 %v2980
    %3429 = vmatmul.bf16.gmra.mxu0 0
    %v3430 = vpop.f32.mrf.mxu0
    %v3431 = vadd.f32 0.0, %v3430
    %v3432 = vpop.f32.mrf.mxu0
    %v3433 = vadd.f32 0.0, %v3432
    %3434 = vmatmul.bf16.gmra.mxu0 0
    %v3435 = vpop.f32.mrf.mxu0
    %v3436 = vadd.f32 0.0, %v3435
    %v3437 = vpop.f32.mrf.mxu0
    %v3438 = vadd.f32 0.0, %v3437
    %3439 = vdwg.mxu0
    %3440 = vmatpush.bf16.msra.mxu0 %v3100
    %3441 = vmatpush.bf16.msra.mxu0 %v3092
    %3442 = vmatpush.bf16.msra.mxu0 %v3084
    %3443 = vmatpush.bf16.msra.mxu0 %v3076
    %3444 = vmatpush.bf16.msra.mxu0 %v3068
    %3445 = vmatpush.bf16.msra.mxu0 %v3060
    %3446 = vmatpush.bf16.msra.mxu0 %v3052
    %3447 = vmatpush.bf16.msra.mxu0 %v3044
    %3448 = vmatmul.bf16.gmra.mxu0 0
    %v3449 = vpop.f32.mrf.mxu0
    %v3450 = vadd.f32 %v3431, %v3449
    %v3451 = vpop.f32.mrf.mxu0
    %v3452 = vadd.f32 %v3433, %v3451
    %3453 = vmatmul.bf16.gmra.mxu0 0
    %v3454 = vpop.f32.mrf.mxu0
    %v3455 = vadd.f32 %v3436, %v3454
    %v3456 = vpop.f32.mrf.mxu0
    %v3457 = vadd.f32 %v3438, %v3456
    %3458 = vdwg.mxu0
    %3459 = vmatpush.bf16.msra.mxu0 %v3037
    %3460 = vmatpush.bf16.msra.mxu0 %v3029
    %3461 = vmatpush.bf16.msra.mxu0 %v3021
    %3462 = vmatpush.bf16.msra.mxu0 %v3013
    %3463 = vmatpush.bf16.msra.mxu0 %v3005
    %3464 = vmatpush.bf16.msra.mxu0 %v2997
    %3465 = vmatpush.bf16.msra.mxu0 %v2989
    %3466 = vmatpush.bf16.msra.mxu0 %v2981
    %3467 = vmatmul.bf16.gmra.mxu0 0
    %v3468 = vpop.f32.mrf.mxu0
    %v3469 = vadd.f32 0.0, %v3468
    %v3470 = vpop.f32.mrf.mxu0
    %v3471 = vadd.f32 0.0, %v3470
    %3472 = vmatmul.bf16.gmra.mxu0 0
    %v3473 = vpop.f32.mrf.mxu0
    %v3474 = vadd.f32 0.0, %v3473
    %v3475 = vpop.f32.mrf.mxu0
    %v3476 = vadd.f32 0.0, %v3475
    %3477 = vdwg.mxu0
    %3478 = vmatpush.bf16.msra.mxu0 %v3101
    %3479 = vmatpush.bf16.msra.mxu0 %v3093
    %3480 = vmatpush.bf16.msra.mxu0 %v3085
    %3481 = vmatpush.bf16.msra.mxu0 %v3077
    %3482 = vmatpush.bf16.msra.mxu0 %v3069
    %3483 = vmatpush.bf16.msra.mxu0 %v3061
    %3484 = vmatpush.bf16.msra.mxu0 %v3053
    %3485 = vmatpush.bf16.msra.mxu0 %v3045
    %3486 = vmatmul.bf16.gmra.mxu0 0
    %v3487 = vpop.f32.mrf.mxu0
    %v3488 = vadd.f32 %v3469, %v3487
    %v3489 = vpop.f32.mrf.mxu0
    %v3490 = vadd.f32 %v3471, %v3489
    %3491 = vmatmul.bf16.gmra.mxu0 0
    %v3492 = vpop.f32.mrf.mxu0
    %v3493 = vadd.f32 %v3474, %v3492
    %v3494 = vpop.f32.mrf.mxu0
    %v3495 = vadd.f32 %v3476, %v3494
    %3496 = vdwg.mxu0
    %3497 = vmatpush.bf16.msra.mxu0 %v3038
    %3498 = vmatpush.bf16.msra.mxu0 %v3030
    %3499 = vmatpush.bf16.msra.mxu0 %v3022
    %3500 = vmatpush.bf16.msra.mxu0 %v3014
    %3501 = vmatpush.bf16.msra.mxu0 %v3006
    %3502 = vmatpush.bf16.msra.mxu0 %v2998
    %3503 = vmatpush.bf16.msra.mxu0 %v2990
    %3504 = vmatpush.bf16.msra.mxu0 %v2982
    %3505 = vmatmul.bf16.gmra.mxu0 0
    %v3506 = vpop.f32.mrf.mxu0
    %v3507 = vadd.f32 0.0, %v3506
    %v3508 = vpop.f32.mrf.mxu0
    %v3509 = vadd.f32 0.0, %v3508
    %3510 = vmatmul.bf16.gmra.mxu0 0
    %v3511 = vpop.f32.mrf.mxu0
    %v3512 = vadd.f32 0.0, %v3511
    %v3513 = vpop.f32.mrf.mxu0
    %v3514 = vadd.f32 0.0, %v3513
    %3515 = vdwg.mxu0
    %3516 = vmatpush.bf16.msra.mxu0 %v3102
    %3517 = vmatpush.bf16.msra.mxu0 %v3094
    %3518 = vmatpush.bf16.msra.mxu0 %v3086
    %3519 = vmatpush.bf16.msra.mxu0 %v3078
    %3520 = vmatpush.bf16.msra.mxu0 %v3070
    %3521 = vmatpush.bf16.msra.mxu0 %v3062
    %3522 = vmatpush.bf16.msra.mxu0 %v3054
    %3523 = vmatpush.bf16.msra.mxu0 %v3046
    %3524 = vmatmul.bf16.gmra.mxu0 0
    %v3525 = vpop.f32.mrf.mxu0
    %v3526 = vadd.f32 %v3507, %v3525
    %v3527 = vpop.f32.mrf.mxu0
    %v3528 = vadd.f32 %v3509, %v3527
    %3529 = vmatmul.bf16.gmra.mxu0 0
    %v3530 = vpop.f32.mrf.mxu0
    %v3531 = vadd.f32 %v3512, %v3530
    %v3532 = vpop.f32.mrf.mxu0
    %v3533 = vadd.f32 %v3514, %v3532
    %3534 = vdwg.mxu0
    %v3535 = vadd.f32 %v2559, %v3260
    %v3536 = vadd.f32 %v2560, %v3298
    %v3537 = vadd.f32 %v2561, %v3336
    %v3538 = vadd.f32 %v2562, %v3374
    %v3539 = vadd.f32 %v2563, %v3412
    %v3540 = vadd.f32 %v2564, %v3450
    %v3541 = vadd.f32 %v2565, %v3488
    %v3542 = vadd.f32 %v2566, %v3526
    %v3543 = vadd.f32 %v2567, %v3262
    %v3544 = vadd.f32 %v2568, %v3300
    %v3545 = vadd.f32 %v2569, %v3338
    %v3546 = vadd.f32 %v2570, %v3376
    %v3547 = vadd.f32 %v2571, %v3414
    %v3548 = vadd.f32 %v2572, %v3452
    %v3549 = vadd.f32 %v2573, %v3490
    %v3550 = vadd.f32 %v2574, %v3528
    %v3551 = vadd.f32 %v2575, %v3265
    %v3552 = vadd.f32 %v2576, %v3303
    %v3553 = vadd.f32 %v2577, %v3341
    %v3554 = vadd.f32 %v2578, %v3379
    %v3555 = vadd.f32 %v2579, %v3417
    %v3556 = vadd.f32 %v2580, %v3455
    %v3557 = vadd.f32 %v2581, %v3493
    %v3558 = vadd.f32 %v2582, %v3531
    %v3559 = vadd.f32 %v2583, %v3267
    %v3560 = vadd.f32 %v2584, %v3305
    %v3561 = vadd.f32 %v2585, %v3343
    %v3562 = vadd.f32 %v2586, %v3381
    %v3563 = vadd.f32 %v2587, %v3419
    %v3564 = vadd.f32 %v2588, %v3457
    %v3565 = vadd.f32 %v2589, %v3495
    %v3566 = vadd.f32 %v2590, %v3533
    %v3567 = vxor.u32 %v3535, 2147483648
    %v3568 = vxor.u32 %v3536, 2147483648
    %v3569 = vxor.u32 %v3537, 2147483648
    %v3570 = vxor.u32 %v3538, 2147483648
    %v3571 = vxor.u32 %v3539, 2147483648
    %v3572 = vxor.u32 %v3540, 2147483648
    %v3573 = vxor.u32 %v3543, 2147483648
    %v3574 = vxor.u32 %v3544, 2147483648
    %v3575 = vxor.u32 %v3545, 2147483648
    %v3576 = vxor.u32 %v3546, 2147483648
    %v3577 = vxor.u32 %v3547, 2147483648
    %v3578 = vxor.u32 %v3548, 2147483648
    %v3579 = vxor.u32 %v3551, 2147483648
    %v3580 = vxor.u32 %v3552, 2147483648
    %v3581 = vxor.u32 %v3553, 2147483648
    %v3582 = vxor.u32 %v3554, 2147483648
    %v3583 = vxor.u32 %v3555, 2147483648
    %v3584 = vxor.u32 %v3556, 2147483648
    %v3585 = vxor.u32 %v3559, 2147483648
    %v3586 = vxor.u32 %v3560, 2147483648
    %v3587 = vxor.u32 %v3561, 2147483648
    %v3588 = vxor.u32 %v3562, 2147483648
    %v3589 = vxor.u32 %v3563, 2147483648
    %v3590 = vxor.u32 %v3564, 2147483648
    %v3591 = vmul.f32 %v3567, 1.442695
    %v3592 = vpow.pop %v3591
    %v3593 = vmul.f32 %v3568, 1.442695
    %v3594 = vpow.pop %v3593
    %v3595 = vmul.f32 %v3569, 1.442695
    %v3596 = vpow.pop %v3595
    %v3597 = vmul.f32 %v3570, 1.442695
    %v3598 = vpow.pop %v3597
    %v3599 = vmul.f32 %v3571, 1.442695
    %v3600 = vpow.pop %v3599
    %v3601 = vmul.f32 %v3572, 1.442695
    %v3602 = vpow.pop %v3601
    %v3603 = vmul.f32 %v3573, 1.442695
    %v3604 = vpow.pop %v3603
    %v3605 = vmul.f32 %v3574, 1.442695
    %v3606 = vpow.pop %v3605
    %v3607 = vmul.f32 %v3575, 1.442695
    %v3608 = vpow.pop %v3607
    %v3609 = vmul.f32 %v3576, 1.442695
    %v3610 = vpow.pop %v3609
    %v3611 = vmul.f32 %v3577, 1.442695
    %v3612 = vpow.pop %v3611
    %v3613 = vmul.f32 %v3578, 1.442695
    %v3614 = vpow.pop %v3613
    %v3615 = vmul.f32 %v3579, 1.442695
    %v3616 = vpow.pop %v3615
    %v3617 = vmul.f32 %v3580, 1.442695
    %v3618 = vpow.pop %v3617
    %v3619 = vmul.f32 %v3581, 1.442695
    %v3620 = vpow.pop %v3619
    %v3621 = vmul.f32 %v3582, 1.442695
    %v3622 = vpow.pop %v3621
    %v3623 = vmul.f32 %v3583, 1.442695
    %v3624 = vpow.pop %v3623
    %v3625 = vmul.f32 %v3584, 1.442695
    %v3626 = vpow.pop %v3625
    %v3627 = vmul.f32 %v3585, 1.442695
    %v3628 = vpow.pop %v3627
    %v3629 = vmul.f32 %v3586, 1.442695
    %v3630 = vpow.pop %v3629
    %v3631 = vmul.f32 %v3587, 1.442695
    %v3632 = vpow.pop %v3631
    %v3633 = vmul.f32 %v3588, 1.442695
    %v3634 = vpow.pop %v3633
    %v3635 = vmul.f32 %v3589, 1.442695
    %v3636 = vpow.pop %v3635
    %v3637 = vmul.f32 %v3590, 1.442695
    %v3638 = vpow.pop %v3637
    %v3639 = vadd.f32 %v3592, 1.0
    %v3640 = vadd.f32 %v3594, 1.0
    %v3641 = vadd.f32 %v3596, 1.0
    %v3642 = vadd.f32 %v3598, 1.0
    %v3643 = vadd.f32 %v3600, 1.0
    %v3644 = vadd.f32 %v3602, 1.0
    %v3645 = vadd.f32 %v3604, 1.0
    %v3646 = vadd.f32 %v3606, 1.0
    %v3647 = vadd.f32 %v3608, 1.0
    %v3648 = vadd.f32 %v3610, 1.0
    %v3649 = vadd.f32 %v3612, 1.0
    %v3650 = vadd.f32 %v3614, 1.0
    %v3651 = vadd.f32 %v3616, 1.0
    %v3652 = vadd.f32 %v3618, 1.0
    %v3653 = vadd.f32 %v3620, 1.0
    %v3654 = vadd.f32 %v3622, 1.0
    %v3655 = vadd.f32 %v3624, 1.0
    %v3656 = vadd.f32 %v3626, 1.0
    %v3657 = vadd.f32 %v3628, 1.0
    %v3658 = vadd.f32 %v3630, 1.0
    %v3659 = vadd.f32 %v3632, 1.0
    %v3660 = vadd.f32 %v3634, 1.0
    %v3661 = vadd.f32 %v3636, 1.0
    %v3662 = vadd.f32 %v3638, 1.0
    %v3663 = vrcp.pop %v3639
    %v3664 = vmul.f32 %v3639, %v3663
    %v3665 = vsub.f32 1.0, %v3664
    %v3666 = vmul.f32 %v3663, %v3665
    %v3667 = vadd.f32 %v3663, %v3666
    %vm3668 = vweird.f32 %v3639
    %vm3669 = vweird.f32 %v3663
    %vm3670 = vmor %vm3668, %vm3669
    %v3671 = vsel %vm3670, %v3663, %v3667
    %v3672 = vand.u32 2147483647, %v3639
    %vm3673 = vcmp.eq.f32.partialorder %v3672, 8.507059e+37
    %v3674 = vand.u32 %v3639, 2147483648
    %v3675 = vor.u32 1.1754944e-38, %v3674
    %v3676 = vsel %vm3673, %v3675, %v3671
    %v3677 = vmul.f32 1.0, %v3676
    %v3678 = vrcp.pop %v3640
    %v3679 = vmul.f32 %v3640, %v3678
    %v3680 = vsub.f32 1.0, %v3679
    %v3681 = vmul.f32 %v3678, %v3680
    %v3682 = vadd.f32 %v3678, %v3681
    %vm3683 = vweird.f32 %v3640
    %vm3684 = vweird.f32 %v3678
    %vm3685 = vmor %vm3683, %vm3684
    %v3686 = vsel %vm3685, %v3678, %v3682
    %v3687 = vand.u32 2147483647, %v3640
    %vm3688 = vcmp.eq.f32.partialorder %v3687, 8.507059e+37
    %v3689 = vand.u32 %v3640, 2147483648
    %v3690 = vor.u32 1.1754944e-38, %v3689
    %v3691 = vsel %vm3688, %v3690, %v3686
    %v3692 = vmul.f32 1.0, %v3691
    %v3693 = vrcp.pop %v3641
    %v3694 = vmul.f32 %v3641, %v3693
    %v3695 = vsub.f32 1.0, %v3694
    %v3696 = vmul.f32 %v3693, %v3695
    %v3697 = vadd.f32 %v3693, %v3696
    %vm3698 = vweird.f32 %v3641
    %vm3699 = vweird.f32 %v3693
    %vm3700 = vmor %vm3698, %vm3699
    %v3701 = vsel %vm3700, %v3693, %v3697
    %v3702 = vand.u32 2147483647, %v3641
    %vm3703 = vcmp.eq.f32.partialorder %v3702, 8.507059e+37
    %v3704 = vand.u32 %v3641, 2147483648
    %v3705 = vor.u32 1.1754944e-38, %v3704
    %v3706 = vsel %vm3703, %v3705, %v3701
    %v3707 = vmul.f32 1.0, %v3706
    %v3708 = vrcp.pop %v3642
    %v3709 = vmul.f32 %v3642, %v3708
    %v3710 = vsub.f32 1.0, %v3709
    %v3711 = vmul.f32 %v3708, %v3710
    %v3712 = vadd.f32 %v3708, %v3711
    %vm3713 = vweird.f32 %v3642
    %vm3714 = vweird.f32 %v3708
    %vm3715 = vmor %vm3713, %vm3714
    %v3716 = vsel %vm3715, %v3708, %v3712
    %v3717 = vand.u32 2147483647, %v3642
    %vm3718 = vcmp.eq.f32.partialorder %v3717, 8.507059e+37
    %v3719 = vand.u32 %v3642, 2147483648
    %v3720 = vor.u32 1.1754944e-38, %v3719
    %v3721 = vsel %vm3718, %v3720, %v3716
    %v3722 = vmul.f32 1.0, %v3721
    %v3723 = vrcp.pop %v3643
    %v3724 = vmul.f32 %v3643, %v3723
    %v3725 = vsub.f32 1.0, %v3724
    %v3726 = vmul.f32 %v3723, %v3725
    %v3727 = vadd.f32 %v3723, %v3726
    %vm3728 = vweird.f32 %v3643
    %vm3729 = vweird.f32 %v3723
    %vm3730 = vmor %vm3728, %vm3729
    %v3731 = vsel %vm3730, %v3723, %v3727
    %v3732 = vand.u32 2147483647, %v3643
    %vm3733 = vcmp.eq.f32.partialorder %v3732, 8.507059e+37
    %v3734 = vand.u32 %v3643, 2147483648
    %v3735 = vor.u32 1.1754944e-38, %v3734
    %v3736 = vsel %vm3733, %v3735, %v3731
    %v3737 = vmul.f32 1.0, %v3736
    %v3738 = vrcp.pop %v3644
    %v3739 = vmul.f32 %v3644, %v3738
    %v3740 = vsub.f32 1.0, %v3739
    %v3741 = vmul.f32 %v3738, %v3740
    %v3742 = vadd.f32 %v3738, %v3741
    %vm3743 = vweird.f32 %v3644
    %vm3744 = vweird.f32 %v3738
    %vm3745 = vmor %vm3743, %vm3744
    %v3746 = vsel %vm3745, %v3738, %v3742
    %v3747 = vand.u32 2147483647, %v3644
    %vm3748 = vcmp.eq.f32.partialorder %v3747, 8.507059e+37
    %v3749 = vand.u32 %v3644, 2147483648
    %v3750 = vor.u32 1.1754944e-38, %v3749
    %v3751 = vsel %vm3748, %v3750, %v3746
    %v3752 = vmul.f32 1.0, %v3751
    %v3753 = vrcp.pop %v3645
    %v3754 = vmul.f32 %v3645, %v3753
    %v3755 = vsub.f32 1.0, %v3754
    %v3756 = vmul.f32 %v3753, %v3755
    %v3757 = vadd.f32 %v3753, %v3756
    %vm3758 = vweird.f32 %v3645
    %vm3759 = vweird.f32 %v3753
    %vm3760 = vmor %vm3758, %vm3759
    %v3761 = vsel %vm3760, %v3753, %v3757
    %v3762 = vand.u32 2147483647, %v3645
    %vm3763 = vcmp.eq.f32.partialorder %v3762, 8.507059e+37
    %v3764 = vand.u32 %v3645, 2147483648
    %v3765 = vor.u32 1.1754944e-38, %v3764
    %v3766 = vsel %vm3763, %v3765, %v3761
    %v3767 = vmul.f32 1.0, %v3766
    %v3768 = vrcp.pop %v3646
    %v3769 = vmul.f32 %v3646, %v3768
    %v3770 = vsub.f32 1.0, %v3769
    %v3771 = vmul.f32 %v3768, %v3770
    %v3772 = vadd.f32 %v3768, %v3771
    %vm3773 = vweird.f32 %v3646
    %vm3774 = vweird.f32 %v3768
    %vm3775 = vmor %vm3773, %vm3774
    %v3776 = vsel %vm3775, %v3768, %v3772
    %v3777 = vand.u32 2147483647, %v3646
    %vm3778 = vcmp.eq.f32.partialorder %v3777, 8.507059e+37
    %v3779 = vand.u32 %v3646, 2147483648
    %v3780 = vor.u32 1.1754944e-38, %v3779
    %v3781 = vsel %vm3778, %v3780, %v3776
    %v3782 = vmul.f32 1.0, %v3781
    %v3783 = vrcp.pop %v3647
    %v3784 = vmul.f32 %v3647, %v3783
    %v3785 = vsub.f32 1.0, %v3784
    %v3786 = vmul.f32 %v3783, %v3785
    %v3787 = vadd.f32 %v3783, %v3786
    %vm3788 = vweird.f32 %v3647
    %vm3789 = vweird.f32 %v3783
    %vm3790 = vmor %vm3788, %vm3789
    %v3791 = vsel %vm3790, %v3783, %v3787
    %v3792 = vand.u32 2147483647, %v3647
    %vm3793 = vcmp.eq.f32.partialorder %v3792, 8.507059e+37
    %v3794 = vand.u32 %v3647, 2147483648
    %v3795 = vor.u32 1.1754944e-38, %v3794
    %v3796 = vsel %vm3793, %v3795, %v3791
    %v3797 = vmul.f32 1.0, %v3796
    %v3798 = vrcp.pop %v3648
    %v3799 = vmul.f32 %v3648, %v3798
    %v3800 = vsub.f32 1.0, %v3799
    %v3801 = vmul.f32 %v3798, %v3800
    %v3802 = vadd.f32 %v3798, %v3801
    %vm3803 = vweird.f32 %v3648
    %vm3804 = vweird.f32 %v3798
    %vm3805 = vmor %vm3803, %vm3804
    %v3806 = vsel %vm3805, %v3798, %v3802
    %v3807 = vand.u32 2147483647, %v3648
    %vm3808 = vcmp.eq.f32.partialorder %v3807, 8.507059e+37
    %v3809 = vand.u32 %v3648, 2147483648
    %v3810 = vor.u32 1.1754944e-38, %v3809
    %v3811 = vsel %vm3808, %v3810, %v3806
    %v3812 = vmul.f32 1.0, %v3811
    %v3813 = vrcp.pop %v3649
    %v3814 = vmul.f32 %v3649, %v3813
    %v3815 = vsub.f32 1.0, %v3814
    %v3816 = vmul.f32 %v3813, %v3815
    %v3817 = vadd.f32 %v3813, %v3816
    %vm3818 = vweird.f32 %v3649
    %vm3819 = vweird.f32 %v3813
    %vm3820 = vmor %vm3818, %vm3819
    %v3821 = vsel %vm3820, %v3813, %v3817
    %v3822 = vand.u32 2147483647, %v3649
    %vm3823 = vcmp.eq.f32.partialorder %v3822, 8.507059e+37
    %v3824 = vand.u32 %v3649, 2147483648
    %v3825 = vor.u32 1.1754944e-38, %v3824
    %v3826 = vsel %vm3823, %v3825, %v3821
    %v3827 = vmul.f32 1.0, %v3826
    %v3828 = vrcp.pop %v3650
    %v3829 = vmul.f32 %v3650, %v3828
    %v3830 = vsub.f32 1.0, %v3829
    %v3831 = vmul.f32 %v3828, %v3830
    %v3832 = vadd.f32 %v3828, %v3831
    %vm3833 = vweird.f32 %v3650
    %vm3834 = vweird.f32 %v3828
    %vm3835 = vmor %vm3833, %vm3834
    %v3836 = vsel %vm3835, %v3828, %v3832
    %v3837 = vand.u32 2147483647, %v3650
    %vm3838 = vcmp.eq.f32.partialorder %v3837, 8.507059e+37
    %v3839 = vand.u32 %v3650, 2147483648
    %v3840 = vor.u32 1.1754944e-38, %v3839
    %v3841 = vsel %vm3838, %v3840, %v3836
    %v3842 = vmul.f32 1.0, %v3841
    %v3843 = vrcp.pop %v3651
    %v3844 = vmul.f32 %v3651, %v3843
    %v3845 = vsub.f32 1.0, %v3844
    %v3846 = vmul.f32 %v3843, %v3845
    %v3847 = vadd.f32 %v3843, %v3846
    %vm3848 = vweird.f32 %v3651
    %vm3849 = vweird.f32 %v3843
    %vm3850 = vmor %vm3848, %vm3849
    %v3851 = vsel %vm3850, %v3843, %v3847
    %v3852 = vand.u32 2147483647, %v3651
    %vm3853 = vcmp.eq.f32.partialorder %v3852, 8.507059e+37
    %v3854 = vand.u32 %v3651, 2147483648
    %v3855 = vor.u32 1.1754944e-38, %v3854
    %v3856 = vsel %vm3853, %v3855, %v3851
    %v3857 = vmul.f32 1.0, %v3856
    %v3858 = vrcp.pop %v3652
    %v3859 = vmul.f32 %v3652, %v3858
    %v3860 = vsub.f32 1.0, %v3859
    %v3861 = vmul.f32 %v3858, %v3860
    %v3862 = vadd.f32 %v3858, %v3861
    %vm3863 = vweird.f32 %v3652
    %vm3864 = vweird.f32 %v3858
    %vm3865 = vmor %vm3863, %vm3864
    %v3866 = vsel %vm3865, %v3858, %v3862
    %v3867 = vand.u32 2147483647, %v3652
    %vm3868 = vcmp.eq.f32.partialorder %v3867, 8.507059e+37
    %v3869 = vand.u32 %v3652, 2147483648
    %v3870 = vor.u32 1.1754944e-38, %v3869
    %v3871 = vsel %vm3868, %v3870, %v3866
    %v3872 = vmul.f32 1.0, %v3871
    %v3873 = vrcp.pop %v3653
    %v3874 = vmul.f32 %v3653, %v3873
    %v3875 = vsub.f32 1.0, %v3874
    %v3876 = vmul.f32 %v3873, %v3875
    %v3877 = vadd.f32 %v3873, %v3876
    %vm3878 = vweird.f32 %v3653
    %vm3879 = vweird.f32 %v3873
    %vm3880 = vmor %vm3878, %vm3879
    %v3881 = vsel %vm3880, %v3873, %v3877
    %v3882 = vand.u32 2147483647, %v3653
    %vm3883 = vcmp.eq.f32.partialorder %v3882, 8.507059e+37
    %v3884 = vand.u32 %v3653, 2147483648
    %v3885 = vor.u32 1.1754944e-38, %v3884
    %v3886 = vsel %vm3883, %v3885, %v3881
    %v3887 = vmul.f32 1.0, %v3886
    %v3888 = vrcp.pop %v3654
    %v3889 = vmul.f32 %v3654, %v3888
    %v3890 = vsub.f32 1.0, %v3889
    %v3891 = vmul.f32 %v3888, %v3890
    %v3892 = vadd.f32 %v3888, %v3891
    %vm3893 = vweird.f32 %v3654
    %vm3894 = vweird.f32 %v3888
    %vm3895 = vmor %vm3893, %vm3894
    %v3896 = vsel %vm3895, %v3888, %v3892
    %v3897 = vand.u32 2147483647, %v3654
    %vm3898 = vcmp.eq.f32.partialorder %v3897, 8.507059e+37
    %v3899 = vand.u32 %v3654, 2147483648
    %v3900 = vor.u32 1.1754944e-38, %v3899
    %v3901 = vsel %vm3898, %v3900, %v3896
    %v3902 = vmul.f32 1.0, %v3901
    %v3903 = vrcp.pop %v3655
    %v3904 = vmul.f32 %v3655, %v3903
    %v3905 = vsub.f32 1.0, %v3904
    %v3906 = vmul.f32 %v3903, %v3905
    %v3907 = vadd.f32 %v3903, %v3906
    %vm3908 = vweird.f32 %v3655
    %vm3909 = vweird.f32 %v3903
    %vm3910 = vmor %vm3908, %vm3909
    %v3911 = vsel %vm3910, %v3903, %v3907
    %v3912 = vand.u32 2147483647, %v3655
    %vm3913 = vcmp.eq.f32.partialorder %v3912, 8.507059e+37
    %v3914 = vand.u32 %v3655, 2147483648
    %v3915 = vor.u32 1.1754944e-38, %v3914
    %v3916 = vsel %vm3913, %v3915, %v3911
    %v3917 = vmul.f32 1.0, %v3916
    %v3918 = vrcp.pop %v3656
    %v3919 = vmul.f32 %v3656, %v3918
    %v3920 = vsub.f32 1.0, %v3919
    %v3921 = vmul.f32 %v3918, %v3920
    %v3922 = vadd.f32 %v3918, %v3921
    %vm3923 = vweird.f32 %v3656
    %vm3924 = vweird.f32 %v3918
    %vm3925 = vmor %vm3923, %vm3924
    %v3926 = vsel %vm3925, %v3918, %v3922
    %v3927 = vand.u32 2147483647, %v3656
    %vm3928 = vcmp.eq.f32.partialorder %v3927, 8.507059e+37
    %v3929 = vand.u32 %v3656, 2147483648
    %v3930 = vor.u32 1.1754944e-38, %v3929
    %v3931 = vsel %vm3928, %v3930, %v3926
    %v3932 = vmul.f32 1.0, %v3931
    %v3933 = vrcp.pop %v3657
    %v3934 = vmul.f32 %v3657, %v3933
    %v3935 = vsub.f32 1.0, %v3934
    %v3936 = vmul.f32 %v3933, %v3935
    %v3937 = vadd.f32 %v3933, %v3936
    %vm3938 = vweird.f32 %v3657
    %vm3939 = vweird.f32 %v3933
    %vm3940 = vmor %vm3938, %vm3939
    %v3941 = vsel %vm3940, %v3933, %v3937
    %v3942 = vand.u32 2147483647, %v3657
    %vm3943 = vcmp.eq.f32.partialorder %v3942, 8.507059e+37
    %v3944 = vand.u32 %v3657, 2147483648
    %v3945 = vor.u32 1.1754944e-38, %v3944
    %v3946 = vsel %vm3943, %v3945, %v3941
    %v3947 = vmul.f32 1.0, %v3946
    %v3948 = vrcp.pop %v3658
    %v3949 = vmul.f32 %v3658, %v3948
    %v3950 = vsub.f32 1.0, %v3949
    %v3951 = vmul.f32 %v3948, %v3950
    %v3952 = vadd.f32 %v3948, %v3951
    %vm3953 = vweird.f32 %v3658
    %vm3954 = vweird.f32 %v3948
    %vm3955 = vmor %vm3953, %vm3954
    %v3956 = vsel %vm3955, %v3948, %v3952
    %v3957 = vand.u32 2147483647, %v3658
    %vm3958 = vcmp.eq.f32.partialorder %v3957, 8.507059e+37
    %v3959 = vand.u32 %v3658, 2147483648
    %v3960 = vor.u32 1.1754944e-38, %v3959
    %v3961 = vsel %vm3958, %v3960, %v3956
    %v3962 = vmul.f32 1.0, %v3961
    %v3963 = vrcp.pop %v3659
    %v3964 = vmul.f32 %v3659, %v3963
    %v3965 = vsub.f32 1.0, %v3964
    %v3966 = vmul.f32 %v3963, %v3965
    %v3967 = vadd.f32 %v3963, %v3966
    %vm3968 = vweird.f32 %v3659
    %vm3969 = vweird.f32 %v3963
    %vm3970 = vmor %vm3968, %vm3969
    %v3971 = vsel %vm3970, %v3963, %v3967
    %v3972 = vand.u32 2147483647, %v3659
    %vm3973 = vcmp.eq.f32.partialorder %v3972, 8.507059e+37
    %v3974 = vand.u32 %v3659, 2147483648
    %v3975 = vor.u32 1.1754944e-38, %v3974
    %v3976 = vsel %vm3973, %v3975, %v3971
    %v3977 = vmul.f32 1.0, %v3976
    %v3978 = vrcp.pop %v3660
    %v3979 = vmul.f32 %v3660, %v3978
    %v3980 = vsub.f32 1.0, %v3979
    %v3981 = vmul.f32 %v3978, %v3980
    %v3982 = vadd.f32 %v3978, %v3981
    %vm3983 = vweird.f32 %v3660
    %vm3984 = vweird.f32 %v3978
    %vm3985 = vmor %vm3983, %vm3984
    %v3986 = vsel %vm3985, %v3978, %v3982
    %v3987 = vand.u32 2147483647, %v3660
    %vm3988 = vcmp.eq.f32.partialorder %v3987, 8.507059e+37
    %v3989 = vand.u32 %v3660, 2147483648
    %v3990 = vor.u32 1.1754944e-38, %v3989
    %v3991 = vsel %vm3988, %v3990, %v3986
    %v3992 = vmul.f32 1.0, %v3991
    %v3993 = vrcp.pop %v3661
    %v3994 = vmul.f32 %v3661, %v3993
    %v3995 = vsub.f32 1.0, %v3994
    %v3996 = vmul.f32 %v3993, %v3995
    %v3997 = vadd.f32 %v3993, %v3996
    %vm3998 = vweird.f32 %v3661
    %vm3999 = vweird.f32 %v3993
    %vm4000 = vmor %vm3998, %vm3999
    %v4001 = vsel %vm4000, %v3993, %v3997
    %v4002 = vand.u32 2147483647, %v3661
    %vm4003 = vcmp.eq.f32.partialorder %v4002, 8.507059e+37
    %v4004 = vand.u32 %v3661, 2147483648
    %v4005 = vor.u32 1.1754944e-38, %v4004
    %v4006 = vsel %vm4003, %v4005, %v4001
    %v4007 = vmul.f32 1.0, %v4006
    %v4008 = vrcp.pop %v3662
    %v4009 = vmul.f32 %v3662, %v4008
    %v4010 = vsub.f32 1.0, %v4009
    %v4011 = vmul.f32 %v4008, %v4010
    %v4012 = vadd.f32 %v4008, %v4011
    %vm4013 = vweird.f32 %v3662
    %vm4014 = vweird.f32 %v4008
    %vm4015 = vmor %vm4013, %vm4014
    %v4016 = vsel %vm4015, %v4008, %v4012
    %v4017 = vand.u32 2147483647, %v3662
    %vm4018 = vcmp.eq.f32.partialorder %v4017, 8.507059e+37
    %v4019 = vand.u32 %v3662, 2147483648
    %v4020 = vor.u32 1.1754944e-38, %v4019
    %v4021 = vsel %vm4018, %v4020, %v4016
    %v4022 = vmul.f32 1.0, %v4021
    %v4023 = vtanh.pop %v3541
    %v4024 = vtanh.pop %v3542
    %v4025 = vtanh.pop %v3549
    %v4026 = vtanh.pop %v3550
    %v4027 = vtanh.pop %v3557
    %v4028 = vtanh.pop %v3558
    %v4029 = vtanh.pop %v3565
    %v4030 = vtanh.pop %v3566
    %v4031 = vmul.f32 %v3707, 0.0
    %v4032 = vmul.f32 %v3722, 0.0
    %v4033 = vmul.f32 %v3797, 0.0
    %v4034 = vmul.f32 %v3812, 0.0
    %v4035 = vmul.f32 %v3887, 0.0
    %v4036 = vmul.f32 %v3902, 0.0
    %v4037 = vmul.f32 %v3977, 0.0
    %v4038 = vmul.f32 %v3992, 0.0
    %v4039 = vmul.f32 %v3677, %v4023
    %v4040 = vmul.f32 %v3692, %v4024
    %v4041 = vmul.f32 %v3767, %v4025
    %v4042 = vmul.f32 %v3782, %v4026
    %v4043 = vmul.f32 %v3857, %v4027
    %v4044 = vmul.f32 %v3872, %v4028
    %v4045 = vmul.f32 %v3947, %v4029
    %v4046 = vmul.f32 %v3962, %v4030
    %v4047 = vadd.f32 %v4031, %v4039
    %v4048 = vadd.f32 %v4032, %v4040
    %v4049 = vadd.f32 %v4033, %v4041
    %v4050 = vadd.f32 %v4034, %v4042
    %v4051 = vadd.f32 %v4035, %v4043
    %v4052 = vadd.f32 %v4036, %v4044
    %v4053 = vadd.f32 %v4037, %v4045
    %v4054 = vadd.f32 %v4038, %v4046
    %v4055 = vtanh.pop %v4047
    %v4056 = vtanh.pop %v4048
    %v4057 = vtanh.pop %v4049
    %v4058 = vtanh.pop %v4050
    %v4059 = vtanh.pop %v4051
    %v4060 = vtanh.pop %v4052
    %v4061 = vtanh.pop %v4053
    %v4062 = vtanh.pop %v4054
    %v4063 = vmul.f32 %v3737, %v4055
    %v4064 = vmul.f32 %v3752, %v4056
    %v4065 = vmul.f32 %v3827, %v4057
    %v4066 = vmul.f32 %v3842, %v4058
    %v4067 = vmul.f32 %v3917, %v4059
    %v4068 = vmul.f32 %v3932, %v4060
    %v4069 = vmul.f32 %v4007, %v4061
    %v4070 = vmul.f32 %v4022, %v4062
    %s4071 = smul.u32 4, 8
    %s4072 = smul.addr %s4071, 8
    %s4073 = scalar_lea.vmem [#allocation2], %s4072
    %v4074 = vld [vmem:[%s4073] sm:$0xff]
    %v4075 = vld [vmem:[%s4073 + $0x8] sm:$0xff]
    %v4076 = vld [vmem:[%s4073 + $0x10] sm:$0xff]
    %v4077 = vld [vmem:[%s4073 + $0x18] sm:$0xff]
    %v4078 = vld [vmem:[%s4073 + $0x20] sm:$0xff]
    %v4079 = vld [vmem:[%s4073 + $0x28] sm:$0xff]
    %v4080 = vld [vmem:[%s4073 + $0x30] sm:$0xff]
    %v4081 = vld [vmem:[%s4073 + $0x38] sm:$0xff]
    %v4082 = vld [vmem:[%s4073 + $0x40] sm:$0xff]
    %v4083 = vld [vmem:[%s4073 + $0x48] sm:$0xff]
    %v4084 = vld [vmem:[%s4073 + $0x50] sm:$0xff]
    %v4085 = vld [vmem:[%s4073 + $0x58] sm:$0xff]
    %v4086 = vld [vmem:[%s4073 + $0x60] sm:$0xff]
    %v4087 = vld [vmem:[%s4073 + $0x68] sm:$0xff]
    %v4088 = vld [vmem:[%s4073 + $0x70] sm:$0xff]
    %v4089 = vld [vmem:[%s4073 + $0x78] sm:$0xff]
    %v4090 = vld [vmem:[%s4073 + $0x80] sm:$0xff]
    %v4091 = vld [vmem:[%s4073 + $0x88] sm:$0xff]
    %v4092 = vld [vmem:[%s4073 + $0x90] sm:$0xff]
    %v4093 = vld [vmem:[%s4073 + $0x98] sm:$0xff]
    %v4094 = vld [vmem:[%s4073 + $0xa0] sm:$0xff]
    %v4095 = vld [vmem:[%s4073 + $0xa8] sm:$0xff]
    %v4096 = vld [vmem:[%s4073 + $0xb0] sm:$0xff]
    %v4097 = vld [vmem:[%s4073 + $0xb8] sm:$0xff]
    %v4098 = vld [vmem:[%s4073 + $0xc0] sm:$0xff]
    %v4099 = vld [vmem:[%s4073 + $0xc8] sm:$0xff]
    %v4100 = vld [vmem:[%s4073 + $0xd0] sm:$0xff]
    %v4101 = vld [vmem:[%s4073 + $0xd8] sm:$0xff]
    %v4102 = vld [vmem:[%s4073 + $0xe0] sm:$0xff]
    %v4103 = vld [vmem:[%s4073 + $0xe8] sm:$0xff]
    %v4104 = vld [vmem:[%s4073 + $0xf0] sm:$0xff]
    %v4105 = vld [vmem:[%s4073 + $0xf8] sm:$0xff]
    %v4106 = vpack.c.bf16 %v4065, %v4063
    %v4107 = vpack.c.bf16 %v4066, %v4064
    %v4108 = vpack.c.bf16 %v4069, %v4067
    %v4109 = vpack.c.bf16 %v4070, %v4068
    %4110 = vmatpush.bf16.msra.mxu0 %v3031
    %4111 = vmatpush.bf16.msra.mxu0 %v3023
    %4112 = vmatpush.bf16.msra.mxu0 %v3015
    %4113 = vmatpush.bf16.msra.mxu0 %v3007
    %4114 = vmatpush.bf16.msra.mxu0 %v2999
    %4115 = vmatpush.bf16.msra.mxu0 %v2991
    %4116 = vmatpush.bf16.msra.mxu0 %v2983
    %4117 = vmatpush.bf16.msra.mxu0 %v2975
    %4118 = vmatmul.bf16.gmra.mxu0 %v4106
    %v4119 = vpop.f32.mrf.mxu0
    %v4120 = vadd.f32 0.0, %v4119
    %v4121 = vpop.f32.mrf.mxu0
    %v4122 = vadd.f32 0.0, %v4121
    %4123 = vmatmul.bf16.gmra.mxu0 %v4108
    %v4124 = vpop.f32.mrf.mxu0
    %v4125 = vadd.f32 0.0, %v4124
    %v4126 = vpop.f32.mrf.mxu0
    %v4127 = vadd.f32 0.0, %v4126
    %4128 = vdwg.mxu0
    %4129 = vmatpush.bf16.msra.mxu0 %v3095
    %4130 = vmatpush.bf16.msra.mxu0 %v3087
    %4131 = vmatpush.bf16.msra.mxu0 %v3079
    %4132 = vmatpush.bf16.msra.mxu0 %v3071
    %4133 = vmatpush.bf16.msra.mxu0 %v3063
    %4134 = vmatpush.bf16.msra.mxu0 %v3055
    %4135 = vmatpush.bf16.msra.mxu0 %v3047
    %4136 = vmatpush.bf16.msra.mxu0 %v3039
    %4137 = vmatmul.bf16.gmra.mxu0 %v4107
    %v4138 = vpop.f32.mrf.mxu0
    %v4139 = vadd.f32 %v4120, %v4138
    %v4140 = vpop.f32.mrf.mxu0
    %v4141 = vadd.f32 %v4122, %v4140
    %4142 = vmatmul.bf16.gmra.mxu0 %v4109
    %v4143 = vpop.f32.mrf.mxu0
    %v4144 = vadd.f32 %v4125, %v4143
    %v4145 = vpop.f32.mrf.mxu0
    %v4146 = vadd.f32 %v4127, %v4145
    %4147 = vdwg.mxu0
    %4148 = vmatpush.bf16.msra.mxu0 %v3032
    %4149 = vmatpush.bf16.msra.mxu0 %v3024
    %4150 = vmatpush.bf16.msra.mxu0 %v3016
    %4151 = vmatpush.bf16.msra.mxu0 %v3008
    %4152 = vmatpush.bf16.msra.mxu0 %v3000
    %4153 = vmatpush.bf16.msra.mxu0 %v2992
    %4154 = vmatpush.bf16.msra.mxu0 %v2984
    %4155 = vmatpush.bf16.msra.mxu0 %v2976
    %4156 = vmatmul.bf16.gmra.mxu0 %v4106
    %v4157 = vpop.f32.mrf.mxu0
    %v4158 = vadd.f32 0.0, %v4157
    %v4159 = vpop.f32.mrf.mxu0
    %v4160 = vadd.f32 0.0, %v4159
    %4161 = vmatmul.bf16.gmra.mxu0 %v4108
    %v4162 = vpop.f32.mrf.mxu0
    %v4163 = vadd.f32 0.0, %v4162
    %v4164 = vpop.f32.mrf.mxu0
    %v4165 = vadd.f32 0.0, %v4164
    %4166 = vdwg.mxu0
    %4167 = vmatpush.bf16.msra.mxu0 %v3096
    %4168 = vmatpush.bf16.msra.mxu0 %v3088
    %4169 = vmatpush.bf16.msra.mxu0 %v3080
    %4170 = vmatpush.bf16.msra.mxu0 %v3072
    %4171 = vmatpush.bf16.msra.mxu0 %v3064
    %4172 = vmatpush.bf16.msra.mxu0 %v3056
    %4173 = vmatpush.bf16.msra.mxu0 %v3048
    %4174 = vmatpush.bf16.msra.mxu0 %v3040
    %4175 = vmatmul.bf16.gmra.mxu0 %v4107
    %v4176 = vpop.f32.mrf.mxu0
    %v4177 = vadd.f32 %v4158, %v4176
    %v4178 = vpop.f32.mrf.mxu0
    %v4179 = vadd.f32 %v4160, %v4178
    %4180 = vmatmul.bf16.gmra.mxu0 %v4109
    %v4181 = vpop.f32.mrf.mxu0
    %v4182 = vadd.f32 %v4163, %v4181
    %v4183 = vpop.f32.mrf.mxu0
    %v4184 = vadd.f32 %v4165, %v4183
    %4185 = vdwg.mxu0
    %4186 = vmatpush.bf16.msra.mxu0 %v3033
    %4187 = vmatpush.bf16.msra.mxu0 %v3025
    %4188 = vmatpush.bf16.msra.mxu0 %v3017
    %4189 = vmatpush.bf16.msra.mxu0 %v3009
    %4190 = vmatpush.bf16.msra.mxu0 %v3001
    %4191 = vmatpush.bf16.msra.mxu0 %v2993
    %4192 = vmatpush.bf16.msra.mxu0 %v2985
    %4193 = vmatpush.bf16.msra.mxu0 %v2977
    %4194 = vmatmul.bf16.gmra.mxu0 %v4106
    %v4195 = vpop.f32.mrf.mxu0
    %v4196 = vadd.f32 0.0, %v4195
    %v4197 = vpop.f32.mrf.mxu0
    %v4198 = vadd.f32 0.0, %v4197
    %4199 = vmatmul.bf16.gmra.mxu0 %v4108
    %v4200 = vpop.f32.mrf.mxu0
    %v4201 = vadd.f32 0.0, %v4200
    %v4202 = vpop.f32.mrf.mxu0
    %v4203 = vadd.f32 0.0, %v4202
    %4204 = vdwg.mxu0
    %4205 = vmatpush.bf16.msra.mxu0 %v3097
    %4206 = vmatpush.bf16.msra.mxu0 %v3089
    %4207 = vmatpush.bf16.msra.mxu0 %v3081
    %4208 = vmatpush.bf16.msra.mxu0 %v3073
    %4209 = vmatpush.bf16.msra.mxu0 %v3065
    %4210 = vmatpush.bf16.msra.mxu0 %v3057
    %4211 = vmatpush.bf16.msra.mxu0 %v3049
    %4212 = vmatpush.bf16.msra.mxu0 %v3041
    %4213 = vmatmul.bf16.gmra.mxu0 %v4107
    %v4214 = vpop.f32.mrf.mxu0
    %v4215 = vadd.f32 %v4196, %v4214
    %v4216 = vpop.f32.mrf.mxu0
    %v4217 = vadd.f32 %v4198, %v4216
    %4218 = vmatmul.bf16.gmra.mxu0 %v4109
    %v4219 = vpop.f32.mrf.mxu0
    %v4220 = vadd.f32 %v4201, %v4219
    %v4221 = vpop.f32.mrf.mxu0
    %v4222 = vadd.f32 %v4203, %v4221
    %4223 = vdwg.mxu0
    %4224 = vmatpush.bf16.msra.mxu0 %v3034
    %4225 = vmatpush.bf16.msra.mxu0 %v3026
    %4226 = vmatpush.bf16.msra.mxu0 %v3018
    %4227 = vmatpush.bf16.msra.mxu0 %v3010
    %4228 = vmatpush.bf16.msra.mxu0 %v3002
    %4229 = vmatpush.bf16.msra.mxu0 %v2994
    %4230 = vmatpush.bf16.msra.mxu0 %v2986
    %4231 = vmatpush.bf16.msra.mxu0 %v2978
    %4232 = vmatmul.bf16.gmra.mxu0 %v4106
    %v4233 = vpop.f32.mrf.mxu0
    %v4234 = vadd.f32 0.0, %v4233
    %v4235 = vpop.f32.mrf.mxu0
    %v4236 = vadd.f32 0.0, %v4235
    %4237 = vmatmul.bf16.gmra.mxu0 %v4108
    %v4238 = vpop.f32.mrf.mxu0
    %v4239 = vadd.f32 0.0, %v4238
    %v4240 = vpop.f32.mrf.mxu0
    %v4241 = vadd.f32 0.0, %v4240
    %4242 = vdwg.mxu0
    %4243 = vmatpush.bf16.msra.mxu0 %v3098
    %4244 = vmatpush.bf16.msra.mxu0 %v3090
    %4245 = vmatpush.bf16.msra.mxu0 %v3082
    %4246 = vmatpush.bf16.msra.mxu0 %v3074
    %4247 = vmatpush.bf16.msra.mxu0 %v3066
    %4248 = vmatpush.bf16.msra.mxu0 %v3058
    %4249 = vmatpush.bf16.msra.mxu0 %v3050
    %4250 = vmatpush.bf16.msra.mxu0 %v3042
    %4251 = vmatmul.bf16.gmra.mxu0 %v4107
    %v4252 = vpop.f32.mrf.mxu0
    %v4253 = vadd.f32 %v4234, %v4252
    %v4254 = vpop.f32.mrf.mxu0
    %v4255 = vadd.f32 %v4236, %v4254
    %4256 = vmatmul.bf16.gmra.mxu0 %v4109
    %v4257 = vpop.f32.mrf.mxu0
    %v4258 = vadd.f32 %v4239, %v4257
    %v4259 = vpop.f32.mrf.mxu0
    %v4260 = vadd.f32 %v4241, %v4259
    %4261 = vdwg.mxu0
    %4262 = vmatpush.bf16.msra.mxu0 %v3035
    %4263 = vmatpush.bf16.msra.mxu0 %v3027
    %4264 = vmatpush.bf16.msra.mxu0 %v3019
    %4265 = vmatpush.bf16.msra.mxu0 %v3011
    %4266 = vmatpush.bf16.msra.mxu0 %v3003
    %4267 = vmatpush.bf16.msra.mxu0 %v2995
    %4268 = vmatpush.bf16.msra.mxu0 %v2987
    %4269 = vmatpush.bf16.msra.mxu0 %v2979
    %4270 = vmatmul.bf16.gmra.mxu0 %v4106
    %v4271 = vpop.f32.mrf.mxu0
    %v4272 = vadd.f32 0.0, %v4271
    %v4273 = vpop.f32.mrf.mxu0
    %v4274 = vadd.f32 0.0, %v4273
    %4275 = vmatmul.bf16.gmra.mxu0 %v4108
    %v4276 = vpop.f32.mrf.mxu0
    %v4277 = vadd.f32 0.0, %v4276
    %v4278 = vpop.f32.mrf.mxu0
    %v4279 = vadd.f32 0.0, %v4278
    %4280 = vdwg.mxu0
    %4281 = vmatpush.bf16.msra.mxu0 %v3099
    %4282 = vmatpush.bf16.msra.mxu0 %v3091
    %4283 = vmatpush.bf16.msra.mxu0 %v3083
    %4284 = vmatpush.bf16.msra.mxu0 %v3075
    %4285 = vmatpush.bf16.msra.mxu0 %v3067
    %4286 = vmatpush.bf16.msra.mxu0 %v3059
    %4287 = vmatpush.bf16.msra.mxu0 %v3051
    %4288 = vmatpush.bf16.msra.mxu0 %v3043
    %4289 = vmatmul.bf16.gmra.mxu0 %v4107
    %v4290 = vpop.f32.mrf.mxu0
    %v4291 = vadd.f32 %v4272, %v4290
    %v4292 = vpop.f32.mrf.mxu0
    %v4293 = vadd.f32 %v4274, %v4292
    %4294 = vmatmul.bf16.gmra.mxu0 %v4109
    %v4295 = vpop.f32.mrf.mxu0
    %v4296 = vadd.f32 %v4277, %v4295
    %v4297 = vpop.f32.mrf.mxu0
    %v4298 = vadd.f32 %v4279, %v4297
    %4299 = vdwg.mxu0
    %4300 = vmatpush.bf16.msra.mxu0 %v3036
    %4301 = vmatpush.bf16.msra.mxu0 %v3028
    %4302 = vmatpush.bf16.msra.mxu0 %v3020
    %4303 = vmatpush.bf16.msra.mxu0 %v3012
    %4304 = vmatpush.bf16.msra.mxu0 %v3004
    %4305 = vmatpush.bf16.msra.mxu0 %v2996
    %4306 = vmatpush.bf16.msra.mxu0 %v2988
    %4307 = vmatpush.bf16.msra.mxu0 %v2980
    %4308 = vmatmul.bf16.gmra.mxu0 %v4106
    %v4309 = vpop.f32.mrf.mxu0
    %v4310 = vadd.f32 0.0, %v4309
    %v4311 = vpop.f32.mrf.mxu0
    %v4312 = vadd.f32 0.0, %v4311
    %4313 = vmatmul.bf16.gmra.mxu0 %v4108
    %v4314 = vpop.f32.mrf.mxu0
    %v4315 = vadd.f32 0.0, %v4314
    %v4316 = vpop.f32.mrf.mxu0
    %v4317 = vadd.f32 0.0, %v4316
    %4318 = vdwg.mxu0
    %4319 = vmatpush.bf16.msra.mxu0 %v3100
    %4320 = vmatpush.bf16.msra.mxu0 %v3092
    %4321 = vmatpush.bf16.msra.mxu0 %v3084
    %4322 = vmatpush.bf16.msra.mxu0 %v3076
    %4323 = vmatpush.bf16.msra.mxu0 %v3068
    %4324 = vmatpush.bf16.msra.mxu0 %v3060
    %4325 = vmatpush.bf16.msra.mxu0 %v3052
    %4326 = vmatpush.bf16.msra.mxu0 %v3044
    %4327 = vmatmul.bf16.gmra.mxu0 %v4107
    %v4328 = vpop.f32.mrf.mxu0
    %v4329 = vadd.f32 %v4310, %v4328
    %v4330 = vpop.f32.mrf.mxu0
    %v4331 = vadd.f32 %v4312, %v4330
    %4332 = vmatmul.bf16.gmra.mxu0 %v4109
    %v4333 = vpop.f32.mrf.mxu0
    %v4334 = vadd.f32 %v4315, %v4333
    %v4335 = vpop.f32.mrf.mxu0
    %v4336 = vadd.f32 %v4317, %v4335
    %4337 = vdwg.mxu0
    %4338 = vmatpush.bf16.msra.mxu0 %v3037
    %4339 = vmatpush.bf16.msra.mxu0 %v3029
    %4340 = vmatpush.bf16.msra.mxu0 %v3021
    %4341 = vmatpush.bf16.msra.mxu0 %v3013
    %4342 = vmatpush.bf16.msra.mxu0 %v3005
    %4343 = vmatpush.bf16.msra.mxu0 %v2997
    %4344 = vmatpush.bf16.msra.mxu0 %v2989
    %4345 = vmatpush.bf16.msra.mxu0 %v2981
    %4346 = vmatmul.bf16.gmra.mxu0 %v4106
    %v4347 = vpop.f32.mrf.mxu0
    %v4348 = vadd.f32 0.0, %v4347
    %v4349 = vpop.f32.mrf.mxu0
    %v4350 = vadd.f32 0.0, %v4349
    %4351 = vmatmul.bf16.gmra.mxu0 %v4108
    %v4352 = vpop.f32.mrf.mxu0
    %v4353 = vadd.f32 0.0, %v4352
    %v4354 = vpop.f32.mrf.mxu0
    %v4355 = vadd.f32 0.0, %v4354
    %4356 = vdwg.mxu0
    %4357 = vmatpush.bf16.msra.mxu0 %v3101
    %4358 = vmatpush.bf16.msra.mxu0 %v3093
    %4359 = vmatpush.bf16.msra.mxu0 %v3085
    %4360 = vmatpush.bf16.msra.mxu0 %v3077
    %4361 = vmatpush.bf16.msra.mxu0 %v3069
    %4362 = vmatpush.bf16.msra.mxu0 %v3061
    %4363 = vmatpush.bf16.msra.mxu0 %v3053
    %4364 = vmatpush.bf16.msra.mxu0 %v3045
    %4365 = vmatmul.bf16.gmra.mxu0 %v4107
    %v4366 = vpop.f32.mrf.mxu0
    %v4367 = vadd.f32 %v4348, %v4366
    %v4368 = vpop.f32.mrf.mxu0
    %v4369 = vadd.f32 %v4350, %v4368
    %4370 = vmatmul.bf16.gmra.mxu0 %v4109
    %v4371 = vpop.f32.mrf.mxu0
    %v4372 = vadd.f32 %v4353, %v4371
    %v4373 = vpop.f32.mrf.mxu0
    %v4374 = vadd.f32 %v4355, %v4373
    %4375 = vdwg.mxu0
    %4376 = vmatpush.bf16.msra.mxu0 %v3038
    %4377 = vmatpush.bf16.msra.mxu0 %v3030
    %4378 = vmatpush.bf16.msra.mxu0 %v3022
    %4379 = vmatpush.bf16.msra.mxu0 %v3014
    %4380 = vmatpush.bf16.msra.mxu0 %v3006
    %4381 = vmatpush.bf16.msra.mxu0 %v2998
    %4382 = vmatpush.bf16.msra.mxu0 %v2990
    %4383 = vmatpush.bf16.msra.mxu0 %v2982
    %4384 = vmatmul.bf16.gmra.mxu0 %v4106
    %v4385 = vpop.f32.mrf.mxu0
    %v4386 = vadd.f32 0.0, %v4385
    %v4387 = vpop.f32.mrf.mxu0
    %v4388 = vadd.f32 0.0, %v4387
    %4389 = vmatmul.bf16.gmra.mxu0 %v4108
    %v4390 = vpop.f32.mrf.mxu0
    %v4391 = vadd.f32 0.0, %v4390
    %v4392 = vpop.f32.mrf.mxu0
    %v4393 = vadd.f32 0.0, %v4392
    %4394 = vdwg.mxu0
    %4395 = vmatpush.bf16.msra.mxu0 %v3102
    %4396 = vmatpush.bf16.msra.mxu0 %v3094
    %4397 = vmatpush.bf16.msra.mxu0 %v3086
    %4398 = vmatpush.bf16.msra.mxu0 %v3078
    %4399 = vmatpush.bf16.msra.mxu0 %v3070
    %4400 = vmatpush.bf16.msra.mxu0 %v3062
    %4401 = vmatpush.bf16.msra.mxu0 %v3054
    %4402 = vmatpush.bf16.msra.mxu0 %v3046
    %4403 = vmatmul.bf16.gmra.mxu0 %v4107
    %v4404 = vpop.f32.mrf.mxu0
    %v4405 = vadd.f32 %v4386, %v4404
    %v4406 = vpop.f32.mrf.mxu0
    %v4407 = vadd.f32 %v4388, %v4406
    %4408 = vmatmul.bf16.gmra.mxu0 %v4109
    %v4409 = vpop.f32.mrf.mxu0
    %v4410 = vadd.f32 %v4391, %v4409
    %v4411 = vpop.f32.mrf.mxu0
    %v4412 = vadd.f32 %v4393, %v4411
    %4413 = vdwg.mxu0
    %v4414 = vadd.f32 %v4074, %v4139
    %v4415 = vadd.f32 %v4075, %v4177
    %v4416 = vadd.f32 %v4076, %v4215
    %v4417 = vadd.f32 %v4077, %v4253
    %v4418 = vadd.f32 %v4078, %v4291
    %v4419 = vadd.f32 %v4079, %v4329
    %v4420 = vadd.f32 %v4080, %v4367
    %v4421 = vadd.f32 %v4081, %v4405
    %v4422 = vadd.f32 %v4082, %v4141
    %v4423 = vadd.f32 %v4083, %v4179
    %v4424 = vadd.f32 %v4084, %v4217
    %v4425 = vadd.f32 %v4085, %v4255
    %v4426 = vadd.f32 %v4086, %v4293
    %v4427 = vadd.f32 %v4087, %v4331
    %v4428 = vadd.f32 %v4088, %v4369
    %v4429 = vadd.f32 %v4089, %v4407
    %v4430 = vadd.f32 %v4090, %v4144
    %v4431 = vadd.f32 %v4091, %v4182
    %v4432 = vadd.f32 %v4092, %v4220
    %v4433 = vadd.f32 %v4093, %v4258
    %v4434 = vadd.f32 %v4094, %v4296
    %v4435 = vadd.f32 %v4095, %v4334
    %v4436 = vadd.f32 %v4096, %v4372
    %v4437 = vadd.f32 %v4097, %v4410
    %v4438 = vadd.f32 %v4098, %v4146
    %v4439 = vadd.f32 %v4099, %v4184
    %v4440 = vadd.f32 %v4100, %v4222
    %v4441 = vadd.f32 %v4101, %v4260
    %v4442 = vadd.f32 %v4102, %v4298
    %v4443 = vadd.f32 %v4103, %v4336
    %v4444 = vadd.f32 %v4104, %v4374
    %v4445 = vadd.f32 %v4105, %v4412
    %v4446 = vxor.u32 %v4414, 2147483648
    %v4447 = vxor.u32 %v4415, 2147483648
    %v4448 = vxor.u32 %v4416, 2147483648
    %v4449 = vxor.u32 %v4417, 2147483648
    %v4450 = vxor.u32 %v4418, 2147483648
    %v4451 = vxor.u32 %v4419, 2147483648
    %v4452 = vxor.u32 %v4422, 2147483648
    %v4453 = vxor.u32 %v4423, 2147483648
    %v4454 = vxor.u32 %v4424, 2147483648
    %v4455 = vxor.u32 %v4425, 2147483648
    %v4456 = vxor.u32 %v4426, 2147483648
    %v4457 = vxor.u32 %v4427, 2147483648
    %v4458 = vxor.u32 %v4430, 2147483648
    %v4459 = vxor.u32 %v4431, 2147483648
    %v4460 = vxor.u32 %v4432, 2147483648
    %v4461 = vxor.u32 %v4433, 2147483648
    %v4462 = vxor.u32 %v4434, 2147483648
    %v4463 = vxor.u32 %v4435, 2147483648
    %v4464 = vxor.u32 %v4438, 2147483648
    %v4465 = vxor.u32 %v4439, 2147483648
    %v4466 = vxor.u32 %v4440, 2147483648
    %v4467 = vxor.u32 %v4441, 2147483648
    %v4468 = vxor.u32 %v4442, 2147483648
    %v4469 = vxor.u32 %v4443, 2147483648
    %v4470 = vmul.f32 %v4446, 1.442695
    %v4471 = vpow.pop %v4470
    %v4472 = vmul.f32 %v4447, 1.442695
    %v4473 = vpow.pop %v4472
    %v4474 = vmul.f32 %v4448, 1.442695
    %v4475 = vpow.pop %v4474
    %v4476 = vmul.f32 %v4449, 1.442695
    %v4477 = vpow.pop %v4476
    %v4478 = vmul.f32 %v4450, 1.442695
    %v4479 = vpow.pop %v4478
    %v4480 = vmul.f32 %v4451, 1.442695
    %v4481 = vpow.pop %v4480
    %v4482 = vmul.f32 %v4452, 1.442695
    %v4483 = vpow.pop %v4482
    %v4484 = vmul.f32 %v4453, 1.442695
    %v4485 = vpow.pop %v4484
    %v4486 = vmul.f32 %v4454, 1.442695
    %v4487 = vpow.pop %v4486
    %v4488 = vmul.f32 %v4455, 1.442695
    %v4489 = vpow.pop %v4488
    %v4490 = vmul.f32 %v4456, 1.442695
    %v4491 = vpow.pop %v4490
    %v4492 = vmul.f32 %v4457, 1.442695
    %v4493 = vpow.pop %v4492
    %v4494 = vmul.f32 %v4458, 1.442695
    %v4495 = vpow.pop %v4494
    %v4496 = vmul.f32 %v4459, 1.442695
    %v4497 = vpow.pop %v4496
    %v4498 = vmul.f32 %v4460, 1.442695
    %v4499 = vpow.pop %v4498
    %v4500 = vmul.f32 %v4461, 1.442695
    %v4501 = vpow.pop %v4500
    %v4502 = vmul.f32 %v4462, 1.442695
    %v4503 = vpow.pop %v4502
    %v4504 = vmul.f32 %v4463, 1.442695
    %v4505 = vpow.pop %v4504
    %v4506 = vmul.f32 %v4464, 1.442695
    %v4507 = vpow.pop %v4506
    %v4508 = vmul.f32 %v4465, 1.442695
    %v4509 = vpow.pop %v4508
    %v4510 = vmul.f32 %v4466, 1.442695
    %v4511 = vpow.pop %v4510
    %v4512 = vmul.f32 %v4467, 1.442695
    %v4513 = vpow.pop %v4512
    %v4514 = vmul.f32 %v4468, 1.442695
    %v4515 = vpow.pop %v4514
    %v4516 = vmul.f32 %v4469, 1.442695
    %v4517 = vpow.pop %v4516
    %v4518 = vadd.f32 %v4471, 1.0
    %v4519 = vadd.f32 %v4473, 1.0
    %v4520 = vadd.f32 %v4475, 1.0
    %v4521 = vadd.f32 %v4477, 1.0
    %v4522 = vadd.f32 %v4479, 1.0
    %v4523 = vadd.f32 %v4481, 1.0
    %v4524 = vadd.f32 %v4483, 1.0
    %v4525 = vadd.f32 %v4485, 1.0
    %v4526 = vadd.f32 %v4487, 1.0
    %v4527 = vadd.f32 %v4489, 1.0
    %v4528 = vadd.f32 %v4491, 1.0
    %v4529 = vadd.f32 %v4493, 1.0
    %v4530 = vadd.f32 %v4495, 1.0
    %v4531 = vadd.f32 %v4497, 1.0
    %v4532 = vadd.f32 %v4499, 1.0
    %v4533 = vadd.f32 %v4501, 1.0
    %v4534 = vadd.f32 %v4503, 1.0
    %v4535 = vadd.f32 %v4505, 1.0
    %v4536 = vadd.f32 %v4507, 1.0
    %v4537 = vadd.f32 %v4509, 1.0
    %v4538 = vadd.f32 %v4511, 1.0
    %v4539 = vadd.f32 %v4513, 1.0
    %v4540 = vadd.f32 %v4515, 1.0
    %v4541 = vadd.f32 %v4517, 1.0
    %v4542 = vrcp.pop %v4518
    %v4543 = vmul.f32 %v4518, %v4542
    %v4544 = vsub.f32 1.0, %v4543
    %v4545 = vmul.f32 %v4542, %v4544
    %v4546 = vadd.f32 %v4542, %v4545
    %vm4547 = vweird.f32 %v4518
    %vm4548 = vweird.f32 %v4542
    %vm4549 = vmor %vm4547, %vm4548
    %v4550 = vsel %vm4549, %v4542, %v4546
    %v4551 = vand.u32 2147483647, %v4518
    %vm4552 = vcmp.eq.f32.partialorder %v4551, 8.507059e+37
    %v4553 = vand.u32 %v4518, 2147483648
    %v4554 = vor.u32 1.1754944e-38, %v4553
    %v4555 = vsel %vm4552, %v4554, %v4550
    %v4556 = vmul.f32 1.0, %v4555
    %v4557 = vrcp.pop %v4519
    %v4558 = vmul.f32 %v4519, %v4557
    %v4559 = vsub.f32 1.0, %v4558
    %v4560 = vmul.f32 %v4557, %v4559
    %v4561 = vadd.f32 %v4557, %v4560
    %vm4562 = vweird.f32 %v4519
    %vm4563 = vweird.f32 %v4557
    %vm4564 = vmor %vm4562, %vm4563
    %v4565 = vsel %vm4564, %v4557, %v4561
    %v4566 = vand.u32 2147483647, %v4519
    %vm4567 = vcmp.eq.f32.partialorder %v4566, 8.507059e+37
    %v4568 = vand.u32 %v4519, 2147483648
    %v4569 = vor.u32 1.1754944e-38, %v4568
    %v4570 = vsel %vm4567, %v4569, %v4565
    %v4571 = vmul.f32 1.0, %v4570
    %v4572 = vrcp.pop %v4520
    %v4573 = vmul.f32 %v4520, %v4572
    %v4574 = vsub.f32 1.0, %v4573
    %v4575 = vmul.f32 %v4572, %v4574
    %v4576 = vadd.f32 %v4572, %v4575
    %vm4577 = vweird.f32 %v4520
    %vm4578 = vweird.f32 %v4572
    %vm4579 = vmor %vm4577, %vm4578
    %v4580 = vsel %vm4579, %v4572, %v4576
    %v4581 = vand.u32 2147483647, %v4520
    %vm4582 = vcmp.eq.f32.partialorder %v4581, 8.507059e+37
    %v4583 = vand.u32 %v4520, 2147483648
    %v4584 = vor.u32 1.1754944e-38, %v4583
    %v4585 = vsel %vm4582, %v4584, %v4580
    %v4586 = vmul.f32 1.0, %v4585
    %v4587 = vrcp.pop %v4521
    %v4588 = vmul.f32 %v4521, %v4587
    %v4589 = vsub.f32 1.0, %v4588
    %v4590 = vmul.f32 %v4587, %v4589
    %v4591 = vadd.f32 %v4587, %v4590
    %vm4592 = vweird.f32 %v4521
    %vm4593 = vweird.f32 %v4587
    %vm4594 = vmor %vm4592, %vm4593
    %v4595 = vsel %vm4594, %v4587, %v4591
    %v4596 = vand.u32 2147483647, %v4521
    %vm4597 = vcmp.eq.f32.partialorder %v4596, 8.507059e+37
    %v4598 = vand.u32 %v4521, 2147483648
    %v4599 = vor.u32 1.1754944e-38, %v4598
    %v4600 = vsel %vm4597, %v4599, %v4595
    %v4601 = vmul.f32 1.0, %v4600
    %v4602 = vrcp.pop %v4522
    %v4603 = vmul.f32 %v4522, %v4602
    %v4604 = vsub.f32 1.0, %v4603
    %v4605 = vmul.f32 %v4602, %v4604
    %v4606 = vadd.f32 %v4602, %v4605
    %vm4607 = vweird.f32 %v4522
    %vm4608 = vweird.f32 %v4602
    %vm4609 = vmor %vm4607, %vm4608
    %v4610 = vsel %vm4609, %v4602, %v4606
    %v4611 = vand.u32 2147483647, %v4522
    %vm4612 = vcmp.eq.f32.partialorder %v4611, 8.507059e+37
    %v4613 = vand.u32 %v4522, 2147483648
    %v4614 = vor.u32 1.1754944e-38, %v4613
    %v4615 = vsel %vm4612, %v4614, %v4610
    %v4616 = vmul.f32 1.0, %v4615
    %v4617 = vrcp.pop %v4523
    %v4618 = vmul.f32 %v4523, %v4617
    %v4619 = vsub.f32 1.0, %v4618
    %v4620 = vmul.f32 %v4617, %v4619
    %v4621 = vadd.f32 %v4617, %v4620
    %vm4622 = vweird.f32 %v4523
    %vm4623 = vweird.f32 %v4617
    %vm4624 = vmor %vm4622, %vm4623
    %v4625 = vsel %vm4624, %v4617, %v4621
    %v4626 = vand.u32 2147483647, %v4523
    %vm4627 = vcmp.eq.f32.partialorder %v4626, 8.507059e+37
    %v4628 = vand.u32 %v4523, 2147483648
    %v4629 = vor.u32 1.1754944e-38, %v4628
    %v4630 = vsel %vm4627, %v4629, %v4625
    %v4631 = vmul.f32 1.0, %v4630
    %v4632 = vrcp.pop %v4524
    %v4633 = vmul.f32 %v4524, %v4632
    %v4634 = vsub.f32 1.0, %v4633
    %v4635 = vmul.f32 %v4632, %v4634
    %v4636 = vadd.f32 %v4632, %v4635
    %vm4637 = vweird.f32 %v4524
    %vm4638 = vweird.f32 %v4632
    %vm4639 = vmor %vm4637, %vm4638
    %v4640 = vsel %vm4639, %v4632, %v4636
    %v4641 = vand.u32 2147483647, %v4524
    %vm4642 = vcmp.eq.f32.partialorder %v4641, 8.507059e+37
    %v4643 = vand.u32 %v4524, 2147483648
    %v4644 = vor.u32 1.1754944e-38, %v4643
    %v4645 = vsel %vm4642, %v4644, %v4640
    %v4646 = vmul.f32 1.0, %v4645
    %v4647 = vrcp.pop %v4525
    %v4648 = vmul.f32 %v4525, %v4647
    %v4649 = vsub.f32 1.0, %v4648
    %v4650 = vmul.f32 %v4647, %v4649
    %v4651 = vadd.f32 %v4647, %v4650
    %vm4652 = vweird.f32 %v4525
    %vm4653 = vweird.f32 %v4647
    %vm4654 = vmor %vm4652, %vm4653
    %v4655 = vsel %vm4654, %v4647, %v4651
    %v4656 = vand.u32 2147483647, %v4525
    %vm4657 = vcmp.eq.f32.partialorder %v4656, 8.507059e+37
    %v4658 = vand.u32 %v4525, 2147483648
    %v4659 = vor.u32 1.1754944e-38, %v4658
    %v4660 = vsel %vm4657, %v4659, %v4655
    %v4661 = vmul.f32 1.0, %v4660
    %v4662 = vrcp.pop %v4526
    %v4663 = vmul.f32 %v4526, %v4662
    %v4664 = vsub.f32 1.0, %v4663
    %v4665 = vmul.f32 %v4662, %v4664
    %v4666 = vadd.f32 %v4662, %v4665
    %vm4667 = vweird.f32 %v4526
    %vm4668 = vweird.f32 %v4662
    %vm4669 = vmor %vm4667, %vm4668
    %v4670 = vsel %vm4669, %v4662, %v4666
    %v4671 = vand.u32 2147483647, %v4526
    %vm4672 = vcmp.eq.f32.partialorder %v4671, 8.507059e+37
    %v4673 = vand.u32 %v4526, 2147483648
    %v4674 = vor.u32 1.1754944e-38, %v4673
    %v4675 = vsel %vm4672, %v4674, %v4670
    %v4676 = vmul.f32 1.0, %v4675
    %v4677 = vrcp.pop %v4527
    %v4678 = vmul.f32 %v4527, %v4677
    %v4679 = vsub.f32 1.0, %v4678
    %v4680 = vmul.f32 %v4677, %v4679
    %v4681 = vadd.f32 %v4677, %v4680
    %vm4682 = vweird.f32 %v4527
    %vm4683 = vweird.f32 %v4677
    %vm4684 = vmor %vm4682, %vm4683
    %v4685 = vsel %vm4684, %v4677, %v4681
    %v4686 = vand.u32 2147483647, %v4527
    %vm4687 = vcmp.eq.f32.partialorder %v4686, 8.507059e+37
    %v4688 = vand.u32 %v4527, 2147483648
    %v4689 = vor.u32 1.1754944e-38, %v4688
    %v4690 = vsel %vm4687, %v4689, %v4685
    %v4691 = vmul.f32 1.0, %v4690
    %v4692 = vrcp.pop %v4528
    %v4693 = vmul.f32 %v4528, %v4692
    %v4694 = vsub.f32 1.0, %v4693
    %v4695 = vmul.f32 %v4692, %v4694
    %v4696 = vadd.f32 %v4692, %v4695
    %vm4697 = vweird.f32 %v4528
    %vm4698 = vweird.f32 %v4692
    %vm4699 = vmor %vm4697, %vm4698
    %v4700 = vsel %vm4699, %v4692, %v4696
    %v4701 = vand.u32 2147483647, %v4528
    %vm4702 = vcmp.eq.f32.partialorder %v4701, 8.507059e+37
    %v4703 = vand.u32 %v4528, 2147483648
    %v4704 = vor.u32 1.1754944e-38, %v4703
    %v4705 = vsel %vm4702, %v4704, %v4700
    %v4706 = vmul.f32 1.0, %v4705
    %v4707 = vrcp.pop %v4529
    %v4708 = vmul.f32 %v4529, %v4707
    %v4709 = vsub.f32 1.0, %v4708
    %v4710 = vmul.f32 %v4707, %v4709
    %v4711 = vadd.f32 %v4707, %v4710
    %vm4712 = vweird.f32 %v4529
    %vm4713 = vweird.f32 %v4707
    %vm4714 = vmor %vm4712, %vm4713
    %v4715 = vsel %vm4714, %v4707, %v4711
    %v4716 = vand.u32 2147483647, %v4529
    %vm4717 = vcmp.eq.f32.partialorder %v4716, 8.507059e+37
    %v4718 = vand.u32 %v4529, 2147483648
    %v4719 = vor.u32 1.1754944e-38, %v4718
    %v4720 = vsel %vm4717, %v4719, %v4715
    %v4721 = vmul.f32 1.0, %v4720
    %v4722 = vrcp.pop %v4530
    %v4723 = vmul.f32 %v4530, %v4722
    %v4724 = vsub.f32 1.0, %v4723
    %v4725 = vmul.f32 %v4722, %v4724
    %v4726 = vadd.f32 %v4722, %v4725
    %vm4727 = vweird.f32 %v4530
    %vm4728 = vweird.f32 %v4722
    %vm4729 = vmor %vm4727, %vm4728
    %v4730 = vsel %vm4729, %v4722, %v4726
    %v4731 = vand.u32 2147483647, %v4530
    %vm4732 = vcmp.eq.f32.partialorder %v4731, 8.507059e+37
    %v4733 = vand.u32 %v4530, 2147483648
    %v4734 = vor.u32 1.1754944e-38, %v4733
    %v4735 = vsel %vm4732, %v4734, %v4730
    %v4736 = vmul.f32 1.0, %v4735
    %v4737 = vrcp.pop %v4531
    %v4738 = vmul.f32 %v4531, %v4737
    %v4739 = vsub.f32 1.0, %v4738
    %v4740 = vmul.f32 %v4737, %v4739
    %v4741 = vadd.f32 %v4737, %v4740
    %vm4742 = vweird.f32 %v4531
    %vm4743 = vweird.f32 %v4737
    %vm4744 = vmor %vm4742, %vm4743
    %v4745 = vsel %vm4744, %v4737, %v4741
    %v4746 = vand.u32 2147483647, %v4531
    %vm4747 = vcmp.eq.f32.partialorder %v4746, 8.507059e+37
    %v4748 = vand.u32 %v4531, 2147483648
    %v4749 = vor.u32 1.1754944e-38, %v4748
    %v4750 = vsel %vm4747, %v4749, %v4745
    %v4751 = vmul.f32 1.0, %v4750
    %v4752 = vrcp.pop %v4532
    %v4753 = vmul.f32 %v4532, %v4752
    %v4754 = vsub.f32 1.0, %v4753
    %v4755 = vmul.f32 %v4752, %v4754
    %v4756 = vadd.f32 %v4752, %v4755
    %vm4757 = vweird.f32 %v4532
    %vm4758 = vweird.f32 %v4752
    %vm4759 = vmor %vm4757, %vm4758
    %v4760 = vsel %vm4759, %v4752, %v4756
    %v4761 = vand.u32 2147483647, %v4532
    %vm4762 = vcmp.eq.f32.partialorder %v4761, 8.507059e+37
    %v4763 = vand.u32 %v4532, 2147483648
    %v4764 = vor.u32 1.1754944e-38, %v4763
    %v4765 = vsel %vm4762, %v4764, %v4760
    %v4766 = vmul.f32 1.0, %v4765
    %v4767 = vrcp.pop %v4533
    %v4768 = vmul.f32 %v4533, %v4767
    %v4769 = vsub.f32 1.0, %v4768
    %v4770 = vmul.f32 %v4767, %v4769
    %v4771 = vadd.f32 %v4767, %v4770
    %vm4772 = vweird.f32 %v4533
    %vm4773 = vweird.f32 %v4767
    %vm4774 = vmor %vm4772, %vm4773
    %v4775 = vsel %vm4774, %v4767, %v4771
    %v4776 = vand.u32 2147483647, %v4533
    %vm4777 = vcmp.eq.f32.partialorder %v4776, 8.507059e+37
    %v4778 = vand.u32 %v4533, 2147483648
    %v4779 = vor.u32 1.1754944e-38, %v4778
    %v4780 = vsel %vm4777, %v4779, %v4775
    %v4781 = vmul.f32 1.0, %v4780
    %v4782 = vrcp.pop %v4534
    %v4783 = vmul.f32 %v4534, %v4782
    %v4784 = vsub.f32 1.0, %v4783
    %v4785 = vmul.f32 %v4782, %v4784
    %v4786 = vadd.f32 %v4782, %v4785
    %vm4787 = vweird.f32 %v4534
    %vm4788 = vweird.f32 %v4782
    %vm4789 = vmor %vm4787, %vm4788
    %v4790 = vsel %vm4789, %v4782, %v4786
    %v4791 = vand.u32 2147483647, %v4534
    %vm4792 = vcmp.eq.f32.partialorder %v4791, 8.507059e+37
    %v4793 = vand.u32 %v4534, 2147483648
    %v4794 = vor.u32 1.1754944e-38, %v4793
    %v4795 = vsel %vm4792, %v4794, %v4790
    %v4796 = vmul.f32 1.0, %v4795
    %v4797 = vrcp.pop %v4535
    %v4798 = vmul.f32 %v4535, %v4797
    %v4799 = vsub.f32 1.0, %v4798
    %v4800 = vmul.f32 %v4797, %v4799
    %v4801 = vadd.f32 %v4797, %v4800
    %vm4802 = vweird.f32 %v4535
    %vm4803 = vweird.f32 %v4797
    %vm4804 = vmor %vm4802, %vm4803
    %v4805 = vsel %vm4804, %v4797, %v4801
    %v4806 = vand.u32 2147483647, %v4535
    %vm4807 = vcmp.eq.f32.partialorder %v4806, 8.507059e+37
    %v4808 = vand.u32 %v4535, 2147483648
    %v4809 = vor.u32 1.1754944e-38, %v4808
    %v4810 = vsel %vm4807, %v4809, %v4805
    %v4811 = vmul.f32 1.0, %v4810
    %v4812 = vrcp.pop %v4536
    %v4813 = vmul.f32 %v4536, %v4812
    %v4814 = vsub.f32 1.0, %v4813
    %v4815 = vmul.f32 %v4812, %v4814
    %v4816 = vadd.f32 %v4812, %v4815
    %vm4817 = vweird.f32 %v4536
    %vm4818 = vweird.f32 %v4812
    %vm4819 = vmor %vm4817, %vm4818
    %v4820 = vsel %vm4819, %v4812, %v4816
    %v4821 = vand.u32 2147483647, %v4536
    %vm4822 = vcmp.eq.f32.partialorder %v4821, 8.507059e+37
    %v4823 = vand.u32 %v4536, 2147483648
    %v4824 = vor.u32 1.1754944e-38, %v4823
    %v4825 = vsel %vm4822, %v4824, %v4820
    %v4826 = vmul.f32 1.0, %v4825
    %v4827 = vrcp.pop %v4537
    %v4828 = vmul.f32 %v4537, %v4827
    %v4829 = vsub.f32 1.0, %v4828
    %v4830 = vmul.f32 %v4827, %v4829
    %v4831 = vadd.f32 %v4827, %v4830
    %vm4832 = vweird.f32 %v4537
    %vm4833 = vweird.f32 %v4827
    %vm4834 = vmor %vm4832, %vm4833
    %v4835 = vsel %vm4834, %v4827, %v4831
    %v4836 = vand.u32 2147483647, %v4537
    %vm4837 = vcmp.eq.f32.partialorder %v4836, 8.507059e+37
    %v4838 = vand.u32 %v4537, 2147483648
    %v4839 = vor.u32 1.1754944e-38, %v4838
    %v4840 = vsel %vm4837, %v4839, %v4835
    %v4841 = vmul.f32 1.0, %v4840
    %v4842 = vrcp.pop %v4538
    %v4843 = vmul.f32 %v4538, %v4842
    %v4844 = vsub.f32 1.0, %v4843
    %v4845 = vmul.f32 %v4842, %v4844
    %v4846 = vadd.f32 %v4842, %v4845
    %vm4847 = vweird.f32 %v4538
    %vm4848 = vweird.f32 %v4842
    %vm4849 = vmor %vm4847, %vm4848
    %v4850 = vsel %vm4849, %v4842, %v4846
    %v4851 = vand.u32 2147483647, %v4538
    %vm4852 = vcmp.eq.f32.partialorder %v4851, 8.507059e+37
    %v4853 = vand.u32 %v4538, 2147483648
    %v4854 = vor.u32 1.1754944e-38, %v4853
    %v4855 = vsel %vm4852, %v4854, %v4850
    %v4856 = vmul.f32 1.0, %v4855
    %v4857 = vrcp.pop %v4539
    %v4858 = vmul.f32 %v4539, %v4857
    %v4859 = vsub.f32 1.0, %v4858
    %v4860 = vmul.f32 %v4857, %v4859
    %v4861 = vadd.f32 %v4857, %v4860
    %vm4862 = vweird.f32 %v4539
    %vm4863 = vweird.f32 %v4857
    %vm4864 = vmor %vm4862, %vm4863
    %v4865 = vsel %vm4864, %v4857, %v4861
    %v4866 = vand.u32 2147483647, %v4539
    %vm4867 = vcmp.eq.f32.partialorder %v4866, 8.507059e+37
    %v4868 = vand.u32 %v4539, 2147483648
    %v4869 = vor.u32 1.1754944e-38, %v4868
    %v4870 = vsel %vm4867, %v4869, %v4865
    %v4871 = vmul.f32 1.0, %v4870
    %v4872 = vrcp.pop %v4540
    %v4873 = vmul.f32 %v4540, %v4872
    %v4874 = vsub.f32 1.0, %v4873
    %v4875 = vmul.f32 %v4872, %v4874
    %v4876 = vadd.f32 %v4872, %v4875
    %vm4877 = vweird.f32 %v4540
    %vm4878 = vweird.f32 %v4872
    %vm4879 = vmor %vm4877, %vm4878
    %v4880 = vsel %vm4879, %v4872, %v4876
    %v4881 = vand.u32 2147483647, %v4540
    %vm4882 = vcmp.eq.f32.partialorder %v4881, 8.507059e+37
    %v4883 = vand.u32 %v4540, 2147483648
    %v4884 = vor.u32 1.1754944e-38, %v4883
    %v4885 = vsel %vm4882, %v4884, %v4880
    %v4886 = vmul.f32 1.0, %v4885
    %v4887 = vrcp.pop %v4541
    %v4888 = vmul.f32 %v4541, %v4887
    %v4889 = vsub.f32 1.0, %v4888
    %v4890 = vmul.f32 %v4887, %v4889
    %v4891 = vadd.f32 %v4887, %v4890
    %vm4892 = vweird.f32 %v4541
    %vm4893 = vweird.f32 %v4887
    %vm4894 = vmor %vm4892, %vm4893
    %v4895 = vsel %vm4894, %v4887, %v4891
    %v4896 = vand.u32 2147483647, %v4541
    %vm4897 = vcmp.eq.f32.partialorder %v4896, 8.507059e+37
    %v4898 = vand.u32 %v4541, 2147483648
    %v4899 = vor.u32 1.1754944e-38, %v4898
    %v4900 = vsel %vm4897, %v4899, %v4895
    %v4901 = vmul.f32 1.0, %v4900
    %v4902 = vtanh.pop %v4420
    %v4903 = vtanh.pop %v4421
    %v4904 = vtanh.pop %v4428
    %v4905 = vtanh.pop %v4429
    %v4906 = vtanh.pop %v4436
    %v4907 = vtanh.pop %v4437
    %v4908 = vtanh.pop %v4444
    %v4909 = vtanh.pop %v4445
    %v4910 = vmul.f32 %v4586, %v4047
    %v4911 = vmul.f32 %v4601, %v4048
    %v4912 = vmul.f32 %v4676, %v4049
    %v4913 = vmul.f32 %v4691, %v4050
    %v4914 = vmul.f32 %v4766, %v4051
    %v4915 = vmul.f32 %v4781, %v4052
    %v4916 = vmul.f32 %v4856, %v4053
    %v4917 = vmul.f32 %v4871, %v4054
    %v4918 = vmul.f32 %v4556, %v4902
    %v4919 = vmul.f32 %v4571, %v4903
    %v4920 = vmul.f32 %v4646, %v4904
    %v4921 = vmul.f32 %v4661, %v4905
    %v4922 = vmul.f32 %v4736, %v4906
    %v4923 = vmul.f32 %v4751, %v4907
    %v4924 = vmul.f32 %v4826, %v4908
    %v4925 = vmul.f32 %v4841, %v4909
    %v4926 = vadd.f32 %v4910, %v4918
    %v4927 = vadd.f32 %v4911, %v4919
    %v4928 = vadd.f32 %v4912, %v4920
    %v4929 = vadd.f32 %v4913, %v4921
    %v4930 = vadd.f32 %v4914, %v4922
    %v4931 = vadd.f32 %v4915, %v4923
    %v4932 = vadd.f32 %v4916, %v4924
    %v4933 = vadd.f32 %v4917, %v4925
    %v4934 = vtanh.pop %v4926
    %v4935 = vtanh.pop %v4927
    %v4936 = vtanh.pop %v4928
    %v4937 = vtanh.pop %v4929
    %v4938 = vtanh.pop %v4930
    %v4939 = vtanh.pop %v4931
    %v4940 = vtanh.pop %v4932
    %v4941 = vtanh.pop %v4933
    %v4942 = vmul.f32 %v4616, %v4934
    %v4943 = vmul.f32 %v4631, %v4935
    %v4944 = vmul.f32 %v4706, %v4936
    %v4945 = vmul.f32 %v4721, %v4937
    %v4946 = vmul.f32 %v4796, %v4938
    %v4947 = vmul.f32 %v4811, %v4939
    %v4948 = vmul.f32 %v4886, %v4940
    %v4949 = vmul.f32 %v4901, %v4941
    %s4950 = smul.u32 8, 8
    %s4951 = smul.addr %s4950, 8
    %s4952 = scalar_lea.vmem [#allocation2], %s4951
    %v4953 = vld [vmem:[%s4952] sm:$0xff]
    %v4954 = vld [vmem:[%s4952 + $0x8] sm:$0xff]
    %v4955 = vld [vmem:[%s4952 + $0x10] sm:$0xff]
    %v4956 = vld [vmem:[%s4952 + $0x18] sm:$0xff]
    %v4957 = vld [vmem:[%s4952 + $0x20] sm:$0xff]
    %v4958 = vld [vmem:[%s4952 + $0x28] sm:$0xff]
    %v4959 = vld [vmem:[%s4952 + $0x30] sm:$0xff]
    %v4960 = vld [vmem:[%s4952 + $0x38] sm:$0xff]
    %v4961 = vld [vmem:[%s4952 + $0x40] sm:$0xff]
    %v4962 = vld [vmem:[%s4952 + $0x48] sm:$0xff]
    %v4963 = vld [vmem:[%s4952 + $0x50] sm:$0xff]
    %v4964 = vld [vmem:[%s4952 + $0x58] sm:$0xff]
    %v4965 = vld [vmem:[%s4952 + $0x60] sm:$0xff]
    %v4966 = vld [vmem:[%s4952 + $0x68] sm:$0xff]
    %v4967 = vld [vmem:[%s4952 + $0x70] sm:$0xff]
    %v4968 = vld [vmem:[%s4952 + $0x78] sm:$0xff]
    %v4969 = vld [vmem:[%s4952 + $0x80] sm:$0xff]
    %v4970 = vld [vmem:[%s4952 + $0x88] sm:$0xff]
    %v4971 = vld [vmem:[%s4952 + $0x90] sm:$0xff]
    %v4972 = vld [vmem:[%s4952 + $0x98] sm:$0xff]
    %v4973 = vld [vmem:[%s4952 + $0xa0] sm:$0xff]
    %v4974 = vld [vmem:[%s4952 + $0xa8] sm:$0xff]
    %v4975 = vld [vmem:[%s4952 + $0xb0] sm:$0xff]
    %v4976 = vld [vmem:[%s4952 + $0xb8] sm:$0xff]
    %v4977 = vld [vmem:[%s4952 + $0xc0] sm:$0xff]
    %v4978 = vld [vmem:[%s4952 + $0xc8] sm:$0xff]
    %v4979 = vld [vmem:[%s4952 + $0xd0] sm:$0xff]
    %v4980 = vld [vmem:[%s4952 + $0xd8] sm:$0xff]
    %v4981 = vld [vmem:[%s4952 + $0xe0] sm:$0xff]
    %v4982 = vld [vmem:[%s4952 + $0xe8] sm:$0xff]
    %v4983 = vld [vmem:[%s4952 + $0xf0] sm:$0xff]
    %v4984 = vld [vmem:[%s4952 + $0xf8] sm:$0xff]
    %v4985 = vpack.c.bf16 %v4944, %v4942
    %v4986 = vpack.c.bf16 %v4945, %v4943
    %v4987 = vpack.c.bf16 %v4948, %v4946
    %v4988 = vpack.c.bf16 %v4949, %v4947
    %4989 = vmatpush.bf16.msra.mxu0 %v3031
    %4990 = vmatpush.bf16.msra.mxu0 %v3023
    %4991 = vmatpush.bf16.msra.mxu0 %v3015
    %4992 = vmatpush.bf16.msra.mxu0 %v3007
    %4993 = vmatpush.bf16.msra.mxu0 %v2999
    %4994 = vmatpush.bf16.msra.mxu0 %v2991
    %4995 = vmatpush.bf16.msra.mxu0 %v2983
    %4996 = vmatpush.bf16.msra.mxu0 %v2975
    %4997 = vmatmul.bf16.gmra.mxu0 %v4985
    %v4998 = vpop.f32.mrf.mxu0
    %v4999 = vadd.f32 0.0, %v4998
    %v5000 = vpop.f32.mrf.mxu0
    %v5001 = vadd.f32 0.0, %v5000
    %5002 = vmatmul.bf16.gmra.mxu0 %v4987
    %v5003 = vpop.f32.mrf.mxu0
    %v5004 = vadd.f32 0.0, %v5003
    %v5005 = vpop.f32.mrf.mxu0
    %v5006 = vadd.f32 0.0, %v5005
    %5007 = vdwg.mxu0
    %5008 = vmatpush.bf16.msra.mxu0 %v3095
    %5009 = vmatpush.bf16.msra.mxu0 %v3087
    %5010 = vmatpush.bf16.msra.mxu0 %v3079
    %5011 = vmatpush.bf16.msra.mxu0 %v3071
    %5012 = vmatpush.bf16.msra.mxu0 %v3063
    %5013 = vmatpush.bf16.msra.mxu0 %v3055
    %5014 = vmatpush.bf16.msra.mxu0 %v3047
    %5015 = vmatpush.bf16.msra.mxu0 %v3039
    %5016 = vmatmul.bf16.gmra.mxu0 %v4986
    %v5017 = vpop.f32.mrf.mxu0
    %v5018 = vadd.f32 %v4999, %v5017
    %v5019 = vpop.f32.mrf.mxu0
    %v5020 = vadd.f32 %v5001, %v5019
    %5021 = vmatmul.bf16.gmra.mxu0 %v4988
    %v5022 = vpop.f32.mrf.mxu0
    %v5023 = vadd.f32 %v5004, %v5022
    %v5024 = vpop.f32.mrf.mxu0
    %v5025 = vadd.f32 %v5006, %v5024
    %5026 = vdwg.mxu0
    %5027 = vmatpush.bf16.msra.mxu0 %v3032
    %5028 = vmatpush.bf16.msra.mxu0 %v3024
    %5029 = vmatpush.bf16.msra.mxu0 %v3016
    %5030 = vmatpush.bf16.msra.mxu0 %v3008
    %5031 = vmatpush.bf16.msra.mxu0 %v3000
    %5032 = vmatpush.bf16.msra.mxu0 %v2992
    %5033 = vmatpush.bf16.msra.mxu0 %v2984
    %5034 = vmatpush.bf16.msra.mxu0 %v2976
    %5035 = vmatmul.bf16.gmra.mxu0 %v4985
    %v5036 = vpop.f32.mrf.mxu0
    %v5037 = vadd.f32 0.0, %v5036
    %v5038 = vpop.f32.mrf.mxu0
    %v5039 = vadd.f32 0.0, %v5038
    %5040 = vmatmul.bf16.gmra.mxu0 %v4987
    %v5041 = vpop.f32.mrf.mxu0
    %v5042 = vadd.f32 0.0, %v5041
    %v5043 = vpop.f32.mrf.mxu0
    %v5044 = vadd.f32 0.0, %v5043
    %5045 = vdwg.mxu0
    %5046 = vmatpush.bf16.msra.mxu0 %v3096
    %5047 = vmatpush.bf16.msra.mxu0 %v3088
    %5048 = vmatpush.bf16.msra.mxu0 %v3080
    %5049 = vmatpush.bf16.msra.mxu0 %v3072
    %5050 = vmatpush.bf16.msra.mxu0 %v3064
    %5051 = vmatpush.bf16.msra.mxu0 %v3056
    %5052 = vmatpush.bf16.msra.mxu0 %v3048
    %5053 = vmatpush.bf16.msra.mxu0 %v3040
    %5054 = vmatmul.bf16.gmra.mxu0 %v4986
    %v5055 = vpop.f32.mrf.mxu0
    %v5056 = vadd.f32 %v5037, %v5055
    %v5057 = vpop.f32.mrf.mxu0
    %v5058 = vadd.f32 %v5039, %v5057
    %5059 = vmatmul.bf16.gmra.mxu0 %v4988
    %v5060 = vpop.f32.mrf.mxu0
    %v5061 = vadd.f32 %v5042, %v5060
    %v5062 = vpop.f32.mrf.mxu0
    %v5063 = vadd.f32 %v5044, %v5062
    %5064 = vdwg.mxu0
    %5065 = vmatpush.bf16.msra.mxu0 %v3033
    %5066 = vmatpush.bf16.msra.mxu0 %v3025
    %5067 = vmatpush.bf16.msra.mxu0 %v3017
    %5068 = vmatpush.bf16.msra.mxu0 %v3009
    %5069 = vmatpush.bf16.msra.mxu0 %v3001
    %5070 = vmatpush.bf16.msra.mxu0 %v2993
    %5071 = vmatpush.bf16.msra.mxu0 %v2985
    %5072 = vmatpush.bf16.msra.mxu0 %v2977
    %5073 = vmatmul.bf16.gmra.mxu0 %v4985
    %v5074 = vpop.f32.mrf.mxu0
    %v5075 = vadd.f32 0.0, %v5074
    %v5076 = vpop.f32.mrf.mxu0
    %v5077 = vadd.f32 0.0, %v5076
    %5078 = vmatmul.bf16.gmra.mxu0 %v4987
    %v5079 = vpop.f32.mrf.mxu0
    %v5080 = vadd.f32 0.0, %v5079
    %v5081 = vpop.f32.mrf.mxu0
    %v5082 = vadd.f32 0.0, %v5081
    %5083 = vdwg.mxu0
    %5084 = vmatpush.bf16.msra.mxu0 %v3097
    %5085 = vmatpush.bf16.msra.mxu0 %v3089
    %5086 = vmatpush.bf16.msra.mxu0 %v3081
    %5087 = vmatpush.bf16.msra.mxu0 %v3073
    %5088 = vmatpush.bf16.msra.mxu0 %v3065
    %5089 = vmatpush.bf16.msra.mxu0 %v3057
    %5090 = vmatpush.bf16.msra.mxu0 %v3049
    %5091 = vmatpush.bf16.msra.mxu0 %v3041
    %5092 = vmatmul.bf16.gmra.mxu0 %v4986
    %v5093 = vpop.f32.mrf.mxu0
    %v5094 = vadd.f32 %v5075, %v5093
    %v5095 = vpop.f32.mrf.mxu0
    %v5096 = vadd.f32 %v5077, %v5095
    %5097 = vmatmul.bf16.gmra.mxu0 %v4988
    %v5098 = vpop.f32.mrf.mxu0
    %v5099 = vadd.f32 %v5080, %v5098
    %v5100 = vpop.f32.mrf.mxu0
    %v5101 = vadd.f32 %v5082, %v5100
    %5102 = vdwg.mxu0
    %5103 = vmatpush.bf16.msra.mxu0 %v3034
    %5104 = vmatpush.bf16.msra.mxu0 %v3026
    %5105 = vmatpush.bf16.msra.mxu0 %v3018
    %5106 = vmatpush.bf16.msra.mxu0 %v3010
    %5107 = vmatpush.bf16.msra.mxu0 %v3002
    %5108 = vmatpush.bf16.msra.mxu0 %v2994
    %5109 = vmatpush.bf16.msra.mxu0 %v2986
    %5110 = vmatpush.bf16.msra.mxu0 %v2978
    %5111 = vmatmul.bf16.gmra.mxu0 %v4985
    %v5112 = vpop.f32.mrf.mxu0
    %v5113 = vadd.f32 0.0, %v5112
    %v5114 = vpop.f32.mrf.mxu0
    %v5115 = vadd.f32 0.0, %v5114
    %5116 = vmatmul.bf16.gmra.mxu0 %v4987
    %v5117 = vpop.f32.mrf.mxu0
    %v5118 = vadd.f32 0.0, %v5117
    %v5119 = vpop.f32.mrf.mxu0
    %v5120 = vadd.f32 0.0, %v5119
    %5121 = vdwg.mxu0
    %5122 = vmatpush.bf16.msra.mxu0 %v3098
    %5123 = vmatpush.bf16.msra.mxu0 %v3090
    %5124 = vmatpush.bf16.msra.mxu0 %v3082
    %5125 = vmatpush.bf16.msra.mxu0 %v3074
    %5126 = vmatpush.bf16.msra.mxu0 %v3066
    %5127 = vmatpush.bf16.msra.mxu0 %v3058
    %5128 = vmatpush.bf16.msra.mxu0 %v3050
    %5129 = vmatpush.bf16.msra.mxu0 %v3042
    %5130 = vmatmul.bf16.gmra.mxu0 %v4986
    %v5131 = vpop.f32.mrf.mxu0
    %v5132 = vadd.f32 %v5113, %v5131
    %v5133 = vpop.f32.mrf.mxu0
    %v5134 = vadd.f32 %v5115, %v5133
    %5135 = vmatmul.bf16.gmra.mxu0 %v4988
    %v5136 = vpop.f32.mrf.mxu0
    %v5137 = vadd.f32 %v5118, %v5136
    %v5138 = vpop.f32.mrf.mxu0
    %v5139 = vadd.f32 %v5120, %v5138
    %5140 = vdwg.mxu0
    %5141 = vmatpush.bf16.msra.mxu0 %v3035
    %5142 = vmatpush.bf16.msra.mxu0 %v3027
    %5143 = vmatpush.bf16.msra.mxu0 %v3019
    %5144 = vmatpush.bf16.msra.mxu0 %v3011
    %5145 = vmatpush.bf16.msra.mxu0 %v3003
    %5146 = vmatpush.bf16.msra.mxu0 %v2995
    %5147 = vmatpush.bf16.msra.mxu0 %v2987
    %5148 = vmatpush.bf16.msra.mxu0 %v2979
    %5149 = vmatmul.bf16.gmra.mxu0 %v4985
    %v5150 = vpop.f32.mrf.mxu0
    %v5151 = vadd.f32 0.0, %v5150
    %v5152 = vpop.f32.mrf.mxu0
    %v5153 = vadd.f32 0.0, %v5152
    %5154 = vmatmul.bf16.gmra.mxu0 %v4987
    %v5155 = vpop.f32.mrf.mxu0
    %v5156 = vadd.f32 0.0, %v5155
    %v5157 = vpop.f32.mrf.mxu0
    %v5158 = vadd.f32 0.0, %v5157
    %5159 = vdwg.mxu0
    %5160 = vmatpush.bf16.msra.mxu0 %v3099
    %5161 = vmatpush.bf16.msra.mxu0 %v3091
    %5162 = vmatpush.bf16.msra.mxu0 %v3083
    %5163 = vmatpush.bf16.msra.mxu0 %v3075
    %5164 = vmatpush.bf16.msra.mxu0 %v3067
    %5165 = vmatpush.bf16.msra.mxu0 %v3059
    %5166 = vmatpush.bf16.msra.mxu0 %v3051
    %5167 = vmatpush.bf16.msra.mxu0 %v3043
    %5168 = vmatmul.bf16.gmra.mxu0 %v4986
    %v5169 = vpop.f32.mrf.mxu0
    %v5170 = vadd.f32 %v5151, %v5169
    %v5171 = vpop.f32.mrf.mxu0
    %v5172 = vadd.f32 %v5153, %v5171
    %5173 = vmatmul.bf16.gmra.mxu0 %v4988
    %v5174 = vpop.f32.mrf.mxu0
    %v5175 = vadd.f32 %v5156, %v5174
    %v5176 = vpop.f32.mrf.mxu0
    %v5177 = vadd.f32 %v5158, %v5176
    %5178 = vdwg.mxu0
    %5179 = vmatpush.bf16.msra.mxu0 %v3036
    %5180 = vmatpush.bf16.msra.mxu0 %v3028
    %5181 = vmatpush.bf16.msra.mxu0 %v3020
    %5182 = vmatpush.bf16.msra.mxu0 %v3012
    %5183 = vmatpush.bf16.msra.mxu0 %v3004
    %5184 = vmatpush.bf16.msra.mxu0 %v2996
    %5185 = vmatpush.bf16.msra.mxu0 %v2988
    %5186 = vmatpush.bf16.msra.mxu0 %v2980
    %5187 = vmatmul.bf16.gmra.mxu0 %v4985
    %v5188 = vpop.f32.mrf.mxu0
    %v5189 = vadd.f32 0.0, %v5188
    %v5190 = vpop.f32.mrf.mxu0
    %v5191 = vadd.f32 0.0, %v5190
    %5192 = vmatmul.bf16.gmra.mxu0 %v4987
    %v5193 = vpop.f32.mrf.mxu0
    %v5194 = vadd.f32 0.0, %v5193
    %v5195 = vpop.f32.mrf.mxu0
    %v5196 = vadd.f32 0.0, %v5195
    %5197 = vdwg.mxu0
    %5198 = vmatpush.bf16.msra.mxu0 %v3100
    %5199 = vmatpush.bf16.msra.mxu0 %v3092
    %5200 = vmatpush.bf16.msra.mxu0 %v3084
    %5201 = vmatpush.bf16.msra.mxu0 %v3076
    %5202 = vmatpush.bf16.msra.mxu0 %v3068
    %5203 = vmatpush.bf16.msra.mxu0 %v3060
    %5204 = vmatpush.bf16.msra.mxu0 %v3052
    %5205 = vmatpush.bf16.msra.mxu0 %v3044
    %5206 = vmatmul.bf16.gmra.mxu0 %v4986
    %v5207 = vpop.f32.mrf.mxu0
    %v5208 = vadd.f32 %v5189, %v5207
    %v5209 = vpop.f32.mrf.mxu0
    %v5210 = vadd.f32 %v5191, %v5209
    %5211 = vmatmul.bf16.gmra.mxu0 %v4988
    %v5212 = vpop.f32.mrf.mxu0
    %v5213 = vadd.f32 %v5194, %v5212
    %v5214 = vpop.f32.mrf.mxu0
    %v5215 = vadd.f32 %v5196, %v5214
    %5216 = vdwg.mxu0
    %5217 = vmatpush.bf16.msra.mxu0 %v3037
    %5218 = vmatpush.bf16.msra.mxu0 %v3029
    %5219 = vmatpush.bf16.msra.mxu0 %v3021
    %5220 = vmatpush.bf16.msra.mxu0 %v3013
    %5221 = vmatpush.bf16.msra.mxu0 %v3005
    %5222 = vmatpush.bf16.msra.mxu0 %v2997
    %5223 = vmatpush.bf16.msra.mxu0 %v2989
    %5224 = vmatpush.bf16.msra.mxu0 %v2981
    %5225 = vmatmul.bf16.gmra.mxu0 %v4985
    %v5226 = vpop.f32.mrf.mxu0
    %v5227 = vadd.f32 0.0, %v5226
    %v5228 = vpop.f32.mrf.mxu0
    %v5229 = vadd.f32 0.0, %v5228
    %5230 = vmatmul.bf16.gmra.mxu0 %v4987
    %v5231 = vpop.f32.mrf.mxu0
    %v5232 = vadd.f32 0.0, %v5231
    %v5233 = vpop.f32.mrf.mxu0
    %v5234 = vadd.f32 0.0, %v5233
    %5235 = vdwg.mxu0
    %5236 = vmatpush.bf16.msra.mxu0 %v3101
    %5237 = vmatpush.bf16.msra.mxu0 %v3093
    %5238 = vmatpush.bf16.msra.mxu0 %v3085
    %5239 = vmatpush.bf16.msra.mxu0 %v3077
    %5240 = vmatpush.bf16.msra.mxu0 %v3069
    %5241 = vmatpush.bf16.msra.mxu0 %v3061
    %5242 = vmatpush.bf16.msra.mxu0 %v3053
    %5243 = vmatpush.bf16.msra.mxu0 %v3045
    %5244 = vmatmul.bf16.gmra.mxu0 %v4986
    %v5245 = vpop.f32.mrf.mxu0
    %v5246 = vadd.f32 %v5227, %v5245
    %v5247 = vpop.f32.mrf.mxu0
    %v5248 = vadd.f32 %v5229, %v5247
    %5249 = vmatmul.bf16.gmra.mxu0 %v4988
    %v5250 = vpop.f32.mrf.mxu0
    %v5251 = vadd.f32 %v5232, %v5250
    %v5252 = vpop.f32.mrf.mxu0
    %v5253 = vadd.f32 %v5234, %v5252
    %5254 = vdwg.mxu0
    %5255 = vmatpush.bf16.msra.mxu0 %v3038
    %5256 = vmatpush.bf16.msra.mxu0 %v3030
    %5257 = vmatpush.bf16.msra.mxu0 %v3022
    %5258 = vmatpush.bf16.msra.mxu0 %v3014
    %5259 = vmatpush.bf16.msra.mxu0 %v3006
    %5260 = vmatpush.bf16.msra.mxu0 %v2998
    %5261 = vmatpush.bf16.msra.mxu0 %v2990
    %5262 = vmatpush.bf16.msra.mxu0 %v2982
    %5263 = vmatmul.bf16.gmra.mxu0 %v4985
    %v5264 = vpop.f32.mrf.mxu0
    %v5265 = vadd.f32 0.0, %v5264
    %v5266 = vpop.f32.mrf.mxu0
    %v5267 = vadd.f32 0.0, %v5266
    %5268 = vmatmul.bf16.gmra.mxu0 %v4987
    %v5269 = vpop.f32.mrf.mxu0
    %v5270 = vadd.f32 0.0, %v5269
    %v5271 = vpop.f32.mrf.mxu0
    %v5272 = vadd.f32 0.0, %v5271
    %5273 = vdwg.mxu0
    %5274 = vmatpush.bf16.msra.mxu0 %v3102
    %5275 = vmatpush.bf16.msra.mxu0 %v3094
    %5276 = vmatpush.bf16.msra.mxu0 %v3086
    %5277 = vmatpush.bf16.msra.mxu0 %v3078
    %5278 = vmatpush.bf16.msra.mxu0 %v3070
    %5279 = vmatpush.bf16.msra.mxu0 %v3062
    %5280 = vmatpush.bf16.msra.mxu0 %v3054
    %5281 = vmatpush.bf16.msra.mxu0 %v3046
    %5282 = vmatmul.bf16.gmra.mxu0 %v4986
    %v5283 = vpop.f32.mrf.mxu0
    %v5284 = vadd.f32 %v5265, %v5283
    %v5285 = vpop.f32.mrf.mxu0
    %v5286 = vadd.f32 %v5267, %v5285
    %5287 = vmatmul.bf16.gmra.mxu0 %v4988
    %v5288 = vpop.f32.mrf.mxu0
    %v5289 = vadd.f32 %v5270, %v5288
    %v5290 = vpop.f32.mrf.mxu0
    %v5291 = vadd.f32 %v5272, %v5290
    %5292 = vdwg.mxu0
    %v5293 = vadd.f32 %v4953, %v5018
    %v5294 = vadd.f32 %v4954, %v5056
    %v5295 = vadd.f32 %v4955, %v5094
    %v5296 = vadd.f32 %v4956, %v5132
    %v5297 = vadd.f32 %v4957, %v5170
    %v5298 = vadd.f32 %v4958, %v5208
    %v5299 = vadd.f32 %v4959, %v5246
    %v5300 = vadd.f32 %v4960, %v5284
    %v5301 = vadd.f32 %v4961, %v5020
    %v5302 = vadd.f32 %v4962, %v5058
    %v5303 = vadd.f32 %v4963, %v5096
    %v5304 = vadd.f32 %v4964, %v5134
    %v5305 = vadd.f32 %v4965, %v5172
    %v5306 = vadd.f32 %v4966, %v5210
    %v5307 = vadd.f32 %v4967, %v5248
    %v5308 = vadd.f32 %v4968, %v5286
    %v5309 = vadd.f32 %v4969, %v5023
    %v5310 = vadd.f32 %v4970, %v5061
    %v5311 = vadd.f32 %v4971, %v5099
    %v5312 = vadd.f32 %v4972, %v5137
    %v5313 = vadd.f32 %v4973, %v5175
    %v5314 = vadd.f32 %v4974, %v5213
    %v5315 = vadd.f32 %v4975, %v5251
    %v5316 = vadd.f32 %v4976, %v5289
    %v5317 = vadd.f32 %v4977, %v5025
    %v5318 = vadd.f32 %v4978, %v5063
    %v5319 = vadd.f32 %v4979, %v5101
    %v5320 = vadd.f32 %v4980, %v5139
    %v5321 = vadd.f32 %v4981, %v5177
    %v5322 = vadd.f32 %v4982, %v5215
    %v5323 = vadd.f32 %v4983, %v5253
    %v5324 = vadd.f32 %v4984, %v5291
    %v5325 = vxor.u32 %v5293, 2147483648
    %v5326 = vxor.u32 %v5294, 2147483648
    %v5327 = vxor.u32 %v5295, 2147483648
    %v5328 = vxor.u32 %v5296, 2147483648
    %v5329 = vxor.u32 %v5297, 2147483648
    %v5330 = vxor.u32 %v5298, 2147483648
    %v5331 = vxor.u32 %v5301, 2147483648
    %v5332 = vxor.u32 %v5302, 2147483648
    %v5333 = vxor.u32 %v5303, 2147483648
    %v5334 = vxor.u32 %v5304, 2147483648
    %v5335 = vxor.u32 %v5305, 2147483648
    %v5336 = vxor.u32 %v5306, 2147483648
    %v5337 = vxor.u32 %v5309, 2147483648
    %v5338 = vxor.u32 %v5310, 2147483648
    %v5339 = vxor.u32 %v5311, 2147483648
    %v5340 = vxor.u32 %v5312, 2147483648
    %v5341 = vxor.u32 %v5313, 2147483648
    %v5342 = vxor.u32 %v5314, 2147483648
    %v5343 = vxor.u32 %v5317, 2147483648
    %v5344 = vxor.u32 %v5318, 2147483648
    %v5345 = vxor.u32 %v5319, 2147483648
    %v5346 = vxor.u32 %v5320, 2147483648
    %v5347 = vxor.u32 %v5321, 2147483648
    %v5348 = vxor.u32 %v5322, 2147483648
    %v5349 = vmul.f32 %v5325, 1.442695
    %v5350 = vpow.pop %v5349
    %v5351 = vmul.f32 %v5326, 1.442695
    %v5352 = vpow.pop %v5351
    %v5353 = vmul.f32 %v5327, 1.442695
    %v5354 = vpow.pop %v5353
    %v5355 = vmul.f32 %v5328, 1.442695
    %v5356 = vpow.pop %v5355
    %v5357 = vmul.f32 %v5329, 1.442695
    %v5358 = vpow.pop %v5357
    %v5359 = vmul.f32 %v5330, 1.442695
    %v5360 = vpow.pop %v5359
    %v5361 = vmul.f32 %v5331, 1.442695
    %v5362 = vpow.pop %v5361
    %v5363 = vmul.f32 %v5332, 1.442695
    %v5364 = vpow.pop %v5363
    %v5365 = vmul.f32 %v5333, 1.442695
    %v5366 = vpow.pop %v5365
    %v5367 = vmul.f32 %v5334, 1.442695
    %v5368 = vpow.pop %v5367
    %v5369 = vmul.f32 %v5335, 1.442695
    %v5370 = vpow.pop %v5369
    %v5371 = vmul.f32 %v5336, 1.442695
    %v5372 = vpow.pop %v5371
    %v5373 = vmul.f32 %v5337, 1.442695
    %v5374 = vpow.pop %v5373
    %v5375 = vmul.f32 %v5338, 1.442695
    %v5376 = vpow.pop %v5375
    %v5377 = vmul.f32 %v5339, 1.442695
    %v5378 = vpow.pop %v5377
    %v5379 = vmul.f32 %v5340, 1.442695
    %v5380 = vpow.pop %v5379
    %v5381 = vmul.f32 %v5341, 1.442695
    %v5382 = vpow.pop %v5381
    %v5383 = vmul.f32 %v5342, 1.442695
    %v5384 = vpow.pop %v5383
    %v5385 = vmul.f32 %v5343, 1.442695
    %v5386 = vpow.pop %v5385
    %v5387 = vmul.f32 %v5344, 1.442695
    %v5388 = vpow.pop %v5387
    %v5389 = vmul.f32 %v5345, 1.442695
    %v5390 = vpow.pop %v5389
    %v5391 = vmul.f32 %v5346, 1.442695
    %v5392 = vpow.pop %v5391
    %v5393 = vmul.f32 %v5347, 1.442695
    %v5394 = vpow.pop %v5393
    %v5395 = vmul.f32 %v5348, 1.442695
    %v5396 = vpow.pop %v5395
    %v5397 = vadd.f32 %v5350, 1.0
    %v5398 = vadd.f32 %v5352, 1.0
    %v5399 = vadd.f32 %v5354, 1.0
    %v5400 = vadd.f32 %v5356, 1.0
    %v5401 = vadd.f32 %v5358, 1.0
    %v5402 = vadd.f32 %v5360, 1.0
    %v5403 = vadd.f32 %v5362, 1.0
    %v5404 = vadd.f32 %v5364, 1.0
    %v5405 = vadd.f32 %v5366, 1.0
    %v5406 = vadd.f32 %v5368, 1.0
    %v5407 = vadd.f32 %v5370, 1.0
    %v5408 = vadd.f32 %v5372, 1.0
    %v5409 = vadd.f32 %v5374, 1.0
    %v5410 = vadd.f32 %v5376, 1.0
    %v5411 = vadd.f32 %v5378, 1.0
    %v5412 = vadd.f32 %v5380, 1.0
    %v5413 = vadd.f32 %v5382, 1.0
    %v5414 = vadd.f32 %v5384, 1.0
    %v5415 = vadd.f32 %v5386, 1.0
    %v5416 = vadd.f32 %v5388, 1.0
    %v5417 = vadd.f32 %v5390, 1.0
    %v5418 = vadd.f32 %v5392, 1.0
    %v5419 = vadd.f32 %v5394, 1.0
    %v5420 = vadd.f32 %v5396, 1.0
    %v5421 = vrcp.pop %v5397
    %v5422 = vmul.f32 %v5397, %v5421
    %v5423 = vsub.f32 1.0, %v5422
    %v5424 = vmul.f32 %v5421, %v5423
    %v5425 = vadd.f32 %v5421, %v5424
    %vm5426 = vweird.f32 %v5397
    %vm5427 = vweird.f32 %v5421
    %vm5428 = vmor %vm5426, %vm5427
    %v5429 = vsel %vm5428, %v5421, %v5425
    %v5430 = vand.u32 2147483647, %v5397
    %vm5431 = vcmp.eq.f32.partialorder %v5430, 8.507059e+37
    %v5432 = vand.u32 %v5397, 2147483648
    %v5433 = vor.u32 1.1754944e-38, %v5432
    %v5434 = vsel %vm5431, %v5433, %v5429
    %v5435 = vmul.f32 1.0, %v5434
    %v5436 = vrcp.pop %v5398
    %v5437 = vmul.f32 %v5398, %v5436
    %v5438 = vsub.f32 1.0, %v5437
    %v5439 = vmul.f32 %v5436, %v5438
    %v5440 = vadd.f32 %v5436, %v5439
    %vm5441 = vweird.f32 %v5398
    %vm5442 = vweird.f32 %v5436
    %vm5443 = vmor %vm5441, %vm5442
    %v5444 = vsel %vm5443, %v5436, %v5440
    %v5445 = vand.u32 2147483647, %v5398
    %vm5446 = vcmp.eq.f32.partialorder %v5445, 8.507059e+37
    %v5447 = vand.u32 %v5398, 2147483648
    %v5448 = vor.u32 1.1754944e-38, %v5447
    %v5449 = vsel %vm5446, %v5448, %v5444
    %v5450 = vmul.f32 1.0, %v5449
    %v5451 = vrcp.pop %v5399
    %v5452 = vmul.f32 %v5399, %v5451
    %v5453 = vsub.f32 1.0, %v5452
    %v5454 = vmul.f32 %v5451, %v5453
    %v5455 = vadd.f32 %v5451, %v5454
    %vm5456 = vweird.f32 %v5399
    %vm5457 = vweird.f32 %v5451
    %vm5458 = vmor %vm5456, %vm5457
    %v5459 = vsel %vm5458, %v5451, %v5455
    %v5460 = vand.u32 2147483647, %v5399
    %vm5461 = vcmp.eq.f32.partialorder %v5460, 8.507059e+37
    %v5462 = vand.u32 %v5399, 2147483648
    %v5463 = vor.u32 1.1754944e-38, %v5462
    %v5464 = vsel %vm5461, %v5463, %v5459
    %v5465 = vmul.f32 1.0, %v5464
    %v5466 = vrcp.pop %v5400
    %v5467 = vmul.f32 %v5400, %v5466
    %v5468 = vsub.f32 1.0, %v5467
    %v5469 = vmul.f32 %v5466, %v5468
    %v5470 = vadd.f32 %v5466, %v5469
    %vm5471 = vweird.f32 %v5400
    %vm5472 = vweird.f32 %v5466
    %vm5473 = vmor %vm5471, %vm5472
    %v5474 = vsel %vm5473, %v5466, %v5470
    %v5475 = vand.u32 2147483647, %v5400
    %vm5476 = vcmp.eq.f32.partialorder %v5475, 8.507059e+37
    %v5477 = vand.u32 %v5400, 2147483648
    %v5478 = vor.u32 1.1754944e-38, %v5477
    %v5479 = vsel %vm5476, %v5478, %v5474
    %v5480 = vmul.f32 1.0, %v5479
    %v5481 = vrcp.pop %v5401
    %v5482 = vmul.f32 %v5401, %v5481
    %v5483 = vsub.f32 1.0, %v5482
    %v5484 = vmul.f32 %v5481, %v5483
    %v5485 = vadd.f32 %v5481, %v5484
    %vm5486 = vweird.f32 %v5401
    %vm5487 = vweird.f32 %v5481
    %vm5488 = vmor %vm5486, %vm5487
    %v5489 = vsel %vm5488, %v5481, %v5485
    %v5490 = vand.u32 2147483647, %v5401
    %vm5491 = vcmp.eq.f32.partialorder %v5490, 8.507059e+37
    %v5492 = vand.u32 %v5401, 2147483648
    %v5493 = vor.u32 1.1754944e-38, %v5492
    %v5494 = vsel %vm5491, %v5493, %v5489
    %v5495 = vmul.f32 1.0, %v5494
    %v5496 = vrcp.pop %v5402
    %v5497 = vmul.f32 %v5402, %v5496
    %v5498 = vsub.f32 1.0, %v5497
    %v5499 = vmul.f32 %v5496, %v5498
    %v5500 = vadd.f32 %v5496, %v5499
    %vm5501 = vweird.f32 %v5402
    %vm5502 = vweird.f32 %v5496
    %vm5503 = vmor %vm5501, %vm5502
    %v5504 = vsel %vm5503, %v5496, %v5500
    %v5505 = vand.u32 2147483647, %v5402
    %vm5506 = vcmp.eq.f32.partialorder %v5505, 8.507059e+37
    %v5507 = vand.u32 %v5402, 2147483648
    %v5508 = vor.u32 1.1754944e-38, %v5507
    %v5509 = vsel %vm5506, %v5508, %v5504
    %v5510 = vmul.f32 1.0, %v5509
    %v5511 = vrcp.pop %v5403
    %v5512 = vmul.f32 %v5403, %v5511
    %v5513 = vsub.f32 1.0, %v5512
    %v5514 = vmul.f32 %v5511, %v5513
    %v5515 = vadd.f32 %v5511, %v5514
    %vm5516 = vweird.f32 %v5403
    %vm5517 = vweird.f32 %v5511
    %vm5518 = vmor %vm5516, %vm5517
    %v5519 = vsel %vm5518, %v5511, %v5515
    %v5520 = vand.u32 2147483647, %v5403
    %vm5521 = vcmp.eq.f32.partialorder %v5520, 8.507059e+37
    %v5522 = vand.u32 %v5403, 2147483648
    %v5523 = vor.u32 1.1754944e-38, %v5522
    %v5524 = vsel %vm5521, %v5523, %v5519
    %v5525 = vmul.f32 1.0, %v5524
    %v5526 = vrcp.pop %v5404
    %v5527 = vmul.f32 %v5404, %v5526
    %v5528 = vsub.f32 1.0, %v5527
    %v5529 = vmul.f32 %v5526, %v5528
    %v5530 = vadd.f32 %v5526, %v5529
    %vm5531 = vweird.f32 %v5404
    %vm5532 = vweird.f32 %v5526
    %vm5533 = vmor %vm5531, %vm5532
    %v5534 = vsel %vm5533, %v5526, %v5530
    %v5535 = vand.u32 2147483647, %v5404
    %vm5536 = vcmp.eq.f32.partialorder %v5535, 8.507059e+37
    %v5537 = vand.u32 %v5404, 2147483648
    %v5538 = vor.u32 1.1754944e-38, %v5537
    %v5539 = vsel %vm5536, %v5538, %v5534
    %v5540 = vmul.f32 1.0, %v5539
    %v5541 = vrcp.pop %v5405
    %v5542 = vmul.f32 %v5405, %v5541
    %v5543 = vsub.f32 1.0, %v5542
    %v5544 = vmul.f32 %v5541, %v5543
    %v5545 = vadd.f32 %v5541, %v5544
    %vm5546 = vweird.f32 %v5405
    %vm5547 = vweird.f32 %v5541
    %vm5548 = vmor %vm5546, %vm5547
    %v5549 = vsel %vm5548, %v5541, %v5545
    %v5550 = vand.u32 2147483647, %v5405
    %vm5551 = vcmp.eq.f32.partialorder %v5550, 8.507059e+37
    %v5552 = vand.u32 %v5405, 2147483648
    %v5553 = vor.u32 1.1754944e-38, %v5552
    %v5554 = vsel %vm5551, %v5553, %v5549
    %v5555 = vmul.f32 1.0, %v5554
    %v5556 = vrcp.pop %v5406
    %v5557 = vmul.f32 %v5406, %v5556
    %v5558 = vsub.f32 1.0, %v5557
    %v5559 = vmul.f32 %v5556, %v5558
    %v5560 = vadd.f32 %v5556, %v5559
    %vm5561 = vweird.f32 %v5406
    %vm5562 = vweird.f32 %v5556
    %vm5563 = vmor %vm5561, %vm5562
    %v5564 = vsel %vm5563, %v5556, %v5560
    %v5565 = vand.u32 2147483647, %v5406
    %vm5566 = vcmp.eq.f32.partialorder %v5565, 8.507059e+37
    %v5567 = vand.u32 %v5406, 2147483648
    %v5568 = vor.u32 1.1754944e-38, %v5567
    %v5569 = vsel %vm5566, %v5568, %v5564
    %v5570 = vmul.f32 1.0, %v5569
    %v5571 = vrcp.pop %v5407
    %v5572 = vmul.f32 %v5407, %v5571
    %v5573 = vsub.f32 1.0, %v5572
    %v5574 = vmul.f32 %v5571, %v5573
    %v5575 = vadd.f32 %v5571, %v5574
    %vm5576 = vweird.f32 %v5407
    %vm5577 = vweird.f32 %v5571
    %vm5578 = vmor %vm5576, %vm5577
    %v5579 = vsel %vm5578, %v5571, %v5575
    %v5580 = vand.u32 2147483647, %v5407
    %vm5581 = vcmp.eq.f32.partialorder %v5580, 8.507059e+37
    %v5582 = vand.u32 %v5407, 2147483648
    %v5583 = vor.u32 1.1754944e-38, %v5582
    %v5584 = vsel %vm5581, %v5583, %v5579
    %v5585 = vmul.f32 1.0, %v5584
    %v5586 = vrcp.pop %v5408
    %v5587 = vmul.f32 %v5408, %v5586
    %v5588 = vsub.f32 1.0, %v5587
    %v5589 = vmul.f32 %v5586, %v5588
    %v5590 = vadd.f32 %v5586, %v5589
    %vm5591 = vweird.f32 %v5408
    %vm5592 = vweird.f32 %v5586
    %vm5593 = vmor %vm5591, %vm5592
    %v5594 = vsel %vm5593, %v5586, %v5590
    %v5595 = vand.u32 2147483647, %v5408
    %vm5596 = vcmp.eq.f32.partialorder %v5595, 8.507059e+37
    %v5597 = vand.u32 %v5408, 2147483648
    %v5598 = vor.u32 1.1754944e-38, %v5597
    %v5599 = vsel %vm5596, %v5598, %v5594
    %v5600 = vmul.f32 1.0, %v5599
    %v5601 = vrcp.pop %v5409
    %v5602 = vmul.f32 %v5409, %v5601
    %v5603 = vsub.f32 1.0, %v5602
    %v5604 = vmul.f32 %v5601, %v5603
    %v5605 = vadd.f32 %v5601, %v5604
    %vm5606 = vweird.f32 %v5409
    %vm5607 = vweird.f32 %v5601
    %vm5608 = vmor %vm5606, %vm5607
    %v5609 = vsel %vm5608, %v5601, %v5605
    %v5610 = vand.u32 2147483647, %v5409
    %vm5611 = vcmp.eq.f32.partialorder %v5610, 8.507059e+37
    %v5612 = vand.u32 %v5409, 2147483648
    %v5613 = vor.u32 1.1754944e-38, %v5612
    %v5614 = vsel %vm5611, %v5613, %v5609
    %v5615 = vmul.f32 1.0, %v5614
    %v5616 = vrcp.pop %v5410
    %v5617 = vmul.f32 %v5410, %v5616
    %v5618 = vsub.f32 1.0, %v5617
    %v5619 = vmul.f32 %v5616, %v5618
    %v5620 = vadd.f32 %v5616, %v5619
    %vm5621 = vweird.f32 %v5410
    %vm5622 = vweird.f32 %v5616
    %vm5623 = vmor %vm5621, %vm5622
    %v5624 = vsel %vm5623, %v5616, %v5620
    %v5625 = vand.u32 2147483647, %v5410
    %vm5626 = vcmp.eq.f32.partialorder %v5625, 8.507059e+37
    %v5627 = vand.u32 %v5410, 2147483648
    %v5628 = vor.u32 1.1754944e-38, %v5627
    %v5629 = vsel %vm5626, %v5628, %v5624
    %v5630 = vmul.f32 1.0, %v5629
    %v5631 = vrcp.pop %v5411
    %v5632 = vmul.f32 %v5411, %v5631
    %v5633 = vsub.f32 1.0, %v5632
    %v5634 = vmul.f32 %v5631, %v5633
    %v5635 = vadd.f32 %v5631, %v5634
    %vm5636 = vweird.f32 %v5411
    %vm5637 = vweird.f32 %v5631
    %vm5638 = vmor %vm5636, %vm5637
    %v5639 = vsel %vm5638, %v5631, %v5635
    %v5640 = vand.u32 2147483647, %v5411
    %vm5641 = vcmp.eq.f32.partialorder %v5640, 8.507059e+37
    %v5642 = vand.u32 %v5411, 2147483648
    %v5643 = vor.u32 1.1754944e-38, %v5642
    %v5644 = vsel %vm5641, %v5643, %v5639
    %v5645 = vmul.f32 1.0, %v5644
    %v5646 = vrcp.pop %v5412
    %v5647 = vmul.f32 %v5412, %v5646
    %v5648 = vsub.f32 1.0, %v5647
    %v5649 = vmul.f32 %v5646, %v5648
    %v5650 = vadd.f32 %v5646, %v5649
    %vm5651 = vweird.f32 %v5412
    %vm5652 = vweird.f32 %v5646
    %vm5653 = vmor %vm5651, %vm5652
    %v5654 = vsel %vm5653, %v5646, %v5650
    %v5655 = vand.u32 2147483647, %v5412
    %vm5656 = vcmp.eq.f32.partialorder %v5655, 8.507059e+37
    %v5657 = vand.u32 %v5412, 2147483648
    %v5658 = vor.u32 1.1754944e-38, %v5657
    %v5659 = vsel %vm5656, %v5658, %v5654
    %v5660 = vmul.f32 1.0, %v5659
    %v5661 = vrcp.pop %v5413
    %v5662 = vmul.f32 %v5413, %v5661
    %v5663 = vsub.f32 1.0, %v5662
    %v5664 = vmul.f32 %v5661, %v5663
    %v5665 = vadd.f32 %v5661, %v5664
    %vm5666 = vweird.f32 %v5413
    %vm5667 = vweird.f32 %v5661
    %vm5668 = vmor %vm5666, %vm5667
    %v5669 = vsel %vm5668, %v5661, %v5665
    %v5670 = vand.u32 2147483647, %v5413
    %vm5671 = vcmp.eq.f32.partialorder %v5670, 8.507059e+37
    %v5672 = vand.u32 %v5413, 2147483648
    %v5673 = vor.u32 1.1754944e-38, %v5672
    %v5674 = vsel %vm5671, %v5673, %v5669
    %v5675 = vmul.f32 1.0, %v5674
    %v5676 = vrcp.pop %v5414
    %v5677 = vmul.f32 %v5414, %v5676
    %v5678 = vsub.f32 1.0, %v5677
    %v5679 = vmul.f32 %v5676, %v5678
    %v5680 = vadd.f32 %v5676, %v5679
    %vm5681 = vweird.f32 %v5414
    %vm5682 = vweird.f32 %v5676
    %vm5683 = vmor %vm5681, %vm5682
    %v5684 = vsel %vm5683, %v5676, %v5680
    %v5685 = vand.u32 2147483647, %v5414
    %vm5686 = vcmp.eq.f32.partialorder %v5685, 8.507059e+37
    %v5687 = vand.u32 %v5414, 2147483648
    %v5688 = vor.u32 1.1754944e-38, %v5687
    %v5689 = vsel %vm5686, %v5688, %v5684
    %v5690 = vmul.f32 1.0, %v5689
    %v5691 = vrcp.pop %v5415
    %v5692 = vmul.f32 %v5415, %v5691
    %v5693 = vsub.f32 1.0, %v5692
    %v5694 = vmul.f32 %v5691, %v5693
    %v5695 = vadd.f32 %v5691, %v5694
    %vm5696 = vweird.f32 %v5415
    %vm5697 = vweird.f32 %v5691
    %vm5698 = vmor %vm5696, %vm5697
    %v5699 = vsel %vm5698, %v5691, %v5695
    %v5700 = vand.u32 2147483647, %v5415
    %vm5701 = vcmp.eq.f32.partialorder %v5700, 8.507059e+37
    %v5702 = vand.u32 %v5415, 2147483648
    %v5703 = vor.u32 1.1754944e-38, %v5702
    %v5704 = vsel %vm5701, %v5703, %v5699
    %v5705 = vmul.f32 1.0, %v5704
    %v5706 = vrcp.pop %v5416
    %v5707 = vmul.f32 %v5416, %v5706
    %v5708 = vsub.f32 1.0, %v5707
    %v5709 = vmul.f32 %v5706, %v5708
    %v5710 = vadd.f32 %v5706, %v5709
    %vm5711 = vweird.f32 %v5416
    %vm5712 = vweird.f32 %v5706
    %vm5713 = vmor %vm5711, %vm5712
    %v5714 = vsel %vm5713, %v5706, %v5710
    %v5715 = vand.u32 2147483647, %v5416
    %vm5716 = vcmp.eq.f32.partialorder %v5715, 8.507059e+37
    %v5717 = vand.u32 %v5416, 2147483648
    %v5718 = vor.u32 1.1754944e-38, %v5717
    %v5719 = vsel %vm5716, %v5718, %v5714
    %v5720 = vmul.f32 1.0, %v5719
    %v5721 = vrcp.pop %v5417
    %v5722 = vmul.f32 %v5417, %v5721
    %v5723 = vsub.f32 1.0, %v5722
    %v5724 = vmul.f32 %v5721, %v5723
    %v5725 = vadd.f32 %v5721, %v5724
    %vm5726 = vweird.f32 %v5417
    %vm5727 = vweird.f32 %v5721
    %vm5728 = vmor %vm5726, %vm5727
    %v5729 = vsel %vm5728, %v5721, %v5725
    %v5730 = vand.u32 2147483647, %v5417
    %vm5731 = vcmp.eq.f32.partialorder %v5730, 8.507059e+37
    %v5732 = vand.u32 %v5417, 2147483648
    %v5733 = vor.u32 1.1754944e-38, %v5732
    %v5734 = vsel %vm5731, %v5733, %v5729
    %v5735 = vmul.f32 1.0, %v5734
    %v5736 = vrcp.pop %v5418
    %v5737 = vmul.f32 %v5418, %v5736
    %v5738 = vsub.f32 1.0, %v5737
    %v5739 = vmul.f32 %v5736, %v5738
    %v5740 = vadd.f32 %v5736, %v5739
    %vm5741 = vweird.f32 %v5418
    %vm5742 = vweird.f32 %v5736
    %vm5743 = vmor %vm5741, %vm5742
    %v5744 = vsel %vm5743, %v5736, %v5740
    %v5745 = vand.u32 2147483647, %v5418
    %vm5746 = vcmp.eq.f32.partialorder %v5745, 8.507059e+37
    %v5747 = vand.u32 %v5418, 2147483648
    %v5748 = vor.u32 1.1754944e-38, %v5747
    %v5749 = vsel %vm5746, %v5748, %v5744
    %v5750 = vmul.f32 1.0, %v5749
    %v5751 = vrcp.pop %v5419
    %v5752 = vmul.f32 %v5419, %v5751
    %v5753 = vsub.f32 1.0, %v5752
    %v5754 = vmul.f32 %v5751, %v5753
    %v5755 = vadd.f32 %v5751, %v5754
    %vm5756 = vweird.f32 %v5419
    %vm5757 = vweird.f32 %v5751
    %vm5758 = vmor %vm5756, %vm5757
    %v5759 = vsel %vm5758, %v5751, %v5755
    %v5760 = vand.u32 2147483647, %v5419
    %vm5761 = vcmp.eq.f32.partialorder %v5760, 8.507059e+37
    %v5762 = vand.u32 %v5419, 2147483648
    %v5763 = vor.u32 1.1754944e-38, %v5762
    %v5764 = vsel %vm5761, %v5763, %v5759
    %v5765 = vmul.f32 1.0, %v5764
    %v5766 = vrcp.pop %v5420
    %v5767 = vmul.f32 %v5420, %v5766
    %v5768 = vsub.f32 1.0, %v5767
    %v5769 = vmul.f32 %v5766, %v5768
    %v5770 = vadd.f32 %v5766, %v5769
    %vm5771 = vweird.f32 %v5420
    %vm5772 = vweird.f32 %v5766
    %vm5773 = vmor %vm5771, %vm5772
    %v5774 = vsel %vm5773, %v5766, %v5770
    %v5775 = vand.u32 2147483647, %v5420
    %vm5776 = vcmp.eq.f32.partialorder %v5775, 8.507059e+37
    %v5777 = vand.u32 %v5420, 2147483648
    %v5778 = vor.u32 1.1754944e-38, %v5777
    %v5779 = vsel %vm5776, %v5778, %v5774
    %v5780 = vmul.f32 1.0, %v5779
    %v5781 = vtanh.pop %v5299
    %v5782 = vtanh.pop %v5300
    %v5783 = vtanh.pop %v5307
    %v5784 = vtanh.pop %v5308
    %v5785 = vtanh.pop %v5315
    %v5786 = vtanh.pop %v5316
    %v5787 = vtanh.pop %v5323
    %v5788 = vtanh.pop %v5324
    %v5789 = vmul.f32 %v5465, %v4926
    %v5790 = vmul.f32 %v5480, %v4927
    %v5791 = vmul.f32 %v5555, %v4928
    %v5792 = vmul.f32 %v5570, %v4929
    %v5793 = vmul.f32 %v5645, %v4930
    %v5794 = vmul.f32 %v5660, %v4931
    %v5795 = vmul.f32 %v5735, %v4932
    %v5796 = vmul.f32 %v5750, %v4933
    %v5797 = vmul.f32 %v5435, %v5781
    %v5798 = vmul.f32 %v5450, %v5782
    %v5799 = vmul.f32 %v5525, %v5783
    %v5800 = vmul.f32 %v5540, %v5784
    %v5801 = vmul.f32 %v5615, %v5785
    %v5802 = vmul.f32 %v5630, %v5786
    %v5803 = vmul.f32 %v5705, %v5787
    %v5804 = vmul.f32 %v5720, %v5788
    %v5805 = vadd.f32 %v5789, %v5797
    %v5806 = vadd.f32 %v5790, %v5798
    %v5807 = vadd.f32 %v5791, %v5799
    %v5808 = vadd.f32 %v5792, %v5800
    %v5809 = vadd.f32 %v5793, %v5801
    %v5810 = vadd.f32 %v5794, %v5802
    %v5811 = vadd.f32 %v5795, %v5803
    %v5812 = vadd.f32 %v5796, %v5804
    %v5813 = vtanh.pop %v5805
    %v5814 = vtanh.pop %v5806
    %v5815 = vtanh.pop %v5807
    %v5816 = vtanh.pop %v5808
    %v5817 = vtanh.pop %v5809
    %v5818 = vtanh.pop %v5810
    %v5819 = vtanh.pop %v5811
    %v5820 = vtanh.pop %v5812
    %v5821 = vmul.f32 %v5495, %v5813
    %v5822 = vmul.f32 %v5510, %v5814
    %v5823 = vmul.f32 %v5585, %v5815
    %v5824 = vmul.f32 %v5600, %v5816
    %v5825 = vmul.f32 %v5675, %v5817
    %v5826 = vmul.f32 %v5690, %v5818
    %v5827 = vmul.f32 %v5765, %v5819
    %v5828 = vmul.f32 %v5780, %v5820
    %s5829 = smul.u32 12, 8
    %s5830 = smul.addr %s5829, 8
    %s5831 = scalar_lea.vmem [#allocation2], %s5830
    %v5832 = vld [vmem:[%s5831] sm:$0xff]
    %v5833 = vld [vmem:[%s5831 + $0x8] sm:$0xff]
    %v5834 = vld [vmem:[%s5831 + $0x10] sm:$0xff]
    %v5835 = vld [vmem:[%s5831 + $0x18] sm:$0xff]
    %v5836 = vld [vmem:[%s5831 + $0x20] sm:$0xff]
    %v5837 = vld [vmem:[%s5831 + $0x28] sm:$0xff]
    %v5838 = vld [vmem:[%s5831 + $0x30] sm:$0xff]
    %v5839 = vld [vmem:[%s5831 + $0x38] sm:$0xff]
    %v5840 = vld [vmem:[%s5831 + $0x40] sm:$0xff]
    %v5841 = vld [vmem:[%s5831 + $0x48] sm:$0xff]
    %v5842 = vld [vmem:[%s5831 + $0x50] sm:$0xff]
    %v5843 = vld [vmem:[%s5831 + $0x58] sm:$0xff]
    %v5844 = vld [vmem:[%s5831 + $0x60] sm:$0xff]
    %v5845 = vld [vmem:[%s5831 + $0x68] sm:$0xff]
    %v5846 = vld [vmem:[%s5831 + $0x70] sm:$0xff]
    %v5847 = vld [vmem:[%s5831 + $0x78] sm:$0xff]
    %v5848 = vld [vmem:[%s5831 + $0x80] sm:$0xff]
    %v5849 = vld [vmem:[%s5831 + $0x88] sm:$0xff]
    %v5850 = vld [vmem:[%s5831 + $0x90] sm:$0xff]
    %v5851 = vld [vmem:[%s5831 + $0x98] sm:$0xff]
    %v5852 = vld [vmem:[%s5831 + $0xa0] sm:$0xff]
    %v5853 = vld [vmem:[%s5831 + $0xa8] sm:$0xff]
    %v5854 = vld [vmem:[%s5831 + $0xb0] sm:$0xff]
    %v5855 = vld [vmem:[%s5831 + $0xb8] sm:$0xff]
    %v5856 = vld [vmem:[%s5831 + $0xc0] sm:$0xff]
    %v5857 = vld [vmem:[%s5831 + $0xc8] sm:$0xff]
    %v5858 = vld [vmem:[%s5831 + $0xd0] sm:$0xff]
    %v5859 = vld [vmem:[%s5831 + $0xd8] sm:$0xff]
    %v5860 = vld [vmem:[%s5831 + $0xe0] sm:$0xff]
    %v5861 = vld [vmem:[%s5831 + $0xe8] sm:$0xff]
    %v5862 = vld [vmem:[%s5831 + $0xf0] sm:$0xff]
    %v5863 = vld [vmem:[%s5831 + $0xf8] sm:$0xff]
    %v5864 = vpack.c.bf16 %v5823, %v5821
    %v5865 = vpack.c.bf16 %v5824, %v5822
    %v5866 = vpack.c.bf16 %v5827, %v5825
    %v5867 = vpack.c.bf16 %v5828, %v5826
    %5868 = vmatpush.bf16.msra.mxu0 %v3031
    %5869 = vmatpush.bf16.msra.mxu0 %v3023
    %5870 = vmatpush.bf16.msra.mxu0 %v3015
    %5871 = vmatpush.bf16.msra.mxu0 %v3007
    %5872 = vmatpush.bf16.msra.mxu0 %v2999
    %5873 = vmatpush.bf16.msra.mxu0 %v2991
    %5874 = vmatpush.bf16.msra.mxu0 %v2983
    %5875 = vmatpush.bf16.msra.mxu0 %v2975
    %5876 = vmatmul.bf16.gmra.mxu0 %v5864
    %v5877 = vpop.f32.mrf.mxu0
    %v5878 = vadd.f32 0.0, %v5877
    %v5879 = vpop.f32.mrf.mxu0
    %v5880 = vadd.f32 0.0, %v5879
    %5881 = vmatmul.bf16.gmra.mxu0 %v5866
    %v5882 = vpop.f32.mrf.mxu0
    %v5883 = vadd.f32 0.0, %v5882
    %v5884 = vpop.f32.mrf.mxu0
    %v5885 = vadd.f32 0.0, %v5884
    %5886 = vdwg.mxu0
    %5887 = vmatpush.bf16.msra.mxu0 %v3095
    %5888 = vmatpush.bf16.msra.mxu0 %v3087
    %5889 = vmatpush.bf16.msra.mxu0 %v3079
    %5890 = vmatpush.bf16.msra.mxu0 %v3071
    %5891 = vmatpush.bf16.msra.mxu0 %v3063
    %5892 = vmatpush.bf16.msra.mxu0 %v3055
    %5893 = vmatpush.bf16.msra.mxu0 %v3047
    %5894 = vmatpush.bf16.msra.mxu0 %v3039
    %5895 = vmatmul.bf16.gmra.mxu0 %v5865
    %v5896 = vpop.f32.mrf.mxu0
    %v5897 = vadd.f32 %v5878, %v5896
    %v5898 = vpop.f32.mrf.mxu0
    %v5899 = vadd.f32 %v5880, %v5898
    %5900 = vmatmul.bf16.gmra.mxu0 %v5867
    %v5901 = vpop.f32.mrf.mxu0
    %v5902 = vadd.f32 %v5883, %v5901
    %v5903 = vpop.f32.mrf.mxu0
    %v5904 = vadd.f32 %v5885, %v5903
    %5905 = vdwg.mxu0
    %5906 = vmatpush.bf16.msra.mxu0 %v3032
    %5907 = vmatpush.bf16.msra.mxu0 %v3024
    %5908 = vmatpush.bf16.msra.mxu0 %v3016
    %5909 = vmatpush.bf16.msra.mxu0 %v3008
    %5910 = vmatpush.bf16.msra.mxu0 %v3000
    %5911 = vmatpush.bf16.msra.mxu0 %v2992
    %5912 = vmatpush.bf16.msra.mxu0 %v2984
    %5913 = vmatpush.bf16.msra.mxu0 %v2976
    %5914 = vmatmul.bf16.gmra.mxu0 %v5864
    %v5915 = vpop.f32.mrf.mxu0
    %v5916 = vadd.f32 0.0, %v5915
    %v5917 = vpop.f32.mrf.mxu0
    %v5918 = vadd.f32 0.0, %v5917
    %5919 = vmatmul.bf16.gmra.mxu0 %v5866
    %v5920 = vpop.f32.mrf.mxu0
    %v5921 = vadd.f32 0.0, %v5920
    %v5922 = vpop.f32.mrf.mxu0
    %v5923 = vadd.f32 0.0, %v5922
    %5924 = vdwg.mxu0
    %5925 = vmatpush.bf16.msra.mxu0 %v3096
    %5926 = vmatpush.bf16.msra.mxu0 %v3088
    %5927 = vmatpush.bf16.msra.mxu0 %v3080
    %5928 = vmatpush.bf16.msra.mxu0 %v3072
    %5929 = vmatpush.bf16.msra.mxu0 %v3064
    %5930 = vmatpush.bf16.msra.mxu0 %v3056
    %5931 = vmatpush.bf16.msra.mxu0 %v3048
    %5932 = vmatpush.bf16.msra.mxu0 %v3040
    %5933 = vmatmul.bf16.gmra.mxu0 %v5865
    %v5934 = vpop.f32.mrf.mxu0
    %v5935 = vadd.f32 %v5916, %v5934
    %v5936 = vpop.f32.mrf.mxu0
    %v5937 = vadd.f32 %v5918, %v5936
    %5938 = vmatmul.bf16.gmra.mxu0 %v5867
    %v5939 = vpop.f32.mrf.mxu0
    %v5940 = vadd.f32 %v5921, %v5939
    %v5941 = vpop.f32.mrf.mxu0
    %v5942 = vadd.f32 %v5923, %v5941
    %5943 = vdwg.mxu0
    %5944 = vmatpush.bf16.msra.mxu0 %v3033
    %5945 = vmatpush.bf16.msra.mxu0 %v3025
    %5946 = vmatpush.bf16.msra.mxu0 %v3017
    %5947 = vmatpush.bf16.msra.mxu0 %v3009
    %5948 = vmatpush.bf16.msra.mxu0 %v3001
    %5949 = vmatpush.bf16.msra.mxu0 %v2993
    %5950 = vmatpush.bf16.msra.mxu0 %v2985
    %5951 = vmatpush.bf16.msra.mxu0 %v2977
    %5952 = vmatmul.bf16.gmra.mxu0 %v5864
    %v5953 = vpop.f32.mrf.mxu0
    %v5954 = vadd.f32 0.0, %v5953
    %v5955 = vpop.f32.mrf.mxu0
    %v5956 = vadd.f32 0.0, %v5955
    %5957 = vmatmul.bf16.gmra.mxu0 %v5866
    %v5958 = vpop.f32.mrf.mxu0
    %v5959 = vadd.f32 0.0, %v5958
    %v5960 = vpop.f32.mrf.mxu0
    %v5961 = vadd.f32 0.0, %v5960
    %5962 = vdwg.mxu0
    %5963 = vmatpush.bf16.msra.mxu0 %v3097
    %5964 = vmatpush.bf16.msra.mxu0 %v3089
    %5965 = vmatpush.bf16.msra.mxu0 %v3081
    %5966 = vmatpush.bf16.msra.mxu0 %v3073
    %5967 = vmatpush.bf16.msra.mxu0 %v3065
    %5968 = vmatpush.bf16.msra.mxu0 %v3057
    %5969 = vmatpush.bf16.msra.mxu0 %v3049
    %5970 = vmatpush.bf16.msra.mxu0 %v3041
    %5971 = vmatmul.bf16.gmra.mxu0 %v5865
    %v5972 = vpop.f32.mrf.mxu0
    %v5973 = vadd.f32 %v5954, %v5972
    %v5974 = vpop.f32.mrf.mxu0
    %v5975 = vadd.f32 %v5956, %v5974
    %5976 = vmatmul.bf16.gmra.mxu0 %v5867
    %v5977 = vpop.f32.mrf.mxu0
    %v5978 = vadd.f32 %v5959, %v5977
    %v5979 = vpop.f32.mrf.mxu0
    %v5980 = vadd.f32 %v5961, %v5979
    %5981 = vdwg.mxu0
    %5982 = vmatpush.bf16.msra.mxu0 %v3034
    %5983 = vmatpush.bf16.msra.mxu0 %v3026
    %5984 = vmatpush.bf16.msra.mxu0 %v3018
    %5985 = vmatpush.bf16.msra.mxu0 %v3010
    %5986 = vmatpush.bf16.msra.mxu0 %v3002
    %5987 = vmatpush.bf16.msra.mxu0 %v2994
    %5988 = vmatpush.bf16.msra.mxu0 %v2986
    %5989 = vmatpush.bf16.msra.mxu0 %v2978
    %5990 = vmatmul.bf16.gmra.mxu0 %v5864
    %v5991 = vpop.f32.mrf.mxu0
    %v5992 = vadd.f32 0.0, %v5991
    %v5993 = vpop.f32.mrf.mxu0
    %v5994 = vadd.f32 0.0, %v5993
    %5995 = vmatmul.bf16.gmra.mxu0 %v5866
    %v5996 = vpop.f32.mrf.mxu0
    %v5997 = vadd.f32 0.0, %v5996
    %v5998 = vpop.f32.mrf.mxu0
    %v5999 = vadd.f32 0.0, %v5998
    %6000 = vdwg.mxu0
    %6001 = vmatpush.bf16.msra.mxu0 %v3098
    %6002 = vmatpush.bf16.msra.mxu0 %v3090
    %6003 = vmatpush.bf16.msra.mxu0 %v3082
    %6004 = vmatpush.bf16.msra.mxu0 %v3074
    %6005 = vmatpush.bf16.msra.mxu0 %v3066
    %6006 = vmatpush.bf16.msra.mxu0 %v3058
    %6007 = vmatpush.bf16.msra.mxu0 %v3050
    %6008 = vmatpush.bf16.msra.mxu0 %v3042
    %6009 = vmatmul.bf16.gmra.mxu0 %v5865
    %v6010 = vpop.f32.mrf.mxu0
    %v6011 = vadd.f32 %v5992, %v6010
    %v6012 = vpop.f32.mrf.mxu0
    %v6013 = vadd.f32 %v5994, %v6012
    %6014 = vmatmul.bf16.gmra.mxu0 %v5867
    %v6015 = vpop.f32.mrf.mxu0
    %v6016 = vadd.f32 %v5997, %v6015
    %v6017 = vpop.f32.mrf.mxu0
    %v6018 = vadd.f32 %v5999, %v6017
    %6019 = vdwg.mxu0
    %6020 = vmatpush.bf16.msra.mxu0 %v3035
    %6021 = vmatpush.bf16.msra.mxu0 %v3027
    %6022 = vmatpush.bf16.msra.mxu0 %v3019
    %6023 = vmatpush.bf16.msra.mxu0 %v3011
    %6024 = vmatpush.bf16.msra.mxu0 %v3003
    %6025 = vmatpush.bf16.msra.mxu0 %v2995
    %6026 = vmatpush.bf16.msra.mxu0 %v2987
    %6027 = vmatpush.bf16.msra.mxu0 %v2979
    %6028 = vmatmul.bf16.gmra.mxu0 %v5864
    %v6029 = vpop.f32.mrf.mxu0
    %v6030 = vadd.f32 0.0, %v6029
    %v6031 = vpop.f32.mrf.mxu0
    %v6032 = vadd.f32 0.0, %v6031
    %6033 = vmatmul.bf16.gmra.mxu0 %v5866
    %v6034 = vpop.f32.mrf.mxu0
    %v6035 = vadd.f32 0.0, %v6034
    %v6036 = vpop.f32.mrf.mxu0
    %v6037 = vadd.f32 0.0, %v6036
    %6038 = vdwg.mxu0
    %6039 = vmatpush.bf16.msra.mxu0 %v3099
    %6040 = vmatpush.bf16.msra.mxu0 %v3091
    %6041 = vmatpush.bf16.msra.mxu0 %v3083
    %6042 = vmatpush.bf16.msra.mxu0 %v3075
    %6043 = vmatpush.bf16.msra.mxu0 %v3067
    %6044 = vmatpush.bf16.msra.mxu0 %v3059
    %6045 = vmatpush.bf16.msra.mxu0 %v3051
    %6046 = vmatpush.bf16.msra.mxu0 %v3043
    %6047 = vmatmul.bf16.gmra.mxu0 %v5865
    %v6048 = vpop.f32.mrf.mxu0
    %v6049 = vadd.f32 %v6030, %v6048
    %v6050 = vpop.f32.mrf.mxu0
    %v6051 = vadd.f32 %v6032, %v6050
    %6052 = vmatmul.bf16.gmra.mxu0 %v5867
    %v6053 = vpop.f32.mrf.mxu0
    %v6054 = vadd.f32 %v6035, %v6053
    %v6055 = vpop.f32.mrf.mxu0
    %v6056 = vadd.f32 %v6037, %v6055
    %6057 = vdwg.mxu0
    %6058 = vmatpush.bf16.msra.mxu0 %v3036
    %6059 = vmatpush.bf16.msra.mxu0 %v3028
    %6060 = vmatpush.bf16.msra.mxu0 %v3020
    %6061 = vmatpush.bf16.msra.mxu0 %v3012
    %6062 = vmatpush.bf16.msra.mxu0 %v3004
    %6063 = vmatpush.bf16.msra.mxu0 %v2996
    %6064 = vmatpush.bf16.msra.mxu0 %v2988
    %6065 = vmatpush.bf16.msra.mxu0 %v2980
    %6066 = vmatmul.bf16.gmra.mxu0 %v5864
    %v6067 = vpop.f32.mrf.mxu0
    %v6068 = vadd.f32 0.0, %v6067
    %v6069 = vpop.f32.mrf.mxu0
    %v6070 = vadd.f32 0.0, %v6069
    %6071 = vmatmul.bf16.gmra.mxu0 %v5866
    %v6072 = vpop.f32.mrf.mxu0
    %v6073 = vadd.f32 0.0, %v6072
    %v6074 = vpop.f32.mrf.mxu0
    %v6075 = vadd.f32 0.0, %v6074
    %6076 = vdwg.mxu0
    %6077 = vmatpush.bf16.msra.mxu0 %v3100
    %6078 = vmatpush.bf16.msra.mxu0 %v3092
    %6079 = vmatpush.bf16.msra.mxu0 %v3084
    %6080 = vmatpush.bf16.msra.mxu0 %v3076
    %6081 = vmatpush.bf16.msra.mxu0 %v3068
    %6082 = vmatpush.bf16.msra.mxu0 %v3060
    %6083 = vmatpush.bf16.msra.mxu0 %v3052
    %6084 = vmatpush.bf16.msra.mxu0 %v3044
    %6085 = vmatmul.bf16.gmra.mxu0 %v5865
    %v6086 = vpop.f32.mrf.mxu0
    %v6087 = vadd.f32 %v6068, %v6086
    %v6088 = vpop.f32.mrf.mxu0
    %v6089 = vadd.f32 %v6070, %v6088
    %6090 = vmatmul.bf16.gmra.mxu0 %v5867
    %v6091 = vpop.f32.mrf.mxu0
    %v6092 = vadd.f32 %v6073, %v6091
    %v6093 = vpop.f32.mrf.mxu0
    %v6094 = vadd.f32 %v6075, %v6093
    %6095 = vdwg.mxu0
    %6096 = vmatpush.bf16.msra.mxu0 %v3037
    %6097 = vmatpush.bf16.msra.mxu0 %v3029
    %6098 = vmatpush.bf16.msra.mxu0 %v3021
    %6099 = vmatpush.bf16.msra.mxu0 %v3013
    %6100 = vmatpush.bf16.msra.mxu0 %v3005
    %6101 = vmatpush.bf16.msra.mxu0 %v2997
    %6102 = vmatpush.bf16.msra.mxu0 %v2989
    %6103 = vmatpush.bf16.msra.mxu0 %v2981
    %6104 = vmatmul.bf16.gmra.mxu0 %v5864
    %v6105 = vpop.f32.mrf.mxu0
    %v6106 = vadd.f32 0.0, %v6105
    %v6107 = vpop.f32.mrf.mxu0
    %v6108 = vadd.f32 0.0, %v6107
    %6109 = vmatmul.bf16.gmra.mxu0 %v5866
    %v6110 = vpop.f32.mrf.mxu0
    %v6111 = vadd.f32 0.0, %v6110
    %v6112 = vpop.f32.mrf.mxu0
    %v6113 = vadd.f32 0.0, %v6112
    %6114 = vdwg.mxu0
    %6115 = vmatpush.bf16.msra.mxu0 %v3101
    %6116 = vmatpush.bf16.msra.mxu0 %v3093
    %6117 = vmatpush.bf16.msra.mxu0 %v3085
    %6118 = vmatpush.bf16.msra.mxu0 %v3077
    %6119 = vmatpush.bf16.msra.mxu0 %v3069
    %6120 = vmatpush.bf16.msra.mxu0 %v3061
    %6121 = vmatpush.bf16.msra.mxu0 %v3053
    %6122 = vmatpush.bf16.msra.mxu0 %v3045
    %6123 = vmatmul.bf16.gmra.mxu0 %v5865
    %v6124 = vpop.f32.mrf.mxu0
    %v6125 = vadd.f32 %v6106, %v6124
    %v6126 = vpop.f32.mrf.mxu0
    %v6127 = vadd.f32 %v6108, %v6126
    %6128 = vmatmul.bf16.gmra.mxu0 %v5867
    %v6129 = vpop.f32.mrf.mxu0
    %v6130 = vadd.f32 %v6111, %v6129
    %v6131 = vpop.f32.mrf.mxu0
    %v6132 = vadd.f32 %v6113, %v6131
    %6133 = vdwg.mxu0
    %6134 = vmatpush.bf16.msra.mxu0 %v3038
    %6135 = vmatpush.bf16.msra.mxu0 %v3030
    %6136 = vmatpush.bf16.msra.mxu0 %v3022
    %6137 = vmatpush.bf16.msra.mxu0 %v3014
    %6138 = vmatpush.bf16.msra.mxu0 %v3006
    %6139 = vmatpush.bf16.msra.mxu0 %v2998
    %6140 = vmatpush.bf16.msra.mxu0 %v2990
    %6141 = vmatpush.bf16.msra.mxu0 %v2982
    %6142 = vmatmul.bf16.gmra.mxu0 %v5864
    %v6143 = vpop.f32.mrf.mxu0
    %v6144 = vadd.f32 0.0, %v6143
    %v6145 = vpop.f32.mrf.mxu0
    %v6146 = vadd.f32 0.0, %v6145
    %6147 = vmatmul.bf16.gmra.mxu0 %v5866
    %v6148 = vpop.f32.mrf.mxu0
    %v6149 = vadd.f32 0.0, %v6148
    %v6150 = vpop.f32.mrf.mxu0
    %v6151 = vadd.f32 0.0, %v6150
    %6152 = vdwg.mxu0
    %6153 = vmatpush.bf16.msra.mxu0 %v3102
    %6154 = vmatpush.bf16.msra.mxu0 %v3094
    %6155 = vmatpush.bf16.msra.mxu0 %v3086
    %6156 = vmatpush.bf16.msra.mxu0 %v3078
    %6157 = vmatpush.bf16.msra.mxu0 %v3070
    %6158 = vmatpush.bf16.msra.mxu0 %v3062
    %6159 = vmatpush.bf16.msra.mxu0 %v3054
    %6160 = vmatpush.bf16.msra.mxu0 %v3046
    %6161 = vmatmul.bf16.gmra.mxu0 %v5865
    %v6162 = vpop.f32.mrf.mxu0
    %v6163 = vadd.f32 %v6144, %v6162
    %v6164 = vpop.f32.mrf.mxu0
    %v6165 = vadd.f32 %v6146, %v6164
    %6166 = vmatmul.bf16.gmra.mxu0 %v5867
    %v6167 = vpop.f32.mrf.mxu0
    %v6168 = vadd.f32 %v6149, %v6167
    %v6169 = vpop.f32.mrf.mxu0
    %v6170 = vadd.f32 %v6151, %v6169
    %6171 = vdwg.mxu0
    %v6172 = vadd.f32 %v5832, %v5897
    %v6173 = vadd.f32 %v5833, %v5935
    %v6174 = vadd.f32 %v5834, %v5973
    %v6175 = vadd.f32 %v5835, %v6011
    %v6176 = vadd.f32 %v5836, %v6049
    %v6177 = vadd.f32 %v5837, %v6087
    %v6178 = vadd.f32 %v5838, %v6125
    %v6179 = vadd.f32 %v5839, %v6163
    %v6180 = vadd.f32 %v5840, %v5899
    %v6181 = vadd.f32 %v5841, %v5937
    %v6182 = vadd.f32 %v5842, %v5975
    %v6183 = vadd.f32 %v5843, %v6013
    %v6184 = vadd.f32 %v5844, %v6051
    %v6185 = vadd.f32 %v5845, %v6089
    %v6186 = vadd.f32 %v5846, %v6127
    %v6187 = vadd.f32 %v5847, %v6165
    %v6188 = vadd.f32 %v5848, %v5902
    %v6189 = vadd.f32 %v5849, %v5940
    %v6190 = vadd.f32 %v5850, %v5978
    %v6191 = vadd.f32 %v5851, %v6016
    %v6192 = vadd.f32 %v5852, %v6054
    %v6193 = vadd.f32 %v5853, %v6092
    %v6194 = vadd.f32 %v5854, %v6130
    %v6195 = vadd.f32 %v5855, %v6168
    %v6196 = vadd.f32 %v5856, %v5904
    %v6197 = vadd.f32 %v5857, %v5942
    %v6198 = vadd.f32 %v5858, %v5980
    %v6199 = vadd.f32 %v5859, %v6018
    %v6200 = vadd.f32 %v5860, %v6056
    %v6201 = vadd.f32 %v5861, %v6094
    %v6202 = vadd.f32 %v5862, %v6132
    %v6203 = vadd.f32 %v5863, %v6170
    %v6204 = vxor.u32 %v6172, 2147483648
    %v6205 = vxor.u32 %v6173, 2147483648
    %v6206 = vxor.u32 %v6174, 2147483648
    %v6207 = vxor.u32 %v6175, 2147483648
    %v6208 = vxor.u32 %v6176, 2147483648
    %v6209 = vxor.u32 %v6177, 2147483648
    %v6210 = vxor.u32 %v6180, 2147483648
    %v6211 = vxor.u32 %v6181, 2147483648
    %v6212 = vxor.u32 %v6182, 2147483648
    %v6213 = vxor.u32 %v6183, 2147483648
    %v6214 = vxor.u32 %v6184, 2147483648
    %v6215 = vxor.u32 %v6185, 2147483648
    %v6216 = vxor.u32 %v6188, 2147483648
    %v6217 = vxor.u32 %v6189, 2147483648
    %v6218 = vxor.u32 %v6190, 2147483648
    %v6219 = vxor.u32 %v6191, 2147483648
    %v6220 = vxor.u32 %v6192, 2147483648
    %v6221 = vxor.u32 %v6193, 2147483648
    %v6222 = vxor.u32 %v6196, 2147483648
    %v6223 = vxor.u32 %v6197, 2147483648
    %v6224 = vxor.u32 %v6198, 2147483648
    %v6225 = vxor.u32 %v6199, 2147483648
    %v6226 = vxor.u32 %v6200, 2147483648
    %v6227 = vxor.u32 %v6201, 2147483648
    %v6228 = vmul.f32 %v6204, 1.442695
    %v6229 = vpow.pop %v6228
    %v6230 = vmul.f32 %v6205, 1.442695
    %v6231 = vpow.pop %v6230
    %v6232 = vmul.f32 %v6206, 1.442695
    %v6233 = vpow.pop %v6232
    %v6234 = vmul.f32 %v6207, 1.442695
    %v6235 = vpow.pop %v6234
    %v6236 = vmul.f32 %v6208, 1.442695
    %v6237 = vpow.pop %v6236
    %v6238 = vmul.f32 %v6209, 1.442695
    %v6239 = vpow.pop %v6238
    %v6240 = vmul.f32 %v6210, 1.442695
    %v6241 = vpow.pop %v6240
    %v6242 = vmul.f32 %v6211, 1.442695
    %v6243 = vpow.pop %v6242
    %v6244 = vmul.f32 %v6212, 1.442695
    %v6245 = vpow.pop %v6244
    %v6246 = vmul.f32 %v6213, 1.442695
    %v6247 = vpow.pop %v6246
    %v6248 = vmul.f32 %v6214, 1.442695
    %v6249 = vpow.pop %v6248
    %v6250 = vmul.f32 %v6215, 1.442695
    %v6251 = vpow.pop %v6250
    %v6252 = vmul.f32 %v6216, 1.442695
    %v6253 = vpow.pop %v6252
    %v6254 = vmul.f32 %v6217, 1.442695
    %v6255 = vpow.pop %v6254
    %v6256 = vmul.f32 %v6218, 1.442695
    %v6257 = vpow.pop %v6256
    %v6258 = vmul.f32 %v6219, 1.442695
    %v6259 = vpow.pop %v6258
    %v6260 = vmul.f32 %v6220, 1.442695
    %v6261 = vpow.pop %v6260
    %v6262 = vmul.f32 %v6221, 1.442695
    %v6263 = vpow.pop %v6262
    %v6264 = vmul.f32 %v6222, 1.442695
    %v6265 = vpow.pop %v6264
    %v6266 = vmul.f32 %v6223, 1.442695
    %v6267 = vpow.pop %v6266
    %v6268 = vmul.f32 %v6224, 1.442695
    %v6269 = vpow.pop %v6268
    %v6270 = vmul.f32 %v6225, 1.442695
    %v6271 = vpow.pop %v6270
    %v6272 = vmul.f32 %v6226, 1.442695
    %v6273 = vpow.pop %v6272
    %v6274 = vmul.f32 %v6227, 1.442695
    %v6275 = vpow.pop %v6274
    %v6276 = vadd.f32 %v6229, 1.0
    %v6277 = vadd.f32 %v6231, 1.0
    %v6278 = vadd.f32 %v6233, 1.0
    %v6279 = vadd.f32 %v6235, 1.0
    %v6280 = vadd.f32 %v6237, 1.0
    %v6281 = vadd.f32 %v6239, 1.0
    %v6282 = vadd.f32 %v6241, 1.0
    %v6283 = vadd.f32 %v6243, 1.0
    %v6284 = vadd.f32 %v6245, 1.0
    %v6285 = vadd.f32 %v6247, 1.0
    %v6286 = vadd.f32 %v6249, 1.0
    %v6287 = vadd.f32 %v6251, 1.0
    %v6288 = vadd.f32 %v6253, 1.0
    %v6289 = vadd.f32 %v6255, 1.0
    %v6290 = vadd.f32 %v6257, 1.0
    %v6291 = vadd.f32 %v6259, 1.0
    %v6292 = vadd.f32 %v6261, 1.0
    %v6293 = vadd.f32 %v6263, 1.0
    %v6294 = vadd.f32 %v6265, 1.0
    %v6295 = vadd.f32 %v6267, 1.0
    %v6296 = vadd.f32 %v6269, 1.0
    %v6297 = vadd.f32 %v6271, 1.0
    %v6298 = vadd.f32 %v6273, 1.0
    %v6299 = vadd.f32 %v6275, 1.0
    %v6300 = vrcp.pop %v6276
    %v6301 = vmul.f32 %v6276, %v6300
    %v6302 = vsub.f32 1.0, %v6301
    %v6303 = vmul.f32 %v6300, %v6302
    %v6304 = vadd.f32 %v6300, %v6303
    %vm6305 = vweird.f32 %v6276
    %vm6306 = vweird.f32 %v6300
    %vm6307 = vmor %vm6305, %vm6306
    %v6308 = vsel %vm6307, %v6300, %v6304
    %v6309 = vand.u32 2147483647, %v6276
    %vm6310 = vcmp.eq.f32.partialorder %v6309, 8.507059e+37
    %v6311 = vand.u32 %v6276, 2147483648
    %v6312 = vor.u32 1.1754944e-38, %v6311
    %v6313 = vsel %vm6310, %v6312, %v6308
    %v6314 = vmul.f32 1.0, %v6313
    %v6315 = vrcp.pop %v6277
    %v6316 = vmul.f32 %v6277, %v6315
    %v6317 = vsub.f32 1.0, %v6316
    %v6318 = vmul.f32 %v6315, %v6317
    %v6319 = vadd.f32 %v6315, %v6318
    %vm6320 = vweird.f32 %v6277
    %vm6321 = vweird.f32 %v6315
    %vm6322 = vmor %vm6320, %vm6321
    %v6323 = vsel %vm6322, %v6315, %v6319
    %v6324 = vand.u32 2147483647, %v6277
    %vm6325 = vcmp.eq.f32.partialorder %v6324, 8.507059e+37
    %v6326 = vand.u32 %v6277, 2147483648
    %v6327 = vor.u32 1.1754944e-38, %v6326
    %v6328 = vsel %vm6325, %v6327, %v6323
    %v6329 = vmul.f32 1.0, %v6328
    %v6330 = vrcp.pop %v6278
    %v6331 = vmul.f32 %v6278, %v6330
    %v6332 = vsub.f32 1.0, %v6331
    %v6333 = vmul.f32 %v6330, %v6332
    %v6334 = vadd.f32 %v6330, %v6333
    %vm6335 = vweird.f32 %v6278
    %vm6336 = vweird.f32 %v6330
    %vm6337 = vmor %vm6335, %vm6336
    %v6338 = vsel %vm6337, %v6330, %v6334
    %v6339 = vand.u32 2147483647, %v6278
    %vm6340 = vcmp.eq.f32.partialorder %v6339, 8.507059e+37
    %v6341 = vand.u32 %v6278, 2147483648
    %v6342 = vor.u32 1.1754944e-38, %v6341
    %v6343 = vsel %vm6340, %v6342, %v6338
    %v6344 = vmul.f32 1.0, %v6343
    %v6345 = vrcp.pop %v6279
    %v6346 = vmul.f32 %v6279, %v6345
    %v6347 = vsub.f32 1.0, %v6346
    %v6348 = vmul.f32 %v6345, %v6347
    %v6349 = vadd.f32 %v6345, %v6348
    %vm6350 = vweird.f32 %v6279
    %vm6351 = vweird.f32 %v6345
    %vm6352 = vmor %vm6350, %vm6351
    %v6353 = vsel %vm6352, %v6345, %v6349
    %v6354 = vand.u32 2147483647, %v6279
    %vm6355 = vcmp.eq.f32.partialorder %v6354, 8.507059e+37
    %v6356 = vand.u32 %v6279, 2147483648
    %v6357 = vor.u32 1.1754944e-38, %v6356
    %v6358 = vsel %vm6355, %v6357, %v6353
    %v6359 = vmul.f32 1.0, %v6358
    %v6360 = vrcp.pop %v6280
    %v6361 = vmul.f32 %v6280, %v6360
    %v6362 = vsub.f32 1.0, %v6361
    %v6363 = vmul.f32 %v6360, %v6362
    %v6364 = vadd.f32 %v6360, %v6363
    %vm6365 = vweird.f32 %v6280
    %vm6366 = vweird.f32 %v6360
    %vm6367 = vmor %vm6365, %vm6366
    %v6368 = vsel %vm6367, %v6360, %v6364
    %v6369 = vand.u32 2147483647, %v6280
    %vm6370 = vcmp.eq.f32.partialorder %v6369, 8.507059e+37
    %v6371 = vand.u32 %v6280, 2147483648
    %v6372 = vor.u32 1.1754944e-38, %v6371
    %v6373 = vsel %vm6370, %v6372, %v6368
    %v6374 = vmul.f32 1.0, %v6373
    %v6375 = vrcp.pop %v6281
    %v6376 = vmul.f32 %v6281, %v6375
    %v6377 = vsub.f32 1.0, %v6376
    %v6378 = vmul.f32 %v6375, %v6377
    %v6379 = vadd.f32 %v6375, %v6378
    %vm6380 = vweird.f32 %v6281
    %vm6381 = vweird.f32 %v6375
    %vm6382 = vmor %vm6380, %vm6381
    %v6383 = vsel %vm6382, %v6375, %v6379
    %v6384 = vand.u32 2147483647, %v6281
    %vm6385 = vcmp.eq.f32.partialorder %v6384, 8.507059e+37
    %v6386 = vand.u32 %v6281, 2147483648
    %v6387 = vor.u32 1.1754944e-38, %v6386
    %v6388 = vsel %vm6385, %v6387, %v6383
    %v6389 = vmul.f32 1.0, %v6388
    %v6390 = vrcp.pop %v6282
    %v6391 = vmul.f32 %v6282, %v6390
    %v6392 = vsub.f32 1.0, %v6391
    %v6393 = vmul.f32 %v6390, %v6392
    %v6394 = vadd.f32 %v6390, %v6393
    %vm6395 = vweird.f32 %v6282
    %vm6396 = vweird.f32 %v6390
    %vm6397 = vmor %vm6395, %vm6396
    %v6398 = vsel %vm6397, %v6390, %v6394
    %v6399 = vand.u32 2147483647, %v6282
    %vm6400 = vcmp.eq.f32.partialorder %v6399, 8.507059e+37
    %v6401 = vand.u32 %v6282, 2147483648
    %v6402 = vor.u32 1.1754944e-38, %v6401
    %v6403 = vsel %vm6400, %v6402, %v6398
    %v6404 = vmul.f32 1.0, %v6403
    %v6405 = vrcp.pop %v6283
    %v6406 = vmul.f32 %v6283, %v6405
    %v6407 = vsub.f32 1.0, %v6406
    %v6408 = vmul.f32 %v6405, %v6407
    %v6409 = vadd.f32 %v6405, %v6408
    %vm6410 = vweird.f32 %v6283
    %vm6411 = vweird.f32 %v6405
    %vm6412 = vmor %vm6410, %vm6411
    %v6413 = vsel %vm6412, %v6405, %v6409
    %v6414 = vand.u32 2147483647, %v6283
    %vm6415 = vcmp.eq.f32.partialorder %v6414, 8.507059e+37
    %v6416 = vand.u32 %v6283, 2147483648
    %v6417 = vor.u32 1.1754944e-38, %v6416
    %v6418 = vsel %vm6415, %v6417, %v6413
    %v6419 = vmul.f32 1.0, %v6418
    %v6420 = vrcp.pop %v6284
    %v6421 = vmul.f32 %v6284, %v6420
    %v6422 = vsub.f32 1.0, %v6421
    %v6423 = vmul.f32 %v6420, %v6422
    %v6424 = vadd.f32 %v6420, %v6423
    %vm6425 = vweird.f32 %v6284
    %vm6426 = vweird.f32 %v6420
    %vm6427 = vmor %vm6425, %vm6426
    %v6428 = vsel %vm6427, %v6420, %v6424
    %v6429 = vand.u32 2147483647, %v6284
    %vm6430 = vcmp.eq.f32.partialorder %v6429, 8.507059e+37
    %v6431 = vand.u32 %v6284, 2147483648
    %v6432 = vor.u32 1.1754944e-38, %v6431
    %v6433 = vsel %vm6430, %v6432, %v6428
    %v6434 = vmul.f32 1.0, %v6433
    %v6435 = vrcp.pop %v6285
    %v6436 = vmul.f32 %v6285, %v6435
    %v6437 = vsub.f32 1.0, %v6436
    %v6438 = vmul.f32 %v6435, %v6437
    %v6439 = vadd.f32 %v6435, %v6438
    %vm6440 = vweird.f32 %v6285
    %vm6441 = vweird.f32 %v6435
    %vm6442 = vmor %vm6440, %vm6441
    %v6443 = vsel %vm6442, %v6435, %v6439
    %v6444 = vand.u32 2147483647, %v6285
    %vm6445 = vcmp.eq.f32.partialorder %v6444, 8.507059e+37
    %v6446 = vand.u32 %v6285, 2147483648
    %v6447 = vor.u32 1.1754944e-38, %v6446
    %v6448 = vsel %vm6445, %v6447, %v6443
    %v6449 = vmul.f32 1.0, %v6448
    %v6450 = vrcp.pop %v6286
    %v6451 = vmul.f32 %v6286, %v6450
    %v6452 = vsub.f32 1.0, %v6451
    %v6453 = vmul.f32 %v6450, %v6452
    %v6454 = vadd.f32 %v6450, %v6453
    %vm6455 = vweird.f32 %v6286
    %vm6456 = vweird.f32 %v6450
    %vm6457 = vmor %vm6455, %vm6456
    %v6458 = vsel %vm6457, %v6450, %v6454
    %v6459 = vand.u32 2147483647, %v6286
    %vm6460 = vcmp.eq.f32.partialorder %v6459, 8.507059e+37
    %v6461 = vand.u32 %v6286, 2147483648
    %v6462 = vor.u32 1.1754944e-38, %v6461
    %v6463 = vsel %vm6460, %v6462, %v6458
    %v6464 = vmul.f32 1.0, %v6463
    %v6465 = vrcp.pop %v6287
    %v6466 = vmul.f32 %v6287, %v6465
    %v6467 = vsub.f32 1.0, %v6466
    %v6468 = vmul.f32 %v6465, %v6467
    %v6469 = vadd.f32 %v6465, %v6468
    %vm6470 = vweird.f32 %v6287
    %vm6471 = vweird.f32 %v6465
    %vm6472 = vmor %vm6470, %vm6471
    %v6473 = vsel %vm6472, %v6465, %v6469
    %v6474 = vand.u32 2147483647, %v6287
    %vm6475 = vcmp.eq.f32.partialorder %v6474, 8.507059e+37
    %v6476 = vand.u32 %v6287, 2147483648
    %v6477 = vor.u32 1.1754944e-38, %v6476
    %v6478 = vsel %vm6475, %v6477, %v6473
    %v6479 = vmul.f32 1.0, %v6478
    %v6480 = vrcp.pop %v6288
    %v6481 = vmul.f32 %v6288, %v6480
    %v6482 = vsub.f32 1.0, %v6481
    %v6483 = vmul.f32 %v6480, %v6482
    %v6484 = vadd.f32 %v6480, %v6483
    %vm6485 = vweird.f32 %v6288
    %vm6486 = vweird.f32 %v6480
    %vm6487 = vmor %vm6485, %vm6486
    %v6488 = vsel %vm6487, %v6480, %v6484
    %v6489 = vand.u32 2147483647, %v6288
    %vm6490 = vcmp.eq.f32.partialorder %v6489, 8.507059e+37
    %v6491 = vand.u32 %v6288, 2147483648
    %v6492 = vor.u32 1.1754944e-38, %v6491
    %v6493 = vsel %vm6490, %v6492, %v6488
    %v6494 = vmul.f32 1.0, %v6493
    %v6495 = vrcp.pop %v6289
    %v6496 = vmul.f32 %v6289, %v6495
    %v6497 = vsub.f32 1.0, %v6496
    %v6498 = vmul.f32 %v6495, %v6497
    %v6499 = vadd.f32 %v6495, %v6498
    %vm6500 = vweird.f32 %v6289
    %vm6501 = vweird.f32 %v6495
    %vm6502 = vmor %vm6500, %vm6501
    %v6503 = vsel %vm6502, %v6495, %v6499
    %v6504 = vand.u32 2147483647, %v6289
    %vm6505 = vcmp.eq.f32.partialorder %v6504, 8.507059e+37
    %v6506 = vand.u32 %v6289, 2147483648
    %v6507 = vor.u32 1.1754944e-38, %v6506
    %v6508 = vsel %vm6505, %v6507, %v6503
    %v6509 = vmul.f32 1.0, %v6508
    %v6510 = vrcp.pop %v6290
    %v6511 = vmul.f32 %v6290, %v6510
    %v6512 = vsub.f32 1.0, %v6511
    %v6513 = vmul.f32 %v6510, %v6512
    %v6514 = vadd.f32 %v6510, %v6513
    %vm6515 = vweird.f32 %v6290
    %vm6516 = vweird.f32 %v6510
    %vm6517 = vmor %vm6515, %vm6516
    %v6518 = vsel %vm6517, %v6510, %v6514
    %v6519 = vand.u32 2147483647, %v6290
    %vm6520 = vcmp.eq.f32.partialorder %v6519, 8.507059e+37
    %v6521 = vand.u32 %v6290, 2147483648
    %v6522 = vor.u32 1.1754944e-38, %v6521
    %v6523 = vsel %vm6520, %v6522, %v6518
    %v6524 = vmul.f32 1.0, %v6523
    %v6525 = vrcp.pop %v6291
    %v6526 = vmul.f32 %v6291, %v6525
    %v6527 = vsub.f32 1.0, %v6526
    %v6528 = vmul.f32 %v6525, %v6527
    %v6529 = vadd.f32 %v6525, %v6528
    %vm6530 = vweird.f32 %v6291
    %vm6531 = vweird.f32 %v6525
    %vm6532 = vmor %vm6530, %vm6531
    %v6533 = vsel %vm6532, %v6525, %v6529
    %v6534 = vand.u32 2147483647, %v6291
    %vm6535 = vcmp.eq.f32.partialorder %v6534, 8.507059e+37
    %v6536 = vand.u32 %v6291, 2147483648
    %v6537 = vor.u32 1.1754944e-38, %v6536
    %v6538 = vsel %vm6535, %v6537, %v6533
    %v6539 = vmul.f32 1.0, %v6538
    %v6540 = vrcp.pop %v6292
    %v6541 = vmul.f32 %v6292, %v6540
    %v6542 = vsub.f32 1.0, %v6541
    %v6543 = vmul.f32 %v6540, %v6542
    %v6544 = vadd.f32 %v6540, %v6543
    %vm6545 = vweird.f32 %v6292
    %vm6546 = vweird.f32 %v6540
    %vm6547 = vmor %vm6545, %vm6546
    %v6548 = vsel %vm6547, %v6540, %v6544
    %v6549 = vand.u32 2147483647, %v6292
    %vm6550 = vcmp.eq.f32.partialorder %v6549, 8.507059e+37
    %v6551 = vand.u32 %v6292, 2147483648
    %v6552 = vor.u32 1.1754944e-38, %v6551
    %v6553 = vsel %vm6550, %v6552, %v6548
    %v6554 = vmul.f32 1.0, %v6553
    %v6555 = vrcp.pop %v6293
    %v6556 = vmul.f32 %v6293, %v6555
    %v6557 = vsub.f32 1.0, %v6556
    %v6558 = vmul.f32 %v6555, %v6557
    %v6559 = vadd.f32 %v6555, %v6558
    %vm6560 = vweird.f32 %v6293
    %vm6561 = vweird.f32 %v6555
    %vm6562 = vmor %vm6560, %vm6561
    %v6563 = vsel %vm6562, %v6555, %v6559
    %v6564 = vand.u32 2147483647, %v6293
    %vm6565 = vcmp.eq.f32.partialorder %v6564, 8.507059e+37
    %v6566 = vand.u32 %v6293, 2147483648
    %v6567 = vor.u32 1.1754944e-38, %v6566
    %v6568 = vsel %vm6565, %v6567, %v6563
    %v6569 = vmul.f32 1.0, %v6568
    %v6570 = vrcp.pop %v6294
    %v6571 = vmul.f32 %v6294, %v6570
    %v6572 = vsub.f32 1.0, %v6571
    %v6573 = vmul.f32 %v6570, %v6572
    %v6574 = vadd.f32 %v6570, %v6573
    %vm6575 = vweird.f32 %v6294
    %vm6576 = vweird.f32 %v6570
    %vm6577 = vmor %vm6575, %vm6576
    %v6578 = vsel %vm6577, %v6570, %v6574
    %v6579 = vand.u32 2147483647, %v6294
    %vm6580 = vcmp.eq.f32.partialorder %v6579, 8.507059e+37
    %v6581 = vand.u32 %v6294, 2147483648
    %v6582 = vor.u32 1.1754944e-38, %v6581
    %v6583 = vsel %vm6580, %v6582, %v6578
    %v6584 = vmul.f32 1.0, %v6583
    %v6585 = vrcp.pop %v6295
    %v6586 = vmul.f32 %v6295, %v6585
    %v6587 = vsub.f32 1.0, %v6586
    %v6588 = vmul.f32 %v6585, %v6587
    %v6589 = vadd.f32 %v6585, %v6588
    %vm6590 = vweird.f32 %v6295
    %vm6591 = vweird.f32 %v6585
    %vm6592 = vmor %vm6590, %vm6591
    %v6593 = vsel %vm6592, %v6585, %v6589
    %v6594 = vand.u32 2147483647, %v6295
    %vm6595 = vcmp.eq.f32.partialorder %v6594, 8.507059e+37
    %v6596 = vand.u32 %v6295, 2147483648
    %v6597 = vor.u32 1.1754944e-38, %v6596
    %v6598 = vsel %vm6595, %v6597, %v6593
    %v6599 = vmul.f32 1.0, %v6598
    %v6600 = vrcp.pop %v6296
    %v6601 = vmul.f32 %v6296, %v6600
    %v6602 = vsub.f32 1.0, %v6601
    %v6603 = vmul.f32 %v6600, %v6602
    %v6604 = vadd.f32 %v6600, %v6603
    %vm6605 = vweird.f32 %v6296
    %vm6606 = vweird.f32 %v6600
    %vm6607 = vmor %vm6605, %vm6606
    %v6608 = vsel %vm6607, %v6600, %v6604
    %v6609 = vand.u32 2147483647, %v6296
    %vm6610 = vcmp.eq.f32.partialorder %v6609, 8.507059e+37
    %v6611 = vand.u32 %v6296, 2147483648
    %v6612 = vor.u32 1.1754944e-38, %v6611
    %v6613 = vsel %vm6610, %v6612, %v6608
    %v6614 = vmul.f32 1.0, %v6613
    %v6615 = vrcp.pop %v6297
    %v6616 = vmul.f32 %v6297, %v6615
    %v6617 = vsub.f32 1.0, %v6616
    %v6618 = vmul.f32 %v6615, %v6617
    %v6619 = vadd.f32 %v6615, %v6618
    %vm6620 = vweird.f32 %v6297
    %vm6621 = vweird.f32 %v6615
    %vm6622 = vmor %vm6620, %vm6621
    %v6623 = vsel %vm6622, %v6615, %v6619
    %v6624 = vand.u32 2147483647, %v6297
    %vm6625 = vcmp.eq.f32.partialorder %v6624, 8.507059e+37
    %v6626 = vand.u32 %v6297, 2147483648
    %v6627 = vor.u32 1.1754944e-38, %v6626
    %v6628 = vsel %vm6625, %v6627, %v6623
    %v6629 = vmul.f32 1.0, %v6628
    %v6630 = vrcp.pop %v6298
    %v6631 = vmul.f32 %v6298, %v6630
    %v6632 = vsub.f32 1.0, %v6631
    %v6633 = vmul.f32 %v6630, %v6632
    %v6634 = vadd.f32 %v6630, %v6633
    %vm6635 = vweird.f32 %v6298
    %vm6636 = vweird.f32 %v6630
    %vm6637 = vmor %vm6635, %vm6636
    %v6638 = vsel %vm6637, %v6630, %v6634
    %v6639 = vand.u32 2147483647, %v6298
    %vm6640 = vcmp.eq.f32.partialorder %v6639, 8.507059e+37
    %v6641 = vand.u32 %v6298, 2147483648
    %v6642 = vor.u32 1.1754944e-38, %v6641
    %v6643 = vsel %vm6640, %v6642, %v6638
    %v6644 = vmul.f32 1.0, %v6643
    %v6645 = vrcp.pop %v6299
    %v6646 = vmul.f32 %v6299, %v6645
    %v6647 = vsub.f32 1.0, %v6646
    %v6648 = vmul.f32 %v6645, %v6647
    %v6649 = vadd.f32 %v6645, %v6648
    %vm6650 = vweird.f32 %v6299
    %vm6651 = vweird.f32 %v6645
    %vm6652 = vmor %vm6650, %vm6651
    %v6653 = vsel %vm6652, %v6645, %v6649
    %v6654 = vand.u32 2147483647, %v6299
    %vm6655 = vcmp.eq.f32.partialorder %v6654, 8.507059e+37
    %v6656 = vand.u32 %v6299, 2147483648
    %v6657 = vor.u32 1.1754944e-38, %v6656
    %v6658 = vsel %vm6655, %v6657, %v6653
    %v6659 = vmul.f32 1.0, %v6658
    %v6660 = vtanh.pop %v6178
    %v6661 = vtanh.pop %v6179
    %v6662 = vtanh.pop %v6186
    %v6663 = vtanh.pop %v6187
    %v6664 = vtanh.pop %v6194
    %v6665 = vtanh.pop %v6195
    %v6666 = vtanh.pop %v6202
    %v6667 = vtanh.pop %v6203
    %v6668 = vmul.f32 %v6344, %v5805
    %v6669 = vmul.f32 %v6359, %v5806
    %v6670 = vmul.f32 %v6434, %v5807
    %v6671 = vmul.f32 %v6449, %v5808
    %v6672 = vmul.f32 %v6524, %v5809
    %v6673 = vmul.f32 %v6539, %v5810
    %v6674 = vmul.f32 %v6614, %v5811
    %v6675 = vmul.f32 %v6629, %v5812
    %v6676 = vmul.f32 %v6314, %v6660
    %v6677 = vmul.f32 %v6329, %v6661
    %v6678 = vmul.f32 %v6404, %v6662
    %v6679 = vmul.f32 %v6419, %v6663
    %v6680 = vmul.f32 %v6494, %v6664
    %v6681 = vmul.f32 %v6509, %v6665
    %v6682 = vmul.f32 %v6584, %v6666
    %v6683 = vmul.f32 %v6599, %v6667
    %v6684 = vadd.f32 %v6668, %v6676
    %v6685 = vadd.f32 %v6669, %v6677
    %v6686 = vadd.f32 %v6670, %v6678
    %v6687 = vadd.f32 %v6671, %v6679
    %v6688 = vadd.f32 %v6672, %v6680
    %v6689 = vadd.f32 %v6673, %v6681
    %v6690 = vadd.f32 %v6674, %v6682
    %v6691 = vadd.f32 %v6675, %v6683
    %v6692 = vtanh.pop %v6684
    %v6693 = vtanh.pop %v6685
    %v6694 = vtanh.pop %v6686
    %v6695 = vtanh.pop %v6687
    %v6696 = vtanh.pop %v6688
    %v6697 = vtanh.pop %v6689
    %v6698 = vtanh.pop %v6690
    %v6699 = vtanh.pop %v6691
    %v6700 = vmul.f32 %v6374, %v6692
    %v6701 = vmul.f32 %v6389, %v6693
    %v6702 = vmul.f32 %v6464, %v6694
    %v6703 = vmul.f32 %v6479, %v6695
    %v6704 = vmul.f32 %v6554, %v6696
    %v6705 = vmul.f32 %v6569, %v6697
    %v6706 = vmul.f32 %v6644, %v6698
    %v6707 = vmul.f32 %v6659, %v6699
    %s6708 = smul.u32 16, 8
    %s6709 = smul.addr %s6708, 8
    %s6710 = scalar_lea.vmem [#allocation2], %s6709
    %v6711 = vld [vmem:[%s6710] sm:$0xff]
    %v6712 = vld [vmem:[%s6710 + $0x8] sm:$0xff]
    %v6713 = vld [vmem:[%s6710 + $0x10] sm:$0xff]
    %v6714 = vld [vmem:[%s6710 + $0x18] sm:$0xff]
    %v6715 = vld [vmem:[%s6710 + $0x20] sm:$0xff]
    %v6716 = vld [vmem:[%s6710 + $0x28] sm:$0xff]
    %v6717 = vld [vmem:[%s6710 + $0x30] sm:$0xff]
    %v6718 = vld [vmem:[%s6710 + $0x38] sm:$0xff]
    %v6719 = vld [vmem:[%s6710 + $0x40] sm:$0xff]
    %v6720 = vld [vmem:[%s6710 + $0x48] sm:$0xff]
    %v6721 = vld [vmem:[%s6710 + $0x50] sm:$0xff]
    %v6722 = vld [vmem:[%s6710 + $0x58] sm:$0xff]
    %v6723 = vld [vmem:[%s6710 + $0x60] sm:$0xff]
    %v6724 = vld [vmem:[%s6710 + $0x68] sm:$0xff]
    %v6725 = vld [vmem:[%s6710 + $0x70] sm:$0xff]
    %v6726 = vld [vmem:[%s6710 + $0x78] sm:$0xff]
    %v6727 = vld [vmem:[%s6710 + $0x80] sm:$0xff]
    %v6728 = vld [vmem:[%s6710 + $0x88] sm:$0xff]
    %v6729 = vld [vmem:[%s6710 + $0x90] sm:$0xff]
    %v6730 = vld [vmem:[%s6710 + $0x98] sm:$0xff]
    %v6731 = vld [vmem:[%s6710 + $0xa0] sm:$0xff]
    %v6732 = vld [vmem:[%s6710 + $0xa8] sm:$0xff]
    %v6733 = vld [vmem:[%s6710 + $0xb0] sm:$0xff]
    %v6734 = vld [vmem:[%s6710 + $0xb8] sm:$0xff]
    %v6735 = vld [vmem:[%s6710 + $0xc0] sm:$0xff]
    %v6736 = vld [vmem:[%s6710 + $0xc8] sm:$0xff]
    %v6737 = vld [vmem:[%s6710 + $0xd0] sm:$0xff]
    %v6738 = vld [vmem:[%s6710 + $0xd8] sm:$0xff]
    %v6739 = vld [vmem:[%s6710 + $0xe0] sm:$0xff]
    %v6740 = vld [vmem:[%s6710 + $0xe8] sm:$0xff]
    %v6741 = vld [vmem:[%s6710 + $0xf0] sm:$0xff]
    %v6742 = vld [vmem:[%s6710 + $0xf8] sm:$0xff]
    %v6743 = vpack.c.bf16 %v6702, %v6700
    %v6744 = vpack.c.bf16 %v6703, %v6701
    %v6745 = vpack.c.bf16 %v6706, %v6704
    %v6746 = vpack.c.bf16 %v6707, %v6705
    %6747 = vmatpush.bf16.msra.mxu0 %v3031
    %6748 = vmatpush.bf16.msra.mxu0 %v3023
    %6749 = vmatpush.bf16.msra.mxu0 %v3015
    %6750 = vmatpush.bf16.msra.mxu0 %v3007
    %6751 = vmatpush.bf16.msra.mxu0 %v2999
    %6752 = vmatpush.bf16.msra.mxu0 %v2991
    %6753 = vmatpush.bf16.msra.mxu0 %v2983
    %6754 = vmatpush.bf16.msra.mxu0 %v2975
    %6755 = vmatmul.bf16.gmra.mxu0 %v6743
    %v6756 = vpop.f32.mrf.mxu0
    %v6757 = vadd.f32 0.0, %v6756
    %v6758 = vpop.f32.mrf.mxu0
    %v6759 = vadd.f32 0.0, %v6758
    %6760 = vmatmul.bf16.gmra.mxu0 %v6745
    %v6761 = vpop.f32.mrf.mxu0
    %v6762 = vadd.f32 0.0, %v6761
    %v6763 = vpop.f32.mrf.mxu0
    %v6764 = vadd.f32 0.0, %v6763
    %6765 = vdwg.mxu0
    %6766 = vmatpush.bf16.msra.mxu0 %v3095
    %6767 = vmatpush.bf16.msra.mxu0 %v3087
    %6768 = vmatpush.bf16.msra.mxu0 %v3079
    %6769 = vmatpush.bf16.msra.mxu0 %v3071
    %6770 = vmatpush.bf16.msra.mxu0 %v3063
    %6771 = vmatpush.bf16.msra.mxu0 %v3055
    %6772 = vmatpush.bf16.msra.mxu0 %v3047
    %6773 = vmatpush.bf16.msra.mxu0 %v3039
    %6774 = vmatmul.bf16.gmra.mxu0 %v6744
    %v6775 = vpop.f32.mrf.mxu0
    %v6776 = vadd.f32 %v6757, %v6775
    %v6777 = vpop.f32.mrf.mxu0
    %v6778 = vadd.f32 %v6759, %v6777
    %6779 = vmatmul.bf16.gmra.mxu0 %v6746
    %v6780 = vpop.f32.mrf.mxu0
    %v6781 = vadd.f32 %v6762, %v6780
    %v6782 = vpop.f32.mrf.mxu0
    %v6783 = vadd.f32 %v6764, %v6782
    %6784 = vdwg.mxu0
    %6785 = vmatpush.bf16.msra.mxu0 %v3032
    %6786 = vmatpush.bf16.msra.mxu0 %v3024
    %6787 = vmatpush.bf16.msra.mxu0 %v3016
    %6788 = vmatpush.bf16.msra.mxu0 %v3008
    %6789 = vmatpush.bf16.msra.mxu0 %v3000
    %6790 = vmatpush.bf16.msra.mxu0 %v2992
    %6791 = vmatpush.bf16.msra.mxu0 %v2984
    %6792 = vmatpush.bf16.msra.mxu0 %v2976
    %6793 = vmatmul.bf16.gmra.mxu0 %v6743
    %v6794 = vpop.f32.mrf.mxu0
    %v6795 = vadd.f32 0.0, %v6794
    %v6796 = vpop.f32.mrf.mxu0
    %v6797 = vadd.f32 0.0, %v6796
    %6798 = vmatmul.bf16.gmra.mxu0 %v6745
    %v6799 = vpop.f32.mrf.mxu0
    %v6800 = vadd.f32 0.0, %v6799
    %v6801 = vpop.f32.mrf.mxu0
    %v6802 = vadd.f32 0.0, %v6801
    %6803 = vdwg.mxu0
    %6804 = vmatpush.bf16.msra.mxu0 %v3096
    %6805 = vmatpush.bf16.msra.mxu0 %v3088
    %6806 = vmatpush.bf16.msra.mxu0 %v3080
    %6807 = vmatpush.bf16.msra.mxu0 %v3072
    %6808 = vmatpush.bf16.msra.mxu0 %v3064
    %6809 = vmatpush.bf16.msra.mxu0 %v3056
    %6810 = vmatpush.bf16.msra.mxu0 %v3048
    %6811 = vmatpush.bf16.msra.mxu0 %v3040
    %6812 = vmatmul.bf16.gmra.mxu0 %v6744
    %v6813 = vpop.f32.mrf.mxu0
    %v6814 = vadd.f32 %v6795, %v6813
    %v6815 = vpop.f32.mrf.mxu0
    %v6816 = vadd.f32 %v6797, %v6815
    %6817 = vmatmul.bf16.gmra.mxu0 %v6746
    %v6818 = vpop.f32.mrf.mxu0
    %v6819 = vadd.f32 %v6800, %v6818
    %v6820 = vpop.f32.mrf.mxu0
    %v6821 = vadd.f32 %v6802, %v6820
    %6822 = vdwg.mxu0
    %6823 = vmatpush.bf16.msra.mxu0 %v3033
    %6824 = vmatpush.bf16.msra.mxu0 %v3025
    %6825 = vmatpush.bf16.msra.mxu0 %v3017
    %6826 = vmatpush.bf16.msra.mxu0 %v3009
    %6827 = vmatpush.bf16.msra.mxu0 %v3001
    %6828 = vmatpush.bf16.msra.mxu0 %v2993
    %6829 = vmatpush.bf16.msra.mxu0 %v2985
    %6830 = vmatpush.bf16.msra.mxu0 %v2977
    %6831 = vmatmul.bf16.gmra.mxu0 %v6743
    %v6832 = vpop.f32.mrf.mxu0
    %v6833 = vadd.f32 0.0, %v6832
    %v6834 = vpop.f32.mrf.mxu0
    %v6835 = vadd.f32 0.0, %v6834
    %6836 = vmatmul.bf16.gmra.mxu0 %v6745
    %v6837 = vpop.f32.mrf.mxu0
    %v6838 = vadd.f32 0.0, %v6837
    %v6839 = vpop.f32.mrf.mxu0
    %v6840 = vadd.f32 0.0, %v6839
    %6841 = vdwg.mxu0
    %6842 = vmatpush.bf16.msra.mxu0 %v3097
    %6843 = vmatpush.bf16.msra.mxu0 %v3089
    %6844 = vmatpush.bf16.msra.mxu0 %v3081
    %6845 = vmatpush.bf16.msra.mxu0 %v3073
    %6846 = vmatpush.bf16.msra.mxu0 %v3065
    %6847 = vmatpush.bf16.msra.mxu0 %v3057
    %6848 = vmatpush.bf16.msra.mxu0 %v3049
    %6849 = vmatpush.bf16.msra.mxu0 %v3041
    %6850 = vmatmul.bf16.gmra.mxu0 %v6744
    %v6851 = vpop.f32.mrf.mxu0
    %v6852 = vadd.f32 %v6833, %v6851
    %v6853 = vpop.f32.mrf.mxu0
    %v6854 = vadd.f32 %v6835, %v6853
    %6855 = vmatmul.bf16.gmra.mxu0 %v6746
    %v6856 = vpop.f32.mrf.mxu0
    %v6857 = vadd.f32 %v6838, %v6856
    %v6858 = vpop.f32.mrf.mxu0
    %v6859 = vadd.f32 %v6840, %v6858
    %6860 = vdwg.mxu0
    %6861 = vmatpush.bf16.msra.mxu0 %v3034
    %6862 = vmatpush.bf16.msra.mxu0 %v3026
    %6863 = vmatpush.bf16.msra.mxu0 %v3018
    %6864 = vmatpush.bf16.msra.mxu0 %v3010
    %6865 = vmatpush.bf16.msra.mxu0 %v3002
    %6866 = vmatpush.bf16.msra.mxu0 %v2994
    %6867 = vmatpush.bf16.msra.mxu0 %v2986
    %6868 = vmatpush.bf16.msra.mxu0 %v2978
    %6869 = vmatmul.bf16.gmra.mxu0 %v6743
    %v6870 = vpop.f32.mrf.mxu0
    %v6871 = vadd.f32 0.0, %v6870
    %v6872 = vpop.f32.mrf.mxu0
    %v6873 = vadd.f32 0.0, %v6872
    %6874 = vmatmul.bf16.gmra.mxu0 %v6745
    %v6875 = vpop.f32.mrf.mxu0
    %v6876 = vadd.f32 0.0, %v6875
    %v6877 = vpop.f32.mrf.mxu0
    %v6878 = vadd.f32 0.0, %v6877
    %6879 = vdwg.mxu0
    %6880 = vmatpush.bf16.msra.mxu0 %v3098
    %6881 = vmatpush.bf16.msra.mxu0 %v3090
    %6882 = vmatpush.bf16.msra.mxu0 %v3082
    %6883 = vmatpush.bf16.msra.mxu0 %v3074
    %6884 = vmatpush.bf16.msra.mxu0 %v3066
    %6885 = vmatpush.bf16.msra.mxu0 %v3058
    %6886 = vmatpush.bf16.msra.mxu0 %v3050
    %6887 = vmatpush.bf16.msra.mxu0 %v3042
    %6888 = vmatmul.bf16.gmra.mxu0 %v6744
    %v6889 = vpop.f32.mrf.mxu0
    %v6890 = vadd.f32 %v6871, %v6889
    %v6891 = vpop.f32.mrf.mxu0
    %v6892 = vadd.f32 %v6873, %v6891
    %6893 = vmatmul.bf16.gmra.mxu0 %v6746
    %v6894 = vpop.f32.mrf.mxu0
    %v6895 = vadd.f32 %v6876, %v6894
    %v6896 = vpop.f32.mrf.mxu0
    %v6897 = vadd.f32 %v6878, %v6896
    %6898 = vdwg.mxu0
    %6899 = vmatpush.bf16.msra.mxu0 %v3035
    %6900 = vmatpush.bf16.msra.mxu0 %v3027
    %6901 = vmatpush.bf16.msra.mxu0 %v3019
    %6902 = vmatpush.bf16.msra.mxu0 %v3011
    %6903 = vmatpush.bf16.msra.mxu0 %v3003
    %6904 = vmatpush.bf16.msra.mxu0 %v2995
    %6905 = vmatpush.bf16.msra.mxu0 %v2987
    %6906 = vmatpush.bf16.msra.mxu0 %v2979
    %6907 = vmatmul.bf16.gmra.mxu0 %v6743
    %v6908 = vpop.f32.mrf.mxu0
    %v6909 = vadd.f32 0.0, %v6908
    %v6910 = vpop.f32.mrf.mxu0
    %v6911 = vadd.f32 0.0, %v6910
    %6912 = vmatmul.bf16.gmra.mxu0 %v6745
    %v6913 = vpop.f32.mrf.mxu0
    %v6914 = vadd.f32 0.0, %v6913
    %v6915 = vpop.f32.mrf.mxu0
    %v6916 = vadd.f32 0.0, %v6915
    %6917 = vdwg.mxu0
    %6918 = vmatpush.bf16.msra.mxu0 %v3099
    %6919 = vmatpush.bf16.msra.mxu0 %v3091
    %6920 = vmatpush.bf16.msra.mxu0 %v3083
    %6921 = vmatpush.bf16.msra.mxu0 %v3075
    %6922 = vmatpush.bf16.msra.mxu0 %v3067
    %6923 = vmatpush.bf16.msra.mxu0 %v3059
    %6924 = vmatpush.bf16.msra.mxu0 %v3051
    %6925 = vmatpush.bf16.msra.mxu0 %v3043
    %6926 = vmatmul.bf16.gmra.mxu0 %v6744
    %v6927 = vpop.f32.mrf.mxu0
    %v6928 = vadd.f32 %v6909, %v6927
    %v6929 = vpop.f32.mrf.mxu0
    %v6930 = vadd.f32 %v6911, %v6929
    %6931 = vmatmul.bf16.gmra.mxu0 %v6746
    %v6932 = vpop.f32.mrf.mxu0
    %v6933 = vadd.f32 %v6914, %v6932
    %v6934 = vpop.f32.mrf.mxu0
    %v6935 = vadd.f32 %v6916, %v6934
    %6936 = vdwg.mxu0
    %6937 = vmatpush.bf16.msra.mxu0 %v3036
    %6938 = vmatpush.bf16.msra.mxu0 %v3028
    %6939 = vmatpush.bf16.msra.mxu0 %v3020
    %6940 = vmatpush.bf16.msra.mxu0 %v3012
    %6941 = vmatpush.bf16.msra.mxu0 %v3004
    %6942 = vmatpush.bf16.msra.mxu0 %v2996
    %6943 = vmatpush.bf16.msra.mxu0 %v2988
    %6944 = vmatpush.bf16.msra.mxu0 %v2980
    %6945 = vmatmul.bf16.gmra.mxu0 %v6743
    %v6946 = vpop.f32.mrf.mxu0
    %v6947 = vadd.f32 0.0, %v6946
    %v6948 = vpop.f32.mrf.mxu0
    %v6949 = vadd.f32 0.0, %v6948
    %6950 = vmatmul.bf16.gmra.mxu0 %v6745
    %v6951 = vpop.f32.mrf.mxu0
    %v6952 = vadd.f32 0.0, %v6951
    %v6953 = vpop.f32.mrf.mxu0
    %v6954 = vadd.f32 0.0, %v6953
    %6955 = vdwg.mxu0
    %6956 = vmatpush.bf16.msra.mxu0 %v3100
    %6957 = vmatpush.bf16.msra.mxu0 %v3092
    %6958 = vmatpush.bf16.msra.mxu0 %v3084
    %6959 = vmatpush.bf16.msra.mxu0 %v3076
    %6960 = vmatpush.bf16.msra.mxu0 %v3068
    %6961 = vmatpush.bf16.msra.mxu0 %v3060
    %6962 = vmatpush.bf16.msra.mxu0 %v3052
    %6963 = vmatpush.bf16.msra.mxu0 %v3044
    %6964 = vmatmul.bf16.gmra.mxu0 %v6744
    %v6965 = vpop.f32.mrf.mxu0
    %v6966 = vadd.f32 %v6947, %v6965
    %v6967 = vpop.f32.mrf.mxu0
    %v6968 = vadd.f32 %v6949, %v6967
    %6969 = vmatmul.bf16.gmra.mxu0 %v6746
    %v6970 = vpop.f32.mrf.mxu0
    %v6971 = vadd.f32 %v6952, %v6970
    %v6972 = vpop.f32.mrf.mxu0
    %v6973 = vadd.f32 %v6954, %v6972
    %6974 = vdwg.mxu0
    %6975 = vmatpush.bf16.msra.mxu0 %v3037
    %6976 = vmatpush.bf16.msra.mxu0 %v3029
    %6977 = vmatpush.bf16.msra.mxu0 %v3021
    %6978 = vmatpush.bf16.msra.mxu0 %v3013
    %6979 = vmatpush.bf16.msra.mxu0 %v3005
    %6980 = vmatpush.bf16.msra.mxu0 %v2997
    %6981 = vmatpush.bf16.msra.mxu0 %v2989
    %6982 = vmatpush.bf16.msra.mxu0 %v2981
    %6983 = vmatmul.bf16.gmra.mxu0 %v6743
    %v6984 = vpop.f32.mrf.mxu0
    %v6985 = vadd.f32 0.0, %v6984
    %v6986 = vpop.f32.mrf.mxu0
    %v6987 = vadd.f32 0.0, %v6986
    %6988 = vmatmul.bf16.gmra.mxu0 %v6745
    %v6989 = vpop.f32.mrf.mxu0
    %v6990 = vadd.f32 0.0, %v6989
    %v6991 = vpop.f32.mrf.mxu0
    %v6992 = vadd.f32 0.0, %v6991
    %6993 = vdwg.mxu0
    %6994 = vmatpush.bf16.msra.mxu0 %v3101
    %6995 = vmatpush.bf16.msra.mxu0 %v3093
    %6996 = vmatpush.bf16.msra.mxu0 %v3085
    %6997 = vmatpush.bf16.msra.mxu0 %v3077
    %6998 = vmatpush.bf16.msra.mxu0 %v3069
    %6999 = vmatpush.bf16.msra.mxu0 %v3061
    %7000 = vmatpush.bf16.msra.mxu0 %v3053
    %7001 = vmatpush.bf16.msra.mxu0 %v3045
    %7002 = vmatmul.bf16.gmra.mxu0 %v6744
    %v7003 = vpop.f32.mrf.mxu0
    %v7004 = vadd.f32 %v6985, %v7003
    %v7005 = vpop.f32.mrf.mxu0
    %v7006 = vadd.f32 %v6987, %v7005
    %7007 = vmatmul.bf16.gmra.mxu0 %v6746
    %v7008 = vpop.f32.mrf.mxu0
    %v7009 = vadd.f32 %v6990, %v7008
    %v7010 = vpop.f32.mrf.mxu0
    %v7011 = vadd.f32 %v6992, %v7010
    %7012 = vdwg.mxu0
    %7013 = vmatpush.bf16.msra.mxu0 %v3038
    %7014 = vmatpush.bf16.msra.mxu0 %v3030
    %7015 = vmatpush.bf16.msra.mxu0 %v3022
    %7016 = vmatpush.bf16.msra.mxu0 %v3014
    %7017 = vmatpush.bf16.msra.mxu0 %v3006
    %7018 = vmatpush.bf16.msra.mxu0 %v2998
    %7019 = vmatpush.bf16.msra.mxu0 %v2990
    %7020 = vmatpush.bf16.msra.mxu0 %v2982
    %7021 = vmatmul.bf16.gmra.mxu0 %v6743
    %v7022 = vpop.f32.mrf.mxu0
    %v7023 = vadd.f32 0.0, %v7022
    %v7024 = vpop.f32.mrf.mxu0
    %v7025 = vadd.f32 0.0, %v7024
    %7026 = vmatmul.bf16.gmra.mxu0 %v6745
    %v7027 = vpop.f32.mrf.mxu0
    %v7028 = vadd.f32 0.0, %v7027
    %v7029 = vpop.f32.mrf.mxu0
    %v7030 = vadd.f32 0.0, %v7029
    %7031 = vdwg.mxu0
    %7032 = vmatpush.bf16.msra.mxu0 %v3102
    %7033 = vmatpush.bf16.msra.mxu0 %v3094
    %7034 = vmatpush.bf16.msra.mxu0 %v3086
    %7035 = vmatpush.bf16.msra.mxu0 %v3078
    %7036 = vmatpush.bf16.msra.mxu0 %v3070
    %7037 = vmatpush.bf16.msra.mxu0 %v3062
    %7038 = vmatpush.bf16.msra.mxu0 %v3054
    %7039 = vmatpush.bf16.msra.mxu0 %v3046
    %7040 = vmatmul.bf16.gmra.mxu0 %v6744
    %v7041 = vpop.f32.mrf.mxu0
    %v7042 = vadd.f32 %v7023, %v7041
    %v7043 = vpop.f32.mrf.mxu0
    %v7044 = vadd.f32 %v7025, %v7043
    %7045 = vmatmul.bf16.gmra.mxu0 %v6746
    %v7046 = vpop.f32.mrf.mxu0
    %v7047 = vadd.f32 %v7028, %v7046
    %v7048 = vpop.f32.mrf.mxu0
    %v7049 = vadd.f32 %v7030, %v7048
    %7050 = vdwg.mxu0
    %v7051 = vadd.f32 %v6711, %v6776
    %v7052 = vadd.f32 %v6712, %v6814
    %v7053 = vadd.f32 %v6713, %v6852
    %v7054 = vadd.f32 %v6714, %v6890
    %v7055 = vadd.f32 %v6715, %v6928
    %v7056 = vadd.f32 %v6716, %v6966
    %v7057 = vadd.f32 %v6717, %v7004
    %v7058 = vadd.f32 %v6718, %v7042
    %v7059 = vadd.f32 %v6719, %v6778
    %v7060 = vadd.f32 %v6720, %v6816
    %v7061 = vadd.f32 %v6721, %v6854
    %v7062 = vadd.f32 %v6722, %v6892
    %v7063 = vadd.f32 %v6723, %v6930
    %v7064 = vadd.f32 %v6724, %v6968
    %v7065 = vadd.f32 %v6725, %v7006
    %v7066 = vadd.f32 %v6726, %v7044
    %v7067 = vadd.f32 %v6727, %v6781
    %v7068 = vadd.f32 %v6728, %v6819
    %v7069 = vadd.f32 %v6729, %v6857
    %v7070 = vadd.f32 %v6730, %v6895
    %v7071 = vadd.f32 %v6731, %v6933
    %v7072 = vadd.f32 %v6732, %v6971
    %v7073 = vadd.f32 %v6733, %v7009
    %v7074 = vadd.f32 %v6734, %v7047
    %v7075 = vadd.f32 %v6735, %v6783
    %v7076 = vadd.f32 %v6736, %v6821
    %v7077 = vadd.f32 %v6737, %v6859
    %v7078 = vadd.f32 %v6738, %v6897
    %v7079 = vadd.f32 %v6739, %v6935
    %v7080 = vadd.f32 %v6740, %v6973
    %v7081 = vadd.f32 %v6741, %v7011
    %v7082 = vadd.f32 %v6742, %v7049
    %v7083 = vxor.u32 %v7051, 2147483648
    %v7084 = vxor.u32 %v7052, 2147483648
    %v7085 = vxor.u32 %v7053, 2147483648
    %v7086 = vxor.u32 %v7054, 2147483648
    %v7087 = vxor.u32 %v7055, 2147483648
    %v7088 = vxor.u32 %v7056, 2147483648
    %v7089 = vxor.u32 %v7059, 2147483648
    %v7090 = vxor.u32 %v7060, 2147483648
    %v7091 = vxor.u32 %v7061, 2147483648
    %v7092 = vxor.u32 %v7062, 2147483648
    %v7093 = vxor.u32 %v7063, 2147483648
    %v7094 = vxor.u32 %v7064, 2147483648
    %v7095 = vxor.u32 %v7067, 2147483648
    %v7096 = vxor.u32 %v7068, 2147483648
    %v7097 = vxor.u32 %v7069, 2147483648
    %v7098 = vxor.u32 %v7070, 2147483648
    %v7099 = vxor.u32 %v7071, 2147483648
    %v7100 = vxor.u32 %v7072, 2147483648
    %v7101 = vxor.u32 %v7075, 2147483648
    %v7102 = vxor.u32 %v7076, 2147483648
    %v7103 = vxor.u32 %v7077, 2147483648
    %v7104 = vxor.u32 %v7078, 2147483648
    %v7105 = vxor.u32 %v7079, 2147483648
    %v7106 = vxor.u32 %v7080, 2147483648
    %v7107 = vmul.f32 %v7083, 1.442695
    %v7108 = vpow.pop %v7107
    %v7109 = vmul.f32 %v7084, 1.442695
    %v7110 = vpow.pop %v7109
    %v7111 = vmul.f32 %v7085, 1.442695
    %v7112 = vpow.pop %v7111
    %v7113 = vmul.f32 %v7086, 1.442695
    %v7114 = vpow.pop %v7113
    %v7115 = vmul.f32 %v7087, 1.442695
    %v7116 = vpow.pop %v7115
    %v7117 = vmul.f32 %v7088, 1.442695
    %v7118 = vpow.pop %v7117
    %v7119 = vmul.f32 %v7089, 1.442695
    %v7120 = vpow.pop %v7119
    %v7121 = vmul.f32 %v7090, 1.442695
    %v7122 = vpow.pop %v7121
    %v7123 = vmul.f32 %v7091, 1.442695
    %v7124 = vpow.pop %v7123
    %v7125 = vmul.f32 %v7092, 1.442695
    %v7126 = vpow.pop %v7125
    %v7127 = vmul.f32 %v7093, 1.442695
    %v7128 = vpow.pop %v7127
    %v7129 = vmul.f32 %v7094, 1.442695
    %v7130 = vpow.pop %v7129
    %v7131 = vmul.f32 %v7095, 1.442695
    %v7132 = vpow.pop %v7131
    %v7133 = vmul.f32 %v7096, 1.442695
    %v7134 = vpow.pop %v7133
    %v7135 = vmul.f32 %v7097, 1.442695
    %v7136 = vpow.pop %v7135
    %v7137 = vmul.f32 %v7098, 1.442695
    %v7138 = vpow.pop %v7137
    %v7139 = vmul.f32 %v7099, 1.442695
    %v7140 = vpow.pop %v7139
    %v7141 = vmul.f32 %v7100, 1.442695
    %v7142 = vpow.pop %v7141
    %v7143 = vmul.f32 %v7101, 1.442695
    %v7144 = vpow.pop %v7143
    %v7145 = vmul.f32 %v7102, 1.442695
    %v7146 = vpow.pop %v7145
    %v7147 = vmul.f32 %v7103, 1.442695
    %v7148 = vpow.pop %v7147
    %v7149 = vmul.f32 %v7104, 1.442695
    %v7150 = vpow.pop %v7149
    %v7151 = vmul.f32 %v7105, 1.442695
    %v7152 = vpow.pop %v7151
    %v7153 = vmul.f32 %v7106, 1.442695
    %v7154 = vpow.pop %v7153
    %v7155 = vadd.f32 %v7108, 1.0
    %v7156 = vadd.f32 %v7110, 1.0
    %v7157 = vadd.f32 %v7112, 1.0
    %v7158 = vadd.f32 %v7114, 1.0
    %v7159 = vadd.f32 %v7116, 1.0
    %v7160 = vadd.f32 %v7118, 1.0
    %v7161 = vadd.f32 %v7120, 1.0
    %v7162 = vadd.f32 %v7122, 1.0
    %v7163 = vadd.f32 %v7124, 1.0
    %v7164 = vadd.f32 %v7126, 1.0
    %v7165 = vadd.f32 %v7128, 1.0
    %v7166 = vadd.f32 %v7130, 1.0
    %v7167 = vadd.f32 %v7132, 1.0
    %v7168 = vadd.f32 %v7134, 1.0
    %v7169 = vadd.f32 %v7136, 1.0
    %v7170 = vadd.f32 %v7138, 1.0
    %v7171 = vadd.f32 %v7140, 1.0
    %v7172 = vadd.f32 %v7142, 1.0
    %v7173 = vadd.f32 %v7144, 1.0
    %v7174 = vadd.f32 %v7146, 1.0
    %v7175 = vadd.f32 %v7148, 1.0
    %v7176 = vadd.f32 %v7150, 1.0
    %v7177 = vadd.f32 %v7152, 1.0
    %v7178 = vadd.f32 %v7154, 1.0
    %v7179 = vrcp.pop %v7155
    %v7180 = vmul.f32 %v7155, %v7179
    %v7181 = vsub.f32 1.0, %v7180
    %v7182 = vmul.f32 %v7179, %v7181
    %v7183 = vadd.f32 %v7179, %v7182
    %vm7184 = vweird.f32 %v7155
    %vm7185 = vweird.f32 %v7179
    %vm7186 = vmor %vm7184, %vm7185
    %v7187 = vsel %vm7186, %v7179, %v7183
    %v7188 = vand.u32 2147483647, %v7155
    %vm7189 = vcmp.eq.f32.partialorder %v7188, 8.507059e+37
    %v7190 = vand.u32 %v7155, 2147483648
    %v7191 = vor.u32 1.1754944e-38, %v7190
    %v7192 = vsel %vm7189, %v7191, %v7187
    %v7193 = vmul.f32 1.0, %v7192
    %v7194 = vrcp.pop %v7156
    %v7195 = vmul.f32 %v7156, %v7194
    %v7196 = vsub.f32 1.0, %v7195
    %v7197 = vmul.f32 %v7194, %v7196
    %v7198 = vadd.f32 %v7194, %v7197
    %vm7199 = vweird.f32 %v7156
    %vm7200 = vweird.f32 %v7194
    %vm7201 = vmor %vm7199, %vm7200
    %v7202 = vsel %vm7201, %v7194, %v7198
    %v7203 = vand.u32 2147483647, %v7156
    %vm7204 = vcmp.eq.f32.partialorder %v7203, 8.507059e+37
    %v7205 = vand.u32 %v7156, 2147483648
    %v7206 = vor.u32 1.1754944e-38, %v7205
    %v7207 = vsel %vm7204, %v7206, %v7202
    %v7208 = vmul.f32 1.0, %v7207
    %v7209 = vrcp.pop %v7157
    %v7210 = vmul.f32 %v7157, %v7209
    %v7211 = vsub.f32 1.0, %v7210
    %v7212 = vmul.f32 %v7209, %v7211
    %v7213 = vadd.f32 %v7209, %v7212
    %vm7214 = vweird.f32 %v7157
    %vm7215 = vweird.f32 %v7209
    %vm7216 = vmor %vm7214, %vm7215
    %v7217 = vsel %vm7216, %v7209, %v7213
    %v7218 = vand.u32 2147483647, %v7157
    %vm7219 = vcmp.eq.f32.partialorder %v7218, 8.507059e+37
    %v7220 = vand.u32 %v7157, 2147483648
    %v7221 = vor.u32 1.1754944e-38, %v7220
    %v7222 = vsel %vm7219, %v7221, %v7217
    %v7223 = vmul.f32 1.0, %v7222
    %v7224 = vrcp.pop %v7158
    %v7225 = vmul.f32 %v7158, %v7224
    %v7226 = vsub.f32 1.0, %v7225
    %v7227 = vmul.f32 %v7224, %v7226
    %v7228 = vadd.f32 %v7224, %v7227
    %vm7229 = vweird.f32 %v7158
    %vm7230 = vweird.f32 %v7224
    %vm7231 = vmor %vm7229, %vm7230
    %v7232 = vsel %vm7231, %v7224, %v7228
    %v7233 = vand.u32 2147483647, %v7158
    %vm7234 = vcmp.eq.f32.partialorder %v7233, 8.507059e+37
    %v7235 = vand.u32 %v7158, 2147483648
    %v7236 = vor.u32 1.1754944e-38, %v7235
    %v7237 = vsel %vm7234, %v7236, %v7232
    %v7238 = vmul.f32 1.0, %v7237
    %v7239 = vrcp.pop %v7159
    %v7240 = vmul.f32 %v7159, %v7239
    %v7241 = vsub.f32 1.0, %v7240
    %v7242 = vmul.f32 %v7239, %v7241
    %v7243 = vadd.f32 %v7239, %v7242
    %vm7244 = vweird.f32 %v7159
    %vm7245 = vweird.f32 %v7239
    %vm7246 = vmor %vm7244, %vm7245
    %v7247 = vsel %vm7246, %v7239, %v7243
    %v7248 = vand.u32 2147483647, %v7159
    %vm7249 = vcmp.eq.f32.partialorder %v7248, 8.507059e+37
    %v7250 = vand.u32 %v7159, 2147483648
    %v7251 = vor.u32 1.1754944e-38, %v7250
    %v7252 = vsel %vm7249, %v7251, %v7247
    %v7253 = vmul.f32 1.0, %v7252
    %v7254 = vrcp.pop %v7160
    %v7255 = vmul.f32 %v7160, %v7254
    %v7256 = vsub.f32 1.0, %v7255
    %v7257 = vmul.f32 %v7254, %v7256
    %v7258 = vadd.f32 %v7254, %v7257
    %vm7259 = vweird.f32 %v7160
    %vm7260 = vweird.f32 %v7254
    %vm7261 = vmor %vm7259, %vm7260
    %v7262 = vsel %vm7261, %v7254, %v7258
    %v7263 = vand.u32 2147483647, %v7160
    %vm7264 = vcmp.eq.f32.partialorder %v7263, 8.507059e+37
    %v7265 = vand.u32 %v7160, 2147483648
    %v7266 = vor.u32 1.1754944e-38, %v7265
    %v7267 = vsel %vm7264, %v7266, %v7262
    %v7268 = vmul.f32 1.0, %v7267
    %v7269 = vrcp.pop %v7161
    %v7270 = vmul.f32 %v7161, %v7269
    %v7271 = vsub.f32 1.0, %v7270
    %v7272 = vmul.f32 %v7269, %v7271
    %v7273 = vadd.f32 %v7269, %v7272
    %vm7274 = vweird.f32 %v7161
    %vm7275 = vweird.f32 %v7269
    %vm7276 = vmor %vm7274, %vm7275
    %v7277 = vsel %vm7276, %v7269, %v7273
    %v7278 = vand.u32 2147483647, %v7161
    %vm7279 = vcmp.eq.f32.partialorder %v7278, 8.507059e+37
    %v7280 = vand.u32 %v7161, 2147483648
    %v7281 = vor.u32 1.1754944e-38, %v7280
    %v7282 = vsel %vm7279, %v7281, %v7277
    %v7283 = vmul.f32 1.0, %v7282
    %v7284 = vrcp.pop %v7162
    %v7285 = vmul.f32 %v7162, %v7284
    %v7286 = vsub.f32 1.0, %v7285
    %v7287 = vmul.f32 %v7284, %v7286
    %v7288 = vadd.f32 %v7284, %v7287
    %vm7289 = vweird.f32 %v7162
    %vm7290 = vweird.f32 %v7284
    %vm7291 = vmor %vm7289, %vm7290
    %v7292 = vsel %vm7291, %v7284, %v7288
    %v7293 = vand.u32 2147483647, %v7162
    %vm7294 = vcmp.eq.f32.partialorder %v7293, 8.507059e+37
    %v7295 = vand.u32 %v7162, 2147483648
    %v7296 = vor.u32 1.1754944e-38, %v7295
    %v7297 = vsel %vm7294, %v7296, %v7292
    %v7298 = vmul.f32 1.0, %v7297
    %v7299 = vrcp.pop %v7163
    %v7300 = vmul.f32 %v7163, %v7299
    %v7301 = vsub.f32 1.0, %v7300
    %v7302 = vmul.f32 %v7299, %v7301
    %v7303 = vadd.f32 %v7299, %v7302
    %vm7304 = vweird.f32 %v7163
    %vm7305 = vweird.f32 %v7299
    %vm7306 = vmor %vm7304, %vm7305
    %v7307 = vsel %vm7306, %v7299, %v7303
    %v7308 = vand.u32 2147483647, %v7163
    %vm7309 = vcmp.eq.f32.partialorder %v7308, 8.507059e+37
    %v7310 = vand.u32 %v7163, 2147483648
    %v7311 = vor.u32 1.1754944e-38, %v7310
    %v7312 = vsel %vm7309, %v7311, %v7307
    %v7313 = vmul.f32 1.0, %v7312
    %v7314 = vrcp.pop %v7164
    %v7315 = vmul.f32 %v7164, %v7314
    %v7316 = vsub.f32 1.0, %v7315
    %v7317 = vmul.f32 %v7314, %v7316
    %v7318 = vadd.f32 %v7314, %v7317
    %vm7319 = vweird.f32 %v7164
    %vm7320 = vweird.f32 %v7314
    %vm7321 = vmor %vm7319, %vm7320
    %v7322 = vsel %vm7321, %v7314, %v7318
    %v7323 = vand.u32 2147483647, %v7164
    %vm7324 = vcmp.eq.f32.partialorder %v7323, 8.507059e+37
    %v7325 = vand.u32 %v7164, 2147483648
    %v7326 = vor.u32 1.1754944e-38, %v7325
    %v7327 = vsel %vm7324, %v7326, %v7322
    %v7328 = vmul.f32 1.0, %v7327
    %v7329 = vrcp.pop %v7165
    %v7330 = vmul.f32 %v7165, %v7329
    %v7331 = vsub.f32 1.0, %v7330
    %v7332 = vmul.f32 %v7329, %v7331
    %v7333 = vadd.f32 %v7329, %v7332
    %vm7334 = vweird.f32 %v7165
    %vm7335 = vweird.f32 %v7329
    %vm7336 = vmor %vm7334, %vm7335
    %v7337 = vsel %vm7336, %v7329, %v7333
    %v7338 = vand.u32 2147483647, %v7165
    %vm7339 = vcmp.eq.f32.partialorder %v7338, 8.507059e+37
    %v7340 = vand.u32 %v7165, 2147483648
    %v7341 = vor.u32 1.1754944e-38, %v7340
    %v7342 = vsel %vm7339, %v7341, %v7337
    %v7343 = vmul.f32 1.0, %v7342
    %v7344 = vrcp.pop %v7166
    %v7345 = vmul.f32 %v7166, %v7344
    %v7346 = vsub.f32 1.0, %v7345
    %v7347 = vmul.f32 %v7344, %v7346
    %v7348 = vadd.f32 %v7344, %v7347
    %vm7349 = vweird.f32 %v7166
    %vm7350 = vweird.f32 %v7344
    %vm7351 = vmor %vm7349, %vm7350
    %v7352 = vsel %vm7351, %v7344, %v7348
    %v7353 = vand.u32 2147483647, %v7166
    %vm7354 = vcmp.eq.f32.partialorder %v7353, 8.507059e+37
    %v7355 = vand.u32 %v7166, 2147483648
    %v7356 = vor.u32 1.1754944e-38, %v7355
    %v7357 = vsel %vm7354, %v7356, %v7352
    %v7358 = vmul.f32 1.0, %v7357
    %v7359 = vrcp.pop %v7167
    %v7360 = vmul.f32 %v7167, %v7359
    %v7361 = vsub.f32 1.0, %v7360
    %v7362 = vmul.f32 %v7359, %v7361
    %v7363 = vadd.f32 %v7359, %v7362
    %vm7364 = vweird.f32 %v7167
    %vm7365 = vweird.f32 %v7359
    %vm7366 = vmor %vm7364, %vm7365
    %v7367 = vsel %vm7366, %v7359, %v7363
    %v7368 = vand.u32 2147483647, %v7167
    %vm7369 = vcmp.eq.f32.partialorder %v7368, 8.507059e+37
    %v7370 = vand.u32 %v7167, 2147483648
    %v7371 = vor.u32 1.1754944e-38, %v7370
    %v7372 = vsel %vm7369, %v7371, %v7367
    %v7373 = vmul.f32 1.0, %v7372
    %v7374 = vrcp.pop %v7168
    %v7375 = vmul.f32 %v7168, %v7374
    %v7376 = vsub.f32 1.0, %v7375
    %v7377 = vmul.f32 %v7374, %v7376
    %v7378 = vadd.f32 %v7374, %v7377
    %vm7379 = vweird.f32 %v7168
    %vm7380 = vweird.f32 %v7374
    %vm7381 = vmor %vm7379, %vm7380
    %v7382 = vsel %vm7381, %v7374, %v7378
    %v7383 = vand.u32 2147483647, %v7168
    %vm7384 = vcmp.eq.f32.partialorder %v7383, 8.507059e+37
    %v7385 = vand.u32 %v7168, 2147483648
    %v7386 = vor.u32 1.1754944e-38, %v7385
    %v7387 = vsel %vm7384, %v7386, %v7382
    %v7388 = vmul.f32 1.0, %v7387
    %v7389 = vrcp.pop %v7169
    %v7390 = vmul.f32 %v7169, %v7389
    %v7391 = vsub.f32 1.0, %v7390
    %v7392 = vmul.f32 %v7389, %v7391
    %v7393 = vadd.f32 %v7389, %v7392
    %vm7394 = vweird.f32 %v7169
    %vm7395 = vweird.f32 %v7389
    %vm7396 = vmor %vm7394, %vm7395
    %v7397 = vsel %vm7396, %v7389, %v7393
    %v7398 = vand.u32 2147483647, %v7169
    %vm7399 = vcmp.eq.f32.partialorder %v7398, 8.507059e+37
    %v7400 = vand.u32 %v7169, 2147483648
    %v7401 = vor.u32 1.1754944e-38, %v7400
    %v7402 = vsel %vm7399, %v7401, %v7397
    %v7403 = vmul.f32 1.0, %v7402
    %v7404 = vrcp.pop %v7170
    %v7405 = vmul.f32 %v7170, %v7404
    %v7406 = vsub.f32 1.0, %v7405
    %v7407 = vmul.f32 %v7404, %v7406
    %v7408 = vadd.f32 %v7404, %v7407
    %vm7409 = vweird.f32 %v7170
    %vm7410 = vweird.f32 %v7404
    %vm7411 = vmor %vm7409, %vm7410
    %v7412 = vsel %vm7411, %v7404, %v7408
    %v7413 = vand.u32 2147483647, %v7170
    %vm7414 = vcmp.eq.f32.partialorder %v7413, 8.507059e+37
    %v7415 = vand.u32 %v7170, 2147483648
    %v7416 = vor.u32 1.1754944e-38, %v7415
    %v7417 = vsel %vm7414, %v7416, %v7412
    %v7418 = vmul.f32 1.0, %v7417
    %v7419 = vrcp.pop %v7171
    %v7420 = vmul.f32 %v7171, %v7419
    %v7421 = vsub.f32 1.0, %v7420
    %v7422 = vmul.f32 %v7419, %v7421
    %v7423 = vadd.f32 %v7419, %v7422
    %vm7424 = vweird.f32 %v7171
    %vm7425 = vweird.f32 %v7419
    %vm7426 = vmor %vm7424, %vm7425
    %v7427 = vsel %vm7426, %v7419, %v7423
    %v7428 = vand.u32 2147483647, %v7171
    %vm7429 = vcmp.eq.f32.partialorder %v7428, 8.507059e+37
    %v7430 = vand.u32 %v7171, 2147483648
    %v7431 = vor.u32 1.1754944e-38, %v7430
    %v7432 = vsel %vm7429, %v7431, %v7427
    %v7433 = vmul.f32 1.0, %v7432
    %v7434 = vrcp.pop %v7172
    %v7435 = vmul.f32 %v7172, %v7434
    %v7436 = vsub.f32 1.0, %v7435
    %v7437 = vmul.f32 %v7434, %v7436
    %v7438 = vadd.f32 %v7434, %v7437
    %vm7439 = vweird.f32 %v7172
    %vm7440 = vweird.f32 %v7434
    %vm7441 = vmor %vm7439, %vm7440
    %v7442 = vsel %vm7441, %v7434, %v7438
    %v7443 = vand.u32 2147483647, %v7172
    %vm7444 = vcmp.eq.f32.partialorder %v7443, 8.507059e+37
    %v7445 = vand.u32 %v7172, 2147483648
    %v7446 = vor.u32 1.1754944e-38, %v7445
    %v7447 = vsel %vm7444, %v7446, %v7442
    %v7448 = vmul.f32 1.0, %v7447
    %v7449 = vrcp.pop %v7173
    %v7450 = vmul.f32 %v7173, %v7449
    %v7451 = vsub.f32 1.0, %v7450
    %v7452 = vmul.f32 %v7449, %v7451
    %v7453 = vadd.f32 %v7449, %v7452
    %vm7454 = vweird.f32 %v7173
    %vm7455 = vweird.f32 %v7449
    %vm7456 = vmor %vm7454, %vm7455
    %v7457 = vsel %vm7456, %v7449, %v7453
    %v7458 = vand.u32 2147483647, %v7173
    %vm7459 = vcmp.eq.f32.partialorder %v7458, 8.507059e+37
    %v7460 = vand.u32 %v7173, 2147483648
    %v7461 = vor.u32 1.1754944e-38, %v7460
    %v7462 = vsel %vm7459, %v7461, %v7457
    %v7463 = vmul.f32 1.0, %v7462
    %v7464 = vrcp.pop %v7174
    %v7465 = vmul.f32 %v7174, %v7464
    %v7466 = vsub.f32 1.0, %v7465
    %v7467 = vmul.f32 %v7464, %v7466
    %v7468 = vadd.f32 %v7464, %v7467
    %vm7469 = vweird.f32 %v7174
    %vm7470 = vweird.f32 %v7464
    %vm7471 = vmor %vm7469, %vm7470
    %v7472 = vsel %vm7471, %v7464, %v7468
    %v7473 = vand.u32 2147483647, %v7174
    %vm7474 = vcmp.eq.f32.partialorder %v7473, 8.507059e+37
    %v7475 = vand.u32 %v7174, 2147483648
    %v7476 = vor.u32 1.1754944e-38, %v7475
    %v7477 = vsel %vm7474, %v7476, %v7472
    %v7478 = vmul.f32 1.0, %v7477
    %v7479 = vrcp.pop %v7175
    %v7480 = vmul.f32 %v7175, %v7479
    %v7481 = vsub.f32 1.0, %v7480
    %v7482 = vmul.f32 %v7479, %v7481
    %v7483 = vadd.f32 %v7479, %v7482
    %vm7484 = vweird.f32 %v7175
    %vm7485 = vweird.f32 %v7479
    %vm7486 = vmor %vm7484, %vm7485
    %v7487 = vsel %vm7486, %v7479, %v7483
    %v7488 = vand.u32 2147483647, %v7175
    %vm7489 = vcmp.eq.f32.partialorder %v7488, 8.507059e+37
    %v7490 = vand.u32 %v7175, 2147483648
    %v7491 = vor.u32 1.1754944e-38, %v7490
    %v7492 = vsel %vm7489, %v7491, %v7487
    %v7493 = vmul.f32 1.0, %v7492
    %v7494 = vrcp.pop %v7176
    %v7495 = vmul.f32 %v7176, %v7494
    %v7496 = vsub.f32 1.0, %v7495
    %v7497 = vmul.f32 %v7494, %v7496
    %v7498 = vadd.f32 %v7494, %v7497
    %vm7499 = vweird.f32 %v7176
    %vm7500 = vweird.f32 %v7494
    %vm7501 = vmor %vm7499, %vm7500
    %v7502 = vsel %vm7501, %v7494, %v7498
    %v7503 = vand.u32 2147483647, %v7176
    %vm7504 = vcmp.eq.f32.partialorder %v7503, 8.507059e+37
    %v7505 = vand.u32 %v7176, 2147483648
    %v7506 = vor.u32 1.1754944e-38, %v7505
    %v7507 = vsel %vm7504, %v7506, %v7502
    %v7508 = vmul.f32 1.0, %v7507
    %v7509 = vrcp.pop %v7177
    %v7510 = vmul.f32 %v7177, %v7509
    %v7511 = vsub.f32 1.0, %v7510
    %v7512 = vmul.f32 %v7509, %v7511
    %v7513 = vadd.f32 %v7509, %v7512
    %vm7514 = vweird.f32 %v7177
    %vm7515 = vweird.f32 %v7509
    %vm7516 = vmor %vm7514, %vm7515
    %v7517 = vsel %vm7516, %v7509, %v7513
    %v7518 = vand.u32 2147483647, %v7177
    %vm7519 = vcmp.eq.f32.partialorder %v7518, 8.507059e+37
    %v7520 = vand.u32 %v7177, 2147483648
    %v7521 = vor.u32 1.1754944e-38, %v7520
    %v7522 = vsel %vm7519, %v7521, %v7517
    %v7523 = vmul.f32 1.0, %v7522
    %v7524 = vrcp.pop %v7178
    %v7525 = vmul.f32 %v7178, %v7524
    %v7526 = vsub.f32 1.0, %v7525
    %v7527 = vmul.f32 %v7524, %v7526
    %v7528 = vadd.f32 %v7524, %v7527
    %vm7529 = vweird.f32 %v7178
    %vm7530 = vweird.f32 %v7524
    %vm7531 = vmor %vm7529, %vm7530
    %v7532 = vsel %vm7531, %v7524, %v7528
    %v7533 = vand.u32 2147483647, %v7178
    %vm7534 = vcmp.eq.f32.partialorder %v7533, 8.507059e+37
    %v7535 = vand.u32 %v7178, 2147483648
    %v7536 = vor.u32 1.1754944e-38, %v7535
    %v7537 = vsel %vm7534, %v7536, %v7532
    %v7538 = vmul.f32 1.0, %v7537
    %v7539 = vtanh.pop %v7057
    %v7540 = vtanh.pop %v7058
    %v7541 = vtanh.pop %v7065
    %v7542 = vtanh.pop %v7066
    %v7543 = vtanh.pop %v7073
    %v7544 = vtanh.pop %v7074
    %v7545 = vtanh.pop %v7081
    %v7546 = vtanh.pop %v7082
    %v7547 = vmul.f32 %v7223, %v6684
    %v7548 = vmul.f32 %v7238, %v6685
    %v7549 = vmul.f32 %v7313, %v6686
    %v7550 = vmul.f32 %v7328, %v6687
    %v7551 = vmul.f32 %v7403, %v6688
    %v7552 = vmul.f32 %v7418, %v6689
    %v7553 = vmul.f32 %v7493, %v6690
    %v7554 = vmul.f32 %v7508, %v6691
    %v7555 = vmul.f32 %v7193, %v7539
    %v7556 = vmul.f32 %v7208, %v7540
    %v7557 = vmul.f32 %v7283, %v7541
    %v7558 = vmul.f32 %v7298, %v7542
    %v7559 = vmul.f32 %v7373, %v7543
    %v7560 = vmul.f32 %v7388, %v7544
    %v7561 = vmul.f32 %v7463, %v7545
    %v7562 = vmul.f32 %v7478, %v7546
    %v7563 = vadd.f32 %v7547, %v7555
    %v7564 = vadd.f32 %v7548, %v7556
    %v7565 = vadd.f32 %v7549, %v7557
    %v7566 = vadd.f32 %v7550, %v7558
    %v7567 = vadd.f32 %v7551, %v7559
    %v7568 = vadd.f32 %v7552, %v7560
    %v7569 = vadd.f32 %v7553, %v7561
    %v7570 = vadd.f32 %v7554, %v7562
    %v7571 = vtanh.pop %v7563
    %v7572 = vtanh.pop %v7564
    %v7573 = vtanh.pop %v7565
    %v7574 = vtanh.pop %v7566
    %v7575 = vtanh.pop %v7567
    %v7576 = vtanh.pop %v7568
    %v7577 = vtanh.pop %v7569
    %v7578 = vtanh.pop %v7570
    %v7579 = vmul.f32 %v7253, %v7571
    %v7580 = vmul.f32 %v7268, %v7572
    %v7581 = vmul.f32 %v7343, %v7573
    %v7582 = vmul.f32 %v7358, %v7574
    %v7583 = vmul.f32 %v7433, %v7575
    %v7584 = vmul.f32 %v7448, %v7576
    %v7585 = vmul.f32 %v7523, %v7577
    %v7586 = vmul.f32 %v7538, %v7578
    %s7587 = smul.u32 20, 8
    %s7588 = smul.addr %s7587, 8
    %s7589 = scalar_lea.vmem [#allocation2], %s7588
    %v7590 = vld [vmem:[%s7589] sm:$0xff]
    %v7591 = vld [vmem:[%s7589 + $0x8] sm:$0xff]
    %v7592 = vld [vmem:[%s7589 + $0x10] sm:$0xff]
    %v7593 = vld [vmem:[%s7589 + $0x18] sm:$0xff]
    %v7594 = vld [vmem:[%s7589 + $0x20] sm:$0xff]
    %v7595 = vld [vmem:[%s7589 + $0x28] sm:$0xff]
    %v7596 = vld [vmem:[%s7589 + $0x30] sm:$0xff]
    %v7597 = vld [vmem:[%s7589 + $0x38] sm:$0xff]
    %v7598 = vld [vmem:[%s7589 + $0x40] sm:$0xff]
    %v7599 = vld [vmem:[%s7589 + $0x48] sm:$0xff]
    %v7600 = vld [vmem:[%s7589 + $0x50] sm:$0xff]
    %v7601 = vld [vmem:[%s7589 + $0x58] sm:$0xff]
    %v7602 = vld [vmem:[%s7589 + $0x60] sm:$0xff]
    %v7603 = vld [vmem:[%s7589 + $0x68] sm:$0xff]
    %v7604 = vld [vmem:[%s7589 + $0x70] sm:$0xff]
    %v7605 = vld [vmem:[%s7589 + $0x78] sm:$0xff]
    %v7606 = vld [vmem:[%s7589 + $0x80] sm:$0xff]
    %v7607 = vld [vmem:[%s7589 + $0x88] sm:$0xff]
    %v7608 = vld [vmem:[%s7589 + $0x90] sm:$0xff]
    %v7609 = vld [vmem:[%s7589 + $0x98] sm:$0xff]
    %v7610 = vld [vmem:[%s7589 + $0xa0] sm:$0xff]
    %v7611 = vld [vmem:[%s7589 + $0xa8] sm:$0xff]
    %v7612 = vld [vmem:[%s7589 + $0xb0] sm:$0xff]
    %v7613 = vld [vmem:[%s7589 + $0xb8] sm:$0xff]
    %v7614 = vld [vmem:[%s7589 + $0xc0] sm:$0xff]
    %v7615 = vld [vmem:[%s7589 + $0xc8] sm:$0xff]
    %v7616 = vld [vmem:[%s7589 + $0xd0] sm:$0xff]
    %v7617 = vld [vmem:[%s7589 + $0xd8] sm:$0xff]
    %v7618 = vld [vmem:[%s7589 + $0xe0] sm:$0xff]
    %v7619 = vld [vmem:[%s7589 + $0xe8] sm:$0xff]
    %v7620 = vld [vmem:[%s7589 + $0xf0] sm:$0xff]
    %v7621 = vld [vmem:[%s7589 + $0xf8] sm:$0xff]
    %v7622 = vpack.c.bf16 %v7581, %v7579
    %v7623 = vpack.c.bf16 %v7582, %v7580
    %v7624 = vpack.c.bf16 %v7585, %v7583
    %v7625 = vpack.c.bf16 %v7586, %v7584
    %7626 = vmatpush.bf16.msra.mxu0 %v3031
    %7627 = vmatpush.bf16.msra.mxu0 %v3023
    %7628 = vmatpush.bf16.msra.mxu0 %v3015
    %7629 = vmatpush.bf16.msra.mxu0 %v3007
    %7630 = vmatpush.bf16.msra.mxu0 %v2999
    %7631 = vmatpush.bf16.msra.mxu0 %v2991
    %7632 = vmatpush.bf16.msra.mxu0 %v2983
    %7633 = vmatpush.bf16.msra.mxu0 %v2975
    %7634 = vmatmul.bf16.gmra.mxu0 %v7622
    %v7635 = vpop.f32.mrf.mxu0
    %v7636 = vadd.f32 0.0, %v7635
    %v7637 = vpop.f32.mrf.mxu0
    %v7638 = vadd.f32 0.0, %v7637
    %7639 = vmatmul.bf16.gmra.mxu0 %v7624
    %v7640 = vpop.f32.mrf.mxu0
    %v7641 = vadd.f32 0.0, %v7640
    %v7642 = vpop.f32.mrf.mxu0
    %v7643 = vadd.f32 0.0, %v7642
    %7644 = vdwg.mxu0
    %7645 = vmatpush.bf16.msra.mxu0 %v3095
    %7646 = vmatpush.bf16.msra.mxu0 %v3087
    %7647 = vmatpush.bf16.msra.mxu0 %v3079
    %7648 = vmatpush.bf16.msra.mxu0 %v3071
    %7649 = vmatpush.bf16.msra.mxu0 %v3063
    %7650 = vmatpush.bf16.msra.mxu0 %v3055
    %7651 = vmatpush.bf16.msra.mxu0 %v3047
    %7652 = vmatpush.bf16.msra.mxu0 %v3039
    %7653 = vmatmul.bf16.gmra.mxu0 %v7623
    %v7654 = vpop.f32.mrf.mxu0
    %v7655 = vadd.f32 %v7636, %v7654
    %v7656 = vpop.f32.mrf.mxu0
    %v7657 = vadd.f32 %v7638, %v7656
    %7658 = vmatmul.bf16.gmra.mxu0 %v7625
    %v7659 = vpop.f32.mrf.mxu0
    %v7660 = vadd.f32 %v7641, %v7659
    %v7661 = vpop.f32.mrf.mxu0
    %v7662 = vadd.f32 %v7643, %v7661
    %7663 = vdwg.mxu0
    %7664 = vmatpush.bf16.msra.mxu0 %v3032
    %7665 = vmatpush.bf16.msra.mxu0 %v3024
    %7666 = vmatpush.bf16.msra.mxu0 %v3016
    %7667 = vmatpush.bf16.msra.mxu0 %v3008
    %7668 = vmatpush.bf16.msra.mxu0 %v3000
    %7669 = vmatpush.bf16.msra.mxu0 %v2992
    %7670 = vmatpush.bf16.msra.mxu0 %v2984
    %7671 = vmatpush.bf16.msra.mxu0 %v2976
    %7672 = vmatmul.bf16.gmra.mxu0 %v7622
    %v7673 = vpop.f32.mrf.mxu0
    %v7674 = vadd.f32 0.0, %v7673
    %v7675 = vpop.f32.mrf.mxu0
    %v7676 = vadd.f32 0.0, %v7675
    %7677 = vmatmul.bf16.gmra.mxu0 %v7624
    %v7678 = vpop.f32.mrf.mxu0
    %v7679 = vadd.f32 0.0, %v7678
    %v7680 = vpop.f32.mrf.mxu0
    %v7681 = vadd.f32 0.0, %v7680
    %7682 = vdwg.mxu0
    %7683 = vmatpush.bf16.msra.mxu0 %v3096
    %7684 = vmatpush.bf16.msra.mxu0 %v3088
    %7685 = vmatpush.bf16.msra.mxu0 %v3080
    %7686 = vmatpush.bf16.msra.mxu0 %v3072
    %7687 = vmatpush.bf16.msra.mxu0 %v3064
    %7688 = vmatpush.bf16.msra.mxu0 %v3056
    %7689 = vmatpush.bf16.msra.mxu0 %v3048
    %7690 = vmatpush.bf16.msra.mxu0 %v3040
    %7691 = vmatmul.bf16.gmra.mxu0 %v7623
    %v7692 = vpop.f32.mrf.mxu0
    %v7693 = vadd.f32 %v7674, %v7692
    %v7694 = vpop.f32.mrf.mxu0
    %v7695 = vadd.f32 %v7676, %v7694
    %7696 = vmatmul.bf16.gmra.mxu0 %v7625
    %v7697 = vpop.f32.mrf.mxu0
    %v7698 = vadd.f32 %v7679, %v7697
    %v7699 = vpop.f32.mrf.mxu0
    %v7700 = vadd.f32 %v7681, %v7699
    %7701 = vdwg.mxu0
    %7702 = vmatpush.bf16.msra.mxu0 %v3033
    %7703 = vmatpush.bf16.msra.mxu0 %v3025
    %7704 = vmatpush.bf16.msra.mxu0 %v3017
    %7705 = vmatpush.bf16.msra.mxu0 %v3009
    %7706 = vmatpush.bf16.msra.mxu0 %v3001
    %7707 = vmatpush.bf16.msra.mxu0 %v2993
    %7708 = vmatpush.bf16.msra.mxu0 %v2985
    %7709 = vmatpush.bf16.msra.mxu0 %v2977
    %7710 = vmatmul.bf16.gmra.mxu0 %v7622
    %v7711 = vpop.f32.mrf.mxu0
    %v7712 = vadd.f32 0.0, %v7711
    %v7713 = vpop.f32.mrf.mxu0
    %v7714 = vadd.f32 0.0, %v7713
    %7715 = vmatmul.bf16.gmra.mxu0 %v7624
    %v7716 = vpop.f32.mrf.mxu0
    %v7717 = vadd.f32 0.0, %v7716
    %v7718 = vpop.f32.mrf.mxu0
    %v7719 = vadd.f32 0.0, %v7718
    %7720 = vdwg.mxu0
    %7721 = vmatpush.bf16.msra.mxu0 %v3097
    %7722 = vmatpush.bf16.msra.mxu0 %v3089
    %7723 = vmatpush.bf16.msra.mxu0 %v3081
    %7724 = vmatpush.bf16.msra.mxu0 %v3073
    %7725 = vmatpush.bf16.msra.mxu0 %v3065
    %7726 = vmatpush.bf16.msra.mxu0 %v3057
    %7727 = vmatpush.bf16.msra.mxu0 %v3049
    %7728 = vmatpush.bf16.msra.mxu0 %v3041
    %7729 = vmatmul.bf16.gmra.mxu0 %v7623
    %v7730 = vpop.f32.mrf.mxu0
    %v7731 = vadd.f32 %v7712, %v7730
    %v7732 = vpop.f32.mrf.mxu0
    %v7733 = vadd.f32 %v7714, %v7732
    %7734 = vmatmul.bf16.gmra.mxu0 %v7625
    %v7735 = vpop.f32.mrf.mxu0
    %v7736 = vadd.f32 %v7717, %v7735
    %v7737 = vpop.f32.mrf.mxu0
    %v7738 = vadd.f32 %v7719, %v7737
    %7739 = vdwg.mxu0
    %7740 = vmatpush.bf16.msra.mxu0 %v3034
    %7741 = vmatpush.bf16.msra.mxu0 %v3026
    %7742 = vmatpush.bf16.msra.mxu0 %v3018
    %7743 = vmatpush.bf16.msra.mxu0 %v3010
    %7744 = vmatpush.bf16.msra.mxu0 %v3002
    %7745 = vmatpush.bf16.msra.mxu0 %v2994
    %7746 = vmatpush.bf16.msra.mxu0 %v2986
    %7747 = vmatpush.bf16.msra.mxu0 %v2978
    %7748 = vmatmul.bf16.gmra.mxu0 %v7622
    %v7749 = vpop.f32.mrf.mxu0
    %v7750 = vadd.f32 0.0, %v7749
    %v7751 = vpop.f32.mrf.mxu0
    %v7752 = vadd.f32 0.0, %v7751
    %7753 = vmatmul.bf16.gmra.mxu0 %v7624
    %v7754 = vpop.f32.mrf.mxu0
    %v7755 = vadd.f32 0.0, %v7754
    %v7756 = vpop.f32.mrf.mxu0
    %v7757 = vadd.f32 0.0, %v7756
    %7758 = vdwg.mxu0
    %7759 = vmatpush.bf16.msra.mxu0 %v3098
    %7760 = vmatpush.bf16.msra.mxu0 %v3090
    %7761 = vmatpush.bf16.msra.mxu0 %v3082
    %7762 = vmatpush.bf16.msra.mxu0 %v3074
    %7763 = vmatpush.bf16.msra.mxu0 %v3066
    %7764 = vmatpush.bf16.msra.mxu0 %v3058
    %7765 = vmatpush.bf16.msra.mxu0 %v3050
    %7766 = vmatpush.bf16.msra.mxu0 %v3042
    %7767 = vmatmul.bf16.gmra.mxu0 %v7623
    %v7768 = vpop.f32.mrf.mxu0
    %v7769 = vadd.f32 %v7750, %v7768
    %v7770 = vpop.f32.mrf.mxu0
    %v7771 = vadd.f32 %v7752, %v7770
    %7772 = vmatmul.bf16.gmra.mxu0 %v7625
    %v7773 = vpop.f32.mrf.mxu0
    %v7774 = vadd.f32 %v7755, %v7773
    %v7775 = vpop.f32.mrf.mxu0
    %v7776 = vadd.f32 %v7757, %v7775
    %7777 = vdwg.mxu0
    %7778 = vmatpush.bf16.msra.mxu0 %v3035
    %7779 = vmatpush.bf16.msra.mxu0 %v3027
    %7780 = vmatpush.bf16.msra.mxu0 %v3019
    %7781 = vmatpush.bf16.msra.mxu0 %v3011
    %7782 = vmatpush.bf16.msra.mxu0 %v3003
    %7783 = vmatpush.bf16.msra.mxu0 %v2995
    %7784 = vmatpush.bf16.msra.mxu0 %v2987
    %7785 = vmatpush.bf16.msra.mxu0 %v2979
    %7786 = vmatmul.bf16.gmra.mxu0 %v7622
    %v7787 = vpop.f32.mrf.mxu0
    %v7788 = vadd.f32 0.0, %v7787
    %v7789 = vpop.f32.mrf.mxu0
    %v7790 = vadd.f32 0.0, %v7789
    %7791 = vmatmul.bf16.gmra.mxu0 %v7624
    %v7792 = vpop.f32.mrf.mxu0
    %v7793 = vadd.f32 0.0, %v7792
    %v7794 = vpop.f32.mrf.mxu0
    %v7795 = vadd.f32 0.0, %v7794
    %7796 = vdwg.mxu0
    %7797 = vmatpush.bf16.msra.mxu0 %v3099
    %7798 = vmatpush.bf16.msra.mxu0 %v3091
    %7799 = vmatpush.bf16.msra.mxu0 %v3083
    %7800 = vmatpush.bf16.msra.mxu0 %v3075
    %7801 = vmatpush.bf16.msra.mxu0 %v3067
    %7802 = vmatpush.bf16.msra.mxu0 %v3059
    %7803 = vmatpush.bf16.msra.mxu0 %v3051
    %7804 = vmatpush.bf16.msra.mxu0 %v3043
    %7805 = vmatmul.bf16.gmra.mxu0 %v7623
    %v7806 = vpop.f32.mrf.mxu0
    %v7807 = vadd.f32 %v7788, %v7806
    %v7808 = vpop.f32.mrf.mxu0
    %v7809 = vadd.f32 %v7790, %v7808
    %7810 = vmatmul.bf16.gmra.mxu0 %v7625
    %v7811 = vpop.f32.mrf.mxu0
    %v7812 = vadd.f32 %v7793, %v7811
    %v7813 = vpop.f32.mrf.mxu0
    %v7814 = vadd.f32 %v7795, %v7813
    %7815 = vdwg.mxu0
    %7816 = vmatpush.bf16.msra.mxu0 %v3036
    %7817 = vmatpush.bf16.msra.mxu0 %v3028
    %7818 = vmatpush.bf16.msra.mxu0 %v3020
    %7819 = vmatpush.bf16.msra.mxu0 %v3012
    %7820 = vmatpush.bf16.msra.mxu0 %v3004
    %7821 = vmatpush.bf16.msra.mxu0 %v2996
    %7822 = vmatpush.bf16.msra.mxu0 %v2988
    %7823 = vmatpush.bf16.msra.mxu0 %v2980
    %7824 = vmatmul.bf16.gmra.mxu0 %v7622
    %v7825 = vpop.f32.mrf.mxu0
    %v7826 = vadd.f32 0.0, %v7825
    %v7827 = vpop.f32.mrf.mxu0
    %v7828 = vadd.f32 0.0, %v7827
    %7829 = vmatmul.bf16.gmra.mxu0 %v7624
    %v7830 = vpop.f32.mrf.mxu0
    %v7831 = vadd.f32 0.0, %v7830
    %v7832 = vpop.f32.mrf.mxu0
    %v7833 = vadd.f32 0.0, %v7832
    %7834 = vdwg.mxu0
    %7835 = vmatpush.bf16.msra.mxu0 %v3100
    %7836 = vmatpush.bf16.msra.mxu0 %v3092
    %7837 = vmatpush.bf16.msra.mxu0 %v3084
    %7838 = vmatpush.bf16.msra.mxu0 %v3076
    %7839 = vmatpush.bf16.msra.mxu0 %v3068
    %7840 = vmatpush.bf16.msra.mxu0 %v3060
    %7841 = vmatpush.bf16.msra.mxu0 %v3052
    %7842 = vmatpush.bf16.msra.mxu0 %v3044
    %7843 = vmatmul.bf16.gmra.mxu0 %v7623
    %v7844 = vpop.f32.mrf.mxu0
    %v7845 = vadd.f32 %v7826, %v7844
    %v7846 = vpop.f32.mrf.mxu0
    %v7847 = vadd.f32 %v7828, %v7846
    %7848 = vmatmul.bf16.gmra.mxu0 %v7625
    %v7849 = vpop.f32.mrf.mxu0
    %v7850 = vadd.f32 %v7831, %v7849
    %v7851 = vpop.f32.mrf.mxu0
    %v7852 = vadd.f32 %v7833, %v7851
    %7853 = vdwg.mxu0
    %7854 = vmatpush.bf16.msra.mxu0 %v3037
    %7855 = vmatpush.bf16.msra.mxu0 %v3029
    %7856 = vmatpush.bf16.msra.mxu0 %v3021
    %7857 = vmatpush.bf16.msra.mxu0 %v3013
    %7858 = vmatpush.bf16.msra.mxu0 %v3005
    %7859 = vmatpush.bf16.msra.mxu0 %v2997
    %7860 = vmatpush.bf16.msra.mxu0 %v2989
    %7861 = vmatpush.bf16.msra.mxu0 %v2981
    %7862 = vmatmul.bf16.gmra.mxu0 %v7622
    %v7863 = vpop.f32.mrf.mxu0
    %v7864 = vadd.f32 0.0, %v7863
    %v7865 = vpop.f32.mrf.mxu0
    %v7866 = vadd.f32 0.0, %v7865
    %7867 = vmatmul.bf16.gmra.mxu0 %v7624
    %v7868 = vpop.f32.mrf.mxu0
    %v7869 = vadd.f32 0.0, %v7868
    %v7870 = vpop.f32.mrf.mxu0
    %v7871 = vadd.f32 0.0, %v7870
    %7872 = vdwg.mxu0
    %7873 = vmatpush.bf16.msra.mxu0 %v3101
    %7874 = vmatpush.bf16.msra.mxu0 %v3093
    %7875 = vmatpush.bf16.msra.mxu0 %v3085
    %7876 = vmatpush.bf16.msra.mxu0 %v3077
    %7877 = vmatpush.bf16.msra.mxu0 %v3069
    %7878 = vmatpush.bf16.msra.mxu0 %v3061
    %7879 = vmatpush.bf16.msra.mxu0 %v3053
    %7880 = vmatpush.bf16.msra.mxu0 %v3045
    %7881 = vmatmul.bf16.gmra.mxu0 %v7623
    %v7882 = vpop.f32.mrf.mxu0
    %v7883 = vadd.f32 %v7864, %v7882
    %v7884 = vpop.f32.mrf.mxu0
    %v7885 = vadd.f32 %v7866, %v7884
    %7886 = vmatmul.bf16.gmra.mxu0 %v7625
    %v7887 = vpop.f32.mrf.mxu0
    %v7888 = vadd.f32 %v7869, %v7887
    %v7889 = vpop.f32.mrf.mxu0
    %v7890 = vadd.f32 %v7871, %v7889
    %7891 = vdwg.mxu0
    %7892 = vmatpush.bf16.msra.mxu0 %v3038
    %7893 = vmatpush.bf16.msra.mxu0 %v3030
    %7894 = vmatpush.bf16.msra.mxu0 %v3022
    %7895 = vmatpush.bf16.msra.mxu0 %v3014
    %7896 = vmatpush.bf16.msra.mxu0 %v3006
    %7897 = vmatpush.bf16.msra.mxu0 %v2998
    %7898 = vmatpush.bf16.msra.mxu0 %v2990
    %7899 = vmatpush.bf16.msra.mxu0 %v2982
    %7900 = vmatmul.bf16.gmra.mxu0 %v7622
    %v7901 = vpop.f32.mrf.mxu0
    %v7902 = vadd.f32 0.0, %v7901
    %v7903 = vpop.f32.mrf.mxu0
    %v7904 = vadd.f32 0.0, %v7903
    %7905 = vmatmul.bf16.gmra.mxu0 %v7624
    %v7906 = vpop.f32.mrf.mxu0
    %v7907 = vadd.f32 0.0, %v7906
    %v7908 = vpop.f32.mrf.mxu0
    %v7909 = vadd.f32 0.0, %v7908
    %7910 = vdwg.mxu0
    %7911 = vmatpush.bf16.msra.mxu0 %v3102
    %7912 = vmatpush.bf16.msra.mxu0 %v3094
    %7913 = vmatpush.bf16.msra.mxu0 %v3086
    %7914 = vmatpush.bf16.msra.mxu0 %v3078
    %7915 = vmatpush.bf16.msra.mxu0 %v3070
    %7916 = vmatpush.bf16.msra.mxu0 %v3062
    %7917 = vmatpush.bf16.msra.mxu0 %v3054
    %7918 = vmatpush.bf16.msra.mxu0 %v3046
    %7919 = vmatmul.bf16.gmra.mxu0 %v7623
    %v7920 = vpop.f32.mrf.mxu0
    %v7921 = vadd.f32 %v7902, %v7920
    %v7922 = vpop.f32.mrf.mxu0
    %v7923 = vadd.f32 %v7904, %v7922
    %7924 = vmatmul.bf16.gmra.mxu0 %v7625
    %v7925 = vpop.f32.mrf.mxu0
    %v7926 = vadd.f32 %v7907, %v7925
    %v7927 = vpop.f32.mrf.mxu0
    %v7928 = vadd.f32 %v7909, %v7927
    %7929 = vdwg.mxu0
    %v7930 = vadd.f32 %v7590, %v7655
    %v7931 = vadd.f32 %v7591, %v7693
    %v7932 = vadd.f32 %v7592, %v7731
    %v7933 = vadd.f32 %v7593, %v7769
    %v7934 = vadd.f32 %v7594, %v7807
    %v7935 = vadd.f32 %v7595, %v7845
    %v7936 = vadd.f32 %v7596, %v7883
    %v7937 = vadd.f32 %v7597, %v7921
    %v7938 = vadd.f32 %v7598, %v7657
    %v7939 = vadd.f32 %v7599, %v7695
    %v7940 = vadd.f32 %v7600, %v7733
    %v7941 = vadd.f32 %v7601, %v7771
    %v7942 = vadd.f32 %v7602, %v7809
    %v7943 = vadd.f32 %v7603, %v7847
    %v7944 = vadd.f32 %v7604, %v7885
    %v7945 = vadd.f32 %v7605, %v7923
    %v7946 = vadd.f32 %v7606, %v7660
    %v7947 = vadd.f32 %v7607, %v7698
    %v7948 = vadd.f32 %v7608, %v7736
    %v7949 = vadd.f32 %v7609, %v7774
    %v7950 = vadd.f32 %v7610, %v7812
    %v7951 = vadd.f32 %v7611, %v7850
    %v7952 = vadd.f32 %v7612, %v7888
    %v7953 = vadd.f32 %v7613, %v7926
    %v7954 = vadd.f32 %v7614, %v7662
    %v7955 = vadd.f32 %v7615, %v7700
    %v7956 = vadd.f32 %v7616, %v7738
    %v7957 = vadd.f32 %v7617, %v7776
    %v7958 = vadd.f32 %v7618, %v7814
    %v7959 = vadd.f32 %v7619, %v7852
    %v7960 = vadd.f32 %v7620, %v7890
    %v7961 = vadd.f32 %v7621, %v7928
    %v7962 = vxor.u32 %v7930, 2147483648
    %v7963 = vxor.u32 %v7931, 2147483648
    %v7964 = vxor.u32 %v7932, 2147483648
    %v7965 = vxor.u32 %v7933, 2147483648
    %v7966 = vxor.u32 %v7934, 2147483648
    %v7967 = vxor.u32 %v7935, 2147483648
    %v7968 = vxor.u32 %v7938, 2147483648
    %v7969 = vxor.u32 %v7939, 2147483648
    %v7970 = vxor.u32 %v7940, 2147483648
    %v7971 = vxor.u32 %v7941, 2147483648
    %v7972 = vxor.u32 %v7942, 2147483648
    %v7973 = vxor.u32 %v7943, 2147483648
    %v7974 = vxor.u32 %v7946, 2147483648
    %v7975 = vxor.u32 %v7947, 2147483648
    %v7976 = vxor.u32 %v7948, 2147483648
    %v7977 = vxor.u32 %v7949, 2147483648
    %v7978 = vxor.u32 %v7950, 2147483648
    %v7979 = vxor.u32 %v7951, 2147483648
    %v7980 = vxor.u32 %v7954, 2147483648
    %v7981 = vxor.u32 %v7955, 2147483648
    %v7982 = vxor.u32 %v7956, 2147483648
    %v7983 = vxor.u32 %v7957, 2147483648
    %v7984 = vxor.u32 %v7958, 2147483648
    %v7985 = vxor.u32 %v7959, 2147483648
    %v7986 = vmul.f32 %v7962, 1.442695
    %v7987 = vpow.pop %v7986
    %v7988 = vmul.f32 %v7963, 1.442695
    %v7989 = vpow.pop %v7988
    %v7990 = vmul.f32 %v7964, 1.442695
    %v7991 = vpow.pop %v7990
    %v7992 = vmul.f32 %v7965, 1.442695
    %v7993 = vpow.pop %v7992
    %v7994 = vmul.f32 %v7966, 1.442695
    %v7995 = vpow.pop %v7994
    %v7996 = vmul.f32 %v7967, 1.442695
    %v7997 = vpow.pop %v7996
    %v7998 = vmul.f32 %v7968, 1.442695
    %v7999 = vpow.pop %v7998
    %v8000 = vmul.f32 %v7969, 1.442695
    %v8001 = vpow.pop %v8000
    %v8002 = vmul.f32 %v7970, 1.442695
    %v8003 = vpow.pop %v8002
    %v8004 = vmul.f32 %v7971, 1.442695
    %v8005 = vpow.pop %v8004
    %v8006 = vmul.f32 %v7972, 1.442695
    %v8007 = vpow.pop %v8006
    %v8008 = vmul.f32 %v7973, 1.442695
    %v8009 = vpow.pop %v8008
    %v8010 = vmul.f32 %v7974, 1.442695
    %v8011 = vpow.pop %v8010
    %v8012 = vmul.f32 %v7975, 1.442695
    %v8013 = vpow.pop %v8012
    %v8014 = vmul.f32 %v7976, 1.442695
    %v8015 = vpow.pop %v8014
    %v8016 = vmul.f32 %v7977, 1.442695
    %v8017 = vpow.pop %v8016
    %v8018 = vmul.f32 %v7978, 1.442695
    %v8019 = vpow.pop %v8018
    %v8020 = vmul.f32 %v7979, 1.442695
    %v8021 = vpow.pop %v8020
    %v8022 = vmul.f32 %v7980, 1.442695
    %v8023 = vpow.pop %v8022
    %v8024 = vmul.f32 %v7981, 1.442695
    %v8025 = vpow.pop %v8024
    %v8026 = vmul.f32 %v7982, 1.442695
    %v8027 = vpow.pop %v8026
    %v8028 = vmul.f32 %v7983, 1.442695
    %v8029 = vpow.pop %v8028
    %v8030 = vmul.f32 %v7984, 1.442695
    %v8031 = vpow.pop %v8030
    %v8032 = vmul.f32 %v7985, 1.442695
    %v8033 = vpow.pop %v8032
    %v8034 = vadd.f32 %v7987, 1.0
    %v8035 = vadd.f32 %v7989, 1.0
    %v8036 = vadd.f32 %v7991, 1.0
    %v8037 = vadd.f32 %v7993, 1.0
    %v8038 = vadd.f32 %v7995, 1.0
    %v8039 = vadd.f32 %v7997, 1.0
    %v8040 = vadd.f32 %v7999, 1.0
    %v8041 = vadd.f32 %v8001, 1.0
    %v8042 = vadd.f32 %v8003, 1.0
    %v8043 = vadd.f32 %v8005, 1.0
    %v8044 = vadd.f32 %v8007, 1.0
    %v8045 = vadd.f32 %v8009, 1.0
    %v8046 = vadd.f32 %v8011, 1.0
    %v8047 = vadd.f32 %v8013, 1.0
    %v8048 = vadd.f32 %v8015, 1.0
    %v8049 = vadd.f32 %v8017, 1.0
    %v8050 = vadd.f32 %v8019, 1.0
    %v8051 = vadd.f32 %v8021, 1.0
    %v8052 = vadd.f32 %v8023, 1.0
    %v8053 = vadd.f32 %v8025, 1.0
    %v8054 = vadd.f32 %v8027, 1.0
    %v8055 = vadd.f32 %v8029, 1.0
    %v8056 = vadd.f32 %v8031, 1.0
    %v8057 = vadd.f32 %v8033, 1.0
    %v8058 = vrcp.pop %v8034
    %v8059 = vmul.f32 %v8034, %v8058
    %v8060 = vsub.f32 1.0, %v8059
    %v8061 = vmul.f32 %v8058, %v8060
    %v8062 = vadd.f32 %v8058, %v8061
    %vm8063 = vweird.f32 %v8034
    %vm8064 = vweird.f32 %v8058
    %vm8065 = vmor %vm8063, %vm8064
    %v8066 = vsel %vm8065, %v8058, %v8062
    %v8067 = vand.u32 2147483647, %v8034
    %vm8068 = vcmp.eq.f32.partialorder %v8067, 8.507059e+37
    %v8069 = vand.u32 %v8034, 2147483648
    %v8070 = vor.u32 1.1754944e-38, %v8069
    %v8071 = vsel %vm8068, %v8070, %v8066
    %v8072 = vmul.f32 1.0, %v8071
    %v8073 = vrcp.pop %v8035
    %v8074 = vmul.f32 %v8035, %v8073
    %v8075 = vsub.f32 1.0, %v8074
    %v8076 = vmul.f32 %v8073, %v8075
    %v8077 = vadd.f32 %v8073, %v8076
    %vm8078 = vweird.f32 %v8035
    %vm8079 = vweird.f32 %v8073
    %vm8080 = vmor %vm8078, %vm8079
    %v8081 = vsel %vm8080, %v8073, %v8077
    %v8082 = vand.u32 2147483647, %v8035
    %vm8083 = vcmp.eq.f32.partialorder %v8082, 8.507059e+37
    %v8084 = vand.u32 %v8035, 2147483648
    %v8085 = vor.u32 1.1754944e-38, %v8084
    %v8086 = vsel %vm8083, %v8085, %v8081
    %v8087 = vmul.f32 1.0, %v8086
    %v8088 = vrcp.pop %v8036
    %v8089 = vmul.f32 %v8036, %v8088
    %v8090 = vsub.f32 1.0, %v8089
    %v8091 = vmul.f32 %v8088, %v8090
    %v8092 = vadd.f32 %v8088, %v8091
    %vm8093 = vweird.f32 %v8036
    %vm8094 = vweird.f32 %v8088
    %vm8095 = vmor %vm8093, %vm8094
    %v8096 = vsel %vm8095, %v8088, %v8092
    %v8097 = vand.u32 2147483647, %v8036
    %vm8098 = vcmp.eq.f32.partialorder %v8097, 8.507059e+37
    %v8099 = vand.u32 %v8036, 2147483648
    %v8100 = vor.u32 1.1754944e-38, %v8099
    %v8101 = vsel %vm8098, %v8100, %v8096
    %v8102 = vmul.f32 1.0, %v8101
    %v8103 = vrcp.pop %v8037
    %v8104 = vmul.f32 %v8037, %v8103
    %v8105 = vsub.f32 1.0, %v8104
    %v8106 = vmul.f32 %v8103, %v8105
    %v8107 = vadd.f32 %v8103, %v8106
    %vm8108 = vweird.f32 %v8037
    %vm8109 = vweird.f32 %v8103
    %vm8110 = vmor %vm8108, %vm8109
    %v8111 = vsel %vm8110, %v8103, %v8107
    %v8112 = vand.u32 2147483647, %v8037
    %vm8113 = vcmp.eq.f32.partialorder %v8112, 8.507059e+37
    %v8114 = vand.u32 %v8037, 2147483648
    %v8115 = vor.u32 1.1754944e-38, %v8114
    %v8116 = vsel %vm8113, %v8115, %v8111
    %v8117 = vmul.f32 1.0, %v8116
    %v8118 = vrcp.pop %v8038
    %v8119 = vmul.f32 %v8038, %v8118
    %v8120 = vsub.f32 1.0, %v8119
    %v8121 = vmul.f32 %v8118, %v8120
    %v8122 = vadd.f32 %v8118, %v8121
    %vm8123 = vweird.f32 %v8038
    %vm8124 = vweird.f32 %v8118
    %vm8125 = vmor %vm8123, %vm8124
    %v8126 = vsel %vm8125, %v8118, %v8122
    %v8127 = vand.u32 2147483647, %v8038
    %vm8128 = vcmp.eq.f32.partialorder %v8127, 8.507059e+37
    %v8129 = vand.u32 %v8038, 2147483648
    %v8130 = vor.u32 1.1754944e-38, %v8129
    %v8131 = vsel %vm8128, %v8130, %v8126
    %v8132 = vmul.f32 1.0, %v8131
    %v8133 = vrcp.pop %v8039
    %v8134 = vmul.f32 %v8039, %v8133
    %v8135 = vsub.f32 1.0, %v8134
    %v8136 = vmul.f32 %v8133, %v8135
    %v8137 = vadd.f32 %v8133, %v8136
    %vm8138 = vweird.f32 %v8039
    %vm8139 = vweird.f32 %v8133
    %vm8140 = vmor %vm8138, %vm8139
    %v8141 = vsel %vm8140, %v8133, %v8137
    %v8142 = vand.u32 2147483647, %v8039
    %vm8143 = vcmp.eq.f32.partialorder %v8142, 8.507059e+37
    %v8144 = vand.u32 %v8039, 2147483648
    %v8145 = vor.u32 1.1754944e-38, %v8144
    %v8146 = vsel %vm8143, %v8145, %v8141
    %v8147 = vmul.f32 1.0, %v8146
    %v8148 = vrcp.pop %v8040
    %v8149 = vmul.f32 %v8040, %v8148
    %v8150 = vsub.f32 1.0, %v8149
    %v8151 = vmul.f32 %v8148, %v8150
    %v8152 = vadd.f32 %v8148, %v8151
    %vm8153 = vweird.f32 %v8040
    %vm8154 = vweird.f32 %v8148
    %vm8155 = vmor %vm8153, %vm8154
    %v8156 = vsel %vm8155, %v8148, %v8152
    %v8157 = vand.u32 2147483647, %v8040
    %vm8158 = vcmp.eq.f32.partialorder %v8157, 8.507059e+37
    %v8159 = vand.u32 %v8040, 2147483648
    %v8160 = vor.u32 1.1754944e-38, %v8159
    %v8161 = vsel %vm8158, %v8160, %v8156
    %v8162 = vmul.f32 1.0, %v8161
    %v8163 = vrcp.pop %v8041
    %v8164 = vmul.f32 %v8041, %v8163
    %v8165 = vsub.f32 1.0, %v8164
    %v8166 = vmul.f32 %v8163, %v8165
    %v8167 = vadd.f32 %v8163, %v8166
    %vm8168 = vweird.f32 %v8041
    %vm8169 = vweird.f32 %v8163
    %vm8170 = vmor %vm8168, %vm8169
    %v8171 = vsel %vm8170, %v8163, %v8167
    %v8172 = vand.u32 2147483647, %v8041
    %vm8173 = vcmp.eq.f32.partialorder %v8172, 8.507059e+37
    %v8174 = vand.u32 %v8041, 2147483648
    %v8175 = vor.u32 1.1754944e-38, %v8174
    %v8176 = vsel %vm8173, %v8175, %v8171
    %v8177 = vmul.f32 1.0, %v8176
    %v8178 = vrcp.pop %v8042
    %v8179 = vmul.f32 %v8042, %v8178
    %v8180 = vsub.f32 1.0, %v8179
    %v8181 = vmul.f32 %v8178, %v8180
    %v8182 = vadd.f32 %v8178, %v8181
    %vm8183 = vweird.f32 %v8042
    %vm8184 = vweird.f32 %v8178
    %vm8185 = vmor %vm8183, %vm8184
    %v8186 = vsel %vm8185, %v8178, %v8182
    %v8187 = vand.u32 2147483647, %v8042
    %vm8188 = vcmp.eq.f32.partialorder %v8187, 8.507059e+37
    %v8189 = vand.u32 %v8042, 2147483648
    %v8190 = vor.u32 1.1754944e-38, %v8189
    %v8191 = vsel %vm8188, %v8190, %v8186
    %v8192 = vmul.f32 1.0, %v8191
    %v8193 = vrcp.pop %v8043
    %v8194 = vmul.f32 %v8043, %v8193
    %v8195 = vsub.f32 1.0, %v8194
    %v8196 = vmul.f32 %v8193, %v8195
    %v8197 = vadd.f32 %v8193, %v8196
    %vm8198 = vweird.f32 %v8043
    %vm8199 = vweird.f32 %v8193
    %vm8200 = vmor %vm8198, %vm8199
    %v8201 = vsel %vm8200, %v8193, %v8197
    %v8202 = vand.u32 2147483647, %v8043
    %vm8203 = vcmp.eq.f32.partialorder %v8202, 8.507059e+37
    %v8204 = vand.u32 %v8043, 2147483648
    %v8205 = vor.u32 1.1754944e-38, %v8204
    %v8206 = vsel %vm8203, %v8205, %v8201
    %v8207 = vmul.f32 1.0, %v8206
    %v8208 = vrcp.pop %v8044
    %v8209 = vmul.f32 %v8044, %v8208
    %v8210 = vsub.f32 1.0, %v8209
    %v8211 = vmul.f32 %v8208, %v8210
    %v8212 = vadd.f32 %v8208, %v8211
    %vm8213 = vweird.f32 %v8044
    %vm8214 = vweird.f32 %v8208
    %vm8215 = vmor %vm8213, %vm8214
    %v8216 = vsel %vm8215, %v8208, %v8212
    %v8217 = vand.u32 2147483647, %v8044
    %vm8218 = vcmp.eq.f32.partialorder %v8217, 8.507059e+37
    %v8219 = vand.u32 %v8044, 2147483648
    %v8220 = vor.u32 1.1754944e-38, %v8219
    %v8221 = vsel %vm8218, %v8220, %v8216
    %v8222 = vmul.f32 1.0, %v8221
    %v8223 = vrcp.pop %v8045
    %v8224 = vmul.f32 %v8045, %v8223
    %v8225 = vsub.f32 1.0, %v8224
    %v8226 = vmul.f32 %v8223, %v8225
    %v8227 = vadd.f32 %v8223, %v8226
    %vm8228 = vweird.f32 %v8045
    %vm8229 = vweird.f32 %v8223
    %vm8230 = vmor %vm8228, %vm8229
    %v8231 = vsel %vm8230, %v8223, %v8227
    %v8232 = vand.u32 2147483647, %v8045
    %vm8233 = vcmp.eq.f32.partialorder %v8232, 8.507059e+37
    %v8234 = vand.u32 %v8045, 2147483648
    %v8235 = vor.u32 1.1754944e-38, %v8234
    %v8236 = vsel %vm8233, %v8235, %v8231
    %v8237 = vmul.f32 1.0, %v8236
    %v8238 = vrcp.pop %v8046
    %v8239 = vmul.f32 %v8046, %v8238
    %v8240 = vsub.f32 1.0, %v8239
    %v8241 = vmul.f32 %v8238, %v8240
    %v8242 = vadd.f32 %v8238, %v8241
    %vm8243 = vweird.f32 %v8046
    %vm8244 = vweird.f32 %v8238
    %vm8245 = vmor %vm8243, %vm8244
    %v8246 = vsel %vm8245, %v8238, %v8242
    %v8247 = vand.u32 2147483647, %v8046
    %vm8248 = vcmp.eq.f32.partialorder %v8247, 8.507059e+37
    %v8249 = vand.u32 %v8046, 2147483648
    %v8250 = vor.u32 1.1754944e-38, %v8249
    %v8251 = vsel %vm8248, %v8250, %v8246
    %v8252 = vmul.f32 1.0, %v8251
    %v8253 = vrcp.pop %v8047
    %v8254 = vmul.f32 %v8047, %v8253
    %v8255 = vsub.f32 1.0, %v8254
    %v8256 = vmul.f32 %v8253, %v8255
    %v8257 = vadd.f32 %v8253, %v8256
    %vm8258 = vweird.f32 %v8047
    %vm8259 = vweird.f32 %v8253
    %vm8260 = vmor %vm8258, %vm8259
    %v8261 = vsel %vm8260, %v8253, %v8257
    %v8262 = vand.u32 2147483647, %v8047
    %vm8263 = vcmp.eq.f32.partialorder %v8262, 8.507059e+37
    %v8264 = vand.u32 %v8047, 2147483648
    %v8265 = vor.u32 1.1754944e-38, %v8264
    %v8266 = vsel %vm8263, %v8265, %v8261
    %v8267 = vmul.f32 1.0, %v8266
    %v8268 = vrcp.pop %v8048
    %v8269 = vmul.f32 %v8048, %v8268
    %v8270 = vsub.f32 1.0, %v8269
    %v8271 = vmul.f32 %v8268, %v8270
    %v8272 = vadd.f32 %v8268, %v8271
    %vm8273 = vweird.f32 %v8048
    %vm8274 = vweird.f32 %v8268
    %vm8275 = vmor %vm8273, %vm8274
    %v8276 = vsel %vm8275, %v8268, %v8272
    %v8277 = vand.u32 2147483647, %v8048
    %vm8278 = vcmp.eq.f32.partialorder %v8277, 8.507059e+37
    %v8279 = vand.u32 %v8048, 2147483648
    %v8280 = vor.u32 1.1754944e-38, %v8279
    %v8281 = vsel %vm8278, %v8280, %v8276
    %v8282 = vmul.f32 1.0, %v8281
    %v8283 = vrcp.pop %v8049
    %v8284 = vmul.f32 %v8049, %v8283
    %v8285 = vsub.f32 1.0, %v8284
    %v8286 = vmul.f32 %v8283, %v8285
    %v8287 = vadd.f32 %v8283, %v8286
    %vm8288 = vweird.f32 %v8049
    %vm8289 = vweird.f32 %v8283
    %vm8290 = vmor %vm8288, %vm8289
    %v8291 = vsel %vm8290, %v8283, %v8287
    %v8292 = vand.u32 2147483647, %v8049
    %vm8293 = vcmp.eq.f32.partialorder %v8292, 8.507059e+37
    %v8294 = vand.u32 %v8049, 2147483648
    %v8295 = vor.u32 1.1754944e-38, %v8294
    %v8296 = vsel %vm8293, %v8295, %v8291
    %v8297 = vmul.f32 1.0, %v8296
    %v8298 = vrcp.pop %v8050
    %v8299 = vmul.f32 %v8050, %v8298
    %v8300 = vsub.f32 1.0, %v8299
    %v8301 = vmul.f32 %v8298, %v8300
    %v8302 = vadd.f32 %v8298, %v8301
    %vm8303 = vweird.f32 %v8050
    %vm8304 = vweird.f32 %v8298
    %vm8305 = vmor %vm8303, %vm8304
    %v8306 = vsel %vm8305, %v8298, %v8302
    %v8307 = vand.u32 2147483647, %v8050
    %vm8308 = vcmp.eq.f32.partialorder %v8307, 8.507059e+37
    %v8309 = vand.u32 %v8050, 2147483648
    %v8310 = vor.u32 1.1754944e-38, %v8309
    %v8311 = vsel %vm8308, %v8310, %v8306
    %v8312 = vmul.f32 1.0, %v8311
    %v8313 = vrcp.pop %v8051
    %v8314 = vmul.f32 %v8051, %v8313
    %v8315 = vsub.f32 1.0, %v8314
    %v8316 = vmul.f32 %v8313, %v8315
    %v8317 = vadd.f32 %v8313, %v8316
    %vm8318 = vweird.f32 %v8051
    %vm8319 = vweird.f32 %v8313
    %vm8320 = vmor %vm8318, %vm8319
    %v8321 = vsel %vm8320, %v8313, %v8317
    %v8322 = vand.u32 2147483647, %v8051
    %vm8323 = vcmp.eq.f32.partialorder %v8322, 8.507059e+37
    %v8324 = vand.u32 %v8051, 2147483648
    %v8325 = vor.u32 1.1754944e-38, %v8324
    %v8326 = vsel %vm8323, %v8325, %v8321
    %v8327 = vmul.f32 1.0, %v8326
    %v8328 = vrcp.pop %v8052
    %v8329 = vmul.f32 %v8052, %v8328
    %v8330 = vsub.f32 1.0, %v8329
    %v8331 = vmul.f32 %v8328, %v8330
    %v8332 = vadd.f32 %v8328, %v8331
    %vm8333 = vweird.f32 %v8052
    %vm8334 = vweird.f32 %v8328
    %vm8335 = vmor %vm8333, %vm8334
    %v8336 = vsel %vm8335, %v8328, %v8332
    %v8337 = vand.u32 2147483647, %v8052
    %vm8338 = vcmp.eq.f32.partialorder %v8337, 8.507059e+37
    %v8339 = vand.u32 %v8052, 2147483648
    %v8340 = vor.u32 1.1754944e-38, %v8339
    %v8341 = vsel %vm8338, %v8340, %v8336
    %v8342 = vmul.f32 1.0, %v8341
    %v8343 = vrcp.pop %v8053
    %v8344 = vmul.f32 %v8053, %v8343
    %v8345 = vsub.f32 1.0, %v8344
    %v8346 = vmul.f32 %v8343, %v8345
    %v8347 = vadd.f32 %v8343, %v8346
    %vm8348 = vweird.f32 %v8053
    %vm8349 = vweird.f32 %v8343
    %vm8350 = vmor %vm8348, %vm8349
    %v8351 = vsel %vm8350, %v8343, %v8347
    %v8352 = vand.u32 2147483647, %v8053
    %vm8353 = vcmp.eq.f32.partialorder %v8352, 8.507059e+37
    %v8354 = vand.u32 %v8053, 2147483648
    %v8355 = vor.u32 1.1754944e-38, %v8354
    %v8356 = vsel %vm8353, %v8355, %v8351
    %v8357 = vmul.f32 1.0, %v8356
    %v8358 = vrcp.pop %v8054
    %v8359 = vmul.f32 %v8054, %v8358
    %v8360 = vsub.f32 1.0, %v8359
    %v8361 = vmul.f32 %v8358, %v8360
    %v8362 = vadd.f32 %v8358, %v8361
    %vm8363 = vweird.f32 %v8054
    %vm8364 = vweird.f32 %v8358
    %vm8365 = vmor %vm8363, %vm8364
    %v8366 = vsel %vm8365, %v8358, %v8362
    %v8367 = vand.u32 2147483647, %v8054
    %vm8368 = vcmp.eq.f32.partialorder %v8367, 8.507059e+37
    %v8369 = vand.u32 %v8054, 2147483648
    %v8370 = vor.u32 1.1754944e-38, %v8369
    %v8371 = vsel %vm8368, %v8370, %v8366
    %v8372 = vmul.f32 1.0, %v8371
    %v8373 = vrcp.pop %v8055
    %v8374 = vmul.f32 %v8055, %v8373
    %v8375 = vsub.f32 1.0, %v8374
    %v8376 = vmul.f32 %v8373, %v8375
    %v8377 = vadd.f32 %v8373, %v8376
    %vm8378 = vweird.f32 %v8055
    %vm8379 = vweird.f32 %v8373
    %vm8380 = vmor %vm8378, %vm8379
    %v8381 = vsel %vm8380, %v8373, %v8377
    %v8382 = vand.u32 2147483647, %v8055
    %vm8383 = vcmp.eq.f32.partialorder %v8382, 8.507059e+37
    %v8384 = vand.u32 %v8055, 2147483648
    %v8385 = vor.u32 1.1754944e-38, %v8384
    %v8386 = vsel %vm8383, %v8385, %v8381
    %v8387 = vmul.f32 1.0, %v8386
    %v8388 = vrcp.pop %v8056
    %v8389 = vmul.f32 %v8056, %v8388
    %v8390 = vsub.f32 1.0, %v8389
    %v8391 = vmul.f32 %v8388, %v8390
    %v8392 = vadd.f32 %v8388, %v8391
    %vm8393 = vweird.f32 %v8056
    %vm8394 = vweird.f32 %v8388
    %vm8395 = vmor %vm8393, %vm8394
    %v8396 = vsel %vm8395, %v8388, %v8392
    %v8397 = vand.u32 2147483647, %v8056
    %vm8398 = vcmp.eq.f32.partialorder %v8397, 8.507059e+37
    %v8399 = vand.u32 %v8056, 2147483648
    %v8400 = vor.u32 1.1754944e-38, %v8399
    %v8401 = vsel %vm8398, %v8400, %v8396
    %v8402 = vmul.f32 1.0, %v8401
    %v8403 = vrcp.pop %v8057
    %v8404 = vmul.f32 %v8057, %v8403
    %v8405 = vsub.f32 1.0, %v8404
    %v8406 = vmul.f32 %v8403, %v8405
    %v8407 = vadd.f32 %v8403, %v8406
    %vm8408 = vweird.f32 %v8057
    %vm8409 = vweird.f32 %v8403
    %vm8410 = vmor %vm8408, %vm8409
    %v8411 = vsel %vm8410, %v8403, %v8407
    %v8412 = vand.u32 2147483647, %v8057
    %vm8413 = vcmp.eq.f32.partialorder %v8412, 8.507059e+37
    %v8414 = vand.u32 %v8057, 2147483648
    %v8415 = vor.u32 1.1754944e-38, %v8414
    %v8416 = vsel %vm8413, %v8415, %v8411
    %v8417 = vmul.f32 1.0, %v8416
    %v8418 = vtanh.pop %v7936
    %v8419 = vtanh.pop %v7937
    %v8420 = vtanh.pop %v7944
    %v8421 = vtanh.pop %v7945
    %v8422 = vtanh.pop %v7952
    %v8423 = vtanh.pop %v7953
    %v8424 = vtanh.pop %v7960
    %v8425 = vtanh.pop %v7961
    %v8426 = vmul.f32 %v8102, %v7563
    %v8427 = vmul.f32 %v8117, %v7564
    %v8428 = vmul.f32 %v8192, %v7565
    %v8429 = vmul.f32 %v8207, %v7566
    %v8430 = vmul.f32 %v8282, %v7567
    %v8431 = vmul.f32 %v8297, %v7568
    %v8432 = vmul.f32 %v8372, %v7569
    %v8433 = vmul.f32 %v8387, %v7570
    %v8434 = vmul.f32 %v8072, %v8418
    %v8435 = vmul.f32 %v8087, %v8419
    %v8436 = vmul.f32 %v8162, %v8420
    %v8437 = vmul.f32 %v8177, %v8421
    %v8438 = vmul.f32 %v8252, %v8422
    %v8439 = vmul.f32 %v8267, %v8423
    %v8440 = vmul.f32 %v8342, %v8424
    %v8441 = vmul.f32 %v8357, %v8425
    %v8442 = vadd.f32 %v8426, %v8434
    %v8443 = vadd.f32 %v8427, %v8435
    %v8444 = vadd.f32 %v8428, %v8436
    %v8445 = vadd.f32 %v8429, %v8437
    %v8446 = vadd.f32 %v8430, %v8438
    %v8447 = vadd.f32 %v8431, %v8439
    %v8448 = vadd.f32 %v8432, %v8440
    %v8449 = vadd.f32 %v8433, %v8441
    %v8450 = vtanh.pop %v8442
    %v8451 = vtanh.pop %v8443
    %v8452 = vtanh.pop %v8444
    %v8453 = vtanh.pop %v8445
    %v8454 = vtanh.pop %v8446
    %v8455 = vtanh.pop %v8447
    %v8456 = vtanh.pop %v8448
    %v8457 = vtanh.pop %v8449
    %v8458 = vmul.f32 %v8132, %v8450
    %v8459 = vmul.f32 %v8147, %v8451
    %v8460 = vmul.f32 %v8222, %v8452
    %v8461 = vmul.f32 %v8237, %v8453
    %v8462 = vmul.f32 %v8312, %v8454
    %v8463 = vmul.f32 %v8327, %v8455
    %v8464 = vmul.f32 %v8402, %v8456
    %v8465 = vmul.f32 %v8417, %v8457
    %s8466 = smul.u32 24, 8
    %s8467 = smul.addr %s8466, 8
    %s8468 = scalar_lea.vmem [#allocation2], %s8467
    %v8469 = vld [vmem:[%s8468] sm:$0xff]
    %v8470 = vld [vmem:[%s8468 + $0x8] sm:$0xff]
    %v8471 = vld [vmem:[%s8468 + $0x10] sm:$0xff]
    %v8472 = vld [vmem:[%s8468 + $0x18] sm:$0xff]
    %v8473 = vld [vmem:[%s8468 + $0x20] sm:$0xff]
    %v8474 = vld [vmem:[%s8468 + $0x28] sm:$0xff]
    %v8475 = vld [vmem:[%s8468 + $0x30] sm:$0xff]
    %v8476 = vld [vmem:[%s8468 + $0x38] sm:$0xff]
    %v8477 = vld [vmem:[%s8468 + $0x40] sm:$0xff]
    %v8478 = vld [vmem:[%s8468 + $0x48] sm:$0xff]
    %v8479 = vld [vmem:[%s8468 + $0x50] sm:$0xff]
    %v8480 = vld [vmem:[%s8468 + $0x58] sm:$0xff]
    %v8481 = vld [vmem:[%s8468 + $0x60] sm:$0xff]
    %v8482 = vld [vmem:[%s8468 + $0x68] sm:$0xff]
    %v8483 = vld [vmem:[%s8468 + $0x70] sm:$0xff]
    %v8484 = vld [vmem:[%s8468 + $0x78] sm:$0xff]
    %v8485 = vld [vmem:[%s8468 + $0x80] sm:$0xff]
    %v8486 = vld [vmem:[%s8468 + $0x88] sm:$0xff]
    %v8487 = vld [vmem:[%s8468 + $0x90] sm:$0xff]
    %v8488 = vld [vmem:[%s8468 + $0x98] sm:$0xff]
    %v8489 = vld [vmem:[%s8468 + $0xa0] sm:$0xff]
    %v8490 = vld [vmem:[%s8468 + $0xa8] sm:$0xff]
    %v8491 = vld [vmem:[%s8468 + $0xb0] sm:$0xff]
    %v8492 = vld [vmem:[%s8468 + $0xb8] sm:$0xff]
    %v8493 = vld [vmem:[%s8468 + $0xc0] sm:$0xff]
    %v8494 = vld [vmem:[%s8468 + $0xc8] sm:$0xff]
    %v8495 = vld [vmem:[%s8468 + $0xd0] sm:$0xff]
    %v8496 = vld [vmem:[%s8468 + $0xd8] sm:$0xff]
    %v8497 = vld [vmem:[%s8468 + $0xe0] sm:$0xff]
    %v8498 = vld [vmem:[%s8468 + $0xe8] sm:$0xff]
    %v8499 = vld [vmem:[%s8468 + $0xf0] sm:$0xff]
    %v8500 = vld [vmem:[%s8468 + $0xf8] sm:$0xff]
    %v8501 = vpack.c.bf16 %v8460, %v8458
    %v8502 = vpack.c.bf16 %v8461, %v8459
    %v8503 = vpack.c.bf16 %v8464, %v8462
    %v8504 = vpack.c.bf16 %v8465, %v8463
    %8505 = vmatpush.bf16.msra.mxu0 %v3031
    %8506 = vmatpush.bf16.msra.mxu0 %v3023
    %8507 = vmatpush.bf16.msra.mxu0 %v3015
    %8508 = vmatpush.bf16.msra.mxu0 %v3007
    %8509 = vmatpush.bf16.msra.mxu0 %v2999
    %8510 = vmatpush.bf16.msra.mxu0 %v2991
    %8511 = vmatpush.bf16.msra.mxu0 %v2983
    %8512 = vmatpush.bf16.msra.mxu0 %v2975
    %8513 = vmatmul.bf16.gmra.mxu0 %v8501
    %v8514 = vpop.f32.mrf.mxu0
    %v8515 = vadd.f32 0.0, %v8514
    %v8516 = vpop.f32.mrf.mxu0
    %v8517 = vadd.f32 0.0, %v8516
    %8518 = vmatmul.bf16.gmra.mxu0 %v8503
    %v8519 = vpop.f32.mrf.mxu0
    %v8520 = vadd.f32 0.0, %v8519
    %v8521 = vpop.f32.mrf.mxu0
    %v8522 = vadd.f32 0.0, %v8521
    %8523 = vdwg.mxu0
    %8524 = vmatpush.bf16.msra.mxu0 %v3095
    %8525 = vmatpush.bf16.msra.mxu0 %v3087
    %8526 = vmatpush.bf16.msra.mxu0 %v3079
    %8527 = vmatpush.bf16.msra.mxu0 %v3071
    %8528 = vmatpush.bf16.msra.mxu0 %v3063
    %8529 = vmatpush.bf16.msra.mxu0 %v3055
    %8530 = vmatpush.bf16.msra.mxu0 %v3047
    %8531 = vmatpush.bf16.msra.mxu0 %v3039
    %8532 = vmatmul.bf16.gmra.mxu0 %v8502
    %v8533 = vpop.f32.mrf.mxu0
    %v8534 = vadd.f32 %v8515, %v8533
    %v8535 = vpop.f32.mrf.mxu0
    %v8536 = vadd.f32 %v8517, %v8535
    %8537 = vmatmul.bf16.gmra.mxu0 %v8504
    %v8538 = vpop.f32.mrf.mxu0
    %v8539 = vadd.f32 %v8520, %v8538
    %v8540 = vpop.f32.mrf.mxu0
    %v8541 = vadd.f32 %v8522, %v8540
    %8542 = vdwg.mxu0
    %8543 = vmatpush.bf16.msra.mxu0 %v3032
    %8544 = vmatpush.bf16.msra.mxu0 %v3024
    %8545 = vmatpush.bf16.msra.mxu0 %v3016
    %8546 = vmatpush.bf16.msra.mxu0 %v3008
    %8547 = vmatpush.bf16.msra.mxu0 %v3000
    %8548 = vmatpush.bf16.msra.mxu0 %v2992
    %8549 = vmatpush.bf16.msra.mxu0 %v2984
    %8550 = vmatpush.bf16.msra.mxu0 %v2976
    %8551 = vmatmul.bf16.gmra.mxu0 %v8501
    %v8552 = vpop.f32.mrf.mxu0
    %v8553 = vadd.f32 0.0, %v8552
    %v8554 = vpop.f32.mrf.mxu0
    %v8555 = vadd.f32 0.0, %v8554
    %8556 = vmatmul.bf16.gmra.mxu0 %v8503
    %v8557 = vpop.f32.mrf.mxu0
    %v8558 = vadd.f32 0.0, %v8557
    %v8559 = vpop.f32.mrf.mxu0
    %v8560 = vadd.f32 0.0, %v8559
    %8561 = vdwg.mxu0
    %8562 = vmatpush.bf16.msra.mxu0 %v3096
    %8563 = vmatpush.bf16.msra.mxu0 %v3088
    %8564 = vmatpush.bf16.msra.mxu0 %v3080
    %8565 = vmatpush.bf16.msra.mxu0 %v3072
    %8566 = vmatpush.bf16.msra.mxu0 %v3064
    %8567 = vmatpush.bf16.msra.mxu0 %v3056
    %8568 = vmatpush.bf16.msra.mxu0 %v3048
    %8569 = vmatpush.bf16.msra.mxu0 %v3040
    %8570 = vmatmul.bf16.gmra.mxu0 %v8502
    %v8571 = vpop.f32.mrf.mxu0
    %v8572 = vadd.f32 %v8553, %v8571
    %v8573 = vpop.f32.mrf.mxu0
    %v8574 = vadd.f32 %v8555, %v8573
    %8575 = vmatmul.bf16.gmra.mxu0 %v8504
    %v8576 = vpop.f32.mrf.mxu0
    %v8577 = vadd.f32 %v8558, %v8576
    %v8578 = vpop.f32.mrf.mxu0
    %v8579 = vadd.f32 %v8560, %v8578
    %8580 = vdwg.mxu0
    %8581 = vmatpush.bf16.msra.mxu0 %v3033
    %8582 = vmatpush.bf16.msra.mxu0 %v3025
    %8583 = vmatpush.bf16.msra.mxu0 %v3017
    %8584 = vmatpush.bf16.msra.mxu0 %v3009
    %8585 = vmatpush.bf16.msra.mxu0 %v3001
    %8586 = vmatpush.bf16.msra.mxu0 %v2993
    %8587 = vmatpush.bf16.msra.mxu0 %v2985
    %8588 = vmatpush.bf16.msra.mxu0 %v2977
    %8589 = vmatmul.bf16.gmra.mxu0 %v8501
    %v8590 = vpop.f32.mrf.mxu0
    %v8591 = vadd.f32 0.0, %v8590
    %v8592 = vpop.f32.mrf.mxu0
    %v8593 = vadd.f32 0.0, %v8592
    %8594 = vmatmul.bf16.gmra.mxu0 %v8503
    %v8595 = vpop.f32.mrf.mxu0
    %v8596 = vadd.f32 0.0, %v8595
    %v8597 = vpop.f32.mrf.mxu0
    %v8598 = vadd.f32 0.0, %v8597
    %8599 = vdwg.mxu0
    %8600 = vmatpush.bf16.msra.mxu0 %v3097
    %8601 = vmatpush.bf16.msra.mxu0 %v3089
    %8602 = vmatpush.bf16.msra.mxu0 %v3081
    %8603 = vmatpush.bf16.msra.mxu0 %v3073
    %8604 = vmatpush.bf16.msra.mxu0 %v3065
    %8605 = vmatpush.bf16.msra.mxu0 %v3057
    %8606 = vmatpush.bf16.msra.mxu0 %v3049
    %8607 = vmatpush.bf16.msra.mxu0 %v3041
    %8608 = vmatmul.bf16.gmra.mxu0 %v8502
    %v8609 = vpop.f32.mrf.mxu0
    %v8610 = vadd.f32 %v8591, %v8609
    %v8611 = vpop.f32.mrf.mxu0
    %v8612 = vadd.f32 %v8593, %v8611
    %8613 = vmatmul.bf16.gmra.mxu0 %v8504
    %v8614 = vpop.f32.mrf.mxu0
    %v8615 = vadd.f32 %v8596, %v8614
    %v8616 = vpop.f32.mrf.mxu0
    %v8617 = vadd.f32 %v8598, %v8616
    %8618 = vdwg.mxu0
    %8619 = vmatpush.bf16.msra.mxu0 %v3034
    %8620 = vmatpush.bf16.msra.mxu0 %v3026
    %8621 = vmatpush.bf16.msra.mxu0 %v3018
    %8622 = vmatpush.bf16.msra.mxu0 %v3010
    %8623 = vmatpush.bf16.msra.mxu0 %v3002
    %8624 = vmatpush.bf16.msra.mxu0 %v2994
    %8625 = vmatpush.bf16.msra.mxu0 %v2986
    %8626 = vmatpush.bf16.msra.mxu0 %v2978
    %8627 = vmatmul.bf16.gmra.mxu0 %v8501
    %v8628 = vpop.f32.mrf.mxu0
    %v8629 = vadd.f32 0.0, %v8628
    %v8630 = vpop.f32.mrf.mxu0
    %v8631 = vadd.f32 0.0, %v8630
    %8632 = vmatmul.bf16.gmra.mxu0 %v8503
    %v8633 = vpop.f32.mrf.mxu0
    %v8634 = vadd.f32 0.0, %v8633
    %v8635 = vpop.f32.mrf.mxu0
    %v8636 = vadd.f32 0.0, %v8635
    %8637 = vdwg.mxu0
    %8638 = vmatpush.bf16.msra.mxu0 %v3098
    %8639 = vmatpush.bf16.msra.mxu0 %v3090
    %8640 = vmatpush.bf16.msra.mxu0 %v3082
    %8641 = vmatpush.bf16.msra.mxu0 %v3074
    %8642 = vmatpush.bf16.msra.mxu0 %v3066
    %8643 = vmatpush.bf16.msra.mxu0 %v3058
    %8644 = vmatpush.bf16.msra.mxu0 %v3050
    %8645 = vmatpush.bf16.msra.mxu0 %v3042
    %8646 = vmatmul.bf16.gmra.mxu0 %v8502
    %v8647 = vpop.f32.mrf.mxu0
    %v8648 = vadd.f32 %v8629, %v8647
    %v8649 = vpop.f32.mrf.mxu0
    %v8650 = vadd.f32 %v8631, %v8649
    %8651 = vmatmul.bf16.gmra.mxu0 %v8504
    %v8652 = vpop.f32.mrf.mxu0
    %v8653 = vadd.f32 %v8634, %v8652
    %v8654 = vpop.f32.mrf.mxu0
    %v8655 = vadd.f32 %v8636, %v8654
    %8656 = vdwg.mxu0
    %8657 = vmatpush.bf16.msra.mxu0 %v3035
    %8658 = vmatpush.bf16.msra.mxu0 %v3027
    %8659 = vmatpush.bf16.msra.mxu0 %v3019
    %8660 = vmatpush.bf16.msra.mxu0 %v3011
    %8661 = vmatpush.bf16.msra.mxu0 %v3003
    %8662 = vmatpush.bf16.msra.mxu0 %v2995
    %8663 = vmatpush.bf16.msra.mxu0 %v2987
    %8664 = vmatpush.bf16.msra.mxu0 %v2979
    %8665 = vmatmul.bf16.gmra.mxu0 %v8501
    %v8666 = vpop.f32.mrf.mxu0
    %v8667 = vadd.f32 0.0, %v8666
    %v8668 = vpop.f32.mrf.mxu0
    %v8669 = vadd.f32 0.0, %v8668
    %8670 = vmatmul.bf16.gmra.mxu0 %v8503
    %v8671 = vpop.f32.mrf.mxu0
    %v8672 = vadd.f32 0.0, %v8671
    %v8673 = vpop.f32.mrf.mxu0
    %v8674 = vadd.f32 0.0, %v8673
    %8675 = vdwg.mxu0
    %8676 = vmatpush.bf16.msra.mxu0 %v3099
    %8677 = vmatpush.bf16.msra.mxu0 %v3091
    %8678 = vmatpush.bf16.msra.mxu0 %v3083
    %8679 = vmatpush.bf16.msra.mxu0 %v3075
    %8680 = vmatpush.bf16.msra.mxu0 %v3067
    %8681 = vmatpush.bf16.msra.mxu0 %v3059
    %8682 = vmatpush.bf16.msra.mxu0 %v3051
    %8683 = vmatpush.bf16.msra.mxu0 %v3043
    %8684 = vmatmul.bf16.gmra.mxu0 %v8502
    %v8685 = vpop.f32.mrf.mxu0
    %v8686 = vadd.f32 %v8667, %v8685
    %v8687 = vpop.f32.mrf.mxu0
    %v8688 = vadd.f32 %v8669, %v8687
    %8689 = vmatmul.bf16.gmra.mxu0 %v8504
    %v8690 = vpop.f32.mrf.mxu0
    %v8691 = vadd.f32 %v8672, %v8690
    %v8692 = vpop.f32.mrf.mxu0
    %v8693 = vadd.f32 %v8674, %v8692
    %8694 = vdwg.mxu0
    %8695 = vmatpush.bf16.msra.mxu0 %v3036
    %8696 = vmatpush.bf16.msra.mxu0 %v3028
    %8697 = vmatpush.bf16.msra.mxu0 %v3020
    %8698 = vmatpush.bf16.msra.mxu0 %v3012
    %8699 = vmatpush.bf16.msra.mxu0 %v3004
    %8700 = vmatpush.bf16.msra.mxu0 %v2996
    %8701 = vmatpush.bf16.msra.mxu0 %v2988
    %8702 = vmatpush.bf16.msra.mxu0 %v2980
    %8703 = vmatmul.bf16.gmra.mxu0 %v8501
    %v8704 = vpop.f32.mrf.mxu0
    %v8705 = vadd.f32 0.0, %v8704
    %v8706 = vpop.f32.mrf.mxu0
    %v8707 = vadd.f32 0.0, %v8706
    %8708 = vmatmul.bf16.gmra.mxu0 %v8503
    %v8709 = vpop.f32.mrf.mxu0
    %v8710 = vadd.f32 0.0, %v8709
    %v8711 = vpop.f32.mrf.mxu0
    %v8712 = vadd.f32 0.0, %v8711
    %8713 = vdwg.mxu0
    %8714 = vmatpush.bf16.msra.mxu0 %v3100
    %8715 = vmatpush.bf16.msra.mxu0 %v3092
    %8716 = vmatpush.bf16.msra.mxu0 %v3084
    %8717 = vmatpush.bf16.msra.mxu0 %v3076
    %8718 = vmatpush.bf16.msra.mxu0 %v3068
    %8719 = vmatpush.bf16.msra.mxu0 %v3060
    %8720 = vmatpush.bf16.msra.mxu0 %v3052
    %8721 = vmatpush.bf16.msra.mxu0 %v3044
    %8722 = vmatmul.bf16.gmra.mxu0 %v8502
    %v8723 = vpop.f32.mrf.mxu0
    %v8724 = vadd.f32 %v8705, %v8723
    %v8725 = vpop.f32.mrf.mxu0
    %v8726 = vadd.f32 %v8707, %v8725
    %8727 = vmatmul.bf16.gmra.mxu0 %v8504
    %v8728 = vpop.f32.mrf.mxu0
    %v8729 = vadd.f32 %v8710, %v8728
    %v8730 = vpop.f32.mrf.mxu0
    %v8731 = vadd.f32 %v8712, %v8730
    %8732 = vdwg.mxu0
    %8733 = vmatpush.bf16.msra.mxu0 %v3037
    %8734 = vmatpush.bf16.msra.mxu0 %v3029
    %8735 = vmatpush.bf16.msra.mxu0 %v3021
    %8736 = vmatpush.bf16.msra.mxu0 %v3013
    %8737 = vmatpush.bf16.msra.mxu0 %v3005
    %8738 = vmatpush.bf16.msra.mxu0 %v2997
    %8739 = vmatpush.bf16.msra.mxu0 %v2989
    %8740 = vmatpush.bf16.msra.mxu0 %v2981
    %8741 = vmatmul.bf16.gmra.mxu0 %v8501
    %v8742 = vpop.f32.mrf.mxu0
    %v8743 = vadd.f32 0.0, %v8742
    %v8744 = vpop.f32.mrf.mxu0
    %v8745 = vadd.f32 0.0, %v8744
    %8746 = vmatmul.bf16.gmra.mxu0 %v8503
    %v8747 = vpop.f32.mrf.mxu0
    %v8748 = vadd.f32 0.0, %v8747
    %v8749 = vpop.f32.mrf.mxu0
    %v8750 = vadd.f32 0.0, %v8749
    %8751 = vdwg.mxu0
    %8752 = vmatpush.bf16.msra.mxu0 %v3101
    %8753 = vmatpush.bf16.msra.mxu0 %v3093
    %8754 = vmatpush.bf16.msra.mxu0 %v3085
    %8755 = vmatpush.bf16.msra.mxu0 %v3077
    %8756 = vmatpush.bf16.msra.mxu0 %v3069
    %8757 = vmatpush.bf16.msra.mxu0 %v3061
    %8758 = vmatpush.bf16.msra.mxu0 %v3053
    %8759 = vmatpush.bf16.msra.mxu0 %v3045
    %8760 = vmatmul.bf16.gmra.mxu0 %v8502
    %v8761 = vpop.f32.mrf.mxu0
    %v8762 = vadd.f32 %v8743, %v8761
    %v8763 = vpop.f32.mrf.mxu0
    %v8764 = vadd.f32 %v8745, %v8763
    %8765 = vmatmul.bf16.gmra.mxu0 %v8504
    %v8766 = vpop.f32.mrf.mxu0
    %v8767 = vadd.f32 %v8748, %v8766
    %v8768 = vpop.f32.mrf.mxu0
    %v8769 = vadd.f32 %v8750, %v8768
    %8770 = vdwg.mxu0
    %8771 = vmatpush.bf16.msra.mxu0 %v3038
    %8772 = vmatpush.bf16.msra.mxu0 %v3030
    %8773 = vmatpush.bf16.msra.mxu0 %v3022
    %8774 = vmatpush.bf16.msra.mxu0 %v3014
    %8775 = vmatpush.bf16.msra.mxu0 %v3006
    %8776 = vmatpush.bf16.msra.mxu0 %v2998
    %8777 = vmatpush.bf16.msra.mxu0 %v2990
    %8778 = vmatpush.bf16.msra.mxu0 %v2982
    %8779 = vmatmul.bf16.gmra.mxu0 %v8501
    %v8780 = vpop.f32.mrf.mxu0
    %v8781 = vadd.f32 0.0, %v8780
    %v8782 = vpop.f32.mrf.mxu0
    %v8783 = vadd.f32 0.0, %v8782
    %8784 = vmatmul.bf16.gmra.mxu0 %v8503
    %v8785 = vpop.f32.mrf.mxu0
    %v8786 = vadd.f32 0.0, %v8785
    %v8787 = vpop.f32.mrf.mxu0
    %v8788 = vadd.f32 0.0, %v8787
    %8789 = vdwg.mxu0
    %8790 = vmatpush.bf16.msra.mxu0 %v3102
    %8791 = vmatpush.bf16.msra.mxu0 %v3094
    %8792 = vmatpush.bf16.msra.mxu0 %v3086
    %8793 = vmatpush.bf16.msra.mxu0 %v3078
    %8794 = vmatpush.bf16.msra.mxu0 %v3070
    %8795 = vmatpush.bf16.msra.mxu0 %v3062
    %8796 = vmatpush.bf16.msra.mxu0 %v3054
    %8797 = vmatpush.bf16.msra.mxu0 %v3046
    %8798 = vmatmul.bf16.gmra.mxu0 %v8502
    %v8799 = vpop.f32.mrf.mxu0
    %v8800 = vadd.f32 %v8781, %v8799
    %v8801 = vpop.f32.mrf.mxu0
    %v8802 = vadd.f32 %v8783, %v8801
    %8803 = vmatmul.bf16.gmra.mxu0 %v8504
    %v8804 = vpop.f32.mrf.mxu0
    %v8805 = vadd.f32 %v8786, %v8804
    %v8806 = vpop.f32.mrf.mxu0
    %v8807 = vadd.f32 %v8788, %v8806
    %8808 = vdwg.mxu0
    %v8809 = vadd.f32 %v8469, %v8534
    %v8810 = vadd.f32 %v8470, %v8572
    %v8811 = vadd.f32 %v8471, %v8610
    %v8812 = vadd.f32 %v8472, %v8648
    %v8813 = vadd.f32 %v8473, %v8686
    %v8814 = vadd.f32 %v8474, %v8724
    %v8815 = vadd.f32 %v8475, %v8762
    %v8816 = vadd.f32 %v8476, %v8800
    %v8817 = vadd.f32 %v8477, %v8536
    %v8818 = vadd.f32 %v8478, %v8574
    %v8819 = vadd.f32 %v8479, %v8612
    %v8820 = vadd.f32 %v8480, %v8650
    %v8821 = vadd.f32 %v8481, %v8688
    %v8822 = vadd.f32 %v8482, %v8726
    %v8823 = vadd.f32 %v8483, %v8764
    %v8824 = vadd.f32 %v8484, %v8802
    %v8825 = vadd.f32 %v8485, %v8539
    %v8826 = vadd.f32 %v8486, %v8577
    %v8827 = vadd.f32 %v8487, %v8615
    %v8828 = vadd.f32 %v8488, %v8653
    %v8829 = vadd.f32 %v8489, %v8691
    %v8830 = vadd.f32 %v8490, %v8729
    %v8831 = vadd.f32 %v8491, %v8767
    %v8832 = vadd.f32 %v8492, %v8805
    %v8833 = vadd.f32 %v8493, %v8541
    %v8834 = vadd.f32 %v8494, %v8579
    %v8835 = vadd.f32 %v8495, %v8617
    %v8836 = vadd.f32 %v8496, %v8655
    %v8837 = vadd.f32 %v8497, %v8693
    %v8838 = vadd.f32 %v8498, %v8731
    %v8839 = vadd.f32 %v8499, %v8769
    %v8840 = vadd.f32 %v8500, %v8807
    %v8841 = vxor.u32 %v8809, 2147483648
    %v8842 = vxor.u32 %v8810, 2147483648
    %v8843 = vxor.u32 %v8811, 2147483648
    %v8844 = vxor.u32 %v8812, 2147483648
    %v8845 = vxor.u32 %v8813, 2147483648
    %v8846 = vxor.u32 %v8814, 2147483648
    %v8847 = vxor.u32 %v8817, 2147483648
    %v8848 = vxor.u32 %v8818, 2147483648
    %v8849 = vxor.u32 %v8819, 2147483648
    %v8850 = vxor.u32 %v8820, 2147483648
    %v8851 = vxor.u32 %v8821, 2147483648
    %v8852 = vxor.u32 %v8822, 2147483648
    %v8853 = vxor.u32 %v8825, 2147483648
    %v8854 = vxor.u32 %v8826, 2147483648
    %v8855 = vxor.u32 %v8827, 2147483648
    %v8856 = vxor.u32 %v8828, 2147483648
    %v8857 = vxor.u32 %v8829, 2147483648
    %v8858 = vxor.u32 %v8830, 2147483648
    %v8859 = vxor.u32 %v8833, 2147483648
    %v8860 = vxor.u32 %v8834, 2147483648
    %v8861 = vxor.u32 %v8835, 2147483648
    %v8862 = vxor.u32 %v8836, 2147483648
    %v8863 = vxor.u32 %v8837, 2147483648
    %v8864 = vxor.u32 %v8838, 2147483648
    %v8865 = vmul.f32 %v8841, 1.442695
    %v8866 = vpow.pop %v8865
    %v8867 = vmul.f32 %v8842, 1.442695
    %v8868 = vpow.pop %v8867
    %v8869 = vmul.f32 %v8843, 1.442695
    %v8870 = vpow.pop %v8869
    %v8871 = vmul.f32 %v8844, 1.442695
    %v8872 = vpow.pop %v8871
    %v8873 = vmul.f32 %v8845, 1.442695
    %v8874 = vpow.pop %v8873
    %v8875 = vmul.f32 %v8846, 1.442695
    %v8876 = vpow.pop %v8875
    %v8877 = vmul.f32 %v8847, 1.442695
    %v8878 = vpow.pop %v8877
    %v8879 = vmul.f32 %v8848, 1.442695
    %v8880 = vpow.pop %v8879
    %v8881 = vmul.f32 %v8849, 1.442695
    %v8882 = vpow.pop %v8881
    %v8883 = vmul.f32 %v8850, 1.442695
    %v8884 = vpow.pop %v8883
    %v8885 = vmul.f32 %v8851, 1.442695
    %v8886 = vpow.pop %v8885
    %v8887 = vmul.f32 %v8852, 1.442695
    %v8888 = vpow.pop %v8887
    %v8889 = vmul.f32 %v8853, 1.442695
    %v8890 = vpow.pop %v8889
    %v8891 = vmul.f32 %v8854, 1.442695
    %v8892 = vpow.pop %v8891
    %v8893 = vmul.f32 %v8855, 1.442695
    %v8894 = vpow.pop %v8893
    %v8895 = vmul.f32 %v8856, 1.442695
    %v8896 = vpow.pop %v8895
    %v8897 = vmul.f32 %v8857, 1.442695
    %v8898 = vpow.pop %v8897
    %v8899 = vmul.f32 %v8858, 1.442695
    %v8900 = vpow.pop %v8899
    %v8901 = vmul.f32 %v8859, 1.442695
    %v8902 = vpow.pop %v8901
    %v8903 = vmul.f32 %v8860, 1.442695
    %v8904 = vpow.pop %v8903
    %v8905 = vmul.f32 %v8861, 1.442695
    %v8906 = vpow.pop %v8905
    %v8907 = vmul.f32 %v8862, 1.442695
    %v8908 = vpow.pop %v8907
    %v8909 = vmul.f32 %v8863, 1.442695
    %v8910 = vpow.pop %v8909
    %v8911 = vmul.f32 %v8864, 1.442695
    %v8912 = vpow.pop %v8911
    %v8913 = vadd.f32 %v8866, 1.0
    %v8914 = vadd.f32 %v8868, 1.0
    %v8915 = vadd.f32 %v8870, 1.0
    %v8916 = vadd.f32 %v8872, 1.0
    %v8917 = vadd.f32 %v8874, 1.0
    %v8918 = vadd.f32 %v8876, 1.0
    %v8919 = vadd.f32 %v8878, 1.0
    %v8920 = vadd.f32 %v8880, 1.0
    %v8921 = vadd.f32 %v8882, 1.0
    %v8922 = vadd.f32 %v8884, 1.0
    %v8923 = vadd.f32 %v8886, 1.0
    %v8924 = vadd.f32 %v8888, 1.0
    %v8925 = vadd.f32 %v8890, 1.0
    %v8926 = vadd.f32 %v8892, 1.0
    %v8927 = vadd.f32 %v8894, 1.0
    %v8928 = vadd.f32 %v8896, 1.0
    %v8929 = vadd.f32 %v8898, 1.0
    %v8930 = vadd.f32 %v8900, 1.0
    %v8931 = vadd.f32 %v8902, 1.0
    %v8932 = vadd.f32 %v8904, 1.0
    %v8933 = vadd.f32 %v8906, 1.0
    %v8934 = vadd.f32 %v8908, 1.0
    %v8935 = vadd.f32 %v8910, 1.0
    %v8936 = vadd.f32 %v8912, 1.0
    %v8937 = vrcp.pop %v8913
    %v8938 = vmul.f32 %v8913, %v8937
    %v8939 = vsub.f32 1.0, %v8938
    %v8940 = vmul.f32 %v8937, %v8939
    %v8941 = vadd.f32 %v8937, %v8940
    %vm8942 = vweird.f32 %v8913
    %vm8943 = vweird.f32 %v8937
    %vm8944 = vmor %vm8942, %vm8943
    %v8945 = vsel %vm8944, %v8937, %v8941
    %v8946 = vand.u32 2147483647, %v8913
    %vm8947 = vcmp.eq.f32.partialorder %v8946, 8.507059e+37
    %v8948 = vand.u32 %v8913, 2147483648
    %v8949 = vor.u32 1.1754944e-38, %v8948
    %v8950 = vsel %vm8947, %v8949, %v8945
    %v8951 = vmul.f32 1.0, %v8950
    %v8952 = vrcp.pop %v8914
    %v8953 = vmul.f32 %v8914, %v8952
    %v8954 = vsub.f32 1.0, %v8953
    %v8955 = vmul.f32 %v8952, %v8954
    %v8956 = vadd.f32 %v8952, %v8955
    %vm8957 = vweird.f32 %v8914
    %vm8958 = vweird.f32 %v8952
    %vm8959 = vmor %vm8957, %vm8958
    %v8960 = vsel %vm8959, %v8952, %v8956
    %v8961 = vand.u32 2147483647, %v8914
    %vm8962 = vcmp.eq.f32.partialorder %v8961, 8.507059e+37
    %v8963 = vand.u32 %v8914, 2147483648
    %v8964 = vor.u32 1.1754944e-38, %v8963
    %v8965 = vsel %vm8962, %v8964, %v8960
    %v8966 = vmul.f32 1.0, %v8965
    %v8967 = vrcp.pop %v8915
    %v8968 = vmul.f32 %v8915, %v8967
    %v8969 = vsub.f32 1.0, %v8968
    %v8970 = vmul.f32 %v8967, %v8969
    %v8971 = vadd.f32 %v8967, %v8970
    %vm8972 = vweird.f32 %v8915
    %vm8973 = vweird.f32 %v8967
    %vm8974 = vmor %vm8972, %vm8973
    %v8975 = vsel %vm8974, %v8967, %v8971
    %v8976 = vand.u32 2147483647, %v8915
    %vm8977 = vcmp.eq.f32.partialorder %v8976, 8.507059e+37
    %v8978 = vand.u32 %v8915, 2147483648
    %v8979 = vor.u32 1.1754944e-38, %v8978
    %v8980 = vsel %vm8977, %v8979, %v8975
    %v8981 = vmul.f32 1.0, %v8980
    %v8982 = vrcp.pop %v8916
    %v8983 = vmul.f32 %v8916, %v8982
    %v8984 = vsub.f32 1.0, %v8983
    %v8985 = vmul.f32 %v8982, %v8984
    %v8986 = vadd.f32 %v8982, %v8985
    %vm8987 = vweird.f32 %v8916
    %vm8988 = vweird.f32 %v8982
    %vm8989 = vmor %vm8987, %vm8988
    %v8990 = vsel %vm8989, %v8982, %v8986
    %v8991 = vand.u32 2147483647, %v8916
    %vm8992 = vcmp.eq.f32.partialorder %v8991, 8.507059e+37
    %v8993 = vand.u32 %v8916, 2147483648
    %v8994 = vor.u32 1.1754944e-38, %v8993
    %v8995 = vsel %vm8992, %v8994, %v8990
    %v8996 = vmul.f32 1.0, %v8995
    %v8997 = vrcp.pop %v8917
    %v8998 = vmul.f32 %v8917, %v8997
    %v8999 = vsub.f32 1.0, %v8998
    %v9000 = vmul.f32 %v8997, %v8999
    %v9001 = vadd.f32 %v8997, %v9000
    %vm9002 = vweird.f32 %v8917
    %vm9003 = vweird.f32 %v8997
    %vm9004 = vmor %vm9002, %vm9003
    %v9005 = vsel %vm9004, %v8997, %v9001
    %v9006 = vand.u32 2147483647, %v8917
    %vm9007 = vcmp.eq.f32.partialorder %v9006, 8.507059e+37
    %v9008 = vand.u32 %v8917, 2147483648
    %v9009 = vor.u32 1.1754944e-38, %v9008
    %v9010 = vsel %vm9007, %v9009, %v9005
    %v9011 = vmul.f32 1.0, %v9010
    %v9012 = vrcp.pop %v8918
    %v9013 = vmul.f32 %v8918, %v9012
    %v9014 = vsub.f32 1.0, %v9013
    %v9015 = vmul.f32 %v9012, %v9014
    %v9016 = vadd.f32 %v9012, %v9015
    %vm9017 = vweird.f32 %v8918
    %vm9018 = vweird.f32 %v9012
    %vm9019 = vmor %vm9017, %vm9018
    %v9020 = vsel %vm9019, %v9012, %v9016
    %v9021 = vand.u32 2147483647, %v8918
    %vm9022 = vcmp.eq.f32.partialorder %v9021, 8.507059e+37
    %v9023 = vand.u32 %v8918, 2147483648
    %v9024 = vor.u32 1.1754944e-38, %v9023
    %v9025 = vsel %vm9022, %v9024, %v9020
    %v9026 = vmul.f32 1.0, %v9025
    %v9027 = vrcp.pop %v8919
    %v9028 = vmul.f32 %v8919, %v9027
    %v9029 = vsub.f32 1.0, %v9028
    %v9030 = vmul.f32 %v9027, %v9029
    %v9031 = vadd.f32 %v9027, %v9030
    %vm9032 = vweird.f32 %v8919
    %vm9033 = vweird.f32 %v9027
    %vm9034 = vmor %vm9032, %vm9033
    %v9035 = vsel %vm9034, %v9027, %v9031
    %v9036 = vand.u32 2147483647, %v8919
    %vm9037 = vcmp.eq.f32.partialorder %v9036, 8.507059e+37
    %v9038 = vand.u32 %v8919, 2147483648
    %v9039 = vor.u32 1.1754944e-38, %v9038
    %v9040 = vsel %vm9037, %v9039, %v9035
    %v9041 = vmul.f32 1.0, %v9040
    %v9042 = vrcp.pop %v8920
    %v9043 = vmul.f32 %v8920, %v9042
    %v9044 = vsub.f32 1.0, %v9043
    %v9045 = vmul.f32 %v9042, %v9044
    %v9046 = vadd.f32 %v9042, %v9045
    %vm9047 = vweird.f32 %v8920
    %vm9048 = vweird.f32 %v9042
    %vm9049 = vmor %vm9047, %vm9048
    %v9050 = vsel %vm9049, %v9042, %v9046
    %v9051 = vand.u32 2147483647, %v8920
    %vm9052 = vcmp.eq.f32.partialorder %v9051, 8.507059e+37
    %v9053 = vand.u32 %v8920, 2147483648
    %v9054 = vor.u32 1.1754944e-38, %v9053
    %v9055 = vsel %vm9052, %v9054, %v9050
    %v9056 = vmul.f32 1.0, %v9055
    %v9057 = vrcp.pop %v8921
    %v9058 = vmul.f32 %v8921, %v9057
    %v9059 = vsub.f32 1.0, %v9058
    %v9060 = vmul.f32 %v9057, %v9059
    %v9061 = vadd.f32 %v9057, %v9060
    %vm9062 = vweird.f32 %v8921
    %vm9063 = vweird.f32 %v9057
    %vm9064 = vmor %vm9062, %vm9063
    %v9065 = vsel %vm9064, %v9057, %v9061
    %v9066 = vand.u32 2147483647, %v8921
    %vm9067 = vcmp.eq.f32.partialorder %v9066, 8.507059e+37
    %v9068 = vand.u32 %v8921, 2147483648
    %v9069 = vor.u32 1.1754944e-38, %v9068
    %v9070 = vsel %vm9067, %v9069, %v9065
    %v9071 = vmul.f32 1.0, %v9070
    %v9072 = vrcp.pop %v8922
    %v9073 = vmul.f32 %v8922, %v9072
    %v9074 = vsub.f32 1.0, %v9073
    %v9075 = vmul.f32 %v9072, %v9074
    %v9076 = vadd.f32 %v9072, %v9075
    %vm9077 = vweird.f32 %v8922
    %vm9078 = vweird.f32 %v9072
    %vm9079 = vmor %vm9077, %vm9078
    %v9080 = vsel %vm9079, %v9072, %v9076
    %v9081 = vand.u32 2147483647, %v8922
    %vm9082 = vcmp.eq.f32.partialorder %v9081, 8.507059e+37
    %v9083 = vand.u32 %v8922, 2147483648
    %v9084 = vor.u32 1.1754944e-38, %v9083
    %v9085 = vsel %vm9082, %v9084, %v9080
    %v9086 = vmul.f32 1.0, %v9085
    %v9087 = vrcp.pop %v8923
    %v9088 = vmul.f32 %v8923, %v9087
    %v9089 = vsub.f32 1.0, %v9088
    %v9090 = vmul.f32 %v9087, %v9089
    %v9091 = vadd.f32 %v9087, %v9090
    %vm9092 = vweird.f32 %v8923
    %vm9093 = vweird.f32 %v9087
    %vm9094 = vmor %vm9092, %vm9093
    %v9095 = vsel %vm9094, %v9087, %v9091
    %v9096 = vand.u32 2147483647, %v8923
    %vm9097 = vcmp.eq.f32.partialorder %v9096, 8.507059e+37
    %v9098 = vand.u32 %v8923, 2147483648
    %v9099 = vor.u32 1.1754944e-38, %v9098
    %v9100 = vsel %vm9097, %v9099, %v9095
    %v9101 = vmul.f32 1.0, %v9100
    %v9102 = vrcp.pop %v8924
    %v9103 = vmul.f32 %v8924, %v9102
    %v9104 = vsub.f32 1.0, %v9103
    %v9105 = vmul.f32 %v9102, %v9104
    %v9106 = vadd.f32 %v9102, %v9105
    %vm9107 = vweird.f32 %v8924
    %vm9108 = vweird.f32 %v9102
    %vm9109 = vmor %vm9107, %vm9108
    %v9110 = vsel %vm9109, %v9102, %v9106
    %v9111 = vand.u32 2147483647, %v8924
    %vm9112 = vcmp.eq.f32.partialorder %v9111, 8.507059e+37
    %v9113 = vand.u32 %v8924, 2147483648
    %v9114 = vor.u32 1.1754944e-38, %v9113
    %v9115 = vsel %vm9112, %v9114, %v9110
    %v9116 = vmul.f32 1.0, %v9115
    %v9117 = vrcp.pop %v8925
    %v9118 = vmul.f32 %v8925, %v9117
    %v9119 = vsub.f32 1.0, %v9118
    %v9120 = vmul.f32 %v9117, %v9119
    %v9121 = vadd.f32 %v9117, %v9120
    %vm9122 = vweird.f32 %v8925
    %vm9123 = vweird.f32 %v9117
    %vm9124 = vmor %vm9122, %vm9123
    %v9125 = vsel %vm9124, %v9117, %v9121
    %v9126 = vand.u32 2147483647, %v8925
    %vm9127 = vcmp.eq.f32.partialorder %v9126, 8.507059e+37
    %v9128 = vand.u32 %v8925, 2147483648
    %v9129 = vor.u32 1.1754944e-38, %v9128
    %v9130 = vsel %vm9127, %v9129, %v9125
    %v9131 = vmul.f32 1.0, %v9130
    %v9132 = vrcp.pop %v8926
    %v9133 = vmul.f32 %v8926, %v9132
    %v9134 = vsub.f32 1.0, %v9133
    %v9135 = vmul.f32 %v9132, %v9134
    %v9136 = vadd.f32 %v9132, %v9135
    %vm9137 = vweird.f32 %v8926
    %vm9138 = vweird.f32 %v9132
    %vm9139 = vmor %vm9137, %vm9138
    %v9140 = vsel %vm9139, %v9132, %v9136
    %v9141 = vand.u32 2147483647, %v8926
    %vm9142 = vcmp.eq.f32.partialorder %v9141, 8.507059e+37
    %v9143 = vand.u32 %v8926, 2147483648
    %v9144 = vor.u32 1.1754944e-38, %v9143
    %v9145 = vsel %vm9142, %v9144, %v9140
    %v9146 = vmul.f32 1.0, %v9145
    %v9147 = vrcp.pop %v8927
    %v9148 = vmul.f32 %v8927, %v9147
    %v9149 = vsub.f32 1.0, %v9148
    %v9150 = vmul.f32 %v9147, %v9149
    %v9151 = vadd.f32 %v9147, %v9150
    %vm9152 = vweird.f32 %v8927
    %vm9153 = vweird.f32 %v9147
    %vm9154 = vmor %vm9152, %vm9153
    %v9155 = vsel %vm9154, %v9147, %v9151
    %v9156 = vand.u32 2147483647, %v8927
    %vm9157 = vcmp.eq.f32.partialorder %v9156, 8.507059e+37
    %v9158 = vand.u32 %v8927, 2147483648
    %v9159 = vor.u32 1.1754944e-38, %v9158
    %v9160 = vsel %vm9157, %v9159, %v9155
    %v9161 = vmul.f32 1.0, %v9160
    %v9162 = vrcp.pop %v8928
    %v9163 = vmul.f32 %v8928, %v9162
    %v9164 = vsub.f32 1.0, %v9163
    %v9165 = vmul.f32 %v9162, %v9164
    %v9166 = vadd.f32 %v9162, %v9165
    %vm9167 = vweird.f32 %v8928
    %vm9168 = vweird.f32 %v9162
    %vm9169 = vmor %vm9167, %vm9168
    %v9170 = vsel %vm9169, %v9162, %v9166
    %v9171 = vand.u32 2147483647, %v8928
    %vm9172 = vcmp.eq.f32.partialorder %v9171, 8.507059e+37
    %v9173 = vand.u32 %v8928, 2147483648
    %v9174 = vor.u32 1.1754944e-38, %v9173
    %v9175 = vsel %vm9172, %v9174, %v9170
    %v9176 = vmul.f32 1.0, %v9175
    %v9177 = vrcp.pop %v8929
    %v9178 = vmul.f32 %v8929, %v9177
    %v9179 = vsub.f32 1.0, %v9178
    %v9180 = vmul.f32 %v9177, %v9179
    %v9181 = vadd.f32 %v9177, %v9180
    %vm9182 = vweird.f32 %v8929
    %vm9183 = vweird.f32 %v9177
    %vm9184 = vmor %vm9182, %vm9183
    %v9185 = vsel %vm9184, %v9177, %v9181
    %v9186 = vand.u32 2147483647, %v8929
    %vm9187 = vcmp.eq.f32.partialorder %v9186, 8.507059e+37
    %v9188 = vand.u32 %v8929, 2147483648
    %v9189 = vor.u32 1.1754944e-38, %v9188
    %v9190 = vsel %vm9187, %v9189, %v9185
    %v9191 = vmul.f32 1.0, %v9190
    %v9192 = vrcp.pop %v8930
    %v9193 = vmul.f32 %v8930, %v9192
    %v9194 = vsub.f32 1.0, %v9193
    %v9195 = vmul.f32 %v9192, %v9194
    %v9196 = vadd.f32 %v9192, %v9195
    %vm9197 = vweird.f32 %v8930
    %vm9198 = vweird.f32 %v9192
    %vm9199 = vmor %vm9197, %vm9198
    %v9200 = vsel %vm9199, %v9192, %v9196
    %v9201 = vand.u32 2147483647, %v8930
    %vm9202 = vcmp.eq.f32.partialorder %v9201, 8.507059e+37
    %v9203 = vand.u32 %v8930, 2147483648
    %v9204 = vor.u32 1.1754944e-38, %v9203
    %v9205 = vsel %vm9202, %v9204, %v9200
    %v9206 = vmul.f32 1.0, %v9205
    %v9207 = vrcp.pop %v8931
    %v9208 = vmul.f32 %v8931, %v9207
    %v9209 = vsub.f32 1.0, %v9208
    %v9210 = vmul.f32 %v9207, %v9209
    %v9211 = vadd.f32 %v9207, %v9210
    %vm9212 = vweird.f32 %v8931
    %vm9213 = vweird.f32 %v9207
    %vm9214 = vmor %vm9212, %vm9213
    %v9215 = vsel %vm9214, %v9207, %v9211
    %v9216 = vand.u32 2147483647, %v8931
    %vm9217 = vcmp.eq.f32.partialorder %v9216, 8.507059e+37
    %v9218 = vand.u32 %v8931, 2147483648
    %v9219 = vor.u32 1.1754944e-38, %v9218
    %v9220 = vsel %vm9217, %v9219, %v9215
    %v9221 = vmul.f32 1.0, %v9220
    %v9222 = vrcp.pop %v8932
    %v9223 = vmul.f32 %v8932, %v9222
    %v9224 = vsub.f32 1.0, %v9223
    %v9225 = vmul.f32 %v9222, %v9224
    %v9226 = vadd.f32 %v9222, %v9225
    %vm9227 = vweird.f32 %v8932
    %vm9228 = vweird.f32 %v9222
    %vm9229 = vmor %vm9227, %vm9228
    %v9230 = vsel %vm9229, %v9222, %v9226
    %v9231 = vand.u32 2147483647, %v8932
    %vm9232 = vcmp.eq.f32.partialorder %v9231, 8.507059e+37
    %v9233 = vand.u32 %v8932, 2147483648
    %v9234 = vor.u32 1.1754944e-38, %v9233
    %v9235 = vsel %vm9232, %v9234, %v9230
    %v9236 = vmul.f32 1.0, %v9235
    %v9237 = vrcp.pop %v8933
    %v9238 = vmul.f32 %v8933, %v9237
    %v9239 = vsub.f32 1.0, %v9238
    %v9240 = vmul.f32 %v9237, %v9239
    %v9241 = vadd.f32 %v9237, %v9240
    %vm9242 = vweird.f32 %v8933
    %vm9243 = vweird.f32 %v9237
    %vm9244 = vmor %vm9242, %vm9243
    %v9245 = vsel %vm9244, %v9237, %v9241
    %v9246 = vand.u32 2147483647, %v8933
    %vm9247 = vcmp.eq.f32.partialorder %v9246, 8.507059e+37
    %v9248 = vand.u32 %v8933, 2147483648
    %v9249 = vor.u32 1.1754944e-38, %v9248
    %v9250 = vsel %vm9247, %v9249, %v9245
    %v9251 = vmul.f32 1.0, %v9250
    %v9252 = vrcp.pop %v8934
    %v9253 = vmul.f32 %v8934, %v9252
    %v9254 = vsub.f32 1.0, %v9253
    %v9255 = vmul.f32 %v9252, %v9254
    %v9256 = vadd.f32 %v9252, %v9255
    %vm9257 = vweird.f32 %v8934
    %vm9258 = vweird.f32 %v9252
    %vm9259 = vmor %vm9257, %vm9258
    %v9260 = vsel %vm9259, %v9252, %v9256
    %v9261 = vand.u32 2147483647, %v8934
    %vm9262 = vcmp.eq.f32.partialorder %v9261, 8.507059e+37
    %v9263 = vand.u32 %v8934, 2147483648
    %v9264 = vor.u32 1.1754944e-38, %v9263
    %v9265 = vsel %vm9262, %v9264, %v9260
    %v9266 = vmul.f32 1.0, %v9265
    %v9267 = vrcp.pop %v8935
    %v9268 = vmul.f32 %v8935, %v9267
    %v9269 = vsub.f32 1.0, %v9268
    %v9270 = vmul.f32 %v9267, %v9269
    %v9271 = vadd.f32 %v9267, %v9270
    %vm9272 = vweird.f32 %v8935
    %vm9273 = vweird.f32 %v9267
    %vm9274 = vmor %vm9272, %vm9273
    %v9275 = vsel %vm9274, %v9267, %v9271
    %v9276 = vand.u32 2147483647, %v8935
    %vm9277 = vcmp.eq.f32.partialorder %v9276, 8.507059e+37
    %v9278 = vand.u32 %v8935, 2147483648
    %v9279 = vor.u32 1.1754944e-38, %v9278
    %v9280 = vsel %vm9277, %v9279, %v9275
    %v9281 = vmul.f32 1.0, %v9280
    %v9282 = vrcp.pop %v8936
    %v9283 = vmul.f32 %v8936, %v9282
    %v9284 = vsub.f32 1.0, %v9283
    %v9285 = vmul.f32 %v9282, %v9284
    %v9286 = vadd.f32 %v9282, %v9285
    %vm9287 = vweird.f32 %v8936
    %vm9288 = vweird.f32 %v9282
    %vm9289 = vmor %vm9287, %vm9288
    %v9290 = vsel %vm9289, %v9282, %v9286
    %v9291 = vand.u32 2147483647, %v8936
    %vm9292 = vcmp.eq.f32.partialorder %v9291, 8.507059e+37
    %v9293 = vand.u32 %v8936, 2147483648
    %v9294 = vor.u32 1.1754944e-38, %v9293
    %v9295 = vsel %vm9292, %v9294, %v9290
    %v9296 = vmul.f32 1.0, %v9295
    %v9297 = vtanh.pop %v8815
    %v9298 = vtanh.pop %v8816
    %v9299 = vtanh.pop %v8823
    %v9300 = vtanh.pop %v8824
    %v9301 = vtanh.pop %v8831
    %v9302 = vtanh.pop %v8832
    %v9303 = vtanh.pop %v8839
    %v9304 = vtanh.pop %v8840
    %v9305 = vmul.f32 %v8981, %v8442
    %v9306 = vmul.f32 %v8996, %v8443
    %v9307 = vmul.f32 %v9071, %v8444
    %v9308 = vmul.f32 %v9086, %v8445
    %v9309 = vmul.f32 %v9161, %v8446
    %v9310 = vmul.f32 %v9176, %v8447
    %v9311 = vmul.f32 %v9251, %v8448
    %v9312 = vmul.f32 %v9266, %v8449
    %v9313 = vmul.f32 %v8951, %v9297
    %v9314 = vmul.f32 %v8966, %v9298
    %v9315 = vmul.f32 %v9041, %v9299
    %v9316 = vmul.f32 %v9056, %v9300
    %v9317 = vmul.f32 %v9131, %v9301
    %v9318 = vmul.f32 %v9146, %v9302
    %v9319 = vmul.f32 %v9221, %v9303
    %v9320 = vmul.f32 %v9236, %v9304
    %v9321 = vadd.f32 %v9305, %v9313
    %v9322 = vadd.f32 %v9306, %v9314
    %v9323 = vadd.f32 %v9307, %v9315
    %v9324 = vadd.f32 %v9308, %v9316
    %v9325 = vadd.f32 %v9309, %v9317
    %v9326 = vadd.f32 %v9310, %v9318
    %v9327 = vadd.f32 %v9311, %v9319
    %v9328 = vadd.f32 %v9312, %v9320
    %v9329 = vtanh.pop %v9321
    %v9330 = vtanh.pop %v9322
    %v9331 = vtanh.pop %v9323
    %v9332 = vtanh.pop %v9324
    %v9333 = vtanh.pop %v9325
    %v9334 = vtanh.pop %v9326
    %v9335 = vtanh.pop %v9327
    %v9336 = vtanh.pop %v9328
    %v9337 = vmul.f32 %v9011, %v9329
    %v9338 = vmul.f32 %v9026, %v9330
    %v9339 = vmul.f32 %v9101, %v9331
    %v9340 = vmul.f32 %v9116, %v9332
    %v9341 = vmul.f32 %v9191, %v9333
    %v9342 = vmul.f32 %v9206, %v9334
    %v9343 = vmul.f32 %v9281, %v9335
    %v9344 = vmul.f32 %v9296, %v9336
    %s9345 = smul.u32 28, 8
    %s9346 = smul.addr %s9345, 8
    %s9347 = scalar_lea.vmem [#allocation2], %s9346
    %v9348 = vld [vmem:[%s9347] sm:$0xff]
    %v9349 = vld [vmem:[%s9347 + $0x8] sm:$0xff]
    %v9350 = vld [vmem:[%s9347 + $0x10] sm:$0xff]
    %v9351 = vld [vmem:[%s9347 + $0x18] sm:$0xff]
    %v9352 = vld [vmem:[%s9347 + $0x20] sm:$0xff]
    %v9353 = vld [vmem:[%s9347 + $0x28] sm:$0xff]
    %v9354 = vld [vmem:[%s9347 + $0x30] sm:$0xff]
    %v9355 = vld [vmem:[%s9347 + $0x38] sm:$0xff]
    %v9356 = vld [vmem:[%s9347 + $0x40] sm:$0xff]
    %v9357 = vld [vmem:[%s9347 + $0x48] sm:$0xff]
    %v9358 = vld [vmem:[%s9347 + $0x50] sm:$0xff]
    %v9359 = vld [vmem:[%s9347 + $0x58] sm:$0xff]
    %v9360 = vld [vmem:[%s9347 + $0x60] sm:$0xff]
    %v9361 = vld [vmem:[%s9347 + $0x68] sm:$0xff]
    %v9362 = vld [vmem:[%s9347 + $0x70] sm:$0xff]
    %v9363 = vld [vmem:[%s9347 + $0x78] sm:$0xff]
    %v9364 = vld [vmem:[%s9347 + $0x80] sm:$0xff]
    %v9365 = vld [vmem:[%s9347 + $0x88] sm:$0xff]
    %v9366 = vld [vmem:[%s9347 + $0x90] sm:$0xff]
    %v9367 = vld [vmem:[%s9347 + $0x98] sm:$0xff]
    %v9368 = vld [vmem:[%s9347 + $0xa0] sm:$0xff]
    %v9369 = vld [vmem:[%s9347 + $0xa8] sm:$0xff]
    %v9370 = vld [vmem:[%s9347 + $0xb0] sm:$0xff]
    %v9371 = vld [vmem:[%s9347 + $0xb8] sm:$0xff]
    %v9372 = vld [vmem:[%s9347 + $0xc0] sm:$0xff]
    %v9373 = vld [vmem:[%s9347 + $0xc8] sm:$0xff]
    %v9374 = vld [vmem:[%s9347 + $0xd0] sm:$0xff]
    %v9375 = vld [vmem:[%s9347 + $0xd8] sm:$0xff]
    %v9376 = vld [vmem:[%s9347 + $0xe0] sm:$0xff]
    %v9377 = vld [vmem:[%s9347 + $0xe8] sm:$0xff]
    %v9378 = vld [vmem:[%s9347 + $0xf0] sm:$0xff]
    %v9379 = vld [vmem:[%s9347 + $0xf8] sm:$0xff]
    %v9380 = vpack.c.bf16 %v9339, %v9337
    %v9381 = vpack.c.bf16 %v9340, %v9338
    %v9382 = vpack.c.bf16 %v9343, %v9341
    %v9383 = vpack.c.bf16 %v9344, %v9342
    %9384 = vmatpush.bf16.msra.mxu0 %v3031
    %9385 = vmatpush.bf16.msra.mxu0 %v3023
    %9386 = vmatpush.bf16.msra.mxu0 %v3015
    %9387 = vmatpush.bf16.msra.mxu0 %v3007
    %9388 = vmatpush.bf16.msra.mxu0 %v2999
    %9389 = vmatpush.bf16.msra.mxu0 %v2991
    %9390 = vmatpush.bf16.msra.mxu0 %v2983
    %9391 = vmatpush.bf16.msra.mxu0 %v2975
    %9392 = vmatmul.bf16.gmra.mxu0 %v9380
    %v9393 = vpop.f32.mrf.mxu0
    %v9394 = vadd.f32 0.0, %v9393
    %v9395 = vpop.f32.mrf.mxu0
    %v9396 = vadd.f32 0.0, %v9395
    %9397 = vmatmul.bf16.gmra.mxu0 %v9382
    %v9398 = vpop.f32.mrf.mxu0
    %v9399 = vadd.f32 0.0, %v9398
    %v9400 = vpop.f32.mrf.mxu0
    %v9401 = vadd.f32 0.0, %v9400
    %9402 = vdwg.mxu0
    %9403 = vmatpush.bf16.msra.mxu0 %v3095
    %9404 = vmatpush.bf16.msra.mxu0 %v3087
    %9405 = vmatpush.bf16.msra.mxu0 %v3079
    %9406 = vmatpush.bf16.msra.mxu0 %v3071
    %9407 = vmatpush.bf16.msra.mxu0 %v3063
    %9408 = vmatpush.bf16.msra.mxu0 %v3055
    %9409 = vmatpush.bf16.msra.mxu0 %v3047
    %9410 = vmatpush.bf16.msra.mxu0 %v3039
    %9411 = vmatmul.bf16.gmra.mxu0 %v9381
    %v9412 = vpop.f32.mrf.mxu0
    %v9413 = vadd.f32 %v9394, %v9412
    %v9414 = vpop.f32.mrf.mxu0
    %v9415 = vadd.f32 %v9396, %v9414
    %9416 = vmatmul.bf16.gmra.mxu0 %v9383
    %v9417 = vpop.f32.mrf.mxu0
    %v9418 = vadd.f32 %v9399, %v9417
    %v9419 = vpop.f32.mrf.mxu0
    %v9420 = vadd.f32 %v9401, %v9419
    %9421 = vdwg.mxu0
    %9422 = vmatpush.bf16.msra.mxu0 %v3032
    %9423 = vmatpush.bf16.msra.mxu0 %v3024
    %9424 = vmatpush.bf16.msra.mxu0 %v3016
    %9425 = vmatpush.bf16.msra.mxu0 %v3008
    %9426 = vmatpush.bf16.msra.mxu0 %v3000
    %9427 = vmatpush.bf16.msra.mxu0 %v2992
    %9428 = vmatpush.bf16.msra.mxu0 %v2984
    %9429 = vmatpush.bf16.msra.mxu0 %v2976
    %9430 = vmatmul.bf16.gmra.mxu0 %v9380
    %v9431 = vpop.f32.mrf.mxu0
    %v9432 = vadd.f32 0.0, %v9431
    %v9433 = vpop.f32.mrf.mxu0
    %v9434 = vadd.f32 0.0, %v9433
    %9435 = vmatmul.bf16.gmra.mxu0 %v9382
    %v9436 = vpop.f32.mrf.mxu0
    %v9437 = vadd.f32 0.0, %v9436
    %v9438 = vpop.f32.mrf.mxu0
    %v9439 = vadd.f32 0.0, %v9438
    %9440 = vdwg.mxu0
    %9441 = vmatpush.bf16.msra.mxu0 %v3096
    %9442 = vmatpush.bf16.msra.mxu0 %v3088
    %9443 = vmatpush.bf16.msra.mxu0 %v3080
    %9444 = vmatpush.bf16.msra.mxu0 %v3072
    %9445 = vmatpush.bf16.msra.mxu0 %v3064
    %9446 = vmatpush.bf16.msra.mxu0 %v3056
    %9447 = vmatpush.bf16.msra.mxu0 %v3048
    %9448 = vmatpush.bf16.msra.mxu0 %v3040
    %9449 = vmatmul.bf16.gmra.mxu0 %v9381
    %v9450 = vpop.f32.mrf.mxu0
    %v9451 = vadd.f32 %v9432, %v9450
    %v9452 = vpop.f32.mrf.mxu0
    %v9453 = vadd.f32 %v9434, %v9452
    %9454 = vmatmul.bf16.gmra.mxu0 %v9383
    %v9455 = vpop.f32.mrf.mxu0
    %v9456 = vadd.f32 %v9437, %v9455
    %v9457 = vpop.f32.mrf.mxu0
    %v9458 = vadd.f32 %v9439, %v9457
    %9459 = vdwg.mxu0
    %9460 = vmatpush.bf16.msra.mxu0 %v3033
    %9461 = vmatpush.bf16.msra.mxu0 %v3025
    %9462 = vmatpush.bf16.msra.mxu0 %v3017
    %9463 = vmatpush.bf16.msra.mxu0 %v3009
    %9464 = vmatpush.bf16.msra.mxu0 %v3001
    %9465 = vmatpush.bf16.msra.mxu0 %v2993
    %9466 = vmatpush.bf16.msra.mxu0 %v2985
    %9467 = vmatpush.bf16.msra.mxu0 %v2977
    %9468 = vmatmul.bf16.gmra.mxu0 %v9380
    %v9469 = vpop.f32.mrf.mxu0
    %v9470 = vadd.f32 0.0, %v9469
    %v9471 = vpop.f32.mrf.mxu0
    %v9472 = vadd.f32 0.0, %v9471
    %9473 = vmatmul.bf16.gmra.mxu0 %v9382
    %v9474 = vpop.f32.mrf.mxu0
    %v9475 = vadd.f32 0.0, %v9474
    %v9476 = vpop.f32.mrf.mxu0
    %v9477 = vadd.f32 0.0, %v9476
    %9478 = vdwg.mxu0
    %9479 = vmatpush.bf16.msra.mxu0 %v3097
    %9480 = vmatpush.bf16.msra.mxu0 %v3089
    %9481 = vmatpush.bf16.msra.mxu0 %v3081
    %9482 = vmatpush.bf16.msra.mxu0 %v3073
    %9483 = vmatpush.bf16.msra.mxu0 %v3065
    %9484 = vmatpush.bf16.msra.mxu0 %v3057
    %9485 = vmatpush.bf16.msra.mxu0 %v3049
    %9486 = vmatpush.bf16.msra.mxu0 %v3041
    %9487 = vmatmul.bf16.gmra.mxu0 %v9381
    %v9488 = vpop.f32.mrf.mxu0
    %v9489 = vadd.f32 %v9470, %v9488
    %v9490 = vpop.f32.mrf.mxu0
    %v9491 = vadd.f32 %v9472, %v9490
    %9492 = vmatmul.bf16.gmra.mxu0 %v9383
    %v9493 = vpop.f32.mrf.mxu0
    %v9494 = vadd.f32 %v9475, %v9493
    %v9495 = vpop.f32.mrf.mxu0
    %v9496 = vadd.f32 %v9477, %v9495
    %9497 = vdwg.mxu0
    %9498 = vmatpush.bf16.msra.mxu0 %v3034
    %9499 = vmatpush.bf16.msra.mxu0 %v3026
    %9500 = vmatpush.bf16.msra.mxu0 %v3018
    %9501 = vmatpush.bf16.msra.mxu0 %v3010
    %9502 = vmatpush.bf16.msra.mxu0 %v3002
    %9503 = vmatpush.bf16.msra.mxu0 %v2994
    %9504 = vmatpush.bf16.msra.mxu0 %v2986
    %9505 = vmatpush.bf16.msra.mxu0 %v2978
    %9506 = vmatmul.bf16.gmra.mxu0 %v9380
    %v9507 = vpop.f32.mrf.mxu0
    %v9508 = vadd.f32 0.0, %v9507
    %v9509 = vpop.f32.mrf.mxu0
    %v9510 = vadd.f32 0.0, %v9509
    %9511 = vmatmul.bf16.gmra.mxu0 %v9382
    %v9512 = vpop.f32.mrf.mxu0
    %v9513 = vadd.f32 0.0, %v9512
    %v9514 = vpop.f32.mrf.mxu0
    %v9515 = vadd.f32 0.0, %v9514
    %9516 = vdwg.mxu0
    %9517 = vmatpush.bf16.msra.mxu0 %v3098
    %9518 = vmatpush.bf16.msra.mxu0 %v3090
    %9519 = vmatpush.bf16.msra.mxu0 %v3082
    %9520 = vmatpush.bf16.msra.mxu0 %v3074
    %9521 = vmatpush.bf16.msra.mxu0 %v3066
    %9522 = vmatpush.bf16.msra.mxu0 %v3058
    %9523 = vmatpush.bf16.msra.mxu0 %v3050
    %9524 = vmatpush.bf16.msra.mxu0 %v3042
    %9525 = vmatmul.bf16.gmra.mxu0 %v9381
    %v9526 = vpop.f32.mrf.mxu0
    %v9527 = vadd.f32 %v9508, %v9526
    %v9528 = vpop.f32.mrf.mxu0
    %v9529 = vadd.f32 %v9510, %v9528
    %9530 = vmatmul.bf16.gmra.mxu0 %v9383
    %v9531 = vpop.f32.mrf.mxu0
    %v9532 = vadd.f32 %v9513, %v9531
    %v9533 = vpop.f32.mrf.mxu0
    %v9534 = vadd.f32 %v9515, %v9533
    %9535 = vdwg.mxu0
    %9536 = vmatpush.bf16.msra.mxu0 %v3035
    %9537 = vmatpush.bf16.msra.mxu0 %v3027
    %9538 = vmatpush.bf16.msra.mxu0 %v3019
    %9539 = vmatpush.bf16.msra.mxu0 %v3011
    %9540 = vmatpush.bf16.msra.mxu0 %v3003
    %9541 = vmatpush.bf16.msra.mxu0 %v2995
    %9542 = vmatpush.bf16.msra.mxu0 %v2987
    %9543 = vmatpush.bf16.msra.mxu0 %v2979
    %9544 = vmatmul.bf16.gmra.mxu0 %v9380
    %v9545 = vpop.f32.mrf.mxu0
    %v9546 = vadd.f32 0.0, %v9545
    %v9547 = vpop.f32.mrf.mxu0
    %v9548 = vadd.f32 0.0, %v9547
    %9549 = vmatmul.bf16.gmra.mxu0 %v9382
    %v9550 = vpop.f32.mrf.mxu0
    %v9551 = vadd.f32 0.0, %v9550
    %v9552 = vpop.f32.mrf.mxu0
    %v9553 = vadd.f32 0.0, %v9552
    %9554 = vdwg.mxu0
    %9555 = vmatpush.bf16.msra.mxu0 %v3099
    %9556 = vmatpush.bf16.msra.mxu0 %v3091
    %9557 = vmatpush.bf16.msra.mxu0 %v3083
    %9558 = vmatpush.bf16.msra.mxu0 %v3075
    %9559 = vmatpush.bf16.msra.mxu0 %v3067
    %9560 = vmatpush.bf16.msra.mxu0 %v3059
    %9561 = vmatpush.bf16.msra.mxu0 %v3051
    %9562 = vmatpush.bf16.msra.mxu0 %v3043
    %9563 = vmatmul.bf16.gmra.mxu0 %v9381
    %v9564 = vpop.f32.mrf.mxu0
    %v9565 = vadd.f32 %v9546, %v9564
    %v9566 = vpop.f32.mrf.mxu0
    %v9567 = vadd.f32 %v9548, %v9566
    %9568 = vmatmul.bf16.gmra.mxu0 %v9383
    %v9569 = vpop.f32.mrf.mxu0
    %v9570 = vadd.f32 %v9551, %v9569
    %v9571 = vpop.f32.mrf.mxu0
    %v9572 = vadd.f32 %v9553, %v9571
    %9573 = vdwg.mxu0
    %9574 = vmatpush.bf16.msra.mxu0 %v3036
    %9575 = vmatpush.bf16.msra.mxu0 %v3028
    %9576 = vmatpush.bf16.msra.mxu0 %v3020
    %9577 = vmatpush.bf16.msra.mxu0 %v3012
    %9578 = vmatpush.bf16.msra.mxu0 %v3004
    %9579 = vmatpush.bf16.msra.mxu0 %v2996
    %9580 = vmatpush.bf16.msra.mxu0 %v2988
    %9581 = vmatpush.bf16.msra.mxu0 %v2980
    %9582 = vmatmul.bf16.gmra.mxu0 %v9380
    %v9583 = vpop.f32.mrf.mxu0
    %v9584 = vadd.f32 0.0, %v9583
    %v9585 = vpop.f32.mrf.mxu0
    %v9586 = vadd.f32 0.0, %v9585
    %9587 = vmatmul.bf16.gmra.mxu0 %v9382
    %v9588 = vpop.f32.mrf.mxu0
    %v9589 = vadd.f32 0.0, %v9588
    %v9590 = vpop.f32.mrf.mxu0
    %v9591 = vadd.f32 0.0, %v9590
    %9592 = vdwg.mxu0
    %9593 = vmatpush.bf16.msra.mxu0 %v3100
    %9594 = vmatpush.bf16.msra.mxu0 %v3092
    %9595 = vmatpush.bf16.msra.mxu0 %v3084
    %9596 = vmatpush.bf16.msra.mxu0 %v3076
    %9597 = vmatpush.bf16.msra.mxu0 %v3068
    %9598 = vmatpush.bf16.msra.mxu0 %v3060
    %9599 = vmatpush.bf16.msra.mxu0 %v3052
    %9600 = vmatpush.bf16.msra.mxu0 %v3044
    %9601 = vmatmul.bf16.gmra.mxu0 %v9381
    %v9602 = vpop.f32.mrf.mxu0
    %v9603 = vadd.f32 %v9584, %v9602
    %v9604 = vpop.f32.mrf.mxu0
    %v9605 = vadd.f32 %v9586, %v9604
    %9606 = vmatmul.bf16.gmra.mxu0 %v9383
    %v9607 = vpop.f32.mrf.mxu0
    %v9608 = vadd.f32 %v9589, %v9607
    %v9609 = vpop.f32.mrf.mxu0
    %v9610 = vadd.f32 %v9591, %v9609
    %9611 = vdwg.mxu0
    %9612 = vmatpush.bf16.msra.mxu0 %v3037
    %9613 = vmatpush.bf16.msra.mxu0 %v3029
    %9614 = vmatpush.bf16.msra.mxu0 %v3021
    %9615 = vmatpush.bf16.msra.mxu0 %v3013
    %9616 = vmatpush.bf16.msra.mxu0 %v3005
    %9617 = vmatpush.bf16.msra.mxu0 %v2997
    %9618 = vmatpush.bf16.msra.mxu0 %v2989
    %9619 = vmatpush.bf16.msra.mxu0 %v2981
    %9620 = vmatmul.bf16.gmra.mxu0 %v9380
    %v9621 = vpop.f32.mrf.mxu0
    %v9622 = vadd.f32 0.0, %v9621
    %v9623 = vpop.f32.mrf.mxu0
    %v9624 = vadd.f32 0.0, %v9623
    %9625 = vmatmul.bf16.gmra.mxu0 %v9382
    %v9626 = vpop.f32.mrf.mxu0
    %v9627 = vadd.f32 0.0, %v9626
    %v9628 = vpop.f32.mrf.mxu0
    %v9629 = vadd.f32 0.0, %v9628
    %9630 = vdwg.mxu0
    %9631 = vmatpush.bf16.msra.mxu0 %v3101
    %9632 = vmatpush.bf16.msra.mxu0 %v3093
    %9633 = vmatpush.bf16.msra.mxu0 %v3085
    %9634 = vmatpush.bf16.msra.mxu0 %v3077
    %9635 = vmatpush.bf16.msra.mxu0 %v3069
    %9636 = vmatpush.bf16.msra.mxu0 %v3061
    %9637 = vmatpush.bf16.msra.mxu0 %v3053
    %9638 = vmatpush.bf16.msra.mxu0 %v3045
    %9639 = vmatmul.bf16.gmra.mxu0 %v9381
    %v9640 = vpop.f32.mrf.mxu0
    %v9641 = vadd.f32 %v9622, %v9640
    %v9642 = vpop.f32.mrf.mxu0
    %v9643 = vadd.f32 %v9624, %v9642
    %9644 = vmatmul.bf16.gmra.mxu0 %v9383
    %v9645 = vpop.f32.mrf.mxu0
    %v9646 = vadd.f32 %v9627, %v9645
    %v9647 = vpop.f32.mrf.mxu0
    %v9648 = vadd.f32 %v9629, %v9647
    %9649 = vdwg.mxu0
    %9650 = vmatpush.bf16.msra.mxu0 %v3038
    %9651 = vmatpush.bf16.msra.mxu0 %v3030
    %9652 = vmatpush.bf16.msra.mxu0 %v3022
    %9653 = vmatpush.bf16.msra.mxu0 %v3014
    %9654 = vmatpush.bf16.msra.mxu0 %v3006
    %9655 = vmatpush.bf16.msra.mxu0 %v2998
    %9656 = vmatpush.bf16.msra.mxu0 %v2990
    %9657 = vmatpush.bf16.msra.mxu0 %v2982
    %9658 = vmatmul.bf16.gmra.mxu0 %v9380
    %v9659 = vpop.f32.mrf.mxu0
    %v9660 = vadd.f32 0.0, %v9659
    %v9661 = vpop.f32.mrf.mxu0
    %v9662 = vadd.f32 0.0, %v9661
    %9663 = vmatmul.bf16.gmra.mxu0 %v9382
    %v9664 = vpop.f32.mrf.mxu0
    %v9665 = vadd.f32 0.0, %v9664
    %v9666 = vpop.f32.mrf.mxu0
    %v9667 = vadd.f32 0.0, %v9666
    %9668 = vdwg.mxu0
    %9669 = vmatpush.bf16.msra.mxu0 %v3102
    %9670 = vmatpush.bf16.msra.mxu0 %v3094
    %9671 = vmatpush.bf16.msra.mxu0 %v3086
    %9672 = vmatpush.bf16.msra.mxu0 %v3078
    %9673 = vmatpush.bf16.msra.mxu0 %v3070
    %9674 = vmatpush.bf16.msra.mxu0 %v3062
    %9675 = vmatpush.bf16.msra.mxu0 %v3054
    %9676 = vmatpush.bf16.msra.mxu0 %v3046
    %9677 = vmatmul.bf16.gmra.mxu0 %v9381
    %v9678 = vpop.f32.mrf.mxu0
    %v9679 = vadd.f32 %v9660, %v9678
    %v9680 = vpop.f32.mrf.mxu0
    %v9681 = vadd.f32 %v9662, %v9680
    %9682 = vmatmul.bf16.gmra.mxu0 %v9383
    %v9683 = vpop.f32.mrf.mxu0
    %v9684 = vadd.f32 %v9665, %v9683
    %v9685 = vpop.f32.mrf.mxu0
    %v9686 = vadd.f32 %v9667, %v9685
    %9687 = vdwg.mxu0
    %v9688 = vadd.f32 %v9348, %v9413
    %v9689 = vadd.f32 %v9349, %v9451
    %v9690 = vadd.f32 %v9350, %v9489
    %v9691 = vadd.f32 %v9351, %v9527
    %v9692 = vadd.f32 %v9352, %v9565
    %v9693 = vadd.f32 %v9353, %v9603
    %v9694 = vadd.f32 %v9354, %v9641
    %v9695 = vadd.f32 %v9355, %v9679
    %v9696 = vadd.f32 %v9356, %v9415
    %v9697 = vadd.f32 %v9357, %v9453
    %v9698 = vadd.f32 %v9358, %v9491
    %v9699 = vadd.f32 %v9359, %v9529
    %v9700 = vadd.f32 %v9360, %v9567
    %v9701 = vadd.f32 %v9361, %v9605
    %v9702 = vadd.f32 %v9362, %v9643
    %v9703 = vadd.f32 %v9363, %v9681
    %v9704 = vadd.f32 %v9364, %v9418
    %v9705 = vadd.f32 %v9365, %v9456
    %v9706 = vadd.f32 %v9366, %v9494
    %v9707 = vadd.f32 %v9367, %v9532
    %v9708 = vadd.f32 %v9368, %v9570
    %v9709 = vadd.f32 %v9369, %v9608
    %v9710 = vadd.f32 %v9370, %v9646
    %v9711 = vadd.f32 %v9371, %v9684
    %v9712 = vadd.f32 %v9372, %v9420
    %v9713 = vadd.f32 %v9373, %v9458
    %v9714 = vadd.f32 %v9374, %v9496
    %v9715 = vadd.f32 %v9375, %v9534
    %v9716 = vadd.f32 %v9376, %v9572
    %v9717 = vadd.f32 %v9377, %v9610
    %v9718 = vadd.f32 %v9378, %v9648
    %v9719 = vadd.f32 %v9379, %v9686
    %v9720 = vxor.u32 %v9688, 2147483648
    %v9721 = vxor.u32 %v9689, 2147483648
    %v9722 = vxor.u32 %v9690, 2147483648
    %v9723 = vxor.u32 %v9691, 2147483648
    %v9724 = vxor.u32 %v9692, 2147483648
    %v9725 = vxor.u32 %v9693, 2147483648
    %v9726 = vxor.u32 %v9696, 2147483648
    %v9727 = vxor.u32 %v9697, 2147483648
    %v9728 = vxor.u32 %v9698, 2147483648
    %v9729 = vxor.u32 %v9699, 2147483648
    %v9730 = vxor.u32 %v9700, 2147483648
    %v9731 = vxor.u32 %v9701, 2147483648
    %v9732 = vxor.u32 %v9704, 2147483648
    %v9733 = vxor.u32 %v9705, 2147483648
    %v9734 = vxor.u32 %v9706, 2147483648
    %v9735 = vxor.u32 %v9707, 2147483648
    %v9736 = vxor.u32 %v9708, 2147483648
    %v9737 = vxor.u32 %v9709, 2147483648
    %v9738 = vxor.u32 %v9712, 2147483648
    %v9739 = vxor.u32 %v9713, 2147483648
    %v9740 = vxor.u32 %v9714, 2147483648
    %v9741 = vxor.u32 %v9715, 2147483648
    %v9742 = vxor.u32 %v9716, 2147483648
    %v9743 = vxor.u32 %v9717, 2147483648
    %v9744 = vmul.f32 %v9720, 1.442695
    %v9745 = vpow.pop %v9744
    %v9746 = vmul.f32 %v9721, 1.442695
    %v9747 = vpow.pop %v9746
    %v9748 = vmul.f32 %v9722, 1.442695
    %v9749 = vpow.pop %v9748
    %v9750 = vmul.f32 %v9723, 1.442695
    %v9751 = vpow.pop %v9750
    %v9752 = vmul.f32 %v9724, 1.442695
    %v9753 = vpow.pop %v9752
    %v9754 = vmul.f32 %v9725, 1.442695
    %v9755 = vpow.pop %v9754
    %v9756 = vmul.f32 %v9726, 1.442695
    %v9757 = vpow.pop %v9756
    %v9758 = vmul.f32 %v9727, 1.442695
    %v9759 = vpow.pop %v9758
    %v9760 = vmul.f32 %v9728, 1.442695
    %v9761 = vpow.pop %v9760
    %v9762 = vmul.f32 %v9729, 1.442695
    %v9763 = vpow.pop %v9762
    %v9764 = vmul.f32 %v9730, 1.442695
    %v9765 = vpow.pop %v9764
    %v9766 = vmul.f32 %v9731, 1.442695
    %v9767 = vpow.pop %v9766
    %v9768 = vmul.f32 %v9732, 1.442695
    %v9769 = vpow.pop %v9768
    %v9770 = vmul.f32 %v9733, 1.442695
    %v9771 = vpow.pop %v9770
    %v9772 = vmul.f32 %v9734, 1.442695
    %v9773 = vpow.pop %v9772
    %v9774 = vmul.f32 %v9735, 1.442695
    %v9775 = vpow.pop %v9774
    %v9776 = vmul.f32 %v9736, 1.442695
    %v9777 = vpow.pop %v9776
    %v9778 = vmul.f32 %v9737, 1.442695
    %v9779 = vpow.pop %v9778
    %v9780 = vmul.f32 %v9738, 1.442695
    %v9781 = vpow.pop %v9780
    %v9782 = vmul.f32 %v9739, 1.442695
    %v9783 = vpow.pop %v9782
    %v9784 = vmul.f32 %v9740, 1.442695
    %v9785 = vpow.pop %v9784
    %v9786 = vmul.f32 %v9741, 1.442695
    %v9787 = vpow.pop %v9786
    %v9788 = vmul.f32 %v9742, 1.442695
    %v9789 = vpow.pop %v9788
    %v9790 = vmul.f32 %v9743, 1.442695
    %v9791 = vpow.pop %v9790
    %v9792 = vadd.f32 %v9745, 1.0
    %v9793 = vadd.f32 %v9747, 1.0
    %v9794 = vadd.f32 %v9749, 1.0
    %v9795 = vadd.f32 %v9751, 1.0
    %v9796 = vadd.f32 %v9753, 1.0
    %v9797 = vadd.f32 %v9755, 1.0
    %v9798 = vadd.f32 %v9757, 1.0
    %v9799 = vadd.f32 %v9759, 1.0
    %v9800 = vadd.f32 %v9761, 1.0
    %v9801 = vadd.f32 %v9763, 1.0
    %v9802 = vadd.f32 %v9765, 1.0
    %v9803 = vadd.f32 %v9767, 1.0
    %v9804 = vadd.f32 %v9769, 1.0
    %v9805 = vadd.f32 %v9771, 1.0
    %v9806 = vadd.f32 %v9773, 1.0
    %v9807 = vadd.f32 %v9775, 1.0
    %v9808 = vadd.f32 %v9777, 1.0
    %v9809 = vadd.f32 %v9779, 1.0
    %v9810 = vadd.f32 %v9781, 1.0
    %v9811 = vadd.f32 %v9783, 1.0
    %v9812 = vadd.f32 %v9785, 1.0
    %v9813 = vadd.f32 %v9787, 1.0
    %v9814 = vadd.f32 %v9789, 1.0
    %v9815 = vadd.f32 %v9791, 1.0
    %v9816 = vrcp.pop %v9792
    %v9817 = vmul.f32 %v9792, %v9816
    %v9818 = vsub.f32 1.0, %v9817
    %v9819 = vmul.f32 %v9816, %v9818
    %v9820 = vadd.f32 %v9816, %v9819
    %vm9821 = vweird.f32 %v9792
    %vm9822 = vweird.f32 %v9816
    %vm9823 = vmor %vm9821, %vm9822
    %v9824 = vsel %vm9823, %v9816, %v9820
    %v9825 = vand.u32 2147483647, %v9792
    %vm9826 = vcmp.eq.f32.partialorder %v9825, 8.507059e+37
    %v9827 = vand.u32 %v9792, 2147483648
    %v9828 = vor.u32 1.1754944e-38, %v9827
    %v9829 = vsel %vm9826, %v9828, %v9824
    %v9830 = vmul.f32 1.0, %v9829
    %v9831 = vrcp.pop %v9793
    %v9832 = vmul.f32 %v9793, %v9831
    %v9833 = vsub.f32 1.0, %v9832
    %v9834 = vmul.f32 %v9831, %v9833
    %v9835 = vadd.f32 %v9831, %v9834
    %vm9836 = vweird.f32 %v9793
    %vm9837 = vweird.f32 %v9831
    %vm9838 = vmor %vm9836, %vm9837
    %v9839 = vsel %vm9838, %v9831, %v9835
    %v9840 = vand.u32 2147483647, %v9793
    %vm9841 = vcmp.eq.f32.partialorder %v9840, 8.507059e+37
    %v9842 = vand.u32 %v9793, 2147483648
    %v9843 = vor.u32 1.1754944e-38, %v9842
    %v9844 = vsel %vm9841, %v9843, %v9839
    %v9845 = vmul.f32 1.0, %v9844
    %v9846 = vrcp.pop %v9794
    %v9847 = vmul.f32 %v9794, %v9846
    %v9848 = vsub.f32 1.0, %v9847
    %v9849 = vmul.f32 %v9846, %v9848
    %v9850 = vadd.f32 %v9846, %v9849
    %vm9851 = vweird.f32 %v9794
    %vm9852 = vweird.f32 %v9846
    %vm9853 = vmor %vm9851, %vm9852
    %v9854 = vsel %vm9853, %v9846, %v9850
    %v9855 = vand.u32 2147483647, %v9794
    %vm9856 = vcmp.eq.f32.partialorder %v9855, 8.507059e+37
    %v9857 = vand.u32 %v9794, 2147483648
    %v9858 = vor.u32 1.1754944e-38, %v9857
    %v9859 = vsel %vm9856, %v9858, %v9854
    %v9860 = vmul.f32 1.0, %v9859
    %v9861 = vrcp.pop %v9795
    %v9862 = vmul.f32 %v9795, %v9861
    %v9863 = vsub.f32 1.0, %v9862
    %v9864 = vmul.f32 %v9861, %v9863
    %v9865 = vadd.f32 %v9861, %v9864
    %vm9866 = vweird.f32 %v9795
    %vm9867 = vweird.f32 %v9861
    %vm9868 = vmor %vm9866, %vm9867
    %v9869 = vsel %vm9868, %v9861, %v9865
    %v9870 = vand.u32 2147483647, %v9795
    %vm9871 = vcmp.eq.f32.partialorder %v9870, 8.507059e+37
    %v9872 = vand.u32 %v9795, 2147483648
    %v9873 = vor.u32 1.1754944e-38, %v9872
    %v9874 = vsel %vm9871, %v9873, %v9869
    %v9875 = vmul.f32 1.0, %v9874
    %v9876 = vrcp.pop %v9796
    %v9877 = vmul.f32 %v9796, %v9876
    %v9878 = vsub.f32 1.0, %v9877
    %v9879 = vmul.f32 %v9876, %v9878
    %v9880 = vadd.f32 %v9876, %v9879
    %vm9881 = vweird.f32 %v9796
    %vm9882 = vweird.f32 %v9876
    %vm9883 = vmor %vm9881, %vm9882
    %v9884 = vsel %vm9883, %v9876, %v9880
    %v9885 = vand.u32 2147483647, %v9796
    %vm9886 = vcmp.eq.f32.partialorder %v9885, 8.507059e+37
    %v9887 = vand.u32 %v9796, 2147483648
    %v9888 = vor.u32 1.1754944e-38, %v9887
    %v9889 = vsel %vm9886, %v9888, %v9884
    %v9890 = vmul.f32 1.0, %v9889
    %v9891 = vrcp.pop %v9797
    %v9892 = vmul.f32 %v9797, %v9891
    %v9893 = vsub.f32 1.0, %v9892
    %v9894 = vmul.f32 %v9891, %v9893
    %v9895 = vadd.f32 %v9891, %v9894
    %vm9896 = vweird.f32 %v9797
    %vm9897 = vweird.f32 %v9891
    %vm9898 = vmor %vm9896, %vm9897
    %v9899 = vsel %vm9898, %v9891, %v9895
    %v9900 = vand.u32 2147483647, %v9797
    %vm9901 = vcmp.eq.f32.partialorder %v9900, 8.507059e+37
    %v9902 = vand.u32 %v9797, 2147483648
    %v9903 = vor.u32 1.1754944e-38, %v9902
    %v9904 = vsel %vm9901, %v9903, %v9899
    %v9905 = vmul.f32 1.0, %v9904
    %v9906 = vrcp.pop %v9798
    %v9907 = vmul.f32 %v9798, %v9906
    %v9908 = vsub.f32 1.0, %v9907
    %v9909 = vmul.f32 %v9906, %v9908
    %v9910 = vadd.f32 %v9906, %v9909
    %vm9911 = vweird.f32 %v9798
    %vm9912 = vweird.f32 %v9906
    %vm9913 = vmor %vm9911, %vm9912
    %v9914 = vsel %vm9913, %v9906, %v9910
    %v9915 = vand.u32 2147483647, %v9798
    %vm9916 = vcmp.eq.f32.partialorder %v9915, 8.507059e+37
    %v9917 = vand.u32 %v9798, 2147483648
    %v9918 = vor.u32 1.1754944e-38, %v9917
    %v9919 = vsel %vm9916, %v9918, %v9914
    %v9920 = vmul.f32 1.0, %v9919
    %v9921 = vrcp.pop %v9799
    %v9922 = vmul.f32 %v9799, %v9921
    %v9923 = vsub.f32 1.0, %v9922
    %v9924 = vmul.f32 %v9921, %v9923
    %v9925 = vadd.f32 %v9921, %v9924
    %vm9926 = vweird.f32 %v9799
    %vm9927 = vweird.f32 %v9921
    %vm9928 = vmor %vm9926, %vm9927
    %v9929 = vsel %vm9928, %v9921, %v9925
    %v9930 = vand.u32 2147483647, %v9799
    %vm9931 = vcmp.eq.f32.partialorder %v9930, 8.507059e+37
    %v9932 = vand.u32 %v9799, 2147483648
    %v9933 = vor.u32 1.1754944e-38, %v9932
    %v9934 = vsel %vm9931, %v9933, %v9929
    %v9935 = vmul.f32 1.0, %v9934
    %v9936 = vrcp.pop %v9800
    %v9937 = vmul.f32 %v9800, %v9936
    %v9938 = vsub.f32 1.0, %v9937
    %v9939 = vmul.f32 %v9936, %v9938
    %v9940 = vadd.f32 %v9936, %v9939
    %vm9941 = vweird.f32 %v9800
    %vm9942 = vweird.f32 %v9936
    %vm9943 = vmor %vm9941, %vm9942
    %v9944 = vsel %vm9943, %v9936, %v9940
    %v9945 = vand.u32 2147483647, %v9800
    %vm9946 = vcmp.eq.f32.partialorder %v9945, 8.507059e+37
    %v9947 = vand.u32 %v9800, 2147483648
    %v9948 = vor.u32 1.1754944e-38, %v9947
    %v9949 = vsel %vm9946, %v9948, %v9944
    %v9950 = vmul.f32 1.0, %v9949
    %v9951 = vrcp.pop %v9801
    %v9952 = vmul.f32 %v9801, %v9951
    %v9953 = vsub.f32 1.0, %v9952
    %v9954 = vmul.f32 %v9951, %v9953
    %v9955 = vadd.f32 %v9951, %v9954
    %vm9956 = vweird.f32 %v9801
    %vm9957 = vweird.f32 %v9951
    %vm9958 = vmor %vm9956, %vm9957
    %v9959 = vsel %vm9958, %v9951, %v9955
    %v9960 = vand.u32 2147483647, %v9801
    %vm9961 = vcmp.eq.f32.partialorder %v9960, 8.507059e+37
    %v9962 = vand.u32 %v9801, 2147483648
    %v9963 = vor.u32 1.1754944e-38, %v9962
    %v9964 = vsel %vm9961, %v9963, %v9959
    %v9965 = vmul.f32 1.0, %v9964
    %v9966 = vrcp.pop %v9802
    %v9967 = vmul.f32 %v9802, %v9966
    %v9968 = vsub.f32 1.0, %v9967
    %v9969 = vmul.f32 %v9966, %v9968
    %v9970 = vadd.f32 %v9966, %v9969
    %vm9971 = vweird.f32 %v9802
    %vm9972 = vweird.f32 %v9966
    %vm9973 = vmor %vm9971, %vm9972
    %v9974 = vsel %vm9973, %v9966, %v9970
    %v9975 = vand.u32 2147483647, %v9802
    %vm9976 = vcmp.eq.f32.partialorder %v9975, 8.507059e+37
    %v9977 = vand.u32 %v9802, 2147483648
    %v9978 = vor.u32 1.1754944e-38, %v9977
    %v9979 = vsel %vm9976, %v9978, %v9974
    %v9980 = vmul.f32 1.0, %v9979
    %v9981 = vrcp.pop %v9803
    %v9982 = vmul.f32 %v9803, %v9981
    %v9983 = vsub.f32 1.0, %v9982
    %v9984 = vmul.f32 %v9981, %v9983
    %v9985 = vadd.f32 %v9981, %v9984
    %vm9986 = vweird.f32 %v9803
    %vm9987 = vweird.f32 %v9981
    %vm9988 = vmor %vm9986, %vm9987
    %v9989 = vsel %vm9988, %v9981, %v9985
    %v9990 = vand.u32 2147483647, %v9803
    %vm9991 = vcmp.eq.f32.partialorder %v9990, 8.507059e+37
    %v9992 = vand.u32 %v9803, 2147483648
    %v9993 = vor.u32 1.1754944e-38, %v9992
    %v9994 = vsel %vm9991, %v9993, %v9989
    %v9995 = vmul.f32 1.0, %v9994
    %v9996 = vrcp.pop %v9804
    %v9997 = vmul.f32 %v9804, %v9996
    %v9998 = vsub.f32 1.0, %v9997
    %v9999 = vmul.f32 %v9996, %v9998
    %v10000 = vadd.f32 %v9996, %v9999
    %vm10001 = vweird.f32 %v9804
    %vm10002 = vweird.f32 %v9996
    %vm10003 = vmor %vm10001, %vm10002
    %v10004 = vsel %vm10003, %v9996, %v10000
    %v10005 = vand.u32 2147483647, %v9804
    %vm10006 = vcmp.eq.f32.partialorder %v10005, 8.507059e+37
    %v10007 = vand.u32 %v9804, 2147483648
    %v10008 = vor.u32 1.1754944e-38, %v10007
    %v10009 = vsel %vm10006, %v10008, %v10004
    %v10010 = vmul.f32 1.0, %v10009
    %v10011 = vrcp.pop %v9805
    %v10012 = vmul.f32 %v9805, %v10011
    %v10013 = vsub.f32 1.0, %v10012
    %v10014 = vmul.f32 %v10011, %v10013
    %v10015 = vadd.f32 %v10011, %v10014
    %vm10016 = vweird.f32 %v9805
    %vm10017 = vweird.f32 %v10011
    %vm10018 = vmor %vm10016, %vm10017
    %v10019 = vsel %vm10018, %v10011, %v10015
    %v10020 = vand.u32 2147483647, %v9805
    %vm10021 = vcmp.eq.f32.partialorder %v10020, 8.507059e+37
    %v10022 = vand.u32 %v9805, 2147483648
    %v10023 = vor.u32 1.1754944e-38, %v10022
    %v10024 = vsel %vm10021, %v10023, %v10019
    %v10025 = vmul.f32 1.0, %v10024
    %v10026 = vrcp.pop %v9806
    %v10027 = vmul.f32 %v9806, %v10026
    %v10028 = vsub.f32 1.0, %v10027
    %v10029 = vmul.f32 %v10026, %v10028
    %v10030 = vadd.f32 %v10026, %v10029
    %vm10031 = vweird.f32 %v9806
    %vm10032 = vweird.f32 %v10026
    %vm10033 = vmor %vm10031, %vm10032
    %v10034 = vsel %vm10033, %v10026, %v10030
    %v10035 = vand.u32 2147483647, %v9806
    %vm10036 = vcmp.eq.f32.partialorder %v10035, 8.507059e+37
    %v10037 = vand.u32 %v9806, 2147483648
    %v10038 = vor.u32 1.1754944e-38, %v10037
    %v10039 = vsel %vm10036, %v10038, %v10034
    %v10040 = vmul.f32 1.0, %v10039
    %v10041 = vrcp.pop %v9807
    %v10042 = vmul.f32 %v9807, %v10041
    %v10043 = vsub.f32 1.0, %v10042
    %v10044 = vmul.f32 %v10041, %v10043
    %v10045 = vadd.f32 %v10041, %v10044
    %vm10046 = vweird.f32 %v9807
    %vm10047 = vweird.f32 %v10041
    %vm10048 = vmor %vm10046, %vm10047
    %v10049 = vsel %vm10048, %v10041, %v10045
    %v10050 = vand.u32 2147483647, %v9807
    %vm10051 = vcmp.eq.f32.partialorder %v10050, 8.507059e+37
    %v10052 = vand.u32 %v9807, 2147483648
    %v10053 = vor.u32 1.1754944e-38, %v10052
    %v10054 = vsel %vm10051, %v10053, %v10049
    %v10055 = vmul.f32 1.0, %v10054
    %v10056 = vrcp.pop %v9808
    %v10057 = vmul.f32 %v9808, %v10056
    %v10058 = vsub.f32 1.0, %v10057
    %v10059 = vmul.f32 %v10056, %v10058
    %v10060 = vadd.f32 %v10056, %v10059
    %vm10061 = vweird.f32 %v9808
    %vm10062 = vweird.f32 %v10056
    %vm10063 = vmor %vm10061, %vm10062
    %v10064 = vsel %vm10063, %v10056, %v10060
    %v10065 = vand.u32 2147483647, %v9808
    %vm10066 = vcmp.eq.f32.partialorder %v10065, 8.507059e+37
    %v10067 = vand.u32 %v9808, 2147483648
    %v10068 = vor.u32 1.1754944e-38, %v10067
    %v10069 = vsel %vm10066, %v10068, %v10064
    %v10070 = vmul.f32 1.0, %v10069
    %v10071 = vrcp.pop %v9809
    %v10072 = vmul.f32 %v9809, %v10071
    %v10073 = vsub.f32 1.0, %v10072
    %v10074 = vmul.f32 %v10071, %v10073
    %v10075 = vadd.f32 %v10071, %v10074
    %vm10076 = vweird.f32 %v9809
    %vm10077 = vweird.f32 %v10071
    %vm10078 = vmor %vm10076, %vm10077
    %v10079 = vsel %vm10078, %v10071, %v10075
    %v10080 = vand.u32 2147483647, %v9809
    %vm10081 = vcmp.eq.f32.partialorder %v10080, 8.507059e+37
    %v10082 = vand.u32 %v9809, 2147483648
    %v10083 = vor.u32 1.1754944e-38, %v10082
    %v10084 = vsel %vm10081, %v10083, %v10079
    %v10085 = vmul.f32 1.0, %v10084
    %v10086 = vrcp.pop %v9810
    %v10087 = vmul.f32 %v9810, %v10086
    %v10088 = vsub.f32 1.0, %v10087
    %v10089 = vmul.f32 %v10086, %v10088
    %v10090 = vadd.f32 %v10086, %v10089
    %vm10091 = vweird.f32 %v9810
    %vm10092 = vweird.f32 %v10086
    %vm10093 = vmor %vm10091, %vm10092
    %v10094 = vsel %vm10093, %v10086, %v10090
    %v10095 = vand.u32 2147483647, %v9810
    %vm10096 = vcmp.eq.f32.partialorder %v10095, 8.507059e+37
    %v10097 = vand.u32 %v9810, 2147483648
    %v10098 = vor.u32 1.1754944e-38, %v10097
    %v10099 = vsel %vm10096, %v10098, %v10094
    %v10100 = vmul.f32 1.0, %v10099
    %v10101 = vrcp.pop %v9811
    %v10102 = vmul.f32 %v9811, %v10101
    %v10103 = vsub.f32 1.0, %v10102
    %v10104 = vmul.f32 %v10101, %v10103
    %v10105 = vadd.f32 %v10101, %v10104
    %vm10106 = vweird.f32 %v9811
    %vm10107 = vweird.f32 %v10101
    %vm10108 = vmor %vm10106, %vm10107
    %v10109 = vsel %vm10108, %v10101, %v10105
    %v10110 = vand.u32 2147483647, %v9811
    %vm10111 = vcmp.eq.f32.partialorder %v10110, 8.507059e+37
    %v10112 = vand.u32 %v9811, 2147483648
    %v10113 = vor.u32 1.1754944e-38, %v10112
    %v10114 = vsel %vm10111, %v10113, %v10109
    %v10115 = vmul.f32 1.0, %v10114
    %v10116 = vrcp.pop %v9812
    %v10117 = vmul.f32 %v9812, %v10116
    %v10118 = vsub.f32 1.0, %v10117
    %v10119 = vmul.f32 %v10116, %v10118
    %v10120 = vadd.f32 %v10116, %v10119
    %vm10121 = vweird.f32 %v9812
    %vm10122 = vweird.f32 %v10116
    %vm10123 = vmor %vm10121, %vm10122
    %v10124 = vsel %vm10123, %v10116, %v10120
    %v10125 = vand.u32 2147483647, %v9812
    %vm10126 = vcmp.eq.f32.partialorder %v10125, 8.507059e+37
    %v10127 = vand.u32 %v9812, 2147483648
    %v10128 = vor.u32 1.1754944e-38, %v10127
    %v10129 = vsel %vm10126, %v10128, %v10124
    %v10130 = vmul.f32 1.0, %v10129
    %v10131 = vrcp.pop %v9813
    %v10132 = vmul.f32 %v9813, %v10131
    %v10133 = vsub.f32 1.0, %v10132
    %v10134 = vmul.f32 %v10131, %v10133
    %v10135 = vadd.f32 %v10131, %v10134
    %vm10136 = vweird.f32 %v9813
    %vm10137 = vweird.f32 %v10131
    %vm10138 = vmor %vm10136, %vm10137
    %v10139 = vsel %vm10138, %v10131, %v10135
    %v10140 = vand.u32 2147483647, %v9813
    %vm10141 = vcmp.eq.f32.partialorder %v10140, 8.507059e+37
    %v10142 = vand.u32 %v9813, 2147483648
    %v10143 = vor.u32 1.1754944e-38, %v10142
    %v10144 = vsel %vm10141, %v10143, %v10139
    %v10145 = vmul.f32 1.0, %v10144
    %v10146 = vrcp.pop %v9814
    %v10147 = vmul.f32 %v9814, %v10146
    %v10148 = vsub.f32 1.0, %v10147
    %v10149 = vmul.f32 %v10146, %v10148
    %v10150 = vadd.f32 %v10146, %v10149
    %vm10151 = vweird.f32 %v9814
    %vm10152 = vweird.f32 %v10146
    %vm10153 = vmor %vm10151, %vm10152
    %v10154 = vsel %vm10153, %v10146, %v10150
    %v10155 = vand.u32 2147483647, %v9814
    %vm10156 = vcmp.eq.f32.partialorder %v10155, 8.507059e+37
    %v10157 = vand.u32 %v9814, 2147483648
    %v10158 = vor.u32 1.1754944e-38, %v10157
    %v10159 = vsel %vm10156, %v10158, %v10154
    %v10160 = vmul.f32 1.0, %v10159
    %v10161 = vrcp.pop %v9815
    %v10162 = vmul.f32 %v9815, %v10161
    %v10163 = vsub.f32 1.0, %v10162
    %v10164 = vmul.f32 %v10161, %v10163
    %v10165 = vadd.f32 %v10161, %v10164
    %vm10166 = vweird.f32 %v9815
    %vm10167 = vweird.f32 %v10161
    %vm10168 = vmor %vm10166, %vm10167
    %v10169 = vsel %vm10168, %v10161, %v10165
    %v10170 = vand.u32 2147483647, %v9815
    %vm10171 = vcmp.eq.f32.partialorder %v10170, 8.507059e+37
    %v10172 = vand.u32 %v9815, 2147483648
    %v10173 = vor.u32 1.1754944e-38, %v10172
    %v10174 = vsel %vm10171, %v10173, %v10169
    %v10175 = vmul.f32 1.0, %v10174
    %v10176 = vtanh.pop %v9694
    %v10177 = vtanh.pop %v9695
    %v10178 = vtanh.pop %v9702
    %v10179 = vtanh.pop %v9703
    %v10180 = vtanh.pop %v9710
    %v10181 = vtanh.pop %v9711
    %v10182 = vtanh.pop %v9718
    %v10183 = vtanh.pop %v9719
    %v10184 = vmul.f32 %v9860, %v9321
    %v10185 = vmul.f32 %v9875, %v9322
    %v10186 = vmul.f32 %v9950, %v9323
    %v10187 = vmul.f32 %v9965, %v9324
    %v10188 = vmul.f32 %v10040, %v9325
    %v10189 = vmul.f32 %v10055, %v9326
    %v10190 = vmul.f32 %v10130, %v9327
    %v10191 = vmul.f32 %v10145, %v9328
    %v10192 = vmul.f32 %v9830, %v10176
    %v10193 = vmul.f32 %v9845, %v10177
    %v10194 = vmul.f32 %v9920, %v10178
    %v10195 = vmul.f32 %v9935, %v10179
    %v10196 = vmul.f32 %v10010, %v10180
    %v10197 = vmul.f32 %v10025, %v10181
    %v10198 = vmul.f32 %v10100, %v10182
    %v10199 = vmul.f32 %v10115, %v10183
    %v10200 = vadd.f32 %v10184, %v10192
    %v10201 = vadd.f32 %v10185, %v10193
    %v10202 = vadd.f32 %v10186, %v10194
    %v10203 = vadd.f32 %v10187, %v10195
    %v10204 = vadd.f32 %v10188, %v10196
    %v10205 = vadd.f32 %v10189, %v10197
    %v10206 = vadd.f32 %v10190, %v10198
    %v10207 = vadd.f32 %v10191, %v10199
    %v10208 = vtanh.pop %v10200
    %v10209 = vtanh.pop %v10201
    %v10210 = vtanh.pop %v10202
    %v10211 = vtanh.pop %v10203
    %v10212 = vtanh.pop %v10204
    %v10213 = vtanh.pop %v10205
    %v10214 = vtanh.pop %v10206
    %v10215 = vtanh.pop %v10207
    %v10216 = vmul.f32 %v9890, %v10208
    %v10217 = vmul.f32 %v9905, %v10209
    %v10218 = vmul.f32 %v9980, %v10210
    %v10219 = vmul.f32 %v9995, %v10211
    %v10220 = vmul.f32 %v10070, %v10212
    %v10221 = vmul.f32 %v10085, %v10213
    %v10222 = vmul.f32 %v10160, %v10214
    %v10223 = vmul.f32 %v10175, %v10215
    %s10224 = smul.u32 %s2424, 2
    %s10225 = sshll.u32 %s10224, 4
    %10226 = dma.done %s296, %s10225
    %v10227 = vpack.c.bf16 %v10218, %v10216
    %v10228 = vpack.c.bf16 %v10219, %v10217
    %v10229 = vpack.c.bf16 %v10222, %v10220
    %v10230 = vpack.c.bf16 %v10223, %v10221
    %v10231 = vld [vmem:[#allocation4] sm:$0xff]
    %v10232 = vld [vmem:[#allocation4 + $0x8] sm:$0xff]
    %v10233 = vld [vmem:[#allocation4 + $0x10] sm:$0xff]
    %v10234 = vld [vmem:[#allocation4 + $0x18] sm:$0xff]
    %v10235 = vld [vmem:[#allocation4 + $0x20] sm:$0xff]
    %v10236 = vld [vmem:[#allocation4 + $0x28] sm:$0xff]
    %v10237 = vld [vmem:[#allocation4 + $0x30] sm:$0xff]
    %v10238 = vld [vmem:[#allocation4 + $0x38] sm:$0xff]
    %v10239 = vld [vmem:[#allocation4 + $0x40] sm:$0xff]
    %v10240 = vld [vmem:[#allocation4 + $0x48] sm:$0xff]
    %v10241 = vld [vmem:[#allocation4 + $0x50] sm:$0xff]
    %v10242 = vld [vmem:[#allocation4 + $0x58] sm:$0xff]
    %v10243 = vld [vmem:[#allocation4 + $0x60] sm:$0xff]
    %v10244 = vld [vmem:[#allocation4 + $0x68] sm:$0xff]
    %v10245 = vld [vmem:[#allocation4 + $0x70] sm:$0xff]
    %v10246 = vld [vmem:[#allocation4 + $0x78] sm:$0xff]
    %v10247 = vld [vmem:[#allocation4 + $0x80] sm:$0xff]
    %v10248 = vld [vmem:[#allocation4 + $0x88] sm:$0xff]
    %v10249 = vld [vmem:[#allocation4 + $0x90] sm:$0xff]
    %v10250 = vld [vmem:[#allocation4 + $0x98] sm:$0xff]
    %v10251 = vld [vmem:[#allocation4 + $0xa0] sm:$0xff]
    %v10252 = vld [vmem:[#allocation4 + $0xa8] sm:$0xff]
    %v10253 = vld [vmem:[#allocation4 + $0xb0] sm:$0xff]
    %v10254 = vld [vmem:[#allocation4 + $0xb8] sm:$0xff]
    %v10255 = vld [vmem:[#allocation4 + $0xc0] sm:$0xff]
    %v10256 = vld [vmem:[#allocation4 + $0xc8] sm:$0xff]
    %v10257 = vld [vmem:[#allocation4 + $0xd0] sm:$0xff]
    %v10258 = vld [vmem:[#allocation4 + $0xd8] sm:$0xff]
    %v10259 = vld [vmem:[#allocation4 + $0xe0] sm:$0xff]
    %v10260 = vld [vmem:[#allocation4 + $0xe8] sm:$0xff]
    %v10261 = vld [vmem:[#allocation4 + $0xf0] sm:$0xff]
    %v10262 = vld [vmem:[#allocation4 + $0xf8] sm:$0xff]
    %v10263 = vld [vmem:[%s4] sm:$0x3]
    %v10265 = vperm.slane %v10263, 0
    %v10266 = vperm.slane %v10263, 1
    %v10301 = vunpack.c.l.b16 %v10231
    %v10302 = vunpack.c.h.b16 %v10231
    %v10303 = vunpack.c.l.b16 %v10232
    %v10304 = vunpack.c.h.b16 %v10232
    %v10305 = vunpack.c.l.b16 %v10233
    %v10306 = vunpack.c.h.b16 %v10233
    %v10307 = vunpack.c.l.b16 %v10234
    %v10308 = vunpack.c.h.b16 %v10234
    %v10309 = vunpack.c.l.b16 %v10235
    %v10310 = vunpack.c.h.b16 %v10235
    %v10311 = vunpack.c.l.b16 %v10236
    %v10312 = vunpack.c.h.b16 %v10236
    %v10313 = vunpack.c.l.b16 %v10237
    %v10314 = vunpack.c.h.b16 %v10237
    %v10315 = vunpack.c.l.b16 %v10238
    %v10316 = vunpack.c.h.b16 %v10238
    %v10317 = vunpack.c.l.b16 %v10239
    %v10318 = vunpack.c.h.b16 %v10239
    %v10319 = vunpack.c.l.b16 %v10240
    %v10320 = vunpack.c.h.b16 %v10240
    %v10321 = vunpack.c.l.b16 %v10241
    %v10322 = vunpack.c.h.b16 %v10241
    %v10323 = vunpack.c.l.b16 %v10242
    %v10324 = vunpack.c.h.b16 %v10242
    %v10325 = vunpack.c.l.b16 %v10243
    %v10326 = vunpack.c.h.b16 %v10243
    %v10327 = vunpack.c.l.b16 %v10244
    %v10328 = vunpack.c.h.b16 %v10244
    %v10329 = vunpack.c.l.b16 %v10245
    %v10330 = vunpack.c.h.b16 %v10245
    %v10331 = vunpack.c.l.b16 %v10246
    %v10332 = vunpack.c.h.b16 %v10246
    %v10333 = vunpack.c.l.b16 %v10247
    %v10334 = vunpack.c.h.b16 %v10247
    %v10335 = vunpack.c.l.b16 %v10248
    %v10336 = vunpack.c.h.b16 %v10248
    %v10337 = vunpack.c.l.b16 %v10249
    %v10338 = vunpack.c.h.b16 %v10249
    %v10339 = vunpack.c.l.b16 %v10250
    %v10340 = vunpack.c.h.b16 %v10250
    %v10341 = vunpack.c.l.b16 %v10251
    %v10342 = vunpack.c.h.b16 %v10251
    %v10343 = vunpack.c.l.b16 %v10252
    %v10344 = vunpack.c.h.b16 %v10252
    %v10345 = vunpack.c.l.b16 %v10253
    %v10346 = vunpack.c.h.b16 %v10253
    %v10347 = vunpack.c.l.b16 %v10254
    %v10348 = vunpack.c.h.b16 %v10254
    %v10349 = vunpack.c.l.b16 %v10255
    %v10350 = vunpack.c.h.b16 %v10255
    %v10351 = vunpack.c.l.b16 %v10256
    %v10352 = vunpack.c.h.b16 %v10256
    %v10353 = vunpack.c.l.b16 %v10257
    %v10354 = vunpack.c.h.b16 %v10257
    %v10355 = vunpack.c.l.b16 %v10258
    %v10356 = vunpack.c.h.b16 %v10258
    %v10357 = vunpack.c.l.b16 %v10259
    %v10358 = vunpack.c.h.b16 %v10259
    %v10359 = vunpack.c.l.b16 %v10260
    %v10360 = vunpack.c.h.b16 %v10260
    %v10361 = vunpack.c.l.b16 %v10261
    %v10362 = vunpack.c.h.b16 %v10261
    %v10363 = vunpack.c.l.b16 %v10262
    %v10364 = vunpack.c.h.b16 %v10262
    %v10365 = vpack.c.b16 %v10303, %v10301
    %v10366 = vpack.c.b16 %v10304, %v10302
    %v10367 = vpack.c.b16 %v10307, %v10305
    %v10368 = vpack.c.b16 %v10308, %v10306
    %v10369 = vpack.c.b16 %v10311, %v10309
    %v10370 = vpack.c.b16 %v10312, %v10310
    %v10371 = vpack.c.b16 %v10315, %v10313
    %v10372 = vpack.c.b16 %v10316, %v10314
    %v10373 = vpack.c.b16 %v10319, %v10317
    %v10374 = vpack.c.b16 %v10320, %v10318
    %v10375 = vpack.c.b16 %v10323, %v10321
    %v10376 = vpack.c.b16 %v10324, %v10322
    %v10377 = vpack.c.b16 %v10327, %v10325
    %v10378 = vpack.c.b16 %v10328, %v10326
    %v10379 = vpack.c.b16 %v10331, %v10329
    %v10380 = vpack.c.b16 %v10332, %v10330
    %v10381 = vpack.c.b16 %v10335, %v10333
    %v10382 = vpack.c.b16 %v10336, %v10334
    %v10383 = vpack.c.b16 %v10339, %v10337
    %v10384 = vpack.c.b16 %v10340, %v10338
    %v10385 = vpack.c.b16 %v10343, %v10341
    %v10386 = vpack.c.b16 %v10344, %v10342
    %v10387 = vpack.c.b16 %v10347, %v10345
    %v10388 = vpack.c.b16 %v10348, %v10346
    %v10389 = vpack.c.b16 %v10351, %v10349
    %v10390 = vpack.c.b16 %v10352, %v10350
    %v10391 = vpack.c.b16 %v10355, %v10353
    %v10392 = vpack.c.b16 %v10356, %v10354
    %v10393 = vpack.c.b16 %v10359, %v10357
    %v10394 = vpack.c.b16 %v10360, %v10358
    %v10395 = vpack.c.b16 %v10363, %v10361
    %v10396 = vpack.c.b16 %v10364, %v10362
    %10429 = vmatpush.bf16.msra.mxu0 %v10379
    %10430 = vmatpush.bf16.msra.mxu0 %v10377
    %10431 = vmatpush.bf16.msra.mxu0 %v10375
    %10432 = vmatpush.bf16.msra.mxu0 %v10373
    %10433 = vmatpush.bf16.msra.mxu0 %v10371
    %10434 = vmatpush.bf16.msra.mxu0 %v10369
    %10435 = vmatpush.bf16.msra.mxu0 %v10367
    %10436 = vmatpush.bf16.msra.mxu0 %v10365
    %10437 = vmatmul.bf16.gmra.mxu0 %v10227
    %v10438 = vpop.f32.mrf.mxu0
    %v10439 = vadd.f32 %v10265, %v10438
    %v10440 = vpop.f32.mrf.mxu0
    %v10441 = vadd.f32 %v10265, %v10440
    %10442 = vmatmul.bf16.gmra.mxu0 %v10229
    %v10443 = vpop.f32.mrf.mxu0
    %v10444 = vadd.f32 %v10265, %v10443
    %v10445 = vpop.f32.mrf.mxu0
    %v10446 = vadd.f32 %v10265, %v10445
    %10447 = vdwg.mxu0
    %10448 = vmatpush.bf16.msra.mxu0 %v10395
    %10449 = vmatpush.bf16.msra.mxu0 %v10393
    %10450 = vmatpush.bf16.msra.mxu0 %v10391
    %10451 = vmatpush.bf16.msra.mxu0 %v10389
    %10452 = vmatpush.bf16.msra.mxu0 %v10387
    %10453 = vmatpush.bf16.msra.mxu0 %v10385
    %10454 = vmatpush.bf16.msra.mxu0 %v10383
    %10455 = vmatpush.bf16.msra.mxu0 %v10381
    %10456 = vmatmul.bf16.gmra.mxu0 %v10228
    %v10457 = vpop.f32.mrf.mxu0
    %v10458 = vadd.f32 %v10439, %v10457
    %v10459 = vpop.f32.mrf.mxu0
    %v10460 = vadd.f32 %v10441, %v10459
    %10461 = vmatmul.bf16.gmra.mxu0 %v10230
    %v10462 = vpop.f32.mrf.mxu0
    %v10463 = vadd.f32 %v10444, %v10462
    %v10464 = vpop.f32.mrf.mxu0
    %v10465 = vadd.f32 %v10446, %v10464
    %10466 = vdwg.mxu0
    %10467 = vmatpush.bf16.msra.mxu0 %v10380
    %10468 = vmatpush.bf16.msra.mxu0 %v10378
    %10469 = vmatpush.bf16.msra.mxu0 %v10376
    %10470 = vmatpush.bf16.msra.mxu0 %v10374
    %10471 = vmatpush.bf16.msra.mxu0 %v10372
    %10472 = vmatpush.bf16.msra.mxu0 %v10370
    %10473 = vmatpush.bf16.msra.mxu0 %v10368
    %10474 = vmatpush.bf16.msra.mxu0 %v10366
    %10475 = vmatmul.bf16.gmra.mxu0 %v10227
    %v10476 = vpop.f32.mrf.mxu0
    %v10477 = vadd.f32 %v10266, %v10476
    %v10478 = vpop.f32.mrf.mxu0
    %v10479 = vadd.f32 %v10266, %v10478
    %10480 = vmatmul.bf16.gmra.mxu0 %v10229
    %v10481 = vpop.f32.mrf.mxu0
    %v10482 = vadd.f32 %v10266, %v10481
    %v10483 = vpop.f32.mrf.mxu0
    %v10484 = vadd.f32 %v10266, %v10483
    %10485 = vdwg.mxu0
    %10486 = vmatpush.bf16.msra.mxu0 %v10396
    %10487 = vmatpush.bf16.msra.mxu0 %v10394
    %10488 = vmatpush.bf16.msra.mxu0 %v10392
    %10489 = vmatpush.bf16.msra.mxu0 %v10390
    %10490 = vmatpush.bf16.msra.mxu0 %v10388
    %10491 = vmatpush.bf16.msra.mxu0 %v10386
    %10492 = vmatpush.bf16.msra.mxu0 %v10384
    %10493 = vmatpush.bf16.msra.mxu0 %v10382
    %10494 = vmatmul.bf16.gmra.mxu0 %v10228
    %v10495 = vpop.f32.mrf.mxu0
    %v10496 = vadd.f32 %v10477, %v10495
    %v10497 = vpop.f32.mrf.mxu0
    %v10498 = vadd.f32 %v10479, %v10497
    %10499 = vmatmul.bf16.gmra.mxu0 %v10230
    %v10500 = vpop.f32.mrf.mxu0
    %v10501 = vadd.f32 %v10482, %v10500
    %v10502 = vpop.f32.mrf.mxu0
    %v10503 = vadd.f32 %v10484, %v10502
    %10504 = vdwg.mxu0
    %10505 = vst [vmem:[#allocation6] sm:$0xff] %v10458
    %10506 = vst [vmem:[#allocation6 + $0x8] sm:$0xff] %v10496
    %10507 = vst [vmem:[#allocation6 + $0x10] sm:$0xff] %v10460
    %10508 = vst [vmem:[#allocation6 + $0x18] sm:$0xff] %v10498
    %10509 = vst [vmem:[#allocation6 + $0x20] sm:$0xff] %v10463
    %10510 = vst [vmem:[#allocation6 + $0x28] sm:$0xff] %v10501
    %10511 = vst [vmem:[#allocation6 + $0x30] sm:$0xff] %v10465
    %10512 = vst [vmem:[#allocation6 + $0x38] sm:$0xff] %v10503
    // Predicated region
    $region60: #{lstm_language_model.1} parent=1 // pred_check
      _
    $region61: #{lstm_language_model.1} parent=1 // pred_check_branch
      %10514 = sbr.rel (0) target = $region63
    $region62: #{lstm_language_model.1} parent=1 // pred_region
      %10516 = vsyncadd [#allocation7], 0
      %s10517 = sshll.u32 [#allocation6], 4
      %s10518 = int_to_ptr.vmem [resolvable:$true] %s10517
      %s10519 = sshll.u32 %s7, 4
      %s10520 = int_to_ptr.hbm [resolvable:$true] %s10519
      %10525 = dma.vmem_to_hbm [thread:$0]  %s10518, 1024, %s10520, [#allocation7], 256, 256, 16
    $region63: #{lstm_language_model.1} parent=1 // pred_fallthru
      _
    // Predicated region
    $region64: #{lstm_language_model.1} parent=1 // pred_check
      _
    $region65: #{lstm_language_model.1} parent=1 // pred_check_branch
      %10527 = sbr.rel (0) target = $region67
    $region66: #{lstm_language_model.1} parent=1 // pred_region
      %10529 = dma.done [#allocation7], 1024
    $region67: #{lstm_language_model.1} parent=1 // pred_fallthru
      _
    %10530 = vsyncpa [#allocation7], 1
  %10531 = vsyncmov [#allocation5]
  %s10532 = vpop.sfrf %10531
  %p10533 = scmp.eq.s32.totalorder %s10532, 0
  %p10534 = pneg %p10533
  %10536 = shalt.err (%p10534)
  %s10537 = scalar_lea.sflag [#allocation5], 1
  %10538 = vsyncmov %s10537
  %s10539 = vpop.sfrf %10538
  %p10540 = scmp.eq.s32.totalorder %s10539, 0
  %p10541 = pneg %p10540
  %10543 = shalt.err (%p10541)

</llo_original>
